<compile_context>
chip_gen: v7x
topology: tpu7x:2x2x1
jax: 0.10.0
libtpu: 0.0.40
codegen_flags: <defaults>
</compile_context>

<pallas_src>
import math

import jax
import jax.numpy as jnp
import numpy as np
from jax.experimental import pallas as pl
from jax.experimental.pallas import tpu as pltpu

_NUM_CONV = 5
_CONV_CHANNELS = [(3, 8), (8, 16), (16, 32), (32, 64), (64, 128)]


def _round_up(x, m):
    return (x + m - 1) // m * m


def _conv_out(n):
    # Conv2d(kernel=3, stride=2, pad=1) output size.
    return (n - 1) // 2 + 1


# ------------------------------ parameter prep ------------------------------ #
def init_params(key):
    """Torch-equivalent random init (Conv2d / Linear default uniform bounds).

    Conv weights are stored HWIO: (3, 3, Cin, Cout)."""
    params = {"conv": []}
    for cin, cout in _CONV_CHANNELS:
        key, kw, kb = jax.random.split(key, 3)
        bound = 1.0 / math.sqrt(cin * 9)
        w = jax.random.uniform(kw, (3, 3, cin, cout), jnp.float32, -bound, bound)
        b = jax.random.uniform(kb, (cout,), jnp.float32, -bound, bound)
        params["conv"].append((w, b))
    key, kw, kb = jax.random.split(key, 3)
    bound = 1.0 / math.sqrt(128)
    params["linear"] = (
        jax.random.uniform(kw, (128, 4), jnp.float32, -bound, bound),
        jax.random.uniform(kb, (4,), jnp.float32, -bound, bound),
    )
    return params


def prepare_pallas_params(params, image_hw, compute_dtype=jnp.bfloat16):
    """Host-side one-time weight prep for the fused kernel.

    Per conv layer (input (H, W, Cin) -> output (Hout, Wout, Cout)) build
      wexp (3, W*Cin, Wout*Cout): wexp[kh, w*Cin+ci, wo*Cout+co] = W[kh, kw, ci, co]
                                  where w == 2*wo + kw - 1 (0 where padded / no tap)
      bexp (1, Wout*Cout):        bias tiled over wo
    so that  y[ho] = relu( sum_{kh, hi=2*ho+kh-1 valid} x[hi] @ wexp[kh] + bexp )
    reproduces Conv2d(3, stride=2, pad=1) exactly.  /255 is folded into layer 1.
    The head folds mean-pool (1/(H6*W6) and the w6-sum) into the linear weight and
    zero-pads the 4 output columns to 128 for an unmasked lane-dense store.
    """
    H, W = image_hw
    layers, shapes = [], []
    for idx, (w_hwio, b) in enumerate(params["conv"]):
        w_np = np.asarray(w_hwio, np.float32)               # (3, 3, Cin, Cout)
        if idx == 0:
            w_np = w_np / 255.0                              # fold input normalization
        b_np = np.asarray(b, np.float32)
        cin, cout = w_np.shape[2], w_np.shape[3]
        hout, wout = _conv_out(H), _conv_out(W)

        wexp = np.zeros((3, W * cin, wout * cout), np.float32)
        for kh in range(3):
            for kw_ in range(3):
                for wo in range(wout):
                    wi = 2 * wo + kw_ - 1
                    if 0 <= wi < W:
                        wexp[kh, wi * cin:(wi + 1) * cin,
                             wo * cout:(wo + 1) * cout] = w_np[kh, kw_]
        bexp = np.tile(b_np, wout)[None, :]                  # (1, wout*cout)

        layers.append((jnp.asarray(wexp, compute_dtype),
                       jnp.asarray(bexp, jnp.float32)))
        shapes.append((H, W * cin, hout, wout * cout))       # (Hin, W*Cin, Hout, Wout*Cout)
        H, W = hout, wout

    c_last = _CONV_CHANNELS[-1][1]                           # 128
    wl = np.asarray(params["linear"][0], np.float32)         # (128, 4)
    bl = np.asarray(params["linear"][1], np.float32)         # (4,)
    whead = np.zeros((W * c_last, 128), np.float32)
    whead[:, :4] = np.tile(wl, (W, 1)) / float(H * W)        # mean-pool folded
    bhead = np.zeros((1, 128), np.float32)
    bhead[0, :4] = bl
    return {"layers": layers, "shapes": shapes, "head_hw": (H, W),
            "whead": jnp.asarray(whead, compute_dtype),
            "bhead": jnp.asarray(bhead, jnp.float32),
            "dtype": compute_dtype}


# ------------------------------- Pallas kernel ------------------------------ #
def _make_kernel(shapes, head_hw, n_layers):
    """Builds the fused kernel.  Refs layout:
       [0]                x_ref   (H1, TB, W1*C0)    rows outer, batch on sublanes
       [1 + 2l + {0,1}]   wexp_l  (3, W*Cin, Wout*Cout) / bexp_l (1, Wout*Cout)
       [1 + 2L]           whead   (W6*128, 128)
       [2 + 2L]           bhead   (1, 128)
       [3 + 2L]           o_ref   (TB, 128)
       [4 + 2L], [5 + 2L] act_a / act_b VMEM scratch (Hmax, TB, WCmax), ping-pong
    """
    def kernel(*refs):
        x_ref = refs[0]
        conv_refs = refs[1:1 + 2 * n_layers]
        whead_ref = refs[1 + 2 * n_layers]
        bhead_ref = refs[2 + 2 * n_layers]
        o_ref = refs[3 + 2 * n_layers]
        acts = (refs[4 + 2 * n_layers], refs[5 + 2 * n_layers])

        tb = x_ref.shape[1]
        wcmax = acts[0].shape[-1]

        src = 0
        for l in range(n_layers):
            w_ref = conv_refs[2 * l]
            b_ref = conv_refs[2 * l + 1]
            hin, wc_in, hout, wc_out = shapes[l]
            dst = 0 if l == 0 else 1 - src
            for j in range(hout):                       # static unrolled (<=16 per layer)
                acc = jnp.zeros((tb, wc_out), jnp.float32)
                for kh in range(3):                     # 3 accumulating MXU dots, M = TB
                    hi = 2 * j + kh - 1
                    if 0 <= hi < hin:                   # padded rows contribute 0 -> skip
                        if l == 0:
                            row = x_ref[hi]             # (TB, W*Cin), contiguous
                        else:
                            row = acts[src][hi]
                            if row.shape[-1] != wc_in:
                                row = row[:, :wc_in]
                        acc = acc + jnp.dot(row, w_ref[kh],
                                            preferred_element_type=jnp.float32)
                y = jnp.maximum(acc + b_ref[...], 0.0).astype(acts[dst].dtype)
                if wc_out == wcmax:
                    acts[dst][j] = y
                else:
                    acts[dst][j, :, :wc_out] = y
            src = dst

        # Mean pool (folded into whead) + Linear + ReLU; only the h6-sum remains.
        h6, _ = head_hw
        wc_head = whead_ref.shape[0]
        logits = jnp.zeros((tb, 128), jnp.float32)
        for h in range(h6):
            feat = acts[src][h]
            if feat.shape[-1] != wc_head:
                feat = feat[:, :wc_head]
            logits = logits + jnp.dot(feat, whead_ref[...],
                                      preferred_element_type=jnp.float32)
        logits = jnp.maximum(logits + bhead_ref[...], 0.0)
        o_ref[...] = logits.astype(o_ref.dtype)          # full-lane (TB, 128) store

    return kernel


# --------------------------------- forward ---------------------------------- #
def forward(prep, x_nchw, block_batch=256):
    """Fused Pallas forward; matches MyModel.forward for NCHW (or CHW) input."""
    if x_nchw.ndim == 3:
        x_nchw = x_nchw[None]
    n, c, h, w = x_nchw.shape
    shapes = prep["shapes"]
    assert shapes[0][0] == h and shapes[0][1] == w * c, "prep built for another size"
    cdtype = prep["dtype"]

    # Batch tile: fill the MXU (M = TB), but keep >= 2 grid steps when the batch
    # allows so dimension_semantics=("parallel",) can use both v7x TensorCores.
    tb = min(_round_up(block_batch, 8), max(8, _round_up(pl.cdiv(n, 2), 8)))
    n_pad = _round_up(n, tb)

    # NCHW -> (H, N, W*C): rows outermost so every conv row-tap is a contiguous
    # (TB, W*C) sublane block; lane dim stays dense (96/128).  Layout plumbing only.
    x2 = jnp.transpose(x_nchw, (2, 0, 3, 1)).reshape(h, n, w * c).astype(cdtype)
    if n_pad != n:
        x2 = jnp.pad(x2, ((0, 0), (0, n_pad - n), (0, 0)))

    hmax = max(s[2] for s in shapes)            # largest Hout (layer 1)
    wcmax = max(s[3] for s in shapes)           # largest Wout*Cout (== 128 for 32x32)

    operands = [x2]
    in_specs = [pl.BlockSpec((h, tb, w * c), lambda i: (0, i, 0))]
    for wexp, bexp in prep["layers"]:
        operands += [wexp, bexp]
        in_specs += [pl.BlockSpec(wexp.shape, lambda i: (0, 0, 0)),   # resident weights
                     pl.BlockSpec(bexp.shape, lambda i: (0, 0))]
    operands += [prep["whead"], prep["bhead"]]
    in_specs += [pl.BlockSpec(prep["whead"].shape, lambda i: (0, 0)),
                 pl.BlockSpec(prep["bhead"].shape, lambda i: (0, 0))]

    kernel = _make_kernel(shapes, prep["head_hw"], len(prep["layers"]))
    out = pl.pallas_call(
        kernel,
        out_shape=jax.ShapeDtypeStruct((n_pad, 128), jnp.float32),
        grid=(n_pad // tb,),
        in_specs=in_specs,
        out_specs=pl.BlockSpec((tb, 128), lambda i: (i, 0)),
        scratch_shapes=[pltpu.VMEM((hmax, tb, wcmax), cdtype),
                        pltpu.VMEM((hmax, tb, wcmax), cdtype)],
        compiler_params=pltpu.CompilerParams(
            dimension_semantics=("parallel",)),
    )(*operands)
    return out[:n, :4]


# ------------------------------ pure-JAX reference -------------------------- #
def ref_forward(params, x_nchw):
    if x_nchw.ndim == 3:
        x_nchw = x_nchw[None]
    x = x_nchw.astype(jnp.float32) / 255.0
    for w, b in params["conv"]:
        x = jax.lax.conv_general_dilated(
            x, w, window_strides=(2, 2), padding=((1, 1), (1, 1)),
            dimension_numbers=("NCHW", "HWIO", "NCHW"),
            precision=jax.lax.Precision.HIGHEST)
        x = jnp.maximum(x + b[None, :, None, None], 0.0)
    x = x.mean(axis=(2, 3))
    wl, bl = params["linear"]
    return jnp.maximum(jnp.dot(x, wl, precision=jax.lax.Precision.HIGHEST) + bl, 0.0)


if __name__ == "__main__":
    key = jax.random.PRNGKey(0)
    pkey, xkey = jax.random.split(key)
    params = init_params(pkey)
    # NCHW image batch consistent with the module: 3 input channels, 32x32.
    x = jax.random.uniform(xkey, (2, 3, 32, 32), jnp.float32, 0.0, 255.0)

    # float32 path: tight correctness check against the pure-JAX reference
    # (only matmul-reassociation differences vs lax.conv).
    prep_f32 = prepare_pallas_params(params, (32, 32), compute_dtype=jnp.float32)
    out_f32 = jax.block_until_ready(jax.jit(lambda a: forward(prep_f32, a))(x))
    ref = jax.block_until_ready(ref_forward(params, x))
    assert out_f32.shape == (2, 4), out_f32.shape
    assert jnp.allclose(out_f32, ref, rtol=2e-3, atol=2e-4), (out_f32, ref)

    # bfloat16 path (the performance default: half the weight VMEM / input DMA,
    # native bf16 MXU rate, f32 accumulation).  Raw 0-255 pixels + weights are
    # quantized to bf16, so only sanity-check it rather than bit-tight compare.
    prep_bf16 = prepare_pallas_params(params, (32, 32))   # compute_dtype=bfloat16
    out_bf16 = jax.block_until_ready(jax.jit(lambda a: forward(prep_bf16, a))(x))
    assert out_bf16.shape == (2, 4), out_bf16.shape
    assert bool(jnp.all(jnp.isfinite(out_bf16)))
    # TODO(synk): bf16 operands give ~2^-8 relative quantization vs the f32
    # reference; use the f32 prep when bit-tight parity with PyTorch is required.

    print("KERNEL_OK")
</pallas_src>

<mosaic_0001>
module attributes {stable_mosaic.version = 11 : i64} {
  func.func @kernel(%arg0: i32, %arg1: memref<32x8x96xf32, #tpu.memory_space<vmem>>, %arg2: memref<3x96x128xf32, #tpu.memory_space<vmem>>, %arg3: memref<1x128xf32, #tpu.memory_space<vmem>>, %arg4: memref<3x128x128xf32, #tpu.memory_space<vmem>>, %arg5: memref<1x128xf32, #tpu.memory_space<vmem>>, %arg6: memref<3x128x128xf32, #tpu.memory_space<vmem>>, %arg7: memref<1x128xf32, #tpu.memory_space<vmem>>, %arg8: memref<3x128x128xf32, #tpu.memory_space<vmem>>, %arg9: memref<1x128xf32, #tpu.memory_space<vmem>>, %arg10: memref<3x128x128xf32, #tpu.memory_space<vmem>>, %arg11: memref<1x128xf32, #tpu.memory_space<vmem>>, %arg12: memref<128x128xf32, #tpu.memory_space<vmem>>, %arg13: memref<1x128xf32, #tpu.memory_space<vmem>>, %arg14: memref<8x128xf32, #tpu.memory_space<vmem>>, %arg15: memref<16x8x128xf32, #tpu.memory_space<vmem>>, %arg16: memref<16x8x128xf32, #tpu.memory_space<vmem>>) attributes {dimension_semantics = [#tpu.dimension_semantics<parallel>], iteration_bounds = array<i64: 1>, scalar_prefetch = 0 : i64, scratch_operands = 2 : i64, tpu.core_type = #tpu.core_type<tc>, window_params = [{transform_indices = @transform_0, window_bounds = array<i64: 32, 8, 96>}, {pipeline_mode = #tpu.pipeline_mode<synchronous>, transform_indices = @transform_1, window_bounds = array<i64: 3, 96, 128>}, {pipeline_mode = #tpu.pipeline_mode<synchronous>, transform_indices = @transform_2, window_bounds = array<i64: 1, 128>}, {pipeline_mode = #tpu.pipeline_mode<synchronous>, transform_indices = @transform_3, window_bounds = array<i64: 3, 128, 128>}, {pipeline_mode = #tpu.pipeline_mode<synchronous>, transform_indices = @transform_4, window_bounds = array<i64: 1, 128>}, {pipeline_mode = #tpu.pipeline_mode<synchronous>, transform_indices = @transform_5, window_bounds = array<i64: 3, 128, 128>}, {pipeline_mode = #tpu.pipeline_mode<synchronous>, transform_indices = @transform_6, window_bounds = array<i64: 1, 128>}, {pipeline_mode = #tpu.pipeline_mode<synchronous>, transform_indices = @transform_7, window_bounds = array<i64: 3, 128, 128>}, {pipeline_mode = #tpu.pipeline_mode<synchronous>, transform_indices = @transform_8, window_bounds = array<i64: 1, 128>}, {pipeline_mode = #tpu.pipeline_mode<synchronous>, transform_indices = @transform_9, window_bounds = array<i64: 3, 128, 128>}, {pipeline_mode = #tpu.pipeline_mode<synchronous>, transform_indices = @transform_10, window_bounds = array<i64: 1, 128>}, {pipeline_mode = #tpu.pipeline_mode<synchronous>, transform_indices = @transform_11, window_bounds = array<i64: 128, 128>}, {pipeline_mode = #tpu.pipeline_mode<synchronous>, transform_indices = @transform_12, window_bounds = array<i64: 1, 128>}, {transform_indices = @transform_13, window_bounds = array<i64: 8, 128>}]} {
    %cst = arith.constant 0.000000e+00 : f32
    %0 = vector.broadcast %cst : f32 to vector<8x128xf32>
    %c0 = arith.constant 0 : index
    %c0_0 = arith.constant 0 : index
    %c0_1 = arith.constant 0 : index
    %1 = vector.load %arg1[%c0, %c0_0, %c0_1] : memref<32x8x96xf32, #tpu.memory_space<vmem>>, vector<1x8x96xf32>
    %2 = vector.shape_cast %1 : vector<1x8x96xf32> to vector<8x96xf32>
    %c1 = arith.constant 1 : index
    %c0_2 = arith.constant 0 : index
    %c0_3 = arith.constant 0 : index
    %3 = vector.load %arg2[%c1, %c0_2, %c0_3] : memref<3x96x128xf32, #tpu.memory_space<vmem>>, vector<1x96x128xf32>
    %4 = vector.shape_cast %3 : vector<1x96x128xf32> to vector<96x128xf32>
    %cst_4 = arith.constant dense<0.000000e+00> : vector<8x128xf32>
    %5 = tpu.matmul %2, %4, %cst_4 {dimension_numbers = #tpu.dot_dimension_numbers<[1], [0], [0], [1], [0, 0, 1, 1], [], []>} : vector<8x96xf32>, vector<96x128xf32>, vector<8x128xf32> -> vector<8x128xf32>
    %6 = arith.addf %0, %5 : vector<8x128xf32>
    %c1_5 = arith.constant 1 : index
    %c0_6 = arith.constant 0 : index
    %c0_7 = arith.constant 0 : index
    %7 = vector.load %arg1[%c1_5, %c0_6, %c0_7] : memref<32x8x96xf32, #tpu.memory_space<vmem>>, vector<1x8x96xf32>
    %8 = vector.shape_cast %7 : vector<1x8x96xf32> to vector<8x96xf32>
    %c2 = arith.constant 2 : index
    %c0_8 = arith.constant 0 : index
    %c0_9 = arith.constant 0 : index
    %9 = vector.load %arg2[%c2, %c0_8, %c0_9] : memref<3x96x128xf32, #tpu.memory_space<vmem>>, vector<1x96x128xf32>
    %10 = vector.shape_cast %9 : vector<1x96x128xf32> to vector<96x128xf32>
    %cst_10 = arith.constant dense<0.000000e+00> : vector<8x128xf32>
    %11 = tpu.matmul %8, %10, %cst_10 {dimension_numbers = #tpu.dot_dimension_numbers<[1], [0], [0], [1], [0, 0, 1, 1], [], []>} : vector<8x96xf32>, vector<96x128xf32>, vector<8x128xf32> -> vector<8x128xf32>
    %12 = arith.addf %6, %11 : vector<8x128xf32>
    %c0_11 = arith.constant 0 : index
    %c0_12 = arith.constant 0 : index
    %13 = vector.load %arg3[%c0_11, %c0_12] : memref<1x128xf32, #tpu.memory_space<vmem>>, vector<1x128xf32>
    %14 = vector.broadcast %13 : vector<1x128xf32> to vector<8x128xf32>
    %15 = arith.addf %12, %14 : vector<8x128xf32>
    %cst_13 = arith.constant 0.000000e+00 : f32
    %16 = vector.broadcast %cst_13 : f32 to vector<8x128xf32>
    %17 = arith.maximumf %15, %16 : vector<8x128xf32>
    %c0_14 = arith.constant 0 : index
    %c0_15 = arith.constant 0 : index
    %c0_16 = arith.constant 0 : index
    %18 = vector.load %arg15[%c0_14, %c0_15, %c0_16] : memref<16x8x128xf32, #tpu.memory_space<vmem>>, vector<1x8x128xf32>
    %19 = vector.shape_cast %18 : vector<1x8x128xf32> to vector<8x128xf32>
    %20 = vector.shape_cast %17 : vector<8x128xf32> to vector<1x8x128xf32>
    tpu.vector_store %arg15[%c0_14, %c0_15, %c0_16], %20 {strides = array<i32>} : memref<16x8x128xf32, #tpu.memory_space<vmem>>, vector<1x8x128xf32>,
    %cst_17 = arith.constant 0.000000e+00 : f32
    %21 = vector.broadcast %cst_17 : f32 to vector<8x128xf32>
    %c1_18 = arith.constant 1 : index
    %c0_19 = arith.constant 0 : index
    %c0_20 = arith.constant 0 : index
    %22 = vector.load %arg1[%c1_18, %c0_19, %c0_20] : memref<32x8x96xf32, #tpu.memory_space<vmem>>, vector<1x8x96xf32>
    %23 = vector.shape_cast %22 : vector<1x8x96xf32> to vector<8x96xf32>
    %c0_21 = arith.constant 0 : index
    %c0_22 = arith.constant 0 : index
    %c0_23 = arith.constant 0 : index
    %24 = vector.load %arg2[%c0_21, %c0_22, %c0_23] : memref<3x96x128xf32, #tpu.memory_space<vmem>>, vector<1x96x128xf32>
    %25 = vector.shape_cast %24 : vector<1x96x128xf32> to vector<96x128xf32>
    %cst_24 = arith.constant dense<0.000000e+00> : vector<8x128xf32>
    %26 = tpu.matmul %23, %25, %cst_24 {dimension_numbers = #tpu.dot_dimension_numbers<[1], [0], [0], [1], [0, 0, 1, 1], [], []>} : vector<8x96xf32>, vector<96x128xf32>, vector<8x128xf32> -> vector<8x128xf32>
    %27 = arith.addf %21, %26 : vector<8x128xf32>
    %c2_25 = arith.constant 2 : index
    %c0_26 = arith.constant 0 : index
    %c0_27 = arith.constant 0 : index
    %28 = vector.load %arg1[%c2_25, %c0_26, %c0_27] : memref<32x8x96xf32, #tpu.memory_space<vmem>>, vector<1x8x96xf32>
    %29 = vector.shape_cast %28 : vector<1x8x96xf32> to vector<8x96xf32>
    %c1_28 = arith.constant 1 : index
    %c0_29 = arith.constant 0 : index
    %c0_30 = arith.constant 0 : index
    %30 = vector.load %arg2[%c1_28, %c0_29, %c0_30] : memref<3x96x128xf32, #tpu.memory_space<vmem>>, vector<1x96x128xf32>
    %31 = vector.shape_cast %30 : vector<1x96x128xf32> to vector<96x128xf32>
    %cst_31 = arith.constant dense<0.000000e+00> : vector<8x128xf32>
    %32 = tpu.matmul %29, %31, %cst_31 {dimension_numbers = #tpu.dot_dimension_numbers<[1], [0], [0], [1], [0, 0, 1, 1], [], []>} : vector<8x96xf32>, vector<96x128xf32>, vector<8x128xf32> -> vector<8x128xf32>
    %33 = arith.addf %27, %32 : vector<8x128xf32>
    %c3 = arith.constant 3 : index
    %c0_32 = arith.constant 0 : index
    %c0_33 = arith.constant 0 : index
    %34 = vector.load %arg1[%c3, %c0_32, %c0_33] : memref<32x8x96xf32, #tpu.memory_space<vmem>>, vector<1x8x96xf32>
    %35 = vector.shape_cast %34 : vector<1x8x96xf32> to vector<8x96xf32>
    %c2_34 = arith.constant 2 : index
    %c0_35 = arith.constant 0 : index
    %c0_36 = arith.constant 0 : index
    %36 = vector.load %arg2[%c2_34, %c0_35, %c0_36] : memref<3x96x128xf32, #tpu.memory_space<vmem>>, vector<1x96x128xf32>
    %37 = vector.shape_cast %36 : vector<1x96x128xf32> to vector<96x128xf32>
    %cst_37 = arith.constant dense<0.000000e+00> : vector<8x128xf32>
    %38 = tpu.matmul %35, %37, %cst_37 {dimension_numbers = #tpu.dot_dimension_numbers<[1], [0], [0], [1], [0, 0, 1, 1], [], []>} : vector<8x96xf32>, vector<96x128xf32>, vector<8x128xf32> -> vector<8x128xf32>
    %39 = arith.addf %33, %38 : vector<8x128xf32>
    %c0_38 = arith.constant 0 : index
    %c0_39 = arith.constant 0 : index
    %40 = vector.load %arg3[%c0_38, %c0_39] : memref<1x128xf32, #tpu.memory_space<vmem>>, vector<1x128xf32>
    %41 = vector.broadcast %40 : vector<1x128xf32> to vector<8x128xf32>
    %42 = arith.addf %39, %41 : vector<8x128xf32>
    %cst_40 = arith.constant 0.000000e+00 : f32
    %43 = vector.broadcast %cst_40 : f32 to vector<8x128xf32>
    %44 = arith.maximumf %42, %43 : vector<8x128xf32>
    %c1_41 = arith.constant 1 : index
    %c0_42 = arith.constant 0 : index
    %c0_43 = arith.constant 0 : index
    %45 = vector.load %arg15[%c1_41, %c0_42, %c0_43] : memref<16x8x128xf32, #tpu.memory_space<vmem>>, vector<1x8x128xf32>
    %46 = vector.shape_cast %45 : vector<1x8x128xf32> to vector<8x128xf32>
    %47 = vector.shape_cast %44 : vector<8x128xf32> to vector<1x8x128xf32>
    tpu.vector_store %arg15[%c1_41, %c0_42, %c0_43], %47 {strides = array<i32>} : memref<16x8x128xf32, #tpu.memory_space<vmem>>, vector<1x8x128xf32>,
    %cst_44 = arith.constant 0.000000e+00 : f32
    %48 = vector.broadcast %cst_44 : f32 to vector<8x128xf32>
    %c3_45 = arith.constant 3 : index
    %c0_46 = arith.constant 0 : index
    %c0_47 = arith.constant 0 : index
    %49 = vector.load %arg1[%c3_45, %c0_46, %c0_47] : memref<32x8x96xf32, #tpu.memory_space<vmem>>, vector<1x8x96xf32>
    %50 = vector.shape_cast %49 : vector<1x8x96xf32> to vector<8x96xf32>
    %c0_48 = arith.constant 0 : index
    %c0_49 = arith.constant 0 : index
    %c0_50 = arith.constant 0 : index
    %51 = vector.load %arg2[%c0_48, %c0_49, %c0_50] : memref<3x96x128xf32, #tpu.memory_space<vmem>>, vector<1x96x128xf32>
    %52 = vector.shape_cast %51 : vector<1x96x128xf32> to vector<96x128xf32>
    %cst_51 = arith.constant dense<0.000000e+00> : vector<8x128xf32>
    %53 = tpu.matmul %50, %52, %cst_51 {dimension_numbers = #tpu.dot_dimension_numbers<[1], [0], [0], [1], [0, 0, 1, 1], [], []>} : vector<8x96xf32>, vector<96x128xf32>, vector<8x128xf32> -> vector<8x128xf32>
    %54 = arith.addf %48, %53 : vector<8x128xf32>
    %c4 = arith.constant 4 : index
    %c0_52 = arith.constant 0 : index
    %c0_53 = arith.constant 0 : index
    %55 = vector.load %arg1[%c4, %c0_52, %c0_53] : memref<32x8x96xf32, #tpu.memory_space<vmem>>, vector<1x8x96xf32>
    %56 = vector.shape_cast %55 : vector<1x8x96xf32> to vector<8x96xf32>
    %c1_54 = arith.constant 1 : index
    %c0_55 = arith.constant 0 : index
    %c0_56 = arith.constant 0 : index
    %57 = vector.load %arg2[%c1_54, %c0_55, %c0_56] : memref<3x96x128xf32, #tpu.memory_space<vmem>>, vector<1x96x128xf32>
    %58 = vector.shape_cast %57 : vector<1x96x128xf32> to vector<96x128xf32>
    %cst_57 = arith.constant dense<0.000000e+00> : vector<8x128xf32>
    %59 = tpu.matmul %56, %58, %cst_57 {dimension_numbers = #tpu.dot_dimension_numbers<[1], [0], [0], [1], [0, 0, 1, 1], [], []>} : vector<8x96xf32>, vector<96x128xf32>, vector<8x128xf32> -> vector<8x128xf32>
    %60 = arith.addf %54, %59 : vector<8x128xf32>
    %c5 = arith.constant 5 : index
    %c0_58 = arith.constant 0 : index
    %c0_59 = arith.constant 0 : index
    %61 = vector.load %arg1[%c5, %c0_58, %c0_59] : memref<32x8x96xf32, #tpu.memory_space<vmem>>, vector<1x8x96xf32>
    %62 = vector.shape_cast %61 : vector<1x8x96xf32> to vector<8x96xf32>
    %c2_60 = arith.constant 2 : index
    %c0_61 = arith.constant 0 : index
    %c0_62 = arith.constant 0 : index
    %63 = vector.load %arg2[%c2_60, %c0_61, %c0_62] : memref<3x96x128xf32, #tpu.memory_space<vmem>>, vector<1x96x128xf32>
    %64 = vector.shape_cast %63 : vector<1x96x128xf32> to vector<96x128xf32>
    %cst_63 = arith.constant dense<0.000000e+00> : vector<8x128xf32>
    %65 = tpu.matmul %62, %64, %cst_63 {dimension_numbers = #tpu.dot_dimension_numbers<[1], [0], [0], [1], [0, 0, 1, 1], [], []>} : vector<8x96xf32>, vector<96x128xf32>, vector<8x128xf32> -> vector<8x128xf32>
    %66 = arith.addf %60, %65 : vector<8x128xf32>
    %c0_64 = arith.constant 0 : index
    %c0_65 = arith.constant 0 : index
    %67 = vector.load %arg3[%c0_64, %c0_65] : memref<1x128xf32, #tpu.memory_space<vmem>>, vector<1x128xf32>
    %68 = vector.broadcast %67 : vector<1x128xf32> to vector<8x128xf32>
    %69 = arith.addf %66, %68 : vector<8x128xf32>
    %cst_66 = arith.constant 0.000000e+00 : f32
    %70 = vector.broadcast %cst_66 : f32 to vector<8x128xf32>
    %71 = arith.maximumf %69, %70 : vector<8x128xf32>
    %c2_67 = arith.constant 2 : index
    %c0_68 = arith.constant 0 : index
    %c0_69 = arith.constant 0 : index
    %72 = vector.load %arg15[%c2_67, %c0_68, %c0_69] : memref<16x8x128xf32, #tpu.memory_space<vmem>>, vector<1x8x128xf32>
    %73 = vector.shape_cast %72 : vector<1x8x128xf32> to vector<8x128xf32>
    %74 = vector.shape_cast %71 : vector<8x128xf32> to vector<1x8x128xf32>
    tpu.vector_store %arg15[%c2_67, %c0_68, %c0_69], %74 {strides = array<i32>} : memref<16x8x128xf32, #tpu.memory_space<vmem>>, vector<1x8x128xf32>,
    %cst_70 = arith.constant 0.000000e+00 : f32
    %75 = vector.broadcast %cst_70 : f32 to vector<8x128xf32>
    %c5_71 = arith.constant 5 : index
    %c0_72 = arith.constant 0 : index
    %c0_73 = arith.constant 0 : index
    %76 = vector.load %arg1[%c5_71, %c0_72, %c0_73] : memref<32x8x96xf32, #tpu.memory_space<vmem>>, vector<1x8x96xf32>
    %77 = vector.shape_cast %76 : vector<1x8x96xf32> to vector<8x96xf32>
    %c0_74 = arith.constant 0 : index
    %c0_75 = arith.constant 0 : index
    %c0_76 = arith.constant 0 : index
    %78 = vector.load %arg2[%c0_74, %c0_75, %c0_76] : memref<3x96x128xf32, #tpu.memory_space<vmem>>, vector<1x96x128xf32>
    %79 = vector.shape_cast %78 : vector<1x96x128xf32> to vector<96x128xf32>
    %cst_77 = arith.constant dense<0.000000e+00> : vector<8x128xf32>
    %80 = tpu.matmul %77, %79, %cst_77 {dimension_numbers = #tpu.dot_dimension_numbers<[1], [0], [0], [1], [0, 0, 1, 1], [], []>} : vector<8x96xf32>, vector<96x128xf32>, vector<8x128xf32> -> vector<8x128xf32>
    %81 = arith.addf %75, %80 : vector<8x128xf32>
    %c6 = arith.constant 6 : index
    %c0_78 = arith.constant 0 : index
    %c0_79 = arith.constant 0 : index
    %82 = vector.load %arg1[%c6, %c0_78, %c0_79] : memref<32x8x96xf32, #tpu.memory_space<vmem>>, vector<1x8x96xf32>
    %83 = vector.shape_cast %82 : vector<1x8x96xf32> to vector<8x96xf32>
    %c1_80 = arith.constant 1 : index
    %c0_81 = arith.constant 0 : index
    %c0_82 = arith.constant 0 : index
    %84 = vector.load %arg2[%c1_80, %c0_81, %c0_82] : memref<3x96x128xf32, #tpu.memory_space<vmem>>, vector<1x96x128xf32>
    %85 = vector.shape_cast %84 : vector<1x96x128xf32> to vector<96x128xf32>
    %cst_83 = arith.constant dense<0.000000e+00> : vector<8x128xf32>
    %86 = tpu.matmul %83, %85, %cst_83 {dimension_numbers = #tpu.dot_dimension_numbers<[1], [0], [0], [1], [0, 0, 1, 1], [], []>} : vector<8x96xf32>, vector<96x128xf32>, vector<8x128xf32> -> vector<8x128xf32>
    %87 = arith.addf %81, %86 : vector<8x128xf32>
    %c7 = arith.constant 7 : index
    %c0_84 = arith.constant 0 : index
    %c0_85 = arith.constant 0 : index
    %88 = vector.load %arg1[%c7, %c0_84, %c0_85] : memref<32x8x96xf32, #tpu.memory_space<vmem>>, vector<1x8x96xf32>
    %89 = vector.shape_cast %88 : vector<1x8x96xf32> to vector<8x96xf32>
    %c2_86 = arith.constant 2 : index
    %c0_87 = arith.constant 0 : index
    %c0_88 = arith.constant 0 : index
    %90 = vector.load %arg2[%c2_86, %c0_87, %c0_88] : memref<3x96x128xf32, #tpu.memory_space<vmem>>, vector<1x96x128xf32>
    %91 = vector.shape_cast %90 : vector<1x96x128xf32> to vector<96x128xf32>
    %cst_89 = arith.constant dense<0.000000e+00> : vector<8x128xf32>
    %92 = tpu.matmul %89, %91, %cst_89 {dimension_numbers = #tpu.dot_dimension_numbers<[1], [0], [0], [1], [0, 0, 1, 1], [], []>} : vector<8x96xf32>, vector<96x128xf32>, vector<8x128xf32> -> vector<8x128xf32>
    %93 = arith.addf %87, %92 : vector<8x128xf32>
    %c0_90 = arith.constant 0 : index
    %c0_91 = arith.constant 0 : index
    %94 = vector.load %arg3[%c0_90, %c0_91] : memref<1x128xf32, #tpu.memory_space<vmem>>, vector<1x128xf32>
    %95 = vector.broadcast %94 : vector<1x128xf32> to vector<8x128xf32>
    %96 = arith.addf %93, %95 : vector<8x128xf32>
    %cst_92 = arith.constant 0.000000e+00 : f32
    %97 = vector.broadcast %cst_92 : f32 to vector<8x128xf32>
    %98 = arith.maximumf %96, %97 : vector<8x128xf32>
    %c3_93 = arith.constant 3 : index
    %c0_94 = arith.constant 0 : index
    %c0_95 = arith.constant 0 : index
    %99 = vector.load %arg15[%c3_93, %c0_94, %c0_95] : memref<16x8x128xf32, #tpu.memory_space<vmem>>, vector<1x8x128xf32>
    %100 = vector.shape_cast %99 : vector<1x8x128xf32> to vector<8x128xf32>
    %101 = vector.shape_cast %98 : vector<8x128xf32> to vector<1x8x128xf32>
    tpu.vector_store %arg15[%c3_93, %c0_94, %c0_95], %101 {strides = array<i32>} : memref<16x8x128xf32, #tpu.memory_space<vmem>>, vector<1x8x128xf32>,
    %cst_96 = arith.constant 0.000000e+00 : f32
    %102 = vector.broadcast %cst_96 : f32 to vector<8x128xf32>
    %c7_97 = arith.constant 7 : index
    %c0_98 = arith.constant 0 : index
    %c0_99 = arith.constant 0 : index
    %103 = vector.load %arg1[%c7_97, %c0_98, %c0_99] : memref<32x8x96xf32, #tpu.memory_space<vmem>>, vector<1x8x96xf32>
    %104 = vector.shape_cast %103 : vector<1x8x96xf32> to vector<8x96xf32>
    %c0_100 = arith.constant 0 : index
    %c0_101 = arith.constant 0 : index
    %c0_102 = arith.constant 0 : index
    %105 = vector.load %arg2[%c0_100, %c0_101, %c0_102] : memref<3x96x128xf32, #tpu.memory_space<vmem>>, vector<1x96x128xf32>
    %106 = vector.shape_cast %105 : vector<1x96x128xf32> to vector<96x128xf32>
    %cst_103 = arith.constant dense<0.000000e+00> : vector<8x128xf32>
    %107 = tpu.matmul %104, %106, %cst_103 {dimension_numbers = #tpu.dot_dimension_numbers<[1], [0], [0], [1], [0, 0, 1, 1], [], []>} : vector<8x96xf32>, vector<96x128xf32>, vector<8x128xf32> -> vector<8x128xf32>
    %108 = arith.addf %102, %107 : vector<8x128xf32>
    %c8 = arith.constant 8 : index
    %c0_104 = arith.constant 0 : index
    %c0_105 = arith.constant 0 : index
    %109 = vector.load %arg1[%c8, %c0_104, %c0_105] : memref<32x8x96xf32, #tpu.memory_space<vmem>>, vector<1x8x96xf32>
    %110 = vector.shape_cast %109 : vector<1x8x96xf32> to vector<8x96xf32>
    %c1_106 = arith.constant 1 : index
    %c0_107 = arith.constant 0 : index
    %c0_108 = arith.constant 0 : index
    %111 = vector.load %arg2[%c1_106, %c0_107, %c0_108] : memref<3x96x128xf32, #tpu.memory_space<vmem>>, vector<1x96x128xf32>
    %112 = vector.shape_cast %111 : vector<1x96x128xf32> to vector<96x128xf32>
    %cst_109 = arith.constant dense<0.000000e+00> : vector<8x128xf32>
    %113 = tpu.matmul %110, %112, %cst_109 {dimension_numbers = #tpu.dot_dimension_numbers<[1], [0], [0], [1], [0, 0, 1, 1], [], []>} : vector<8x96xf32>, vector<96x128xf32>, vector<8x128xf32> -> vector<8x128xf32>
    %114 = arith.addf %108, %113 : vector<8x128xf32>
    %c9 = arith.constant 9 : index
    %c0_110 = arith.constant 0 : index
    %c0_111 = arith.constant 0 : index
    %115 = vector.load %arg1[%c9, %c0_110, %c0_111] : memref<32x8x96xf32, #tpu.memory_space<vmem>>, vector<1x8x96xf32>
    %116 = vector.shape_cast %115 : vector<1x8x96xf32> to vector<8x96xf32>
    %c2_112 = arith.constant 2 : index
    %c0_113 = arith.constant 0 : index
    %c0_114 = arith.constant 0 : index
    %117 = vector.load %arg2[%c2_112, %c0_113, %c0_114] : memref<3x96x128xf32, #tpu.memory_space<vmem>>, vector<1x96x128xf32>
    %118 = vector.shape_cast %117 : vector<1x96x128xf32> to vector<96x128xf32>
    %cst_115 = arith.constant dense<0.000000e+00> : vector<8x128xf32>
    %119 = tpu.matmul %116, %118, %cst_115 {dimension_numbers = #tpu.dot_dimension_numbers<[1], [0], [0], [1], [0, 0, 1, 1], [], []>} : vector<8x96xf32>, vector<96x128xf32>, vector<8x128xf32> -> vector<8x128xf32>
    %120 = arith.addf %114, %119 : vector<8x128xf32>
    %c0_116 = arith.constant 0 : index
    %c0_117 = arith.constant 0 : index
    %121 = vector.load %arg3[%c0_116, %c0_117] : memref<1x128xf32, #tpu.memory_space<vmem>>, vector<1x128xf32>
    %122 = vector.broadcast %121 : vector<1x128xf32> to vector<8x128xf32>
    %123 = arith.addf %120, %122 : vector<8x128xf32>
    %cst_118 = arith.constant 0.000000e+00 : f32
    %124 = vector.broadcast %cst_118 : f32 to vector<8x128xf32>
    %125 = arith.maximumf %123, %124 : vector<8x128xf32>
    %c4_119 = arith.constant 4 : index
    %c0_120 = arith.constant 0 : index
    %c0_121 = arith.constant 0 : index
    %126 = vector.load %arg15[%c4_119, %c0_120, %c0_121] : memref<16x8x128xf32, #tpu.memory_space<vmem>>, vector<1x8x128xf32>
    %127 = vector.shape_cast %126 : vector<1x8x128xf32> to vector<8x128xf32>
    %128 = vector.shape_cast %125 : vector<8x128xf32> to vector<1x8x128xf32>
    tpu.vector_store %arg15[%c4_119, %c0_120, %c0_121], %128 {strides = array<i32>} : memref<16x8x128xf32, #tpu.memory_space<vmem>>, vector<1x8x128xf32>,
    %cst_122 = arith.constant 0.000000e+00 : f32
    %129 = vector.broadcast %cst_122 : f32 to vector<8x128xf32>
    %c9_123 = arith.constant 9 : index
    %c0_124 = arith.constant 0 : index
    %c0_125 = arith.constant 0 : index
    %130 = vector.load %arg1[%c9_123, %c0_124, %c0_125] : memref<32x8x96xf32, #tpu.memory_space<vmem>>, vector<1x8x96xf32>
    %131 = vector.shape_cast %130 : vector<1x8x96xf32> to vector<8x96xf32>
    %c0_126 = arith.constant 0 : index
    %c0_127 = arith.constant 0 : index
    %c0_128 = arith.constant 0 : index
    %132 = vector.load %arg2[%c0_126, %c0_127, %c0_128] : memref<3x96x128xf32, #tpu.memory_space<vmem>>, vector<1x96x128xf32>
    %133 = vector.shape_cast %132 : vector<1x96x128xf32> to vector<96x128xf32>
    %cst_129 = arith.constant dense<0.000000e+00> : vector<8x128xf32>
    %134 = tpu.matmul %131, %133, %cst_129 {dimension_numbers = #tpu.dot_dimension_numbers<[1], [0], [0], [1], [0, 0, 1, 1], [], []>} : vector<8x96xf32>, vector<96x128xf32>, vector<8x128xf32> -> vector<8x128xf32>
    %135 = arith.addf %129, %134 : vector<8x128xf32>
    %c10 = arith.constant 10 : index
    %c0_130 = arith.constant 0 : index
    %c0_131 = arith.constant 0 : index
    %136 = vector.load %arg1[%c10, %c0_130, %c0_131] : memref<32x8x96xf32, #tpu.memory_space<vmem>>, vector<1x8x96xf32>
    %137 = vector.shape_cast %136 : vector<1x8x96xf32> to vector<8x96xf32>
    %c1_132 = arith.constant 1 : index
    %c0_133 = arith.constant 0 : index
    %c0_134 = arith.constant 0 : index
    %138 = vector.load %arg2[%c1_132, %c0_133, %c0_134] : memref<3x96x128xf32, #tpu.memory_space<vmem>>, vector<1x96x128xf32>
    %139 = vector.shape_cast %138 : vector<1x96x128xf32> to vector<96x128xf32>
    %cst_135 = arith.constant dense<0.000000e+00> : vector<8x128xf32>
    %140 = tpu.matmul %137, %139, %cst_135 {dimension_numbers = #tpu.dot_dimension_numbers<[1], [0], [0], [1], [0, 0, 1, 1], [], []>} : vector<8x96xf32>, vector<96x128xf32>, vector<8x128xf32> -> vector<8x128xf32>
    %141 = arith.addf %135, %140 : vector<8x128xf32>
    %c11 = arith.constant 11 : index
    %c0_136 = arith.constant 0 : index
    %c0_137 = arith.constant 0 : index
    %142 = vector.load %arg1[%c11, %c0_136, %c0_137] : memref<32x8x96xf32, #tpu.memory_space<vmem>>, vector<1x8x96xf32>
    %143 = vector.shape_cast %142 : vector<1x8x96xf32> to vector<8x96xf32>
    %c2_138 = arith.constant 2 : index
    %c0_139 = arith.constant 0 : index
    %c0_140 = arith.constant 0 : index
    %144 = vector.load %arg2[%c2_138, %c0_139, %c0_140] : memref<3x96x128xf32, #tpu.memory_space<vmem>>, vector<1x96x128xf32>
    %145 = vector.shape_cast %144 : vector<1x96x128xf32> to vector<96x128xf32>
    %cst_141 = arith.constant dense<0.000000e+00> : vector<8x128xf32>
    %146 = tpu.matmul %143, %145, %cst_141 {dimension_numbers = #tpu.dot_dimension_numbers<[1], [0], [0], [1], [0, 0, 1, 1], [], []>} : vector<8x96xf32>, vector<96x128xf32>, vector<8x128xf32> -> vector<8x128xf32>
    %147 = arith.addf %141, %146 : vector<8x128xf32>
    %c0_142 = arith.constant 0 : index
    %c0_143 = arith.constant 0 : index
    %148 = vector.load %arg3[%c0_142, %c0_143] : memref<1x128xf32, #tpu.memory_space<vmem>>, vector<1x128xf32>
    %149 = vector.broadcast %148 : vector<1x128xf32> to vector<8x128xf32>
    %150 = arith.addf %147, %149 : vector<8x128xf32>
    %cst_144 = arith.constant 0.000000e+00 : f32
    %151 = vector.broadcast %cst_144 : f32 to vector<8x128xf32>
    %152 = arith.maximumf %150, %151 : vector<8x128xf32>
    %c5_145 = arith.constant 5 : index
    %c0_146 = arith.constant 0 : index
    %c0_147 = arith.constant 0 : index
    %153 = vector.load %arg15[%c5_145, %c0_146, %c0_147] : memref<16x8x128xf32, #tpu.memory_space<vmem>>, vector<1x8x128xf32>
    %154 = vector.shape_cast %153 : vector<1x8x128xf32> to vector<8x128xf32>
    %155 = vector.shape_cast %152 : vector<8x128xf32> to vector<1x8x128xf32>
    tpu.vector_store %arg15[%c5_145, %c0_146, %c0_147], %155 {strides = array<i32>} : memref<16x8x128xf32, #tpu.memory_space<vmem>>, vector<1x8x128xf32>,
    %cst_148 = arith.constant 0.000000e+00 : f32
    %156 = vector.broadcast %cst_148 : f32 to vector<8x128xf32>
    %c11_149 = arith.constant 11 : index
    %c0_150 = arith.constant 0 : index
    %c0_151 = arith.constant 0 : index
    %157 = vector.load %arg1[%c11_149, %c0_150, %c0_151] : memref<32x8x96xf32, #tpu.memory_space<vmem>>, vector<1x8x96xf32>
    %158 = vector.shape_cast %157 : vector<1x8x96xf32> to vector<8x96xf32>
    %c0_152 = arith.constant 0 : index
    %c0_153 = arith.constant 0 : index
    %c0_154 = arith.constant 0 : index
    %159 = vector.load %arg2[%c0_152, %c0_153, %c0_154] : memref<3x96x128xf32, #tpu.memory_space<vmem>>, vector<1x96x128xf32>
    %160 = vector.shape_cast %159 : vector<1x96x128xf32> to vector<96x128xf32>
    %cst_155 = arith.constant dense<0.000000e+00> : vector<8x128xf32>
    %161 = tpu.matmul %158, %160, %cst_155 {dimension_numbers = #tpu.dot_dimension_numbers<[1], [0], [0], [1], [0, 0, 1, 1], [], []>} : vector<8x96xf32>, vector<96x128xf32>, vector<8x128xf32> -> vector<8x128xf32>
    %162 = arith.addf %156, %161 : vector<8x128xf32>
    %c12 = arith.constant 12 : index
    %c0_156 = arith.constant 0 : index
    %c0_157 = arith.constant 0 : index
    %163 = vector.load %arg1[%c12, %c0_156, %c0_157] : memref<32x8x96xf32, #tpu.memory_space<vmem>>, vector<1x8x96xf32>
    %164 = vector.shape_cast %163 : vector<1x8x96xf32> to vector<8x96xf32>
    %c1_158 = arith.constant 1 : index
    %c0_159 = arith.constant 0 : index
    %c0_160 = arith.constant 0 : index
    %165 = vector.load %arg2[%c1_158, %c0_159, %c0_160] : memref<3x96x128xf32, #tpu.memory_space<vmem>>, vector<1x96x128xf32>
    %166 = vector.shape_cast %165 : vector<1x96x128xf32> to vector<96x128xf32>
    %cst_161 = arith.constant dense<0.000000e+00> : vector<8x128xf32>
    %167 = tpu.matmul %164, %166, %cst_161 {dimension_numbers = #tpu.dot_dimension_numbers<[1], [0], [0], [1], [0, 0, 1, 1], [], []>} : vector<8x96xf32>, vector<96x128xf32>, vector<8x128xf32> -> vector<8x128xf32>
    %168 = arith.addf %162, %167 : vector<8x128xf32>
    %c13 = arith.constant 13 : index
    %c0_162 = arith.constant 0 : index
    %c0_163 = arith.constant 0 : index
    %169 = vector.load %arg1[%c13, %c0_162, %c0_163] : memref<32x8x96xf32, #tpu.memory_space<vmem>>, vector<1x8x96xf32>
    %170 = vector.shape_cast %169 : vector<1x8x96xf32> to vector<8x96xf32>
    %c2_164 = arith.constant 2 : index
    %c0_165 = arith.constant 0 : index
    %c0_166 = arith.constant 0 : index
    %171 = vector.load %arg2[%c2_164, %c0_165, %c0_166] : memref<3x96x128xf32, #tpu.memory_space<vmem>>, vector<1x96x128xf32>
    %172 = vector.shape_cast %171 : vector<1x96x128xf32> to vector<96x128xf32>
    %cst_167 = arith.constant dense<0.000000e+00> : vector<8x128xf32>
    %173 = tpu.matmul %170, %172, %cst_167 {dimension_numbers = #tpu.dot_dimension_numbers<[1], [0], [0], [1], [0, 0, 1, 1], [], []>} : vector<8x96xf32>, vector<96x128xf32>, vector<8x128xf32> -> vector<8x128xf32>
    %174 = arith.addf %168, %173 : vector<8x128xf32>
    %c0_168 = arith.constant 0 : index
    %c0_169 = arith.constant 0 : index
    %175 = vector.load %arg3[%c0_168, %c0_169] : memref<1x128xf32, #tpu.memory_space<vmem>>, vector<1x128xf32>
    %176 = vector.broadcast %175 : vector<1x128xf32> to vector<8x128xf32>
    %177 = arith.addf %174, %176 : vector<8x128xf32>
    %cst_170 = arith.constant 0.000000e+00 : f32
    %178 = vector.broadcast %cst_170 : f32 to vector<8x128xf32>
    %179 = arith.maximumf %177, %178 : vector<8x128xf32>
    %c6_171 = arith.constant 6 : index
    %c0_172 = arith.constant 0 : index
    %c0_173 = arith.constant 0 : index
    %180 = vector.load %arg15[%c6_171, %c0_172, %c0_173] : memref<16x8x128xf32, #tpu.memory_space<vmem>>, vector<1x8x128xf32>
    %181 = vector.shape_cast %180 : vector<1x8x128xf32> to vector<8x128xf32>
    %182 = vector.shape_cast %179 : vector<8x128xf32> to vector<1x8x128xf32>
    tpu.vector_store %arg15[%c6_171, %c0_172, %c0_173], %182 {strides = array<i32>} : memref<16x8x128xf32, #tpu.memory_space<vmem>>, vector<1x8x128xf32>,
    %cst_174 = arith.constant 0.000000e+00 : f32
    %183 = vector.broadcast %cst_174 : f32 to vector<8x128xf32>
    %c13_175 = arith.constant 13 : index
    %c0_176 = arith.constant 0 : index
    %c0_177 = arith.constant 0 : index
    %184 = vector.load %arg1[%c13_175, %c0_176, %c0_177] : memref<32x8x96xf32, #tpu.memory_space<vmem>>, vector<1x8x96xf32>
    %185 = vector.shape_cast %184 : vector<1x8x96xf32> to vector<8x96xf32>
    %c0_178 = arith.constant 0 : index
    %c0_179 = arith.constant 0 : index
    %c0_180 = arith.constant 0 : index
    %186 = vector.load %arg2[%c0_178, %c0_179, %c0_180] : memref<3x96x128xf32, #tpu.memory_space<vmem>>, vector<1x96x128xf32>
    %187 = vector.shape_cast %186 : vector<1x96x128xf32> to vector<96x128xf32>
    %cst_181 = arith.constant dense<0.000000e+00> : vector<8x128xf32>
    %188 = tpu.matmul %185, %187, %cst_181 {dimension_numbers = #tpu.dot_dimension_numbers<[1], [0], [0], [1], [0, 0, 1, 1], [], []>} : vector<8x96xf32>, vector<96x128xf32>, vector<8x128xf32> -> vector<8x128xf32>
    %189 = arith.addf %183, %188 : vector<8x128xf32>
    %c14 = arith.constant 14 : index
    %c0_182 = arith.constant 0 : index
    %c0_183 = arith.constant 0 : index
    %190 = vector.load %arg1[%c14, %c0_182, %c0_183] : memref<32x8x96xf32, #tpu.memory_space<vmem>>, vector<1x8x96xf32>
    %191 = vector.shape_cast %190 : vector<1x8x96xf32> to vector<8x96xf32>
    %c1_184 = arith.constant 1 : index
    %c0_185 = arith.constant 0 : index
    %c0_186 = arith.constant 0 : index
    %192 = vector.load %arg2[%c1_184, %c0_185, %c0_186] : memref<3x96x128xf32, #tpu.memory_space<vmem>>, vector<1x96x128xf32>
    %193 = vector.shape_cast %192 : vector<1x96x128xf32> to vector<96x128xf32>
    %cst_187 = arith.constant dense<0.000000e+00> : vector<8x128xf32>
    %194 = tpu.matmul %191, %193, %cst_187 {dimension_numbers = #tpu.dot_dimension_numbers<[1], [0], [0], [1], [0, 0, 1, 1], [], []>} : vector<8x96xf32>, vector<96x128xf32>, vector<8x128xf32> -> vector<8x128xf32>
    %195 = arith.addf %189, %194 : vector<8x128xf32>
    %c15 = arith.constant 15 : index
    %c0_188 = arith.constant 0 : index
    %c0_189 = arith.constant 0 : index
    %196 = vector.load %arg1[%c15, %c0_188, %c0_189] : memref<32x8x96xf32, #tpu.memory_space<vmem>>, vector<1x8x96xf32>
    %197 = vector.shape_cast %196 : vector<1x8x96xf32> to vector<8x96xf32>
    %c2_190 = arith.constant 2 : index
    %c0_191 = arith.constant 0 : index
    %c0_192 = arith.constant 0 : index
    %198 = vector.load %arg2[%c2_190, %c0_191, %c0_192] : memref<3x96x128xf32, #tpu.memory_space<vmem>>, vector<1x96x128xf32>
    %199 = vector.shape_cast %198 : vector<1x96x128xf32> to vector<96x128xf32>
    %cst_193 = arith.constant dense<0.000000e+00> : vector<8x128xf32>
    %200 = tpu.matmul %197, %199, %cst_193 {dimension_numbers = #tpu.dot_dimension_numbers<[1], [0], [0], [1], [0, 0, 1, 1], [], []>} : vector<8x96xf32>, vector<96x128xf32>, vector<8x128xf32> -> vector<8x128xf32>
    %201 = arith.addf %195, %200 : vector<8x128xf32>
    %c0_194 = arith.constant 0 : index
    %c0_195 = arith.constant 0 : index
    %202 = vector.load %arg3[%c0_194, %c0_195] : memref<1x128xf32, #tpu.memory_space<vmem>>, vector<1x128xf32>
    %203 = vector.broadcast %202 : vector<1x128xf32> to vector<8x128xf32>
    %204 = arith.addf %201, %203 : vector<8x128xf32>
    %cst_196 = arith.constant 0.000000e+00 : f32
    %205 = vector.broadcast %cst_196 : f32 to vector<8x128xf32>
    %206 = arith.maximumf %204, %205 : vector<8x128xf32>
    %c7_197 = arith.constant 7 : index
    %c0_198 = arith.constant 0 : index
    %c0_199 = arith.constant 0 : index
    %207 = vector.load %arg15[%c7_197, %c0_198, %c0_199] : memref<16x8x128xf32, #tpu.memory_space<vmem>>, vector<1x8x128xf32>
    %208 = vector.shape_cast %207 : vector<1x8x128xf32> to vector<8x128xf32>
    %209 = vector.shape_cast %206 : vector<8x128xf32> to vector<1x8x128xf32>
    tpu.vector_store %arg15[%c7_197, %c0_198, %c0_199], %209 {strides = array<i32>} : memref<16x8x128xf32, #tpu.memory_space<vmem>>, vector<1x8x128xf32>,
    %cst_200 = arith.constant 0.000000e+00 : f32
    %210 = vector.broadcast %cst_200 : f32 to vector<8x128xf32>
    %c15_201 = arith.constant 15 : index
    %c0_202 = arith.constant 0 : index
    %c0_203 = arith.constant 0 : index
    %211 = vector.load %arg1[%c15_201, %c0_202, %c0_203] : memref<32x8x96xf32, #tpu.memory_space<vmem>>, vector<1x8x96xf32>
    %212 = vector.shape_cast %211 : vector<1x8x96xf32> to vector<8x96xf32>
    %c0_204 = arith.constant 0 : index
    %c0_205 = arith.constant 0 : index
    %c0_206 = arith.constant 0 : index
    %213 = vector.load %arg2[%c0_204, %c0_205, %c0_206] : memref<3x96x128xf32, #tpu.memory_space<vmem>>, vector<1x96x128xf32>
    %214 = vector.shape_cast %213 : vector<1x96x128xf32> to vector<96x128xf32>
    %cst_207 = arith.constant dense<0.000000e+00> : vector<8x128xf32>
    %215 = tpu.matmul %212, %214, %cst_207 {dimension_numbers = #tpu.dot_dimension_numbers<[1], [0], [0], [1], [0, 0, 1, 1], [], []>} : vector<8x96xf32>, vector<96x128xf32>, vector<8x128xf32> -> vector<8x128xf32>
    %216 = arith.addf %210, %215 : vector<8x128xf32>
    %c16 = arith.constant 16 : index
    %c0_208 = arith.constant 0 : index
    %c0_209 = arith.constant 0 : index
    %217 = vector.load %arg1[%c16, %c0_208, %c0_209] : memref<32x8x96xf32, #tpu.memory_space<vmem>>, vector<1x8x96xf32>
    %218 = vector.shape_cast %217 : vector<1x8x96xf32> to vector<8x96xf32>
    %c1_210 = arith.constant 1 : index
    %c0_211 = arith.constant 0 : index
    %c0_212 = arith.constant 0 : index
    %219 = vector.load %arg2[%c1_210, %c0_211, %c0_212] : memref<3x96x128xf32, #tpu.memory_space<vmem>>, vector<1x96x128xf32>
    %220 = vector.shape_cast %219 : vector<1x96x128xf32> to vector<96x128xf32>
    %cst_213 = arith.constant dense<0.000000e+00> : vector<8x128xf32>
    %221 = tpu.matmul %218, %220, %cst_213 {dimension_numbers = #tpu.dot_dimension_numbers<[1], [0], [0], [1], [0, 0, 1, 1], [], []>} : vector<8x96xf32>, vector<96x128xf32>, vector<8x128xf32> -> vector<8x128xf32>
    %222 = arith.addf %216, %221 : vector<8x128xf32>
    %c17 = arith.constant 17 : index
    %c0_214 = arith.constant 0 : index
    %c0_215 = arith.constant 0 : index
    %223 = vector.load %arg1[%c17, %c0_214, %c0_215] : memref<32x8x96xf32, #tpu.memory_space<vmem>>, vector<1x8x96xf32>
    %224 = vector.shape_cast %223 : vector<1x8x96xf32> to vector<8x96xf32>
    %c2_216 = arith.constant 2 : index
    %c0_217 = arith.constant 0 : index
    %c0_218 = arith.constant 0 : index
    %225 = vector.load %arg2[%c2_216, %c0_217, %c0_218] : memref<3x96x128xf32, #tpu.memory_space<vmem>>, vector<1x96x128xf32>
    %226 = vector.shape_cast %225 : vector<1x96x128xf32> to vector<96x128xf32>
    %cst_219 = arith.constant dense<0.000000e+00> : vector<8x128xf32>
    %227 = tpu.matmul %224, %226, %cst_219 {dimension_numbers = #tpu.dot_dimension_numbers<[1], [0], [0], [1], [0, 0, 1, 1], [], []>} : vector<8x96xf32>, vector<96x128xf32>, vector<8x128xf32> -> vector<8x128xf32>
    %228 = arith.addf %222, %227 : vector<8x128xf32>
    %c0_220 = arith.constant 0 : index
    %c0_221 = arith.constant 0 : index
    %229 = vector.load %arg3[%c0_220, %c0_221] : memref<1x128xf32, #tpu.memory_space<vmem>>, vector<1x128xf32>
    %230 = vector.broadcast %229 : vector<1x128xf32> to vector<8x128xf32>
    %231 = arith.addf %228, %230 : vector<8x128xf32>
    %cst_222 = arith.constant 0.000000e+00 : f32
    %232 = vector.broadcast %cst_222 : f32 to vector<8x128xf32>
    %233 = arith.maximumf %231, %232 : vector<8x128xf32>
    %c8_223 = arith.constant 8 : index
    %c0_224 = arith.constant 0 : index
    %c0_225 = arith.constant 0 : index
    %234 = vector.load %arg15[%c8_223, %c0_224, %c0_225] : memref<16x8x128xf32, #tpu.memory_space<vmem>>, vector<1x8x128xf32>
    %235 = vector.shape_cast %234 : vector<1x8x128xf32> to vector<8x128xf32>
    %236 = vector.shape_cast %233 : vector<8x128xf32> to vector<1x8x128xf32>
    tpu.vector_store %arg15[%c8_223, %c0_224, %c0_225], %236 {strides = array<i32>} : memref<16x8x128xf32, #tpu.memory_space<vmem>>, vector<1x8x128xf32>,
    %cst_226 = arith.constant 0.000000e+00 : f32
    %237 = vector.broadcast %cst_226 : f32 to vector<8x128xf32>
    %c17_227 = arith.constant 17 : index
    %c0_228 = arith.constant 0 : index
    %c0_229 = arith.constant 0 : index
    %238 = vector.load %arg1[%c17_227, %c0_228, %c0_229] : memref<32x8x96xf32, #tpu.memory_space<vmem>>, vector<1x8x96xf32>
    %239 = vector.shape_cast %238 : vector<1x8x96xf32> to vector<8x96xf32>
    %c0_230 = arith.constant 0 : index
    %c0_231 = arith.constant 0 : index
    %c0_232 = arith.constant 0 : index
    %240 = vector.load %arg2[%c0_230, %c0_231, %c0_232] : memref<3x96x128xf32, #tpu.memory_space<vmem>>, vector<1x96x128xf32>
    %241 = vector.shape_cast %240 : vector<1x96x128xf32> to vector<96x128xf32>
    %cst_233 = arith.constant dense<0.000000e+00> : vector<8x128xf32>
    %242 = tpu.matmul %239, %241, %cst_233 {dimension_numbers = #tpu.dot_dimension_numbers<[1], [0], [0], [1], [0, 0, 1, 1], [], []>} : vector<8x96xf32>, vector<96x128xf32>, vector<8x128xf32> -> vector<8x128xf32>
    %243 = arith.addf %237, %242 : vector<8x128xf32>
    %c18 = arith.constant 18 : index
    %c0_234 = arith.constant 0 : index
    %c0_235 = arith.constant 0 : index
    %244 = vector.load %arg1[%c18, %c0_234, %c0_235] : memref<32x8x96xf32, #tpu.memory_space<vmem>>, vector<1x8x96xf32>
    %245 = vector.shape_cast %244 : vector<1x8x96xf32> to vector<8x96xf32>
    %c1_236 = arith.constant 1 : index
    %c0_237 = arith.constant 0 : index
    %c0_238 = arith.constant 0 : index
    %246 = vector.load %arg2[%c1_236, %c0_237, %c0_238] : memref<3x96x128xf32, #tpu.memory_space<vmem>>, vector<1x96x128xf32>
    %247 = vector.shape_cast %246 : vector<1x96x128xf32> to vector<96x128xf32>
    %cst_239 = arith.constant dense<0.000000e+00> : vector<8x128xf32>
    %248 = tpu.matmul %245, %247, %cst_239 {dimension_numbers = #tpu.dot_dimension_numbers<[1], [0], [0], [1], [0, 0, 1, 1], [], []>} : vector<8x96xf32>, vector<96x128xf32>, vector<8x128xf32> -> vector<8x128xf32>
    %249 = arith.addf %243, %248 : vector<8x128xf32>
    %c19 = arith.constant 19 : index
    %c0_240 = arith.constant 0 : index
    %c0_241 = arith.constant 0 : index
    %250 = vector.load %arg1[%c19, %c0_240, %c0_241] : memref<32x8x96xf32, #tpu.memory_space<vmem>>, vector<1x8x96xf32>
    %251 = vector.shape_cast %250 : vector<1x8x96xf32> to vector<8x96xf32>
    %c2_242 = arith.constant 2 : index
    %c0_243 = arith.constant 0 : index
    %c0_244 = arith.constant 0 : index
    %252 = vector.load %arg2[%c2_242, %c0_243, %c0_244] : memref<3x96x128xf32, #tpu.memory_space<vmem>>, vector<1x96x128xf32>
    %253 = vector.shape_cast %252 : vector<1x96x128xf32> to vector<96x128xf32>
    %cst_245 = arith.constant dense<0.000000e+00> : vector<8x128xf32>
    %254 = tpu.matmul %251, %253, %cst_245 {dimension_numbers = #tpu.dot_dimension_numbers<[1], [0], [0], [1], [0, 0, 1, 1], [], []>} : vector<8x96xf32>, vector<96x128xf32>, vector<8x128xf32> -> vector<8x128xf32>
    %255 = arith.addf %249, %254 : vector<8x128xf32>
    %c0_246 = arith.constant 0 : index
    %c0_247 = arith.constant 0 : index
    %256 = vector.load %arg3[%c0_246, %c0_247] : memref<1x128xf32, #tpu.memory_space<vmem>>, vector<1x128xf32>
    %257 = vector.broadcast %256 : vector<1x128xf32> to vector<8x128xf32>
    %258 = arith.addf %255, %257 : vector<8x128xf32>
    %cst_248 = arith.constant 0.000000e+00 : f32
    %259 = vector.broadcast %cst_248 : f32 to vector<8x128xf32>
    %260 = arith.maximumf %258, %259 : vector<8x128xf32>
    %c9_249 = arith.constant 9 : index
    %c0_250 = arith.constant 0 : index
    %c0_251 = arith.constant 0 : index
    %261 = vector.load %arg15[%c9_249, %c0_250, %c0_251] : memref<16x8x128xf32, #tpu.memory_space<vmem>>, vector<1x8x128xf32>
    %262 = vector.shape_cast %261 : vector<1x8x128xf32> to vector<8x128xf32>
    %263 = vector.shape_cast %260 : vector<8x128xf32> to vector<1x8x128xf32>
    tpu.vector_store %arg15[%c9_249, %c0_250, %c0_251], %263 {strides = array<i32>} : memref<16x8x128xf32, #tpu.memory_space<vmem>>, vector<1x8x128xf32>,
    %cst_252 = arith.constant 0.000000e+00 : f32
    %264 = vector.broadcast %cst_252 : f32 to vector<8x128xf32>
    %c19_253 = arith.constant 19 : index
    %c0_254 = arith.constant 0 : index
    %c0_255 = arith.constant 0 : index
    %265 = vector.load %arg1[%c19_253, %c0_254, %c0_255] : memref<32x8x96xf32, #tpu.memory_space<vmem>>, vector<1x8x96xf32>
    %266 = vector.shape_cast %265 : vector<1x8x96xf32> to vector<8x96xf32>
    %c0_256 = arith.constant 0 : index
    %c0_257 = arith.constant 0 : index
    %c0_258 = arith.constant 0 : index
    %267 = vector.load %arg2[%c0_256, %c0_257, %c0_258] : memref<3x96x128xf32, #tpu.memory_space<vmem>>, vector<1x96x128xf32>
    %268 = vector.shape_cast %267 : vector<1x96x128xf32> to vector<96x128xf32>
    %cst_259 = arith.constant dense<0.000000e+00> : vector<8x128xf32>
    %269 = tpu.matmul %266, %268, %cst_259 {dimension_numbers = #tpu.dot_dimension_numbers<[1], [0], [0], [1], [0, 0, 1, 1], [], []>} : vector<8x96xf32>, vector<96x128xf32>, vector<8x128xf32> -> vector<8x128xf32>
    %270 = arith.addf %264, %269 : vector<8x128xf32>
    %c20 = arith.constant 20 : index
    %c0_260 = arith.constant 0 : index
    %c0_261 = arith.constant 0 : index
    %271 = vector.load %arg1[%c20, %c0_260, %c0_261] : memref<32x8x96xf32, #tpu.memory_space<vmem>>, vector<1x8x96xf32>
    %272 = vector.shape_cast %271 : vector<1x8x96xf32> to vector<8x96xf32>
    %c1_262 = arith.constant 1 : index
    %c0_263 = arith.constant 0 : index
    %c0_264 = arith.constant 0 : index
    %273 = vector.load %arg2[%c1_262, %c0_263, %c0_264] : memref<3x96x128xf32, #tpu.memory_space<vmem>>, vector<1x96x128xf32>
    %274 = vector.shape_cast %273 : vector<1x96x128xf32> to vector<96x128xf32>
    %cst_265 = arith.constant dense<0.000000e+00> : vector<8x128xf32>
    %275 = tpu.matmul %272, %274, %cst_265 {dimension_numbers = #tpu.dot_dimension_numbers<[1], [0], [0], [1], [0, 0, 1, 1], [], []>} : vector<8x96xf32>, vector<96x128xf32>, vector<8x128xf32> -> vector<8x128xf32>
    %276 = arith.addf %270, %275 : vector<8x128xf32>
    %c21 = arith.constant 21 : index
    %c0_266 = arith.constant 0 : index
    %c0_267 = arith.constant 0 : index
    %277 = vector.load %arg1[%c21, %c0_266, %c0_267] : memref<32x8x96xf32, #tpu.memory_space<vmem>>, vector<1x8x96xf32>
    %278 = vector.shape_cast %277 : vector<1x8x96xf32> to vector<8x96xf32>
    %c2_268 = arith.constant 2 : index
    %c0_269 = arith.constant 0 : index
    %c0_270 = arith.constant 0 : index
    %279 = vector.load %arg2[%c2_268, %c0_269, %c0_270] : memref<3x96x128xf32, #tpu.memory_space<vmem>>, vector<1x96x128xf32>
    %280 = vector.shape_cast %279 : vector<1x96x128xf32> to vector<96x128xf32>
    %cst_271 = arith.constant dense<0.000000e+00> : vector<8x128xf32>
    %281 = tpu.matmul %278, %280, %cst_271 {dimension_numbers = #tpu.dot_dimension_numbers<[1], [0], [0], [1], [0, 0, 1, 1], [], []>} : vector<8x96xf32>, vector<96x128xf32>, vector<8x128xf32> -> vector<8x128xf32>
    %282 = arith.addf %276, %281 : vector<8x128xf32>
    %c0_272 = arith.constant 0 : index
    %c0_273 = arith.constant 0 : index
    %283 = vector.load %arg3[%c0_272, %c0_273] : memref<1x128xf32, #tpu.memory_space<vmem>>, vector<1x128xf32>
    %284 = vector.broadcast %283 : vector<1x128xf32> to vector<8x128xf32>
    %285 = arith.addf %282, %284 : vector<8x128xf32>
    %cst_274 = arith.constant 0.000000e+00 : f32
    %286 = vector.broadcast %cst_274 : f32 to vector<8x128xf32>
    %287 = arith.maximumf %285, %286 : vector<8x128xf32>
    %c10_275 = arith.constant 10 : index
    %c0_276 = arith.constant 0 : index
    %c0_277 = arith.constant 0 : index
    %288 = vector.load %arg15[%c10_275, %c0_276, %c0_277] : memref<16x8x128xf32, #tpu.memory_space<vmem>>, vector<1x8x128xf32>
    %289 = vector.shape_cast %288 : vector<1x8x128xf32> to vector<8x128xf32>
    %290 = vector.shape_cast %287 : vector<8x128xf32> to vector<1x8x128xf32>
    tpu.vector_store %arg15[%c10_275, %c0_276, %c0_277], %290 {strides = array<i32>} : memref<16x8x128xf32, #tpu.memory_space<vmem>>, vector<1x8x128xf32>,
    %cst_278 = arith.constant 0.000000e+00 : f32
    %291 = vector.broadcast %cst_278 : f32 to vector<8x128xf32>
    %c21_279 = arith.constant 21 : index
    %c0_280 = arith.constant 0 : index
    %c0_281 = arith.constant 0 : index
    %292 = vector.load %arg1[%c21_279, %c0_280, %c0_281] : memref<32x8x96xf32, #tpu.memory_space<vmem>>, vector<1x8x96xf32>
    %293 = vector.shape_cast %292 : vector<1x8x96xf32> to vector<8x96xf32>
    %c0_282 = arith.constant 0 : index
    %c0_283 = arith.constant 0 : index
    %c0_284 = arith.constant 0 : index
    %294 = vector.load %arg2[%c0_282, %c0_283, %c0_284] : memref<3x96x128xf32, #tpu.memory_space<vmem>>, vector<1x96x128xf32>
    %295 = vector.shape_cast %294 : vector<1x96x128xf32> to vector<96x128xf32>
    %cst_285 = arith.constant dense<0.000000e+00> : vector<8x128xf32>
    %296 = tpu.matmul %293, %295, %cst_285 {dimension_numbers = #tpu.dot_dimension_numbers<[1], [0], [0], [1], [0, 0, 1, 1], [], []>} : vector<8x96xf32>, vector<96x128xf32>, vector<8x128xf32> -> vector<8x128xf32>
    %297 = arith.addf %291, %296 : vector<8x128xf32>
    %c22 = arith.constant 22 : index
    %c0_286 = arith.constant 0 : index
    %c0_287 = arith.constant 0 : index
    %298 = vector.load %arg1[%c22, %c0_286, %c0_287] : memref<32x8x96xf32, #tpu.memory_space<vmem>>, vector<1x8x96xf32>
    %299 = vector.shape_cast %298 : vector<1x8x96xf32> to vector<8x96xf32>
    %c1_288 = arith.constant 1 : index
    %c0_289 = arith.constant 0 : index
    %c0_290 = arith.constant 0 : index
    %300 = vector.load %arg2[%c1_288, %c0_289, %c0_290] : memref<3x96x128xf32, #tpu.memory_space<vmem>>, vector<1x96x128xf32>
    %301 = vector.shape_cast %300 : vector<1x96x128xf32> to vector<96x128xf32>
    %cst_291 = arith.constant dense<0.000000e+00> : vector<8x128xf32>
    %302 = tpu.matmul %299, %301, %cst_291 {dimension_numbers = #tpu.dot_dimension_numbers<[1], [0], [0], [1], [0, 0, 1, 1], [], []>} : vector<8x96xf32>, vector<96x128xf32>, vector<8x128xf32> -> vector<8x128xf32>
    %303 = arith.addf %297, %302 : vector<8x128xf32>
    %c23 = arith.constant 23 : index
    %c0_292 = arith.constant 0 : index
    %c0_293 = arith.constant 0 : index
    %304 = vector.load %arg1[%c23, %c0_292, %c0_293] : memref<32x8x96xf32, #tpu.memory_space<vmem>>, vector<1x8x96xf32>
    %305 = vector.shape_cast %304 : vector<1x8x96xf32> to vector<8x96xf32>
    %c2_294 = arith.constant 2 : index
    %c0_295 = arith.constant 0 : index
    %c0_296 = arith.constant 0 : index
    %306 = vector.load %arg2[%c2_294, %c0_295, %c0_296] : memref<3x96x128xf32, #tpu.memory_space<vmem>>, vector<1x96x128xf32>
    %307 = vector.shape_cast %306 : vector<1x96x128xf32> to vector<96x128xf32>
    %cst_297 = arith.constant dense<0.000000e+00> : vector<8x128xf32>
    %308 = tpu.matmul %305, %307, %cst_297 {dimension_numbers = #tpu.dot_dimension_numbers<[1], [0], [0], [1], [0, 0, 1, 1], [], []>} : vector<8x96xf32>, vector<96x128xf32>, vector<8x128xf32> -> vector<8x128xf32>
    %309 = arith.addf %303, %308 : vector<8x128xf32>
    %c0_298 = arith.constant 0 : index
    %c0_299 = arith.constant 0 : index
    %310 = vector.load %arg3[%c0_298, %c0_299] : memref<1x128xf32, #tpu.memory_space<vmem>>, vector<1x128xf32>
    %311 = vector.broadcast %310 : vector<1x128xf32> to vector<8x128xf32>
    %312 = arith.addf %309, %311 : vector<8x128xf32>
    %cst_300 = arith.constant 0.000000e+00 : f32
    %313 = vector.broadcast %cst_300 : f32 to vector<8x128xf32>
    %314 = arith.maximumf %312, %313 : vector<8x128xf32>
    %c11_301 = arith.constant 11 : index
    %c0_302 = arith.constant 0 : index
    %c0_303 = arith.constant 0 : index
    %315 = vector.load %arg15[%c11_301, %c0_302, %c0_303] : memref<16x8x128xf32, #tpu.memory_space<vmem>>, vector<1x8x128xf32>
    %316 = vector.shape_cast %315 : vector<1x8x128xf32> to vector<8x128xf32>
    %317 = vector.shape_cast %314 : vector<8x128xf32> to vector<1x8x128xf32>
    tpu.vector_store %arg15[%c11_301, %c0_302, %c0_303], %317 {strides = array<i32>} : memref<16x8x128xf32, #tpu.memory_space<vmem>>, vector<1x8x128xf32>,
    %cst_304 = arith.constant 0.000000e+00 : f32
    %318 = vector.broadcast %cst_304 : f32 to vector<8x128xf32>
    %c23_305 = arith.constant 23 : index
    %c0_306 = arith.constant 0 : index
    %c0_307 = arith.constant 0 : index
    %319 = vector.load %arg1[%c23_305, %c0_306, %c0_307] : memref<32x8x96xf32, #tpu.memory_space<vmem>>, vector<1x8x96xf32>
    %320 = vector.shape_cast %319 : vector<1x8x96xf32> to vector<8x96xf32>
    %c0_308 = arith.constant 0 : index
    %c0_309 = arith.constant 0 : index
    %c0_310 = arith.constant 0 : index
    %321 = vector.load %arg2[%c0_308, %c0_309, %c0_310] : memref<3x96x128xf32, #tpu.memory_space<vmem>>, vector<1x96x128xf32>
    %322 = vector.shape_cast %321 : vector<1x96x128xf32> to vector<96x128xf32>
    %cst_311 = arith.constant dense<0.000000e+00> : vector<8x128xf32>
    %323 = tpu.matmul %320, %322, %cst_311 {dimension_numbers = #tpu.dot_dimension_numbers<[1], [0], [0], [1], [0, 0, 1, 1], [], []>} : vector<8x96xf32>, vector<96x128xf32>, vector<8x128xf32> -> vector<8x128xf32>
    %324 = arith.addf %318, %323 : vector<8x128xf32>
    %c24 = arith.constant 24 : index
    %c0_312 = arith.constant 0 : index
    %c0_313 = arith.constant 0 : index
    %325 = vector.load %arg1[%c24, %c0_312, %c0_313] : memref<32x8x96xf32, #tpu.memory_space<vmem>>, vector<1x8x96xf32>
    %326 = vector.shape_cast %325 : vector<1x8x96xf32> to vector<8x96xf32>
    %c1_314 = arith.constant 1 : index
    %c0_315 = arith.constant 0 : index
    %c0_316 = arith.constant 0 : index
    %327 = vector.load %arg2[%c1_314, %c0_315, %c0_316] : memref<3x96x128xf32, #tpu.memory_space<vmem>>, vector<1x96x128xf32>
    %328 = vector.shape_cast %327 : vector<1x96x128xf32> to vector<96x128xf32>
    %cst_317 = arith.constant dense<0.000000e+00> : vector<8x128xf32>
    %329 = tpu.matmul %326, %328, %cst_317 {dimension_numbers = #tpu.dot_dimension_numbers<[1], [0], [0], [1], [0, 0, 1, 1], [], []>} : vector<8x96xf32>, vector<96x128xf32>, vector<8x128xf32> -> vector<8x128xf32>
    %330 = arith.addf %324, %329 : vector<8x128xf32>
    %c25 = arith.constant 25 : index
    %c0_318 = arith.constant 0 : index
    %c0_319 = arith.constant 0 : index
    %331 = vector.load %arg1[%c25, %c0_318, %c0_319] : memref<32x8x96xf32, #tpu.memory_space<vmem>>, vector<1x8x96xf32>
    %332 = vector.shape_cast %331 : vector<1x8x96xf32> to vector<8x96xf32>
    %c2_320 = arith.constant 2 : index
    %c0_321 = arith.constant 0 : index
    %c0_322 = arith.constant 0 : index
    %333 = vector.load %arg2[%c2_320, %c0_321, %c0_322] : memref<3x96x128xf32, #tpu.memory_space<vmem>>, vector<1x96x128xf32>
    %334 = vector.shape_cast %333 : vector<1x96x128xf32> to vector<96x128xf32>
    %cst_323 = arith.constant dense<0.000000e+00> : vector<8x128xf32>
    %335 = tpu.matmul %332, %334, %cst_323 {dimension_numbers = #tpu.dot_dimension_numbers<[1], [0], [0], [1], [0, 0, 1, 1], [], []>} : vector<8x96xf32>, vector<96x128xf32>, vector<8x128xf32> -> vector<8x128xf32>
    %336 = arith.addf %330, %335 : vector<8x128xf32>
    %c0_324 = arith.constant 0 : index
    %c0_325 = arith.constant 0 : index
    %337 = vector.load %arg3[%c0_324, %c0_325] : memref<1x128xf32, #tpu.memory_space<vmem>>, vector<1x128xf32>
    %338 = vector.broadcast %337 : vector<1x128xf32> to vector<8x128xf32>
    %339 = arith.addf %336, %338 : vector<8x128xf32>
    %cst_326 = arith.constant 0.000000e+00 : f32
    %340 = vector.broadcast %cst_326 : f32 to vector<8x128xf32>
    %341 = arith.maximumf %339, %340 : vector<8x128xf32>
    %c12_327 = arith.constant 12 : index
    %c0_328 = arith.constant 0 : index
    %c0_329 = arith.constant 0 : index
    %342 = vector.load %arg15[%c12_327, %c0_328, %c0_329] : memref<16x8x128xf32, #tpu.memory_space<vmem>>, vector<1x8x128xf32>
    %343 = vector.shape_cast %342 : vector<1x8x128xf32> to vector<8x128xf32>
    %344 = vector.shape_cast %341 : vector<8x128xf32> to vector<1x8x128xf32>
    tpu.vector_store %arg15[%c12_327, %c0_328, %c0_329], %344 {strides = array<i32>} : memref<16x8x128xf32, #tpu.memory_space<vmem>>, vector<1x8x128xf32>,
    %cst_330 = arith.constant 0.000000e+00 : f32
    %345 = vector.broadcast %cst_330 : f32 to vector<8x128xf32>
    %c25_331 = arith.constant 25 : index
    %c0_332 = arith.constant 0 : index
    %c0_333 = arith.constant 0 : index
    %346 = vector.load %arg1[%c25_331, %c0_332, %c0_333] : memref<32x8x96xf32, #tpu.memory_space<vmem>>, vector<1x8x96xf32>
    %347 = vector.shape_cast %346 : vector<1x8x96xf32> to vector<8x96xf32>
    %c0_334 = arith.constant 0 : index
    %c0_335 = arith.constant 0 : index
    %c0_336 = arith.constant 0 : index
    %348 = vector.load %arg2[%c0_334, %c0_335, %c0_336] : memref<3x96x128xf32, #tpu.memory_space<vmem>>, vector<1x96x128xf32>
    %349 = vector.shape_cast %348 : vector<1x96x128xf32> to vector<96x128xf32>
    %cst_337 = arith.constant dense<0.000000e+00> : vector<8x128xf32>
    %350 = tpu.matmul %347, %349, %cst_337 {dimension_numbers = #tpu.dot_dimension_numbers<[1], [0], [0], [1], [0, 0, 1, 1], [], []>} : vector<8x96xf32>, vector<96x128xf32>, vector<8x128xf32> -> vector<8x128xf32>
    %351 = arith.addf %345, %350 : vector<8x128xf32>
    %c26 = arith.constant 26 : index
    %c0_338 = arith.constant 0 : index
    %c0_339 = arith.constant 0 : index
    %352 = vector.load %arg1[%c26, %c0_338, %c0_339] : memref<32x8x96xf32, #tpu.memory_space<vmem>>, vector<1x8x96xf32>
    %353 = vector.shape_cast %352 : vector<1x8x96xf32> to vector<8x96xf32>
    %c1_340 = arith.constant 1 : index
    %c0_341 = arith.constant 0 : index
    %c0_342 = arith.constant 0 : index
    %354 = vector.load %arg2[%c1_340, %c0_341, %c0_342] : memref<3x96x128xf32, #tpu.memory_space<vmem>>, vector<1x96x128xf32>
    %355 = vector.shape_cast %354 : vector<1x96x128xf32> to vector<96x128xf32>
    %cst_343 = arith.constant dense<0.000000e+00> : vector<8x128xf32>
    %356 = tpu.matmul %353, %355, %cst_343 {dimension_numbers = #tpu.dot_dimension_numbers<[1], [0], [0], [1], [0, 0, 1, 1], [], []>} : vector<8x96xf32>, vector<96x128xf32>, vector<8x128xf32> -> vector<8x128xf32>
    %357 = arith.addf %351, %356 : vector<8x128xf32>
    %c27 = arith.constant 27 : index
    %c0_344 = arith.constant 0 : index
    %c0_345 = arith.constant 0 : index
    %358 = vector.load %arg1[%c27, %c0_344, %c0_345] : memref<32x8x96xf32, #tpu.memory_space<vmem>>, vector<1x8x96xf32>
    %359 = vector.shape_cast %358 : vector<1x8x96xf32> to vector<8x96xf32>
    %c2_346 = arith.constant 2 : index
    %c0_347 = arith.constant 0 : index
    %c0_348 = arith.constant 0 : index
    %360 = vector.load %arg2[%c2_346, %c0_347, %c0_348] : memref<3x96x128xf32, #tpu.memory_space<vmem>>, vector<1x96x128xf32>
    %361 = vector.shape_cast %360 : vector<1x96x128xf32> to vector<96x128xf32>
    %cst_349 = arith.constant dense<0.000000e+00> : vector<8x128xf32>
    %362 = tpu.matmul %359, %361, %cst_349 {dimension_numbers = #tpu.dot_dimension_numbers<[1], [0], [0], [1], [0, 0, 1, 1], [], []>} : vector<8x96xf32>, vector<96x128xf32>, vector<8x128xf32> -> vector<8x128xf32>
    %363 = arith.addf %357, %362 : vector<8x128xf32>
    %c0_350 = arith.constant 0 : index
    %c0_351 = arith.constant 0 : index
    %364 = vector.load %arg3[%c0_350, %c0_351] : memref<1x128xf32, #tpu.memory_space<vmem>>, vector<1x128xf32>
    %365 = vector.broadcast %364 : vector<1x128xf32> to vector<8x128xf32>
    %366 = arith.addf %363, %365 : vector<8x128xf32>
    %cst_352 = arith.constant 0.000000e+00 : f32
    %367 = vector.broadcast %cst_352 : f32 to vector<8x128xf32>
    %368 = arith.maximumf %366, %367 : vector<8x128xf32>
    %c13_353 = arith.constant 13 : index
    %c0_354 = arith.constant 0 : index
    %c0_355 = arith.constant 0 : index
    %369 = vector.load %arg15[%c13_353, %c0_354, %c0_355] : memref<16x8x128xf32, #tpu.memory_space<vmem>>, vector<1x8x128xf32>
    %370 = vector.shape_cast %369 : vector<1x8x128xf32> to vector<8x128xf32>
    %371 = vector.shape_cast %368 : vector<8x128xf32> to vector<1x8x128xf32>
    tpu.vector_store %arg15[%c13_353, %c0_354, %c0_355], %371 {strides = array<i32>} : memref<16x8x128xf32, #tpu.memory_space<vmem>>, vector<1x8x128xf32>,
    %cst_356 = arith.constant 0.000000e+00 : f32
    %372 = vector.broadcast %cst_356 : f32 to vector<8x128xf32>
    %c27_357 = arith.constant 27 : index
    %c0_358 = arith.constant 0 : index
    %c0_359 = arith.constant 0 : index
    %373 = vector.load %arg1[%c27_357, %c0_358, %c0_359] : memref<32x8x96xf32, #tpu.memory_space<vmem>>, vector<1x8x96xf32>
    %374 = vector.shape_cast %373 : vector<1x8x96xf32> to vector<8x96xf32>
    %c0_360 = arith.constant 0 : index
    %c0_361 = arith.constant 0 : index
    %c0_362 = arith.constant 0 : index
    %375 = vector.load %arg2[%c0_360, %c0_361, %c0_362] : memref<3x96x128xf32, #tpu.memory_space<vmem>>, vector<1x96x128xf32>
    %376 = vector.shape_cast %375 : vector<1x96x128xf32> to vector<96x128xf32>
    %cst_363 = arith.constant dense<0.000000e+00> : vector<8x128xf32>
    %377 = tpu.matmul %374, %376, %cst_363 {dimension_numbers = #tpu.dot_dimension_numbers<[1], [0], [0], [1], [0, 0, 1, 1], [], []>} : vector<8x96xf32>, vector<96x128xf32>, vector<8x128xf32> -> vector<8x128xf32>
    %378 = arith.addf %372, %377 : vector<8x128xf32>
    %c28 = arith.constant 28 : index
    %c0_364 = arith.constant 0 : index
    %c0_365 = arith.constant 0 : index
    %379 = vector.load %arg1[%c28, %c0_364, %c0_365] : memref<32x8x96xf32, #tpu.memory_space<vmem>>, vector<1x8x96xf32>
    %380 = vector.shape_cast %379 : vector<1x8x96xf32> to vector<8x96xf32>
    %c1_366 = arith.constant 1 : index
    %c0_367 = arith.constant 0 : index
    %c0_368 = arith.constant 0 : index
    %381 = vector.load %arg2[%c1_366, %c0_367, %c0_368] : memref<3x96x128xf32, #tpu.memory_space<vmem>>, vector<1x96x128xf32>
    %382 = vector.shape_cast %381 : vector<1x96x128xf32> to vector<96x128xf32>
    %cst_369 = arith.constant dense<0.000000e+00> : vector<8x128xf32>
    %383 = tpu.matmul %380, %382, %cst_369 {dimension_numbers = #tpu.dot_dimension_numbers<[1], [0], [0], [1], [0, 0, 1, 1], [], []>} : vector<8x96xf32>, vector<96x128xf32>, vector<8x128xf32> -> vector<8x128xf32>
    %384 = arith.addf %378, %383 : vector<8x128xf32>
    %c29 = arith.constant 29 : index
    %c0_370 = arith.constant 0 : index
    %c0_371 = arith.constant 0 : index
    %385 = vector.load %arg1[%c29, %c0_370, %c0_371] : memref<32x8x96xf32, #tpu.memory_space<vmem>>, vector<1x8x96xf32>
    %386 = vector.shape_cast %385 : vector<1x8x96xf32> to vector<8x96xf32>
    %c2_372 = arith.constant 2 : index
    %c0_373 = arith.constant 0 : index
    %c0_374 = arith.constant 0 : index
    %387 = vector.load %arg2[%c2_372, %c0_373, %c0_374] : memref<3x96x128xf32, #tpu.memory_space<vmem>>, vector<1x96x128xf32>
    %388 = vector.shape_cast %387 : vector<1x96x128xf32> to vector<96x128xf32>
    %cst_375 = arith.constant dense<0.000000e+00> : vector<8x128xf32>
    %389 = tpu.matmul %386, %388, %cst_375 {dimension_numbers = #tpu.dot_dimension_numbers<[1], [0], [0], [1], [0, 0, 1, 1], [], []>} : vector<8x96xf32>, vector<96x128xf32>, vector<8x128xf32> -> vector<8x128xf32>
    %390 = arith.addf %384, %389 : vector<8x128xf32>
    %c0_376 = arith.constant 0 : index
    %c0_377 = arith.constant 0 : index
    %391 = vector.load %arg3[%c0_376, %c0_377] : memref<1x128xf32, #tpu.memory_space<vmem>>, vector<1x128xf32>
    %392 = vector.broadcast %391 : vector<1x128xf32> to vector<8x128xf32>
    %393 = arith.addf %390, %392 : vector<8x128xf32>
    %cst_378 = arith.constant 0.000000e+00 : f32
    %394 = vector.broadcast %cst_378 : f32 to vector<8x128xf32>
    %395 = arith.maximumf %393, %394 : vector<8x128xf32>
    %c14_379 = arith.constant 14 : index
    %c0_380 = arith.constant 0 : index
    %c0_381 = arith.constant 0 : index
    %396 = vector.load %arg15[%c14_379, %c0_380, %c0_381] : memref<16x8x128xf32, #tpu.memory_space<vmem>>, vector<1x8x128xf32>
    %397 = vector.shape_cast %396 : vector<1x8x128xf32> to vector<8x128xf32>
    %398 = vector.shape_cast %395 : vector<8x128xf32> to vector<1x8x128xf32>
    tpu.vector_store %arg15[%c14_379, %c0_380, %c0_381], %398 {strides = array<i32>} : memref<16x8x128xf32, #tpu.memory_space<vmem>>, vector<1x8x128xf32>,
    %cst_382 = arith.constant 0.000000e+00 : f32
    %399 = vector.broadcast %cst_382 : f32 to vector<8x128xf32>
    %c29_383 = arith.constant 29 : index
    %c0_384 = arith.constant 0 : index
    %c0_385 = arith.constant 0 : index
    %400 = vector.load %arg1[%c29_383, %c0_384, %c0_385] : memref<32x8x96xf32, #tpu.memory_space<vmem>>, vector<1x8x96xf32>
    %401 = vector.shape_cast %400 : vector<1x8x96xf32> to vector<8x96xf32>
    %c0_386 = arith.constant 0 : index
    %c0_387 = arith.constant 0 : index
    %c0_388 = arith.constant 0 : index
    %402 = vector.load %arg2[%c0_386, %c0_387, %c0_388] : memref<3x96x128xf32, #tpu.memory_space<vmem>>, vector<1x96x128xf32>
    %403 = vector.shape_cast %402 : vector<1x96x128xf32> to vector<96x128xf32>
    %cst_389 = arith.constant dense<0.000000e+00> : vector<8x128xf32>
    %404 = tpu.matmul %401, %403, %cst_389 {dimension_numbers = #tpu.dot_dimension_numbers<[1], [0], [0], [1], [0, 0, 1, 1], [], []>} : vector<8x96xf32>, vector<96x128xf32>, vector<8x128xf32> -> vector<8x128xf32>
    %405 = arith.addf %399, %404 : vector<8x128xf32>
    %c30 = arith.constant 30 : index
    %c0_390 = arith.constant 0 : index
    %c0_391 = arith.constant 0 : index
    %406 = vector.load %arg1[%c30, %c0_390, %c0_391] : memref<32x8x96xf32, #tpu.memory_space<vmem>>, vector<1x8x96xf32>
    %407 = vector.shape_cast %406 : vector<1x8x96xf32> to vector<8x96xf32>
    %c1_392 = arith.constant 1 : index
    %c0_393 = arith.constant 0 : index
    %c0_394 = arith.constant 0 : index
    %408 = vector.load %arg2[%c1_392, %c0_393, %c0_394] : memref<3x96x128xf32, #tpu.memory_space<vmem>>, vector<1x96x128xf32>
    %409 = vector.shape_cast %408 : vector<1x96x128xf32> to vector<96x128xf32>
    %cst_395 = arith.constant dense<0.000000e+00> : vector<8x128xf32>
    %410 = tpu.matmul %407, %409, %cst_395 {dimension_numbers = #tpu.dot_dimension_numbers<[1], [0], [0], [1], [0, 0, 1, 1], [], []>} : vector<8x96xf32>, vector<96x128xf32>, vector<8x128xf32> -> vector<8x128xf32>
    %411 = arith.addf %405, %410 : vector<8x128xf32>
    %c31 = arith.constant 31 : index
    %c0_396 = arith.constant 0 : index
    %c0_397 = arith.constant 0 : index
    %412 = vector.load %arg1[%c31, %c0_396, %c0_397] : memref<32x8x96xf32, #tpu.memory_space<vmem>>, vector<1x8x96xf32>
    %413 = vector.shape_cast %412 : vector<1x8x96xf32> to vector<8x96xf32>
    %c2_398 = arith.constant 2 : index
    %c0_399 = arith.constant 0 : index
    %c0_400 = arith.constant 0 : index
    %414 = vector.load %arg2[%c2_398, %c0_399, %c0_400] : memref<3x96x128xf32, #tpu.memory_space<vmem>>, vector<1x96x128xf32>
    %415 = vector.shape_cast %414 : vector<1x96x128xf32> to vector<96x128xf32>
    %cst_401 = arith.constant dense<0.000000e+00> : vector<8x128xf32>
    %416 = tpu.matmul %413, %415, %cst_401 {dimension_numbers = #tpu.dot_dimension_numbers<[1], [0], [0], [1], [0, 0, 1, 1], [], []>} : vector<8x96xf32>, vector<96x128xf32>, vector<8x128xf32> -> vector<8x128xf32>
    %417 = arith.addf %411, %416 : vector<8x128xf32>
    %c0_402 = arith.constant 0 : index
    %c0_403 = arith.constant 0 : index
    %418 = vector.load %arg3[%c0_402, %c0_403] : memref<1x128xf32, #tpu.memory_space<vmem>>, vector<1x128xf32>
    %419 = vector.broadcast %418 : vector<1x128xf32> to vector<8x128xf32>
    %420 = arith.addf %417, %419 : vector<8x128xf32>
    %cst_404 = arith.constant 0.000000e+00 : f32
    %421 = vector.broadcast %cst_404 : f32 to vector<8x128xf32>
    %422 = arith.maximumf %420, %421 : vector<8x128xf32>
    %c15_405 = arith.constant 15 : index
    %c0_406 = arith.constant 0 : index
    %c0_407 = arith.constant 0 : index
    %423 = vector.load %arg15[%c15_405, %c0_406, %c0_407] : memref<16x8x128xf32, #tpu.memory_space<vmem>>, vector<1x8x128xf32>
    %424 = vector.shape_cast %423 : vector<1x8x128xf32> to vector<8x128xf32>
    %425 = vector.shape_cast %422 : vector<8x128xf32> to vector<1x8x128xf32>
    tpu.vector_store %arg15[%c15_405, %c0_406, %c0_407], %425 {strides = array<i32>} : memref<16x8x128xf32, #tpu.memory_space<vmem>>, vector<1x8x128xf32>,
    %cst_408 = arith.constant 0.000000e+00 : f32
    %426 = vector.broadcast %cst_408 : f32 to vector<8x128xf32>
    %c0_409 = arith.constant 0 : index
    %c0_410 = arith.constant 0 : index
    %c0_411 = arith.constant 0 : index
    %427 = vector.load %arg15[%c0_409, %c0_410, %c0_411] : memref<16x8x128xf32, #tpu.memory_space<vmem>>, vector<1x8x128xf32>
    %428 = vector.shape_cast %427 : vector<1x8x128xf32> to vector<8x128xf32>
    %c1_412 = arith.constant 1 : index
    %c0_413 = arith.constant 0 : index
    %c0_414 = arith.constant 0 : index
    %429 = vector.load %arg4[%c1_412, %c0_413, %c0_414] : memref<3x128x128xf32, #tpu.memory_space<vmem>>, vector<1x128x128xf32>
    %430 = vector.shape_cast %429 : vector<1x128x128xf32> to vector<128x128xf32>
    %cst_415 = arith.constant dense<0.000000e+00> : vector<8x128xf32>
    %431 = tpu.matmul %428, %430, %cst_415 {dimension_numbers = #tpu.dot_dimension_numbers<[1], [0], [0], [1], [0, 0, 1, 1], [], []>} : vector<8x128xf32>, vector<128x128xf32>, vector<8x128xf32> -> vector<8x128xf32>
    %432 = arith.addf %426, %431 : vector<8x128xf32>
    %c1_416 = arith.constant 1 : index
    %c0_417 = arith.constant 0 : index
    %c0_418 = arith.constant 0 : index
    %433 = vector.load %arg15[%c1_416, %c0_417, %c0_418] : memref<16x8x128xf32, #tpu.memory_space<vmem>>, vector<1x8x128xf32>
    %434 = vector.shape_cast %433 : vector<1x8x128xf32> to vector<8x128xf32>
    %c2_419 = arith.constant 2 : index
    %c0_420 = arith.constant 0 : index
    %c0_421 = arith.constant 0 : index
    %435 = vector.load %arg4[%c2_419, %c0_420, %c0_421] : memref<3x128x128xf32, #tpu.memory_space<vmem>>, vector<1x128x128xf32>
    %436 = vector.shape_cast %435 : vector<1x128x128xf32> to vector<128x128xf32>
    %cst_422 = arith.constant dense<0.000000e+00> : vector<8x128xf32>
    %437 = tpu.matmul %434, %436, %cst_422 {dimension_numbers = #tpu.dot_dimension_numbers<[1], [0], [0], [1], [0, 0, 1, 1], [], []>} : vector<8x128xf32>, vector<128x128xf32>, vector<8x128xf32> -> vector<8x128xf32>
    %438 = arith.addf %432, %437 : vector<8x128xf32>
    %c0_423 = arith.constant 0 : index
    %c0_424 = arith.constant 0 : index
    %439 = vector.load %arg5[%c0_423, %c0_424] : memref<1x128xf32, #tpu.memory_space<vmem>>, vector<1x128xf32>
    %440 = vector.broadcast %439 : vector<1x128xf32> to vector<8x128xf32>
    %441 = arith.addf %438, %440 : vector<8x128xf32>
    %cst_425 = arith.constant 0.000000e+00 : f32
    %442 = vector.broadcast %cst_425 : f32 to vector<8x128xf32>
    %443 = arith.maximumf %441, %442 : vector<8x128xf32>
    %c0_426 = arith.constant 0 : index
    %c0_427 = arith.constant 0 : index
    %c0_428 = arith.constant 0 : index
    %444 = vector.load %arg16[%c0_426, %c0_427, %c0_428] : memref<16x8x128xf32, #tpu.memory_space<vmem>>, vector<1x8x128xf32>
    %445 = vector.shape_cast %444 : vector<1x8x128xf32> to vector<8x128xf32>
    %446 = vector.shape_cast %443 : vector<8x128xf32> to vector<1x8x128xf32>
    tpu.vector_store %arg16[%c0_426, %c0_427, %c0_428], %446 {strides = array<i32>} : memref<16x8x128xf32, #tpu.memory_space<vmem>>, vector<1x8x128xf32>,
    %cst_429 = arith.constant 0.000000e+00 : f32
    %447 = vector.broadcast %cst_429 : f32 to vector<8x128xf32>
    %c1_430 = arith.constant 1 : index
    %c0_431 = arith.constant 0 : index
    %c0_432 = arith.constant 0 : index
    %448 = vector.load %arg15[%c1_430, %c0_431, %c0_432] : memref<16x8x128xf32, #tpu.memory_space<vmem>>, vector<1x8x128xf32>
    %449 = vector.shape_cast %448 : vector<1x8x128xf32> to vector<8x128xf32>
    %c0_433 = arith.constant 0 : index
    %c0_434 = arith.constant 0 : index
    %c0_435 = arith.constant 0 : index
    %450 = vector.load %arg4[%c0_433, %c0_434, %c0_435] : memref<3x128x128xf32, #tpu.memory_space<vmem>>, vector<1x128x128xf32>
    %451 = vector.shape_cast %450 : vector<1x128x128xf32> to vector<128x128xf32>
    %cst_436 = arith.constant dense<0.000000e+00> : vector<8x128xf32>
    %452 = tpu.matmul %449, %451, %cst_436 {dimension_numbers = #tpu.dot_dimension_numbers<[1], [0], [0], [1], [0, 0, 1, 1], [], []>} : vector<8x128xf32>, vector<128x128xf32>, vector<8x128xf32> -> vector<8x128xf32>
    %453 = arith.addf %447, %452 : vector<8x128xf32>
    %c2_437 = arith.constant 2 : index
    %c0_438 = arith.constant 0 : index
    %c0_439 = arith.constant 0 : index
    %454 = vector.load %arg15[%c2_437, %c0_438, %c0_439] : memref<16x8x128xf32, #tpu.memory_space<vmem>>, vector<1x8x128xf32>
    %455 = vector.shape_cast %454 : vector<1x8x128xf32> to vector<8x128xf32>
    %c1_440 = arith.constant 1 : index
    %c0_441 = arith.constant 0 : index
    %c0_442 = arith.constant 0 : index
    %456 = vector.load %arg4[%c1_440, %c0_441, %c0_442] : memref<3x128x128xf32, #tpu.memory_space<vmem>>, vector<1x128x128xf32>
    %457 = vector.shape_cast %456 : vector<1x128x128xf32> to vector<128x128xf32>
    %cst_443 = arith.constant dense<0.000000e+00> : vector<8x128xf32>
    %458 = tpu.matmul %455, %457, %cst_443 {dimension_numbers = #tpu.dot_dimension_numbers<[1], [0], [0], [1], [0, 0, 1, 1], [], []>} : vector<8x128xf32>, vector<128x128xf32>, vector<8x128xf32> -> vector<8x128xf32>
    %459 = arith.addf %453, %458 : vector<8x128xf32>
    %c3_444 = arith.constant 3 : index
    %c0_445 = arith.constant 0 : index
    %c0_446 = arith.constant 0 : index
    %460 = vector.load %arg15[%c3_444, %c0_445, %c0_446] : memref<16x8x128xf32, #tpu.memory_space<vmem>>, vector<1x8x128xf32>
    %461 = vector.shape_cast %460 : vector<1x8x128xf32> to vector<8x128xf32>
    %c2_447 = arith.constant 2 : index
    %c0_448 = arith.constant 0 : index
    %c0_449 = arith.constant 0 : index
    %462 = vector.load %arg4[%c2_447, %c0_448, %c0_449] : memref<3x128x128xf32, #tpu.memory_space<vmem>>, vector<1x128x128xf32>
    %463 = vector.shape_cast %462 : vector<1x128x128xf32> to vector<128x128xf32>
    %cst_450 = arith.constant dense<0.000000e+00> : vector<8x128xf32>
    %464 = tpu.matmul %461, %463, %cst_450 {dimension_numbers = #tpu.dot_dimension_numbers<[1], [0], [0], [1], [0, 0, 1, 1], [], []>} : vector<8x128xf32>, vector<128x128xf32>, vector<8x128xf32> -> vector<8x128xf32>
    %465 = arith.addf %459, %464 : vector<8x128xf32>
    %c0_451 = arith.constant 0 : index
    %c0_452 = arith.constant 0 : index
    %466 = vector.load %arg5[%c0_451, %c0_452] : memref<1x128xf32, #tpu.memory_space<vmem>>, vector<1x128xf32>
    %467 = vector.broadcast %466 : vector<1x128xf32> to vector<8x128xf32>
    %468 = arith.addf %465, %467 : vector<8x128xf32>
    %cst_453 = arith.constant 0.000000e+00 : f32
    %469 = vector.broadcast %cst_453 : f32 to vector<8x128xf32>
    %470 = arith.maximumf %468, %469 : vector<8x128xf32>
    %c1_454 = arith.constant 1 : index
    %c0_455 = arith.constant 0 : index
    %c0_456 = arith.constant 0 : index
    %471 = vector.load %arg16[%c1_454, %c0_455, %c0_456] : memref<16x8x128xf32, #tpu.memory_space<vmem>>, vector<1x8x128xf32>
    %472 = vector.shape_cast %471 : vector<1x8x128xf32> to vector<8x128xf32>
    %473 = vector.shape_cast %470 : vector<8x128xf32> to vector<1x8x128xf32>
    tpu.vector_store %arg16[%c1_454, %c0_455, %c0_456], %473 {strides = array<i32>} : memref<16x8x128xf32, #tpu.memory_space<vmem>>, vector<1x8x128xf32>,
    %cst_457 = arith.constant 0.000000e+00 : f32
    %474 = vector.broadcast %cst_457 : f32 to vector<8x128xf32>
    %c3_458 = arith.constant 3 : index
    %c0_459 = arith.constant 0 : index
    %c0_460 = arith.constant 0 : index
    %475 = vector.load %arg15[%c3_458, %c0_459, %c0_460] : memref<16x8x128xf32, #tpu.memory_space<vmem>>, vector<1x8x128xf32>
    %476 = vector.shape_cast %475 : vector<1x8x128xf32> to vector<8x128xf32>
    %c0_461 = arith.constant 0 : index
    %c0_462 = arith.constant 0 : index
    %c0_463 = arith.constant 0 : index
    %477 = vector.load %arg4[%c0_461, %c0_462, %c0_463] : memref<3x128x128xf32, #tpu.memory_space<vmem>>, vector<1x128x128xf32>
    %478 = vector.shape_cast %477 : vector<1x128x128xf32> to vector<128x128xf32>
    %cst_464 = arith.constant dense<0.000000e+00> : vector<8x128xf32>
    %479 = tpu.matmul %476, %478, %cst_464 {dimension_numbers = #tpu.dot_dimension_numbers<[1], [0], [0], [1], [0, 0, 1, 1], [], []>} : vector<8x128xf32>, vector<128x128xf32>, vector<8x128xf32> -> vector<8x128xf32>
    %480 = arith.addf %474, %479 : vector<8x128xf32>
    %c4_465 = arith.constant 4 : index
    %c0_466 = arith.constant 0 : index
    %c0_467 = arith.constant 0 : index
    %481 = vector.load %arg15[%c4_465, %c0_466, %c0_467] : memref<16x8x128xf32, #tpu.memory_space<vmem>>, vector<1x8x128xf32>
    %482 = vector.shape_cast %481 : vector<1x8x128xf32> to vector<8x128xf32>
    %c1_468 = arith.constant 1 : index
    %c0_469 = arith.constant 0 : index
    %c0_470 = arith.constant 0 : index
    %483 = vector.load %arg4[%c1_468, %c0_469, %c0_470] : memref<3x128x128xf32, #tpu.memory_space<vmem>>, vector<1x128x128xf32>
    %484 = vector.shape_cast %483 : vector<1x128x128xf32> to vector<128x128xf32>
    %cst_471 = arith.constant dense<0.000000e+00> : vector<8x128xf32>
    %485 = tpu.matmul %482, %484, %cst_471 {dimension_numbers = #tpu.dot_dimension_numbers<[1], [0], [0], [1], [0, 0, 1, 1], [], []>} : vector<8x128xf32>, vector<128x128xf32>, vector<8x128xf32> -> vector<8x128xf32>
    %486 = arith.addf %480, %485 : vector<8x128xf32>
    %c5_472 = arith.constant 5 : index
    %c0_473 = arith.constant 0 : index
    %c0_474 = arith.constant 0 : index
    %487 = vector.load %arg15[%c5_472, %c0_473, %c0_474] : memref<16x8x128xf32, #tpu.memory_space<vmem>>, vector<1x8x128xf32>
    %488 = vector.shape_cast %487 : vector<1x8x128xf32> to vector<8x128xf32>
    %c2_475 = arith.constant 2 : index
    %c0_476 = arith.constant 0 : index
    %c0_477 = arith.constant 0 : index
    %489 = vector.load %arg4[%c2_475, %c0_476, %c0_477] : memref<3x128x128xf32, #tpu.memory_space<vmem>>, vector<1x128x128xf32>
    %490 = vector.shape_cast %489 : vector<1x128x128xf32> to vector<128x128xf32>
    %cst_478 = arith.constant dense<0.000000e+00> : vector<8x128xf32>
    %491 = tpu.matmul %488, %490, %cst_478 {dimension_numbers = #tpu.dot_dimension_numbers<[1], [0], [0], [1], [0, 0, 1, 1], [], []>} : vector<8x128xf32>, vector<128x128xf32>, vector<8x128xf32> -> vector<8x128xf32>
    %492 = arith.addf %486, %491 : vector<8x128xf32>
    %c0_479 = arith.constant 0 : index
    %c0_480 = arith.constant 0 : index
    %493 = vector.load %arg5[%c0_479, %c0_480] : memref<1x128xf32, #tpu.memory_space<vmem>>, vector<1x128xf32>
    %494 = vector.broadcast %493 : vector<1x128xf32> to vector<8x128xf32>
    %495 = arith.addf %492, %494 : vector<8x128xf32>
    %cst_481 = arith.constant 0.000000e+00 : f32
    %496 = vector.broadcast %cst_481 : f32 to vector<8x128xf32>
    %497 = arith.maximumf %495, %496 : vector<8x128xf32>
    %c2_482 = arith.constant 2 : index
    %c0_483 = arith.constant 0 : index
    %c0_484 = arith.constant 0 : index
    %498 = vector.load %arg16[%c2_482, %c0_483, %c0_484] : memref<16x8x128xf32, #tpu.memory_space<vmem>>, vector<1x8x128xf32>
    %499 = vector.shape_cast %498 : vector<1x8x128xf32> to vector<8x128xf32>
    %500 = vector.shape_cast %497 : vector<8x128xf32> to vector<1x8x128xf32>
    tpu.vector_store %arg16[%c2_482, %c0_483, %c0_484], %500 {strides = array<i32>} : memref<16x8x128xf32, #tpu.memory_space<vmem>>, vector<1x8x128xf32>,
    %cst_485 = arith.constant 0.000000e+00 : f32
    %501 = vector.broadcast %cst_485 : f32 to vector<8x128xf32>
    %c5_486 = arith.constant 5 : index
    %c0_487 = arith.constant 0 : index
    %c0_488 = arith.constant 0 : index
    %502 = vector.load %arg15[%c5_486, %c0_487, %c0_488] : memref<16x8x128xf32, #tpu.memory_space<vmem>>, vector<1x8x128xf32>
    %503 = vector.shape_cast %502 : vector<1x8x128xf32> to vector<8x128xf32>
    %c0_489 = arith.constant 0 : index
    %c0_490 = arith.constant 0 : index
    %c0_491 = arith.constant 0 : index
    %504 = vector.load %arg4[%c0_489, %c0_490, %c0_491] : memref<3x128x128xf32, #tpu.memory_space<vmem>>, vector<1x128x128xf32>
    %505 = vector.shape_cast %504 : vector<1x128x128xf32> to vector<128x128xf32>
    %cst_492 = arith.constant dense<0.000000e+00> : vector<8x128xf32>
    %506 = tpu.matmul %503, %505, %cst_492 {dimension_numbers = #tpu.dot_dimension_numbers<[1], [0], [0], [1], [0, 0, 1, 1], [], []>} : vector<8x128xf32>, vector<128x128xf32>, vector<8x128xf32> -> vector<8x128xf32>
    %507 = arith.addf %501, %506 : vector<8x128xf32>
    %c6_493 = arith.constant 6 : index
    %c0_494 = arith.constant 0 : index
    %c0_495 = arith.constant 0 : index
    %508 = vector.load %arg15[%c6_493, %c0_494, %c0_495] : memref<16x8x128xf32, #tpu.memory_space<vmem>>, vector<1x8x128xf32>
    %509 = vector.shape_cast %508 : vector<1x8x128xf32> to vector<8x128xf32>
    %c1_496 = arith.constant 1 : index
    %c0_497 = arith.constant 0 : index
    %c0_498 = arith.constant 0 : index
    %510 = vector.load %arg4[%c1_496, %c0_497, %c0_498] : memref<3x128x128xf32, #tpu.memory_space<vmem>>, vector<1x128x128xf32>
    %511 = vector.shape_cast %510 : vector<1x128x128xf32> to vector<128x128xf32>
    %cst_499 = arith.constant dense<0.000000e+00> : vector<8x128xf32>
    %512 = tpu.matmul %509, %511, %cst_499 {dimension_numbers = #tpu.dot_dimension_numbers<[1], [0], [0], [1], [0, 0, 1, 1], [], []>} : vector<8x128xf32>, vector<128x128xf32>, vector<8x128xf32> -> vector<8x128xf32>
    %513 = arith.addf %507, %512 : vector<8x128xf32>
    %c7_500 = arith.constant 7 : index
    %c0_501 = arith.constant 0 : index
    %c0_502 = arith.constant 0 : index
    %514 = vector.load %arg15[%c7_500, %c0_501, %c0_502] : memref<16x8x128xf32, #tpu.memory_space<vmem>>, vector<1x8x128xf32>
    %515 = vector.shape_cast %514 : vector<1x8x128xf32> to vector<8x128xf32>
    %c2_503 = arith.constant 2 : index
    %c0_504 = arith.constant 0 : index
    %c0_505 = arith.constant 0 : index
    %516 = vector.load %arg4[%c2_503, %c0_504, %c0_505] : memref<3x128x128xf32, #tpu.memory_space<vmem>>, vector<1x128x128xf32>
    %517 = vector.shape_cast %516 : vector<1x128x128xf32> to vector<128x128xf32>
    %cst_506 = arith.constant dense<0.000000e+00> : vector<8x128xf32>
    %518 = tpu.matmul %515, %517, %cst_506 {dimension_numbers = #tpu.dot_dimension_numbers<[1], [0], [0], [1], [0, 0, 1, 1], [], []>} : vector<8x128xf32>, vector<128x128xf32>, vector<8x128xf32> -> vector<8x128xf32>
    %519 = arith.addf %513, %518 : vector<8x128xf32>
    %c0_507 = arith.constant 0 : index
    %c0_508 = arith.constant 0 : index
    %520 = vector.load %arg5[%c0_507, %c0_508] : memref<1x128xf32, #tpu.memory_space<vmem>>, vector<1x128xf32>
    %521 = vector.broadcast %520 : vector<1x128xf32> to vector<8x128xf32>
    %522 = arith.addf %519, %521 : vector<8x128xf32>
    %cst_509 = arith.constant 0.000000e+00 : f32
    %523 = vector.broadcast %cst_509 : f32 to vector<8x128xf32>
    %524 = arith.maximumf %522, %523 : vector<8x128xf32>
    %c3_510 = arith.constant 3 : index
    %c0_511 = arith.constant 0 : index
    %c0_512 = arith.constant 0 : index
    %525 = vector.load %arg16[%c3_510, %c0_511, %c0_512] : memref<16x8x128xf32, #tpu.memory_space<vmem>>, vector<1x8x128xf32>
    %526 = vector.shape_cast %525 : vector<1x8x128xf32> to vector<8x128xf32>
    %527 = vector.shape_cast %524 : vector<8x128xf32> to vector<1x8x128xf32>
    tpu.vector_store %arg16[%c3_510, %c0_511, %c0_512], %527 {strides = array<i32>} : memref<16x8x128xf32, #tpu.memory_space<vmem>>, vector<1x8x128xf32>,
    %cst_513 = arith.constant 0.000000e+00 : f32
    %528 = vector.broadcast %cst_513 : f32 to vector<8x128xf32>
    %c7_514 = arith.constant 7 : index
    %c0_515 = arith.constant 0 : index
    %c0_516 = arith.constant 0 : index
    %529 = vector.load %arg15[%c7_514, %c0_515, %c0_516] : memref<16x8x128xf32, #tpu.memory_space<vmem>>, vector<1x8x128xf32>
    %530 = vector.shape_cast %529 : vector<1x8x128xf32> to vector<8x128xf32>
    %c0_517 = arith.constant 0 : index
    %c0_518 = arith.constant 0 : index
    %c0_519 = arith.constant 0 : index
    %531 = vector.load %arg4[%c0_517, %c0_518, %c0_519] : memref<3x128x128xf32, #tpu.memory_space<vmem>>, vector<1x128x128xf32>
    %532 = vector.shape_cast %531 : vector<1x128x128xf32> to vector<128x128xf32>
    %cst_520 = arith.constant dense<0.000000e+00> : vector<8x128xf32>
    %533 = tpu.matmul %530, %532, %cst_520 {dimension_numbers = #tpu.dot_dimension_numbers<[1], [0], [0], [1], [0, 0, 1, 1], [], []>} : vector<8x128xf32>, vector<128x128xf32>, vector<8x128xf32> -> vector<8x128xf32>
    %534 = arith.addf %528, %533 : vector<8x128xf32>
    %c8_521 = arith.constant 8 : index
    %c0_522 = arith.constant 0 : index
    %c0_523 = arith.constant 0 : index
    %535 = vector.load %arg15[%c8_521, %c0_522, %c0_523] : memref<16x8x128xf32, #tpu.memory_space<vmem>>, vector<1x8x128xf32>
    %536 = vector.shape_cast %535 : vector<1x8x128xf32> to vector<8x128xf32>
    %c1_524 = arith.constant 1 : index
    %c0_525 = arith.constant 0 : index
    %c0_526 = arith.constant 0 : index
    %537 = vector.load %arg4[%c1_524, %c0_525, %c0_526] : memref<3x128x128xf32, #tpu.memory_space<vmem>>, vector<1x128x128xf32>
    %538 = vector.shape_cast %537 : vector<1x128x128xf32> to vector<128x128xf32>
    %cst_527 = arith.constant dense<0.000000e+00> : vector<8x128xf32>
    %539 = tpu.matmul %536, %538, %cst_527 {dimension_numbers = #tpu.dot_dimension_numbers<[1], [0], [0], [1], [0, 0, 1, 1], [], []>} : vector<8x128xf32>, vector<128x128xf32>, vector<8x128xf32> -> vector<8x128xf32>
    %540 = arith.addf %534, %539 : vector<8x128xf32>
    %c9_528 = arith.constant 9 : index
    %c0_529 = arith.constant 0 : index
    %c0_530 = arith.constant 0 : index
    %541 = vector.load %arg15[%c9_528, %c0_529, %c0_530] : memref<16x8x128xf32, #tpu.memory_space<vmem>>, vector<1x8x128xf32>
    %542 = vector.shape_cast %541 : vector<1x8x128xf32> to vector<8x128xf32>
    %c2_531 = arith.constant 2 : index
    %c0_532 = arith.constant 0 : index
    %c0_533 = arith.constant 0 : index
    %543 = vector.load %arg4[%c2_531, %c0_532, %c0_533] : memref<3x128x128xf32, #tpu.memory_space<vmem>>, vector<1x128x128xf32>
    %544 = vector.shape_cast %543 : vector<1x128x128xf32> to vector<128x128xf32>
    %cst_534 = arith.constant dense<0.000000e+00> : vector<8x128xf32>
    %545 = tpu.matmul %542, %544, %cst_534 {dimension_numbers = #tpu.dot_dimension_numbers<[1], [0], [0], [1], [0, 0, 1, 1], [], []>} : vector<8x128xf32>, vector<128x128xf32>, vector<8x128xf32> -> vector<8x128xf32>
    %546 = arith.addf %540, %545 : vector<8x128xf32>
    %c0_535 = arith.constant 0 : index
    %c0_536 = arith.constant 0 : index
    %547 = vector.load %arg5[%c0_535, %c0_536] : memref<1x128xf32, #tpu.memory_space<vmem>>, vector<1x128xf32>
    %548 = vector.broadcast %547 : vector<1x128xf32> to vector<8x128xf32>
    %549 = arith.addf %546, %548 : vector<8x128xf32>
    %cst_537 = arith.constant 0.000000e+00 : f32
    %550 = vector.broadcast %cst_537 : f32 to vector<8x128xf32>
    %551 = arith.maximumf %549, %550 : vector<8x128xf32>
    %c4_538 = arith.constant 4 : index
    %c0_539 = arith.constant 0 : index
    %c0_540 = arith.constant 0 : index
    %552 = vector.load %arg16[%c4_538, %c0_539, %c0_540] : memref<16x8x128xf32, #tpu.memory_space<vmem>>, vector<1x8x128xf32>
    %553 = vector.shape_cast %552 : vector<1x8x128xf32> to vector<8x128xf32>
    %554 = vector.shape_cast %551 : vector<8x128xf32> to vector<1x8x128xf32>
    tpu.vector_store %arg16[%c4_538, %c0_539, %c0_540], %554 {strides = array<i32>} : memref<16x8x128xf32, #tpu.memory_space<vmem>>, vector<1x8x128xf32>,
    %cst_541 = arith.constant 0.000000e+00 : f32
    %555 = vector.broadcast %cst_541 : f32 to vector<8x128xf32>
    %c9_542 = arith.constant 9 : index
    %c0_543 = arith.constant 0 : index
    %c0_544 = arith.constant 0 : index
    %556 = vector.load %arg15[%c9_542, %c0_543, %c0_544] : memref<16x8x128xf32, #tpu.memory_space<vmem>>, vector<1x8x128xf32>
    %557 = vector.shape_cast %556 : vector<1x8x128xf32> to vector<8x128xf32>
    %c0_545 = arith.constant 0 : index
    %c0_546 = arith.constant 0 : index
    %c0_547 = arith.constant 0 : index
    %558 = vector.load %arg4[%c0_545, %c0_546, %c0_547] : memref<3x128x128xf32, #tpu.memory_space<vmem>>, vector<1x128x128xf32>
    %559 = vector.shape_cast %558 : vector<1x128x128xf32> to vector<128x128xf32>
    %cst_548 = arith.constant dense<0.000000e+00> : vector<8x128xf32>
    %560 = tpu.matmul %557, %559, %cst_548 {dimension_numbers = #tpu.dot_dimension_numbers<[1], [0], [0], [1], [0, 0, 1, 1], [], []>} : vector<8x128xf32>, vector<128x128xf32>, vector<8x128xf32> -> vector<8x128xf32>
    %561 = arith.addf %555, %560 : vector<8x128xf32>
    %c10_549 = arith.constant 10 : index
    %c0_550 = arith.constant 0 : index
    %c0_551 = arith.constant 0 : index
    %562 = vector.load %arg15[%c10_549, %c0_550, %c0_551] : memref<16x8x128xf32, #tpu.memory_space<vmem>>, vector<1x8x128xf32>
    %563 = vector.shape_cast %562 : vector<1x8x128xf32> to vector<8x128xf32>
    %c1_552 = arith.constant 1 : index
    %c0_553 = arith.constant 0 : index
    %c0_554 = arith.constant 0 : index
    %564 = vector.load %arg4[%c1_552, %c0_553, %c0_554] : memref<3x128x128xf32, #tpu.memory_space<vmem>>, vector<1x128x128xf32>
    %565 = vector.shape_cast %564 : vector<1x128x128xf32> to vector<128x128xf32>
    %cst_555 = arith.constant dense<0.000000e+00> : vector<8x128xf32>
    %566 = tpu.matmul %563, %565, %cst_555 {dimension_numbers = #tpu.dot_dimension_numbers<[1], [0], [0], [1], [0, 0, 1, 1], [], []>} : vector<8x128xf32>, vector<128x128xf32>, vector<8x128xf32> -> vector<8x128xf32>
    %567 = arith.addf %561, %566 : vector<8x128xf32>
    %c11_556 = arith.constant 11 : index
    %c0_557 = arith.constant 0 : index
    %c0_558 = arith.constant 0 : index
    %568 = vector.load %arg15[%c11_556, %c0_557, %c0_558] : memref<16x8x128xf32, #tpu.memory_space<vmem>>, vector<1x8x128xf32>
    %569 = vector.shape_cast %568 : vector<1x8x128xf32> to vector<8x128xf32>
    %c2_559 = arith.constant 2 : index
    %c0_560 = arith.constant 0 : index
    %c0_561 = arith.constant 0 : index
    %570 = vector.load %arg4[%c2_559, %c0_560, %c0_561] : memref<3x128x128xf32, #tpu.memory_space<vmem>>, vector<1x128x128xf32>
    %571 = vector.shape_cast %570 : vector<1x128x128xf32> to vector<128x128xf32>
    %cst_562 = arith.constant dense<0.000000e+00> : vector<8x128xf32>
    %572 = tpu.matmul %569, %571, %cst_562 {dimension_numbers = #tpu.dot_dimension_numbers<[1], [0], [0], [1], [0, 0, 1, 1], [], []>} : vector<8x128xf32>, vector<128x128xf32>, vector<8x128xf32> -> vector<8x128xf32>
    %573 = arith.addf %567, %572 : vector<8x128xf32>
    %c0_563 = arith.constant 0 : index
    %c0_564 = arith.constant 0 : index
    %574 = vector.load %arg5[%c0_563, %c0_564] : memref<1x128xf32, #tpu.memory_space<vmem>>, vector<1x128xf32>
    %575 = vector.broadcast %574 : vector<1x128xf32> to vector<8x128xf32>
    %576 = arith.addf %573, %575 : vector<8x128xf32>
    %cst_565 = arith.constant 0.000000e+00 : f32
    %577 = vector.broadcast %cst_565 : f32 to vector<8x128xf32>
    %578 = arith.maximumf %576, %577 : vector<8x128xf32>
    %c5_566 = arith.constant 5 : index
    %c0_567 = arith.constant 0 : index
    %c0_568 = arith.constant 0 : index
    %579 = vector.load %arg16[%c5_566, %c0_567, %c0_568] : memref<16x8x128xf32, #tpu.memory_space<vmem>>, vector<1x8x128xf32>
    %580 = vector.shape_cast %579 : vector<1x8x128xf32> to vector<8x128xf32>
    %581 = vector.shape_cast %578 : vector<8x128xf32> to vector<1x8x128xf32>
    tpu.vector_store %arg16[%c5_566, %c0_567, %c0_568], %581 {strides = array<i32>} : memref<16x8x128xf32, #tpu.memory_space<vmem>>, vector<1x8x128xf32>,
    %cst_569 = arith.constant 0.000000e+00 : f32
    %582 = vector.broadcast %cst_569 : f32 to vector<8x128xf32>
    %c11_570 = arith.constant 11 : index
    %c0_571 = arith.constant 0 : index
    %c0_572 = arith.constant 0 : index
    %583 = vector.load %arg15[%c11_570, %c0_571, %c0_572] : memref<16x8x128xf32, #tpu.memory_space<vmem>>, vector<1x8x128xf32>
    %584 = vector.shape_cast %583 : vector<1x8x128xf32> to vector<8x128xf32>
    %c0_573 = arith.constant 0 : index
    %c0_574 = arith.constant 0 : index
    %c0_575 = arith.constant 0 : index
    %585 = vector.load %arg4[%c0_573, %c0_574, %c0_575] : memref<3x128x128xf32, #tpu.memory_space<vmem>>, vector<1x128x128xf32>
    %586 = vector.shape_cast %585 : vector<1x128x128xf32> to vector<128x128xf32>
    %cst_576 = arith.constant dense<0.000000e+00> : vector<8x128xf32>
    %587 = tpu.matmul %584, %586, %cst_576 {dimension_numbers = #tpu.dot_dimension_numbers<[1], [0], [0], [1], [0, 0, 1, 1], [], []>} : vector<8x128xf32>, vector<128x128xf32>, vector<8x128xf32> -> vector<8x128xf32>
    %588 = arith.addf %582, %587 : vector<8x128xf32>
    %c12_577 = arith.constant 12 : index
    %c0_578 = arith.constant 0 : index
    %c0_579 = arith.constant 0 : index
    %589 = vector.load %arg15[%c12_577, %c0_578, %c0_579] : memref<16x8x128xf32, #tpu.memory_space<vmem>>, vector<1x8x128xf32>
    %590 = vector.shape_cast %589 : vector<1x8x128xf32> to vector<8x128xf32>
    %c1_580 = arith.constant 1 : index
    %c0_581 = arith.constant 0 : index
    %c0_582 = arith.constant 0 : index
    %591 = vector.load %arg4[%c1_580, %c0_581, %c0_582] : memref<3x128x128xf32, #tpu.memory_space<vmem>>, vector<1x128x128xf32>
    %592 = vector.shape_cast %591 : vector<1x128x128xf32> to vector<128x128xf32>
    %cst_583 = arith.constant dense<0.000000e+00> : vector<8x128xf32>
    %593 = tpu.matmul %590, %592, %cst_583 {dimension_numbers = #tpu.dot_dimension_numbers<[1], [0], [0], [1], [0, 0, 1, 1], [], []>} : vector<8x128xf32>, vector<128x128xf32>, vector<8x128xf32> -> vector<8x128xf32>
    %594 = arith.addf %588, %593 : vector<8x128xf32>
    %c13_584 = arith.constant 13 : index
    %c0_585 = arith.constant 0 : index
    %c0_586 = arith.constant 0 : index
    %595 = vector.load %arg15[%c13_584, %c0_585, %c0_586] : memref<16x8x128xf32, #tpu.memory_space<vmem>>, vector<1x8x128xf32>
    %596 = vector.shape_cast %595 : vector<1x8x128xf32> to vector<8x128xf32>
    %c2_587 = arith.constant 2 : index
    %c0_588 = arith.constant 0 : index
    %c0_589 = arith.constant 0 : index
    %597 = vector.load %arg4[%c2_587, %c0_588, %c0_589] : memref<3x128x128xf32, #tpu.memory_space<vmem>>, vector<1x128x128xf32>
    %598 = vector.shape_cast %597 : vector<1x128x128xf32> to vector<128x128xf32>
    %cst_590 = arith.constant dense<0.000000e+00> : vector<8x128xf32>
    %599 = tpu.matmul %596, %598, %cst_590 {dimension_numbers = #tpu.dot_dimension_numbers<[1], [0], [0], [1], [0, 0, 1, 1], [], []>} : vector<8x128xf32>, vector<128x128xf32>, vector<8x128xf32> -> vector<8x128xf32>
    %600 = arith.addf %594, %599 : vector<8x128xf32>
    %c0_591 = arith.constant 0 : index
    %c0_592 = arith.constant 0 : index
    %601 = vector.load %arg5[%c0_591, %c0_592] : memref<1x128xf32, #tpu.memory_space<vmem>>, vector<1x128xf32>
    %602 = vector.broadcast %601 : vector<1x128xf32> to vector<8x128xf32>
    %603 = arith.addf %600, %602 : vector<8x128xf32>
    %cst_593 = arith.constant 0.000000e+00 : f32
    %604 = vector.broadcast %cst_593 : f32 to vector<8x128xf32>
    %605 = arith.maximumf %603, %604 : vector<8x128xf32>
    %c6_594 = arith.constant 6 : index
    %c0_595 = arith.constant 0 : index
    %c0_596 = arith.constant 0 : index
    %606 = vector.load %arg16[%c6_594, %c0_595, %c0_596] : memref<16x8x128xf32, #tpu.memory_space<vmem>>, vector<1x8x128xf32>
    %607 = vector.shape_cast %606 : vector<1x8x128xf32> to vector<8x128xf32>
    %608 = vector.shape_cast %605 : vector<8x128xf32> to vector<1x8x128xf32>
    tpu.vector_store %arg16[%c6_594, %c0_595, %c0_596], %608 {strides = array<i32>} : memref<16x8x128xf32, #tpu.memory_space<vmem>>, vector<1x8x128xf32>,
    %cst_597 = arith.constant 0.000000e+00 : f32
    %609 = vector.broadcast %cst_597 : f32 to vector<8x128xf32>
    %c13_598 = arith.constant 13 : index
    %c0_599 = arith.constant 0 : index
    %c0_600 = arith.constant 0 : index
    %610 = vector.load %arg15[%c13_598, %c0_599, %c0_600] : memref<16x8x128xf32, #tpu.memory_space<vmem>>, vector<1x8x128xf32>
    %611 = vector.shape_cast %610 : vector<1x8x128xf32> to vector<8x128xf32>
    %c0_601 = arith.constant 0 : index
    %c0_602 = arith.constant 0 : index
    %c0_603 = arith.constant 0 : index
    %612 = vector.load %arg4[%c0_601, %c0_602, %c0_603] : memref<3x128x128xf32, #tpu.memory_space<vmem>>, vector<1x128x128xf32>
    %613 = vector.shape_cast %612 : vector<1x128x128xf32> to vector<128x128xf32>
    %cst_604 = arith.constant dense<0.000000e+00> : vector<8x128xf32>
    %614 = tpu.matmul %611, %613, %cst_604 {dimension_numbers = #tpu.dot_dimension_numbers<[1], [0], [0], [1], [0, 0, 1, 1], [], []>} : vector<8x128xf32>, vector<128x128xf32>, vector<8x128xf32> -> vector<8x128xf32>
    %615 = arith.addf %609, %614 : vector<8x128xf32>
    %c14_605 = arith.constant 14 : index
    %c0_606 = arith.constant 0 : index
    %c0_607 = arith.constant 0 : index
    %616 = vector.load %arg15[%c14_605, %c0_606, %c0_607] : memref<16x8x128xf32, #tpu.memory_space<vmem>>, vector<1x8x128xf32>
    %617 = vector.shape_cast %616 : vector<1x8x128xf32> to vector<8x128xf32>
    %c1_608 = arith.constant 1 : index
    %c0_609 = arith.constant 0 : index
    %c0_610 = arith.constant 0 : index
    %618 = vector.load %arg4[%c1_608, %c0_609, %c0_610] : memref<3x128x128xf32, #tpu.memory_space<vmem>>, vector<1x128x128xf32>
    %619 = vector.shape_cast %618 : vector<1x128x128xf32> to vector<128x128xf32>
    %cst_611 = arith.constant dense<0.000000e+00> : vector<8x128xf32>
    %620 = tpu.matmul %617, %619, %cst_611 {dimension_numbers = #tpu.dot_dimension_numbers<[1], [0], [0], [1], [0, 0, 1, 1], [], []>} : vector<8x128xf32>, vector<128x128xf32>, vector<8x128xf32> -> vector<8x128xf32>
    %621 = arith.addf %615, %620 : vector<8x128xf32>
    %c15_612 = arith.constant 15 : index
    %c0_613 = arith.constant 0 : index
    %c0_614 = arith.constant 0 : index
    %622 = vector.load %arg15[%c15_612, %c0_613, %c0_614] : memref<16x8x128xf32, #tpu.memory_space<vmem>>, vector<1x8x128xf32>
    %623 = vector.shape_cast %622 : vector<1x8x128xf32> to vector<8x128xf32>
    %c2_615 = arith.constant 2 : index
    %c0_616 = arith.constant 0 : index
    %c0_617 = arith.constant 0 : index
    %624 = vector.load %arg4[%c2_615, %c0_616, %c0_617] : memref<3x128x128xf32, #tpu.memory_space<vmem>>, vector<1x128x128xf32>
    %625 = vector.shape_cast %624 : vector<1x128x128xf32> to vector<128x128xf32>
    %cst_618 = arith.constant dense<0.000000e+00> : vector<8x128xf32>
    %626 = tpu.matmul %623, %625, %cst_618 {dimension_numbers = #tpu.dot_dimension_numbers<[1], [0], [0], [1], [0, 0, 1, 1], [], []>} : vector<8x128xf32>, vector<128x128xf32>, vector<8x128xf32> -> vector<8x128xf32>
    %627 = arith.addf %621, %626 : vector<8x128xf32>
    %c0_619 = arith.constant 0 : index
    %c0_620 = arith.constant 0 : index
    %628 = vector.load %arg5[%c0_619, %c0_620] : memref<1x128xf32, #tpu.memory_space<vmem>>, vector<1x128xf32>
    %629 = vector.broadcast %628 : vector<1x128xf32> to vector<8x128xf32>
    %630 = arith.addf %627, %629 : vector<8x128xf32>
    %cst_621 = arith.constant 0.000000e+00 : f32
    %631 = vector.broadcast %cst_621 : f32 to vector<8x128xf32>
    %632 = arith.maximumf %630, %631 : vector<8x128xf32>
    %c7_622 = arith.constant 7 : index
    %c0_623 = arith.constant 0 : index
    %c0_624 = arith.constant 0 : index
    %633 = vector.load %arg16[%c7_622, %c0_623, %c0_624] : memref<16x8x128xf32, #tpu.memory_space<vmem>>, vector<1x8x128xf32>
    %634 = vector.shape_cast %633 : vector<1x8x128xf32> to vector<8x128xf32>
    %635 = vector.shape_cast %632 : vector<8x128xf32> to vector<1x8x128xf32>
    tpu.vector_store %arg16[%c7_622, %c0_623, %c0_624], %635 {strides = array<i32>} : memref<16x8x128xf32, #tpu.memory_space<vmem>>, vector<1x8x128xf32>,
    %cst_625 = arith.constant 0.000000e+00 : f32
    %636 = vector.broadcast %cst_625 : f32 to vector<8x128xf32>
    %c0_626 = arith.constant 0 : index
    %c0_627 = arith.constant 0 : index
    %c0_628 = arith.constant 0 : index
    %637 = vector.load %arg16[%c0_626, %c0_627, %c0_628] : memref<16x8x128xf32, #tpu.memory_space<vmem>>, vector<1x8x128xf32>
    %638 = vector.shape_cast %637 : vector<1x8x128xf32> to vector<8x128xf32>
    %c1_629 = arith.constant 1 : index
    %c0_630 = arith.constant 0 : index
    %c0_631 = arith.constant 0 : index
    %639 = vector.load %arg6[%c1_629, %c0_630, %c0_631] : memref<3x128x128xf32, #tpu.memory_space<vmem>>, vector<1x128x128xf32>
    %640 = vector.shape_cast %639 : vector<1x128x128xf32> to vector<128x128xf32>
    %cst_632 = arith.constant dense<0.000000e+00> : vector<8x128xf32>
    %641 = tpu.matmul %638, %640, %cst_632 {dimension_numbers = #tpu.dot_dimension_numbers<[1], [0], [0], [1], [0, 0, 1, 1], [], []>} : vector<8x128xf32>, vector<128x128xf32>, vector<8x128xf32> -> vector<8x128xf32>
    %642 = arith.addf %636, %641 : vector<8x128xf32>
    %c1_633 = arith.constant 1 : index
    %c0_634 = arith.constant 0 : index
    %c0_635 = arith.constant 0 : index
    %643 = vector.load %arg16[%c1_633, %c0_634, %c0_635] : memref<16x8x128xf32, #tpu.memory_space<vmem>>, vector<1x8x128xf32>
    %644 = vector.shape_cast %643 : vector<1x8x128xf32> to vector<8x128xf32>
    %c2_636 = arith.constant 2 : index
    %c0_637 = arith.constant 0 : index
    %c0_638 = arith.constant 0 : index
    %645 = vector.load %arg6[%c2_636, %c0_637, %c0_638] : memref<3x128x128xf32, #tpu.memory_space<vmem>>, vector<1x128x128xf32>
    %646 = vector.shape_cast %645 : vector<1x128x128xf32> to vector<128x128xf32>
    %cst_639 = arith.constant dense<0.000000e+00> : vector<8x128xf32>
    %647 = tpu.matmul %644, %646, %cst_639 {dimension_numbers = #tpu.dot_dimension_numbers<[1], [0], [0], [1], [0, 0, 1, 1], [], []>} : vector<8x128xf32>, vector<128x128xf32>, vector<8x128xf32> -> vector<8x128xf32>
    %648 = arith.addf %642, %647 : vector<8x128xf32>
    %c0_640 = arith.constant 0 : index
    %c0_641 = arith.constant 0 : index
    %649 = vector.load %arg7[%c0_640, %c0_641] : memref<1x128xf32, #tpu.memory_space<vmem>>, vector<1x128xf32>
    %650 = vector.broadcast %649 : vector<1x128xf32> to vector<8x128xf32>
    %651 = arith.addf %648, %650 : vector<8x128xf32>
    %cst_642 = arith.constant 0.000000e+00 : f32
    %652 = vector.broadcast %cst_642 : f32 to vector<8x128xf32>
    %653 = arith.maximumf %651, %652 : vector<8x128xf32>
    %c0_643 = arith.constant 0 : index
    %c0_644 = arith.constant 0 : index
    %c0_645 = arith.constant 0 : index
    %654 = vector.load %arg15[%c0_643, %c0_644, %c0_645] : memref<16x8x128xf32, #tpu.memory_space<vmem>>, vector<1x8x128xf32>
    %655 = vector.shape_cast %654 : vector<1x8x128xf32> to vector<8x128xf32>
    %656 = vector.shape_cast %653 : vector<8x128xf32> to vector<1x8x128xf32>
    tpu.vector_store %arg15[%c0_643, %c0_644, %c0_645], %656 {strides = array<i32>} : memref<16x8x128xf32, #tpu.memory_space<vmem>>, vector<1x8x128xf32>,
    %cst_646 = arith.constant 0.000000e+00 : f32
    %657 = vector.broadcast %cst_646 : f32 to vector<8x128xf32>
    %c1_647 = arith.constant 1 : index
    %c0_648 = arith.constant 0 : index
    %c0_649 = arith.constant 0 : index
    %658 = vector.load %arg16[%c1_647, %c0_648, %c0_649] : memref<16x8x128xf32, #tpu.memory_space<vmem>>, vector<1x8x128xf32>
    %659 = vector.shape_cast %658 : vector<1x8x128xf32> to vector<8x128xf32>
    %c0_650 = arith.constant 0 : index
    %c0_651 = arith.constant 0 : index
    %c0_652 = arith.constant 0 : index
    %660 = vector.load %arg6[%c0_650, %c0_651, %c0_652] : memref<3x128x128xf32, #tpu.memory_space<vmem>>, vector<1x128x128xf32>
    %661 = vector.shape_cast %660 : vector<1x128x128xf32> to vector<128x128xf32>
    %cst_653 = arith.constant dense<0.000000e+00> : vector<8x128xf32>
    %662 = tpu.matmul %659, %661, %cst_653 {dimension_numbers = #tpu.dot_dimension_numbers<[1], [0], [0], [1], [0, 0, 1, 1], [], []>} : vector<8x128xf32>, vector<128x128xf32>, vector<8x128xf32> -> vector<8x128xf32>
    %663 = arith.addf %657, %662 : vector<8x128xf32>
    %c2_654 = arith.constant 2 : index
    %c0_655 = arith.constant 0 : index
    %c0_656 = arith.constant 0 : index
    %664 = vector.load %arg16[%c2_654, %c0_655, %c0_656] : memref<16x8x128xf32, #tpu.memory_space<vmem>>, vector<1x8x128xf32>
    %665 = vector.shape_cast %664 : vector<1x8x128xf32> to vector<8x128xf32>
    %c1_657 = arith.constant 1 : index
    %c0_658 = arith.constant 0 : index
    %c0_659 = arith.constant 0 : index
    %666 = vector.load %arg6[%c1_657, %c0_658, %c0_659] : memref<3x128x128xf32, #tpu.memory_space<vmem>>, vector<1x128x128xf32>
    %667 = vector.shape_cast %666 : vector<1x128x128xf32> to vector<128x128xf32>
    %cst_660 = arith.constant dense<0.000000e+00> : vector<8x128xf32>
    %668 = tpu.matmul %665, %667, %cst_660 {dimension_numbers = #tpu.dot_dimension_numbers<[1], [0], [0], [1], [0, 0, 1, 1], [], []>} : vector<8x128xf32>, vector<128x128xf32>, vector<8x128xf32> -> vector<8x128xf32>
    %669 = arith.addf %663, %668 : vector<8x128xf32>
    %c3_661 = arith.constant 3 : index
    %c0_662 = arith.constant 0 : index
    %c0_663 = arith.constant 0 : index
    %670 = vector.load %arg16[%c3_661, %c0_662, %c0_663] : memref<16x8x128xf32, #tpu.memory_space<vmem>>, vector<1x8x128xf32>
    %671 = vector.shape_cast %670 : vector<1x8x128xf32> to vector<8x128xf32>
    %c2_664 = arith.constant 2 : index
    %c0_665 = arith.constant 0 : index
    %c0_666 = arith.constant 0 : index
    %672 = vector.load %arg6[%c2_664, %c0_665, %c0_666] : memref<3x128x128xf32, #tpu.memory_space<vmem>>, vector<1x128x128xf32>
    %673 = vector.shape_cast %672 : vector<1x128x128xf32> to vector<128x128xf32>
    %cst_667 = arith.constant dense<0.000000e+00> : vector<8x128xf32>
    %674 = tpu.matmul %671, %673, %cst_667 {dimension_numbers = #tpu.dot_dimension_numbers<[1], [0], [0], [1], [0, 0, 1, 1], [], []>} : vector<8x128xf32>, vector<128x128xf32>, vector<8x128xf32> -> vector<8x128xf32>
    %675 = arith.addf %669, %674 : vector<8x128xf32>
    %c0_668 = arith.constant 0 : index
    %c0_669 = arith.constant 0 : index
    %676 = vector.load %arg7[%c0_668, %c0_669] : memref<1x128xf32, #tpu.memory_space<vmem>>, vector<1x128xf32>
    %677 = vector.broadcast %676 : vector<1x128xf32> to vector<8x128xf32>
    %678 = arith.addf %675, %677 : vector<8x128xf32>
    %cst_670 = arith.constant 0.000000e+00 : f32
    %679 = vector.broadcast %cst_670 : f32 to vector<8x128xf32>
    %680 = arith.maximumf %678, %679 : vector<8x128xf32>
    %c1_671 = arith.constant 1 : index
    %c0_672 = arith.constant 0 : index
    %c0_673 = arith.constant 0 : index
    %681 = vector.load %arg15[%c1_671, %c0_672, %c0_673] : memref<16x8x128xf32, #tpu.memory_space<vmem>>, vector<1x8x128xf32>
    %682 = vector.shape_cast %681 : vector<1x8x128xf32> to vector<8x128xf32>
    %683 = vector.shape_cast %680 : vector<8x128xf32> to vector<1x8x128xf32>
    tpu.vector_store %arg15[%c1_671, %c0_672, %c0_673], %683 {strides = array<i32>} : memref<16x8x128xf32, #tpu.memory_space<vmem>>, vector<1x8x128xf32>,
    %cst_674 = arith.constant 0.000000e+00 : f32
    %684 = vector.broadcast %cst_674 : f32 to vector<8x128xf32>
    %c3_675 = arith.constant 3 : index
    %c0_676 = arith.constant 0 : index
    %c0_677 = arith.constant 0 : index
    %685 = vector.load %arg16[%c3_675, %c0_676, %c0_677] : memref<16x8x128xf32, #tpu.memory_space<vmem>>, vector<1x8x128xf32>
    %686 = vector.shape_cast %685 : vector<1x8x128xf32> to vector<8x128xf32>
    %c0_678 = arith.constant 0 : index
    %c0_679 = arith.constant 0 : index
    %c0_680 = arith.constant 0 : index
    %687 = vector.load %arg6[%c0_678, %c0_679, %c0_680] : memref<3x128x128xf32, #tpu.memory_space<vmem>>, vector<1x128x128xf32>
    %688 = vector.shape_cast %687 : vector<1x128x128xf32> to vector<128x128xf32>
    %cst_681 = arith.constant dense<0.000000e+00> : vector<8x128xf32>
    %689 = tpu.matmul %686, %688, %cst_681 {dimension_numbers = #tpu.dot_dimension_numbers<[1], [0], [0], [1], [0, 0, 1, 1], [], []>} : vector<8x128xf32>, vector<128x128xf32>, vector<8x128xf32> -> vector<8x128xf32>
    %690 = arith.addf %684, %689 : vector<8x128xf32>
    %c4_682 = arith.constant 4 : index
    %c0_683 = arith.constant 0 : index
    %c0_684 = arith.constant 0 : index
    %691 = vector.load %arg16[%c4_682, %c0_683, %c0_684] : memref<16x8x128xf32, #tpu.memory_space<vmem>>, vector<1x8x128xf32>
    %692 = vector.shape_cast %691 : vector<1x8x128xf32> to vector<8x128xf32>
    %c1_685 = arith.constant 1 : index
    %c0_686 = arith.constant 0 : index
    %c0_687 = arith.constant 0 : index
    %693 = vector.load %arg6[%c1_685, %c0_686, %c0_687] : memref<3x128x128xf32, #tpu.memory_space<vmem>>, vector<1x128x128xf32>
    %694 = vector.shape_cast %693 : vector<1x128x128xf32> to vector<128x128xf32>
    %cst_688 = arith.constant dense<0.000000e+00> : vector<8x128xf32>
    %695 = tpu.matmul %692, %694, %cst_688 {dimension_numbers = #tpu.dot_dimension_numbers<[1], [0], [0], [1], [0, 0, 1, 1], [], []>} : vector<8x128xf32>, vector<128x128xf32>, vector<8x128xf32> -> vector<8x128xf32>
    %696 = arith.addf %690, %695 : vector<8x128xf32>
    %c5_689 = arith.constant 5 : index
    %c0_690 = arith.constant 0 : index
    %c0_691 = arith.constant 0 : index
    %697 = vector.load %arg16[%c5_689, %c0_690, %c0_691] : memref<16x8x128xf32, #tpu.memory_space<vmem>>, vector<1x8x128xf32>
    %698 = vector.shape_cast %697 : vector<1x8x128xf32> to vector<8x128xf32>
    %c2_692 = arith.constant 2 : index
    %c0_693 = arith.constant 0 : index
    %c0_694 = arith.constant 0 : index
    %699 = vector.load %arg6[%c2_692, %c0_693, %c0_694] : memref<3x128x128xf32, #tpu.memory_space<vmem>>, vector<1x128x128xf32>
    %700 = vector.shape_cast %699 : vector<1x128x128xf32> to vector<128x128xf32>
    %cst_695 = arith.constant dense<0.000000e+00> : vector<8x128xf32>
    %701 = tpu.matmul %698, %700, %cst_695 {dimension_numbers = #tpu.dot_dimension_numbers<[1], [0], [0], [1], [0, 0, 1, 1], [], []>} : vector<8x128xf32>, vector<128x128xf32>, vector<8x128xf32> -> vector<8x128xf32>
    %702 = arith.addf %696, %701 : vector<8x128xf32>
    %c0_696 = arith.constant 0 : index
    %c0_697 = arith.constant 0 : index
    %703 = vector.load %arg7[%c0_696, %c0_697] : memref<1x128xf32, #tpu.memory_space<vmem>>, vector<1x128xf32>
    %704 = vector.broadcast %703 : vector<1x128xf32> to vector<8x128xf32>
    %705 = arith.addf %702, %704 : vector<8x128xf32>
    %cst_698 = arith.constant 0.000000e+00 : f32
    %706 = vector.broadcast %cst_698 : f32 to vector<8x128xf32>
    %707 = arith.maximumf %705, %706 : vector<8x128xf32>
    %c2_699 = arith.constant 2 : index
    %c0_700 = arith.constant 0 : index
    %c0_701 = arith.constant 0 : index
    %708 = vector.load %arg15[%c2_699, %c0_700, %c0_701] : memref<16x8x128xf32, #tpu.memory_space<vmem>>, vector<1x8x128xf32>
    %709 = vector.shape_cast %708 : vector<1x8x128xf32> to vector<8x128xf32>
    %710 = vector.shape_cast %707 : vector<8x128xf32> to vector<1x8x128xf32>
    tpu.vector_store %arg15[%c2_699, %c0_700, %c0_701], %710 {strides = array<i32>} : memref<16x8x128xf32, #tpu.memory_space<vmem>>, vector<1x8x128xf32>,
    %cst_702 = arith.constant 0.000000e+00 : f32
    %711 = vector.broadcast %cst_702 : f32 to vector<8x128xf32>
    %c5_703 = arith.constant 5 : index
    %c0_704 = arith.constant 0 : index
    %c0_705 = arith.constant 0 : index
    %712 = vector.load %arg16[%c5_703, %c0_704, %c0_705] : memref<16x8x128xf32, #tpu.memory_space<vmem>>, vector<1x8x128xf32>
    %713 = vector.shape_cast %712 : vector<1x8x128xf32> to vector<8x128xf32>
    %c0_706 = arith.constant 0 : index
    %c0_707 = arith.constant 0 : index
    %c0_708 = arith.constant 0 : index
    %714 = vector.load %arg6[%c0_706, %c0_707, %c0_708] : memref<3x128x128xf32, #tpu.memory_space<vmem>>, vector<1x128x128xf32>
    %715 = vector.shape_cast %714 : vector<1x128x128xf32> to vector<128x128xf32>
    %cst_709 = arith.constant dense<0.000000e+00> : vector<8x128xf32>
    %716 = tpu.matmul %713, %715, %cst_709 {dimension_numbers = #tpu.dot_dimension_numbers<[1], [0], [0], [1], [0, 0, 1, 1], [], []>} : vector<8x128xf32>, vector<128x128xf32>, vector<8x128xf32> -> vector<8x128xf32>
    %717 = arith.addf %711, %716 : vector<8x128xf32>
    %c6_710 = arith.constant 6 : index
    %c0_711 = arith.constant 0 : index
    %c0_712 = arith.constant 0 : index
    %718 = vector.load %arg16[%c6_710, %c0_711, %c0_712] : memref<16x8x128xf32, #tpu.memory_space<vmem>>, vector<1x8x128xf32>
    %719 = vector.shape_cast %718 : vector<1x8x128xf32> to vector<8x128xf32>
    %c1_713 = arith.constant 1 : index
    %c0_714 = arith.constant 0 : index
    %c0_715 = arith.constant 0 : index
    %720 = vector.load %arg6[%c1_713, %c0_714, %c0_715] : memref<3x128x128xf32, #tpu.memory_space<vmem>>, vector<1x128x128xf32>
    %721 = vector.shape_cast %720 : vector<1x128x128xf32> to vector<128x128xf32>
    %cst_716 = arith.constant dense<0.000000e+00> : vector<8x128xf32>
    %722 = tpu.matmul %719, %721, %cst_716 {dimension_numbers = #tpu.dot_dimension_numbers<[1], [0], [0], [1], [0, 0, 1, 1], [], []>} : vector<8x128xf32>, vector<128x128xf32>, vector<8x128xf32> -> vector<8x128xf32>
    %723 = arith.addf %717, %722 : vector<8x128xf32>
    %c7_717 = arith.constant 7 : index
    %c0_718 = arith.constant 0 : index
    %c0_719 = arith.constant 0 : index
    %724 = vector.load %arg16[%c7_717, %c0_718, %c0_719] : memref<16x8x128xf32, #tpu.memory_space<vmem>>, vector<1x8x128xf32>
    %725 = vector.shape_cast %724 : vector<1x8x128xf32> to vector<8x128xf32>
    %c2_720 = arith.constant 2 : index
    %c0_721 = arith.constant 0 : index
    %c0_722 = arith.constant 0 : index
    %726 = vector.load %arg6[%c2_720, %c0_721, %c0_722] : memref<3x128x128xf32, #tpu.memory_space<vmem>>, vector<1x128x128xf32>
    %727 = vector.shape_cast %726 : vector<1x128x128xf32> to vector<128x128xf32>
    %cst_723 = arith.constant dense<0.000000e+00> : vector<8x128xf32>
    %728 = tpu.matmul %725, %727, %cst_723 {dimension_numbers = #tpu.dot_dimension_numbers<[1], [0], [0], [1], [0, 0, 1, 1], [], []>} : vector<8x128xf32>, vector<128x128xf32>, vector<8x128xf32> -> vector<8x128xf32>
    %729 = arith.addf %723, %728 : vector<8x128xf32>
    %c0_724 = arith.constant 0 : index
    %c0_725 = arith.constant 0 : index
    %730 = vector.load %arg7[%c0_724, %c0_725] : memref<1x128xf32, #tpu.memory_space<vmem>>, vector<1x128xf32>
    %731 = vector.broadcast %730 : vector<1x128xf32> to vector<8x128xf32>
    %732 = arith.addf %729, %731 : vector<8x128xf32>
    %cst_726 = arith.constant 0.000000e+00 : f32
    %733 = vector.broadcast %cst_726 : f32 to vector<8x128xf32>
    %734 = arith.maximumf %732, %733 : vector<8x128xf32>
    %c3_727 = arith.constant 3 : index
    %c0_728 = arith.constant 0 : index
    %c0_729 = arith.constant 0 : index
    %735 = vector.load %arg15[%c3_727, %c0_728, %c0_729] : memref<16x8x128xf32, #tpu.memory_space<vmem>>, vector<1x8x128xf32>
    %736 = vector.shape_cast %735 : vector<1x8x128xf32> to vector<8x128xf32>
    %737 = vector.shape_cast %734 : vector<8x128xf32> to vector<1x8x128xf32>
    tpu.vector_store %arg15[%c3_727, %c0_728, %c0_729], %737 {strides = array<i32>} : memref<16x8x128xf32, #tpu.memory_space<vmem>>, vector<1x8x128xf32>,
    %cst_730 = arith.constant 0.000000e+00 : f32
    %738 = vector.broadcast %cst_730 : f32 to vector<8x128xf32>
    %c0_731 = arith.constant 0 : index
    %c0_732 = arith.constant 0 : index
    %c0_733 = arith.constant 0 : index
    %739 = vector.load %arg15[%c0_731, %c0_732, %c0_733] : memref<16x8x128xf32, #tpu.memory_space<vmem>>, vector<1x8x128xf32>
    %740 = vector.shape_cast %739 : vector<1x8x128xf32> to vector<8x128xf32>
    %c1_734 = arith.constant 1 : index
    %c0_735 = arith.constant 0 : index
    %c0_736 = arith.constant 0 : index
    %741 = vector.load %arg8[%c1_734, %c0_735, %c0_736] : memref<3x128x128xf32, #tpu.memory_space<vmem>>, vector<1x128x128xf32>
    %742 = vector.shape_cast %741 : vector<1x128x128xf32> to vector<128x128xf32>
    %cst_737 = arith.constant dense<0.000000e+00> : vector<8x128xf32>
    %743 = tpu.matmul %740, %742, %cst_737 {dimension_numbers = #tpu.dot_dimension_numbers<[1], [0], [0], [1], [0, 0, 1, 1], [], []>} : vector<8x128xf32>, vector<128x128xf32>, vector<8x128xf32> -> vector<8x128xf32>
    %744 = arith.addf %738, %743 : vector<8x128xf32>
    %c1_738 = arith.constant 1 : index
    %c0_739 = arith.constant 0 : index
    %c0_740 = arith.constant 0 : index
    %745 = vector.load %arg15[%c1_738, %c0_739, %c0_740] : memref<16x8x128xf32, #tpu.memory_space<vmem>>, vector<1x8x128xf32>
    %746 = vector.shape_cast %745 : vector<1x8x128xf32> to vector<8x128xf32>
    %c2_741 = arith.constant 2 : index
    %c0_742 = arith.constant 0 : index
    %c0_743 = arith.constant 0 : index
    %747 = vector.load %arg8[%c2_741, %c0_742, %c0_743] : memref<3x128x128xf32, #tpu.memory_space<vmem>>, vector<1x128x128xf32>
    %748 = vector.shape_cast %747 : vector<1x128x128xf32> to vector<128x128xf32>
    %cst_744 = arith.constant dense<0.000000e+00> : vector<8x128xf32>
    %749 = tpu.matmul %746, %748, %cst_744 {dimension_numbers = #tpu.dot_dimension_numbers<[1], [0], [0], [1], [0, 0, 1, 1], [], []>} : vector<8x128xf32>, vector<128x128xf32>, vector<8x128xf32> -> vector<8x128xf32>
    %750 = arith.addf %744, %749 : vector<8x128xf32>
    %c0_745 = arith.constant 0 : index
    %c0_746 = arith.constant 0 : index
    %751 = vector.load %arg9[%c0_745, %c0_746] : memref<1x128xf32, #tpu.memory_space<vmem>>, vector<1x128xf32>
    %752 = vector.broadcast %751 : vector<1x128xf32> to vector<8x128xf32>
    %753 = arith.addf %750, %752 : vector<8x128xf32>
    %cst_747 = arith.constant 0.000000e+00 : f32
    %754 = vector.broadcast %cst_747 : f32 to vector<8x128xf32>
    %755 = arith.maximumf %753, %754 : vector<8x128xf32>
    %c0_748 = arith.constant 0 : index
    %c0_749 = arith.constant 0 : index
    %c0_750 = arith.constant 0 : index
    %756 = vector.load %arg16[%c0_748, %c0_749, %c0_750] : memref<16x8x128xf32, #tpu.memory_space<vmem>>, vector<1x8x128xf32>
    %757 = vector.shape_cast %756 : vector<1x8x128xf32> to vector<8x128xf32>
    %758 = vector.shape_cast %755 : vector<8x128xf32> to vector<1x8x128xf32>
    tpu.vector_store %arg16[%c0_748, %c0_749, %c0_750], %758 {strides = array<i32>} : memref<16x8x128xf32, #tpu.memory_space<vmem>>, vector<1x8x128xf32>,
    %cst_751 = arith.constant 0.000000e+00 : f32
    %759 = vector.broadcast %cst_751 : f32 to vector<8x128xf32>
    %c1_752 = arith.constant 1 : index
    %c0_753 = arith.constant 0 : index
    %c0_754 = arith.constant 0 : index
    %760 = vector.load %arg15[%c1_752, %c0_753, %c0_754] : memref<16x8x128xf32, #tpu.memory_space<vmem>>, vector<1x8x128xf32>
    %761 = vector.shape_cast %760 : vector<1x8x128xf32> to vector<8x128xf32>
    %c0_755 = arith.constant 0 : index
    %c0_756 = arith.constant 0 : index
    %c0_757 = arith.constant 0 : index
    %762 = vector.load %arg8[%c0_755, %c0_756, %c0_757] : memref<3x128x128xf32, #tpu.memory_space<vmem>>, vector<1x128x128xf32>
    %763 = vector.shape_cast %762 : vector<1x128x128xf32> to vector<128x128xf32>
    %cst_758 = arith.constant dense<0.000000e+00> : vector<8x128xf32>
    %764 = tpu.matmul %761, %763, %cst_758 {dimension_numbers = #tpu.dot_dimension_numbers<[1], [0], [0], [1], [0, 0, 1, 1], [], []>} : vector<8x128xf32>, vector<128x128xf32>, vector<8x128xf32> -> vector<8x128xf32>
    %765 = arith.addf %759, %764 : vector<8x128xf32>
    %c2_759 = arith.constant 2 : index
    %c0_760 = arith.constant 0 : index
    %c0_761 = arith.constant 0 : index
    %766 = vector.load %arg15[%c2_759, %c0_760, %c0_761] : memref<16x8x128xf32, #tpu.memory_space<vmem>>, vector<1x8x128xf32>
    %767 = vector.shape_cast %766 : vector<1x8x128xf32> to vector<8x128xf32>
    %c1_762 = arith.constant 1 : index
    %c0_763 = arith.constant 0 : index
    %c0_764 = arith.constant 0 : index
    %768 = vector.load %arg8[%c1_762, %c0_763, %c0_764] : memref<3x128x128xf32, #tpu.memory_space<vmem>>, vector<1x128x128xf32>
    %769 = vector.shape_cast %768 : vector<1x128x128xf32> to vector<128x128xf32>
    %cst_765 = arith.constant dense<0.000000e+00> : vector<8x128xf32>
    %770 = tpu.matmul %767, %769, %cst_765 {dimension_numbers = #tpu.dot_dimension_numbers<[1], [0], [0], [1], [0, 0, 1, 1], [], []>} : vector<8x128xf32>, vector<128x128xf32>, vector<8x128xf32> -> vector<8x128xf32>
    %771 = arith.addf %765, %770 : vector<8x128xf32>
    %c3_766 = arith.constant 3 : index
    %c0_767 = arith.constant 0 : index
    %c0_768 = arith.constant 0 : index
    %772 = vector.load %arg15[%c3_766, %c0_767, %c0_768] : memref<16x8x128xf32, #tpu.memory_space<vmem>>, vector<1x8x128xf32>
    %773 = vector.shape_cast %772 : vector<1x8x128xf32> to vector<8x128xf32>
    %c2_769 = arith.constant 2 : index
    %c0_770 = arith.constant 0 : index
    %c0_771 = arith.constant 0 : index
    %774 = vector.load %arg8[%c2_769, %c0_770, %c0_771] : memref<3x128x128xf32, #tpu.memory_space<vmem>>, vector<1x128x128xf32>
    %775 = vector.shape_cast %774 : vector<1x128x128xf32> to vector<128x128xf32>
    %cst_772 = arith.constant dense<0.000000e+00> : vector<8x128xf32>
    %776 = tpu.matmul %773, %775, %cst_772 {dimension_numbers = #tpu.dot_dimension_numbers<[1], [0], [0], [1], [0, 0, 1, 1], [], []>} : vector<8x128xf32>, vector<128x128xf32>, vector<8x128xf32> -> vector<8x128xf32>
    %777 = arith.addf %771, %776 : vector<8x128xf32>
    %c0_773 = arith.constant 0 : index
    %c0_774 = arith.constant 0 : index
    %778 = vector.load %arg9[%c0_773, %c0_774] : memref<1x128xf32, #tpu.memory_space<vmem>>, vector<1x128xf32>
    %779 = vector.broadcast %778 : vector<1x128xf32> to vector<8x128xf32>
    %780 = arith.addf %777, %779 : vector<8x128xf32>
    %cst_775 = arith.constant 0.000000e+00 : f32
    %781 = vector.broadcast %cst_775 : f32 to vector<8x128xf32>
    %782 = arith.maximumf %780, %781 : vector<8x128xf32>
    %c1_776 = arith.constant 1 : index
    %c0_777 = arith.constant 0 : index
    %c0_778 = arith.constant 0 : index
    %783 = vector.load %arg16[%c1_776, %c0_777, %c0_778] : memref<16x8x128xf32, #tpu.memory_space<vmem>>, vector<1x8x128xf32>
    %784 = vector.shape_cast %783 : vector<1x8x128xf32> to vector<8x128xf32>
    %785 = vector.shape_cast %782 : vector<8x128xf32> to vector<1x8x128xf32>
    tpu.vector_store %arg16[%c1_776, %c0_777, %c0_778], %785 {strides = array<i32>} : memref<16x8x128xf32, #tpu.memory_space<vmem>>, vector<1x8x128xf32>,
    %cst_779 = arith.constant 0.000000e+00 : f32
    %786 = vector.broadcast %cst_779 : f32 to vector<8x128xf32>
    %c0_780 = arith.constant 0 : index
    %c0_781 = arith.constant 0 : index
    %c0_782 = arith.constant 0 : index
    %787 = vector.load %arg16[%c0_780, %c0_781, %c0_782] : memref<16x8x128xf32, #tpu.memory_space<vmem>>, vector<1x8x128xf32>
    %788 = vector.shape_cast %787 : vector<1x8x128xf32> to vector<8x128xf32>
    %c1_783 = arith.constant 1 : index
    %c0_784 = arith.constant 0 : index
    %c0_785 = arith.constant 0 : index
    %789 = vector.load %arg10[%c1_783, %c0_784, %c0_785] : memref<3x128x128xf32, #tpu.memory_space<vmem>>, vector<1x128x128xf32>
    %790 = vector.shape_cast %789 : vector<1x128x128xf32> to vector<128x128xf32>
    %cst_786 = arith.constant dense<0.000000e+00> : vector<8x128xf32>
    %791 = tpu.matmul %788, %790, %cst_786 {dimension_numbers = #tpu.dot_dimension_numbers<[1], [0], [0], [1], [0, 0, 1, 1], [], []>} : vector<8x128xf32>, vector<128x128xf32>, vector<8x128xf32> -> vector<8x128xf32>
    %792 = arith.addf %786, %791 : vector<8x128xf32>
    %c1_787 = arith.constant 1 : index
    %c0_788 = arith.constant 0 : index
    %c0_789 = arith.constant 0 : index
    %793 = vector.load %arg16[%c1_787, %c0_788, %c0_789] : memref<16x8x128xf32, #tpu.memory_space<vmem>>, vector<1x8x128xf32>
    %794 = vector.shape_cast %793 : vector<1x8x128xf32> to vector<8x128xf32>
    %c2_790 = arith.constant 2 : index
    %c0_791 = arith.constant 0 : index
    %c0_792 = arith.constant 0 : index
    %795 = vector.load %arg10[%c2_790, %c0_791, %c0_792] : memref<3x128x128xf32, #tpu.memory_space<vmem>>, vector<1x128x128xf32>
    %796 = vector.shape_cast %795 : vector<1x128x128xf32> to vector<128x128xf32>
    %cst_793 = arith.constant dense<0.000000e+00> : vector<8x128xf32>
    %797 = tpu.matmul %794, %796, %cst_793 {dimension_numbers = #tpu.dot_dimension_numbers<[1], [0], [0], [1], [0, 0, 1, 1], [], []>} : vector<8x128xf32>, vector<128x128xf32>, vector<8x128xf32> -> vector<8x128xf32>
    %798 = arith.addf %792, %797 : vector<8x128xf32>
    %c0_794 = arith.constant 0 : index
    %c0_795 = arith.constant 0 : index
    %799 = vector.load %arg11[%c0_794, %c0_795] : memref<1x128xf32, #tpu.memory_space<vmem>>, vector<1x128xf32>
    %800 = vector.broadcast %799 : vector<1x128xf32> to vector<8x128xf32>
    %801 = arith.addf %798, %800 : vector<8x128xf32>
    %cst_796 = arith.constant 0.000000e+00 : f32
    %802 = vector.broadcast %cst_796 : f32 to vector<8x128xf32>
    %803 = arith.maximumf %801, %802 : vector<8x128xf32>
    %c0_797 = arith.constant 0 : index
    %c0_798 = arith.constant 0 : index
    %c0_799 = arith.constant 0 : index
    %804 = vector.load %arg15[%c0_797, %c0_798, %c0_799] : memref<16x8x128xf32, #tpu.memory_space<vmem>>, vector<1x8x128xf32>
    %805 = vector.shape_cast %804 : vector<1x8x128xf32> to vector<8x128xf32>
    %806 = vector.shape_cast %803 : vector<8x128xf32> to vector<1x8x128xf32>
    tpu.vector_store %arg15[%c0_797, %c0_798, %c0_799], %806 {strides = array<i32>} : memref<16x8x128xf32, #tpu.memory_space<vmem>>, vector<1x8x128xf32>,
    %cst_800 = arith.constant 0.000000e+00 : f32
    %807 = vector.broadcast %cst_800 : f32 to vector<8x128xf32>
    %c0_801 = arith.constant 0 : index
    %c0_802 = arith.constant 0 : index
    %c0_803 = arith.constant 0 : index
    %808 = vector.load %arg15[%c0_801, %c0_802, %c0_803] : memref<16x8x128xf32, #tpu.memory_space<vmem>>, vector<1x8x128xf32>
    %809 = vector.shape_cast %808 : vector<1x8x128xf32> to vector<8x128xf32>
    %c0_804 = arith.constant 0 : index
    %c0_805 = arith.constant 0 : index
    %810 = vector.load %arg12[%c0_804, %c0_805] : memref<128x128xf32, #tpu.memory_space<vmem>>, vector<128x128xf32>
    %cst_806 = arith.constant dense<0.000000e+00> : vector<8x128xf32>
    %811 = tpu.matmul %809, %810, %cst_806 {dimension_numbers = #tpu.dot_dimension_numbers<[1], [0], [0], [1], [0, 0, 1, 1], [], []>} : vector<8x128xf32>, vector<128x128xf32>, vector<8x128xf32> -> vector<8x128xf32>
    %812 = arith.addf %807, %811 : vector<8x128xf32>
    %c0_807 = arith.constant 0 : index
    %c0_808 = arith.constant 0 : index
    %813 = vector.load %arg13[%c0_807, %c0_808] : memref<1x128xf32, #tpu.memory_space<vmem>>, vector<1x128xf32>
    %814 = vector.broadcast %813 : vector<1x128xf32> to vector<8x128xf32>
    %815 = arith.addf %812, %814 : vector<8x128xf32>
    %cst_809 = arith.constant 0.000000e+00 : f32
    %816 = vector.broadcast %cst_809 : f32 to vector<8x128xf32>
    %817 = arith.maximumf %815, %816 : vector<8x128xf32>
    %c0_810 = arith.constant 0 : index
    %c0_811 = arith.constant 0 : index
    %818 = vector.load %arg14[%c0_810, %c0_811] : memref<8x128xf32, #tpu.memory_space<vmem>>, vector<8x128xf32>
    tpu.vector_store %arg14[%c0_810, %c0_811], %817 {strides = array<i32>} : memref<8x128xf32, #tpu.memory_space<vmem>>, vector<8x128xf32>,
    return
  }
  func.func @transform_0(%arg0: i32) -> (i32, i32, i32) {
    %c0_i32 = arith.constant 0 : i32
    %c0_i32_0 = arith.constant 0 : i32
    %c0_i32_1 = arith.constant 0 : i32
    return %c0_i32, %arg0, %c0_i32_0 : i32, i32, i32
  }
  func.func @transform_1(%arg0: i32) -> (i32, i32, i32) {
    %c0_i32 = arith.constant 0 : i32
    %c0_i32_0 = arith.constant 0 : i32
    %c0_i32_1 = arith.constant 0 : i32
    %c0_i32_2 = arith.constant 0 : i32
    return %c0_i32, %c0_i32_0, %c0_i32_1 : i32, i32, i32
  }
  func.func @transform_2(%arg0: i32) -> (i32, i32) {
    %c0_i32 = arith.constant 0 : i32
    %c0_i32_0 = arith.constant 0 : i32
    %c0_i32_1 = arith.constant 0 : i32
    return %c0_i32, %c0_i32_0 : i32, i32
  }
  func.func @transform_3(%arg0: i32) -> (i32, i32, i32) {
    %c0_i32 = arith.constant 0 : i32
    %c0_i32_0 = arith.constant 0 : i32
    %c0_i32_1 = arith.constant 0 : i32
    %c0_i32_2 = arith.constant 0 : i32
    return %c0_i32, %c0_i32_0, %c0_i32_1 : i32, i32, i32
  }
  func.func @transform_4(%arg0: i32) -> (i32, i32) {
    %c0_i32 = arith.constant 0 : i32
    %c0_i32_0 = arith.constant 0 : i32
    %c0_i32_1 = arith.constant 0 : i32
    return %c0_i32, %c0_i32_0 : i32, i32
  }
  func.func @transform_5(%arg0: i32) -> (i32, i32, i32) {
    %c0_i32 = arith.constant 0 : i32
    %c0_i32_0 = arith.constant 0 : i32
    %c0_i32_1 = arith.constant 0 : i32
    %c0_i32_2 = arith.constant 0 : i32
    return %c0_i32, %c0_i32_0, %c0_i32_1 : i32, i32, i32
  }
  func.func @transform_6(%arg0: i32) -> (i32, i32) {
    %c0_i32 = arith.constant 0 : i32
    %c0_i32_0 = arith.constant 0 : i32
    %c0_i32_1 = arith.constant 0 : i32
    return %c0_i32, %c0_i32_0 : i32, i32
  }
  func.func @transform_7(%arg0: i32) -> (i32, i32, i32) {
    %c0_i32 = arith.constant 0 : i32
    %c0_i32_0 = arith.constant 0 : i32
    %c0_i32_1 = arith.constant 0 : i32
    %c0_i32_2 = arith.constant 0 : i32
    return %c0_i32, %c0_i32_0, %c0_i32_1 : i32, i32, i32
  }
  func.func @transform_8(%arg0: i32) -> (i32, i32) {
    %c0_i32 = arith.constant 0 : i32
    %c0_i32_0 = arith.constant 0 : i32
    %c0_i32_1 = arith.constant 0 : i32
    return %c0_i32, %c0_i32_0 : i32, i32
  }
  func.func @transform_9(%arg0: i32) -> (i32, i32, i32) {
    %c0_i32 = arith.constant 0 : i32
    %c0_i32_0 = arith.constant 0 : i32
    %c0_i32_1 = arith.constant 0 : i32
    %c0_i32_2 = arith.constant 0 : i32
    return %c0_i32, %c0_i32_0, %c0_i32_1 : i32, i32, i32
  }
  func.func @transform_10(%arg0: i32) -> (i32, i32) {
    %c0_i32 = arith.constant 0 : i32
    %c0_i32_0 = arith.constant 0 : i32
    %c0_i32_1 = arith.constant 0 : i32
    return %c0_i32, %c0_i32_0 : i32, i32
  }
  func.func @transform_11(%arg0: i32) -> (i32, i32) {
    %c0_i32 = arith.constant 0 : i32
    %c0_i32_0 = arith.constant 0 : i32
    %c0_i32_1 = arith.constant 0 : i32
    return %c0_i32, %c0_i32_0 : i32, i32
  }
  func.func @transform_12(%arg0: i32) -> (i32, i32) {
    %c0_i32 = arith.constant 0 : i32
    %c0_i32_0 = arith.constant 0 : i32
    %c0_i32_1 = arith.constant 0 : i32
    return %c0_i32, %c0_i32_0 : i32, i32
  }
  func.func @transform_13(%arg0: i32) -> (i32, i32) {
    %c0_i32 = arith.constant 0 : i32
    %c0_i32_0 = arith.constant 0 : i32
    return %arg0, %c0_i32 : i32, i32
  }
}

</mosaic_0001>

<llo_original>
// kernel: _lambda_.1
$region0: #{_lambda_.1}
  #allocation0 [shape = 'u32[]', space=smem, size = 0x4, offset = 0x4, fixed_abs, tag = 'smem constant byte address 0x4 - core index']
  #allocation1 [shape = 'u32[144,128]{1,0:T(1,128)}', space=vmem, size = 0x12000, scoped, tag = 'internal scratch']
  #allocation2 [shape = 'f32[16,8,128]{2,1,0:T(8,128)}', space=vmem, size = 0x10000, scoped, tag = 'scratch operand']
  #allocation3 [shape = 'f32[16,8,128]{2,1,0:T(8,128)}', space=vmem, size = 0x10000, scoped, tag = 'scratch operand']
  %s0 = inlined_call_operand.vmem [shape: f32[32,8,96], index: 0, kind: input, shape index: {}]
  %s1 = inlined_call_operand.hbm [shape: f32[3,96,128], index: 1, kind: input, shape index: {}]
  %s2 = inlined_call_operand.vmem [shape: f32[1,128], index: 2, kind: input, shape index: {}]
  %s3 = inlined_call_operand.hbm [shape: f32[3,128,128], index: 3, kind: input, shape index: {}]
  %s4 = inlined_call_operand.vmem [shape: f32[1,128], index: 4, kind: input, shape index: {}]
  %s5 = inlined_call_operand.hbm [shape: f32[3,128,128], index: 5, kind: input, shape index: {}]
  %s6 = inlined_call_operand.vmem [shape: f32[1,128], index: 6, kind: input, shape index: {}]
  %s7 = inlined_call_operand.vmem [shape: f32[3,128,128], index: 7, kind: input, shape index: {}]
  %s8 = inlined_call_operand.vmem [shape: f32[1,128], index: 8, kind: input, shape index: {}]
  %s9 = inlined_call_operand.vmem [shape: f32[3,128,128], index: 9, kind: input, shape index: {}]
  %s10 = inlined_call_operand.vmem [shape: f32[1,128], index: 10, kind: input, shape index: {}]
  %s11 = inlined_call_operand.vmem [shape: f32[128,128], index: 11, kind: input, shape index: {}]
  %s12 = inlined_call_operand.vmem [shape: f32[1,128], index: 12, kind: input, shape index: {}]
  %s13 = inlined_call_operand.vmem [shape: f32[8,128], index: 13, kind: output, shape index: {}]
  %s14 = sld [smem:[#allocation0]]
  $region74: #{_lambda_.1} parent=0
    _
  %s16 = ssub.s32 1, %s14
  %s17 = scalar_select 0, %s16, %s14
  $region1: #{_lambda_.1} parent=0
    #allocation4 [shape = 'u8[147456]{0}', space=vmem, size = 0x24000, scoped, tag = 'input window, operand 1, single buffered']
    #allocation5 [shape = 's32[1]{0}', space=sflag, size = 0x4, scoped, tag = 'scoped memory for _lambda_.1']
    #allocation6 [shape = 'u8[196608]{0}', space=vmem, size = 0x30000, scoped, tag = 'input window, operand 3, single buffered']
    #allocation7 [shape = 's32[1]{0}', space=sflag, size = 0x4, scoped, tag = 'scoped memory for _lambda_.1']
    #allocation8 [shape = 'u8[196608]{0}', space=vmem, size = 0x30000, scoped, tag = 'input window, operand 5, single buffered']
    %18 = vsyncpa [#allocation5], 0
    %19 = vsyncpa [#allocation7], 0
    // Predicated region
    $region2: #{_lambda_.1} parent=1 // pred_check
      _
    $region3: #{_lambda_.1} parent=1 // pred_check_branch
      %21 = sbr.rel (0) target = $region5
    $region4: #{_lambda_.1} parent=1 // pred_region
      _
    $region5: #{_lambda_.1} parent=1 // pred_fallthru
      _
    // Predicated region
    $region6: #{_lambda_.1} parent=1 // pred_check
      _
    $region7: #{_lambda_.1} parent=1 // pred_check_branch
      %23 = sbr.rel (0) target = $region9
    $region8: #{_lambda_.1} parent=1 // pred_region
      %s25 = ssub.s32 4608, 4608
      %26 = vsyncadd [#allocation5], %s25
      %s27 = sshll.u32 [#allocation4], 4
      %s28 = int_to_ptr.vmem [resolvable:$true] %s27
      %33 = dma.hbm_to_vmem [thread:$0]  %s1, 4608, %s28, [#allocation5], 128, 128, 8
    $region9: #{_lambda_.1} parent=1 // pred_fallthru
      _
    // Predicated region
    $region10: #{_lambda_.1} parent=1 // pred_check
      _
    $region11: #{_lambda_.1} parent=1 // pred_check_branch
      %35 = sbr.rel (0) target = $region13
    $region12: #{_lambda_.1} parent=1 // pred_region
      _
    $region13: #{_lambda_.1} parent=1 // pred_fallthru
      _
    // Predicated region
    $region14: #{_lambda_.1} parent=1 // pred_check
      _
    $region15: #{_lambda_.1} parent=1 // pred_check_branch
      %37 = sbr.rel (0) target = $region17
    $region16: #{_lambda_.1} parent=1 // pred_region
      %s39 = ssub.s32 6144, 6144
      %40 = vsyncadd [#allocation7], %s39
      %s41 = sshll.u32 [#allocation6], 4
      %s42 = int_to_ptr.vmem [resolvable:$true] %s41
      %47 = dma.hbm_to_vmem [thread:$0]  %s3, 6144, %s42, [#allocation7], 128, 128, 8
    $region17: #{_lambda_.1} parent=1 // pred_fallthru
      _
    // Predicated region
    $region18: #{_lambda_.1} parent=1 // pred_check
      _
    $region19: #{_lambda_.1} parent=1 // pred_check_branch
      %49 = sbr.rel (0) target = $region21
    $region20: #{_lambda_.1} parent=1 // pred_region
      _
    $region21: #{_lambda_.1} parent=1 // pred_fallthru
      _
    // Predicated region
    $region22: #{_lambda_.1} parent=1 // pred_check
      _
    $region23: #{_lambda_.1} parent=1 // pred_check_branch
      %51 = sbr.rel (0) target = $region25
    $region24: #{_lambda_.1} parent=1 // pred_region
      %s53 = ssub.s32 6144, 6144
      %54 = vsyncadd [#allocation7], %s53
      %s55 = sshll.u32 [#allocation8], 4
      %s56 = int_to_ptr.vmem [resolvable:$true] %s55
      %61 = dma.hbm_to_vmem [thread:$0]  %s5, 6144, %s56, [#allocation7], 128, 128, 8
    $region25: #{_lambda_.1} parent=1 // pred_fallthru
      _
    // Predicated region
    $region26: #{_lambda_.1} parent=1 // pred_check
      _
    $region27: #{_lambda_.1} parent=1 // pred_check_branch
      %63 = sbr.rel (0) target = $region29
    $region28: #{_lambda_.1} parent=1 // pred_region
      _
    $region29: #{_lambda_.1} parent=1 // pred_fallthru
      _
    // Predicated region
    $region30: #{_lambda_.1} parent=1 // pred_check
      _
    $region31: #{_lambda_.1} parent=1 // pred_check_branch
      %65 = sbr.rel (0) target = $region33
    $region32: #{_lambda_.1} parent=1 // pred_region
      _
    $region33: #{_lambda_.1} parent=1 // pred_fallthru
      _
    // Predicated region
    $region34: #{_lambda_.1} parent=1 // pred_check
      _
    $region35: #{_lambda_.1} parent=1 // pred_check_branch
      %67 = sbr.rel (0) target = $region37
    $region36: #{_lambda_.1} parent=1 // pred_region
      _
    $region37: #{_lambda_.1} parent=1 // pred_fallthru
      _
    // Predicated region
    $region38: #{_lambda_.1} parent=1 // pred_check
      _
    $region39: #{_lambda_.1} parent=1 // pred_check_branch
      %69 = sbr.rel (0) target = $region41
    $region40: #{_lambda_.1} parent=1 // pred_region
      _
    $region41: #{_lambda_.1} parent=1 // pred_fallthru
      _
    // Predicated region
    $region42: #{_lambda_.1} parent=1 // pred_check
      _
    $region43: #{_lambda_.1} parent=1 // pred_check_branch
      %71 = sbr.rel (0) target = $region45
    $region44: #{_lambda_.1} parent=1 // pred_region
      _
    $region45: #{_lambda_.1} parent=1 // pred_fallthru
      _
    // Predicated region
    $region46: #{_lambda_.1} parent=1 // pred_check
      _
    $region47: #{_lambda_.1} parent=1 // pred_check_branch
      %73 = sbr.rel (0) target = $region49
    $region48: #{_lambda_.1} parent=1 // pred_region
      _
    $region49: #{_lambda_.1} parent=1 // pred_fallthru
      _
    // Predicated region
    $region50: #{_lambda_.1} parent=1 // pred_check
      _
    $region51: #{_lambda_.1} parent=1 // pred_check_branch
      %75 = sbr.rel (0) target = $region53
    $region52: #{_lambda_.1} parent=1 // pred_region
      _
    $region53: #{_lambda_.1} parent=1 // pred_fallthru
      _
    // Predicated region
    $region54: #{_lambda_.1} parent=1 // pred_check
      _
    $region55: #{_lambda_.1} parent=1 // pred_check_branch
      %77 = sbr.rel (0) target = $region57
    $region56: #{_lambda_.1} parent=1 // pred_region
      %78 = dma.done [#allocation5], 4608
    $region57: #{_lambda_.1} parent=1 // pred_fallthru
      _
    // Predicated region
    $region58: #{_lambda_.1} parent=1 // pred_check
      _
    $region59: #{_lambda_.1} parent=1 // pred_check_branch
      %80 = sbr.rel (0) target = $region61
    $region60: #{_lambda_.1} parent=1 // pred_region
      %81 = dma.done [#allocation7], 6144
    $region61: #{_lambda_.1} parent=1 // pred_fallthru
      _
    // Predicated region
    $region62: #{_lambda_.1} parent=1 // pred_check
      _
    $region63: #{_lambda_.1} parent=1 // pred_check_branch
      %83 = sbr.rel (0) target = $region65
    $region64: #{_lambda_.1} parent=1 // pred_region
      %84 = dma.done [#allocation7], 6144
    $region65: #{_lambda_.1} parent=1 // pred_fallthru
      _
    %v85 = vld [vmem:[%s0] sm:$0xff]
    %s86 = scalar_lea.vmem [#allocation4], 96
    %v87 = vld [vmem:[%s86] sm:$0xff]
    %v88 = vld [vmem:[%s86 + $0x8] sm:$0xff]
    %v89 = vld [vmem:[%s86 + $0x10] sm:$0xff]
    %v90 = vld [vmem:[%s86 + $0x18] sm:$0xff]
    %v91 = vld [vmem:[%s86 + $0x20] sm:$0xff]
    %v92 = vld [vmem:[%s86 + $0x28] sm:$0xff]
    %v93 = vld [vmem:[%s86 + $0x30] sm:$0xff]
    %v94 = vld [vmem:[%s86 + $0x38] sm:$0xff]
    %v95 = vld [vmem:[%s86 + $0x40] sm:$0xff]
    %v96 = vld [vmem:[%s86 + $0x48] sm:$0xff]
    %v97 = vld [vmem:[%s86 + $0x50] sm:$0xff]
    %v98 = vld [vmem:[%s86 + $0x58] sm:$0xff]
    %s99 = scalar_lea.vmem %s0, 8
    %v100 = vld [vmem:[%s99] sm:$0xff]
    %s101 = scalar_lea.vmem [#allocation4], 192
    %v102 = vld [vmem:[%s101] sm:$0xff]
    %v103 = vld [vmem:[%s101 + $0x8] sm:$0xff]
    %v104 = vld [vmem:[%s101 + $0x10] sm:$0xff]
    %v105 = vld [vmem:[%s101 + $0x18] sm:$0xff]
    %v106 = vld [vmem:[%s101 + $0x20] sm:$0xff]
    %v107 = vld [vmem:[%s101 + $0x28] sm:$0xff]
    %v108 = vld [vmem:[%s101 + $0x30] sm:$0xff]
    %v109 = vld [vmem:[%s101 + $0x38] sm:$0xff]
    %v110 = vld [vmem:[%s101 + $0x40] sm:$0xff]
    %v111 = vld [vmem:[%s101 + $0x48] sm:$0xff]
    %v112 = vld [vmem:[%s101 + $0x50] sm:$0xff]
    %v113 = vld [vmem:[%s101 + $0x58] sm:$0xff]
    %vm114 = vcmask 785408
    %v116 = vsel %vm114, %v100, 0
    %118 = vmatprep.subr.mxu0 0.0
    %119 = vmatpush1.msra.mxu0 %v102
    %120 = vmatprep.subr.mxu0 0.0
    %121 = vmatpush1.msra.mxu0 %v103
    %122 = vmatprep.subr.mxu0 0.0
    %123 = vmatpush1.msra.mxu0 %v104
    %124 = vmatprep.subr.mxu0 0.0
    %125 = vmatpush1.msra.mxu0 %v105
    %126 = vmatprep.subr.mxu0 0.0
    %127 = vmatpush1.msra.mxu0 %v106
    %128 = vmatprep.subr.mxu0 0.0
    %129 = vmatpush1.msra.mxu0 %v107
    %130 = vmatprep.subr.mxu0 0.0
    %131 = vmatpush1.msra.mxu0 %v108
    %132 = vmatprep.subr.mxu0 0.0
    %133 = vmatpush1.msra.mxu0 %v109
    %134 = vmatprep.subr.mxu0 0.0
    %135 = vmatpush1.msra.mxu0 %v110
    %136 = vmatprep.subr.mxu0 0.0
    %137 = vmatpush1.msra.mxu0 %v111
    %138 = vmatprep.subr.mxu0 0.0
    %139 = vmatpush1.msra.mxu0 %v112
    %140 = vmatprep.subr.mxu0 0.0
    %141 = vmatpush1.msra.mxu0 %v113
    %142 = vmatprep.subr.mxu0 0.0
    %143 = vmatpush1.msra.mxu0 0.0
    %144 = vmatprep.subr.mxu0 0.0
    %145 = vmatpush1.msra.mxu0 0.0
    %146 = vmatprep.subr.mxu0 0.0
    %147 = vmatpush1.msra.mxu0 0.0
    %148 = vmatprep.subr.mxu0 0.0
    %149 = vmatpush1.msra.mxu0 0.0
    %150 = vmatprep.subr.mxu0 0.0
    %151 = vmatpush1.msra.mxu0 0.0
    %152 = vmatprep.subr.mxu0 0.0
    %153 = vmatpush1.msra.mxu0 0.0
    %154 = vmatprep.subr.mxu0 0.0
    %155 = vmatpush1.msra.mxu0 0.0
    %156 = vmatprep.subr.mxu0 0.0
    %157 = vmatpush1.msra.mxu0 0.0
    %158 = vmatprep.subr.mxu0 0.0
    %159 = vmatpush1.msra.mxu0 0.0
    %160 = vmatprep.subr.mxu0 0.0
    %161 = vmatpush1.msra.mxu0 0.0
    %162 = vmatprep.subr.mxu0 0.0
    %163 = vmatpush1.msra.mxu0 0.0
    %164 = vmatprep.subr.mxu0 0.0
    %165 = vmatpush1.msra.mxu0 0.0
    %166 = vmatprep.subr.mxu0 0.0
    %167 = vmatpush1.msra.mxu0 0.0
    %168 = vmatprep.subr.mxu0 0.0
    %169 = vmatpush1.msra.mxu0 0.0
    %170 = vmatprep.subr.mxu0 0.0
    %171 = vmatpush1.msra.mxu0 0.0
    %172 = vmatprep.subr.mxu0 0.0
    %173 = vmatpush1.msra.mxu0 0.0
    %174 = vmatprep.subr.mxu0 0.0
    %175 = vmatpush1.msra.mxu0 0.0
    %176 = vmatprep.subr.mxu0 0.0
    %177 = vmatpush1.msra.mxu0 0.0
    %178 = vmatprep.subr.mxu0 0.0
    %179 = vmatpush1.msra.mxu0 0.0
    %180 = vmatprep.subr.mxu0 0.0
    %181 = vmatpush1.msra.mxu0 0.0
    %182 = vmatprep.mubr.f32.mxu0 0.0
    %183 = vmatmul.mubr.f32.gmra.mrb[0].mxu0 %v116
    %v184 = vpop.f32.mrb[0].mxu0
    %v185 = vadd.f32 0.0, %v184
    %v186 = vpop.f32.mrb[0].mxu0
    %187 = vdwg.mxu0
    %v189 = vsel %vm114, %v85, 0
    %191 = vmatprep.subr.mxu0 0.0
    %192 = vmatpush1.msra.mxu0 %v87
    %193 = vmatprep.subr.mxu0 0.0
    %194 = vmatpush1.msra.mxu0 %v88
    %195 = vmatprep.subr.mxu0 0.0
    %196 = vmatpush1.msra.mxu0 %v89
    %197 = vmatprep.subr.mxu0 0.0
    %198 = vmatpush1.msra.mxu0 %v90
    %199 = vmatprep.subr.mxu0 0.0
    %200 = vmatpush1.msra.mxu0 %v91
    %201 = vmatprep.subr.mxu0 0.0
    %202 = vmatpush1.msra.mxu0 %v92
    %203 = vmatprep.subr.mxu0 0.0
    %204 = vmatpush1.msra.mxu0 %v93
    %205 = vmatprep.subr.mxu0 0.0
    %206 = vmatpush1.msra.mxu0 %v94
    %207 = vmatprep.subr.mxu0 0.0
    %208 = vmatpush1.msra.mxu0 %v95
    %209 = vmatprep.subr.mxu0 0.0
    %210 = vmatpush1.msra.mxu0 %v96
    %211 = vmatprep.subr.mxu0 0.0
    %212 = vmatpush1.msra.mxu0 %v97
    %213 = vmatprep.subr.mxu0 0.0
    %214 = vmatpush1.msra.mxu0 %v98
    %215 = vmatprep.subr.mxu0 0.0
    %216 = vmatpush1.msra.mxu0 0.0
    %217 = vmatprep.subr.mxu0 0.0
    %218 = vmatpush1.msra.mxu0 0.0
    %219 = vmatprep.subr.mxu0 0.0
    %220 = vmatpush1.msra.mxu0 0.0
    %221 = vmatprep.subr.mxu0 0.0
    %222 = vmatpush1.msra.mxu0 0.0
    %223 = vmatprep.subr.mxu0 0.0
    %224 = vmatpush1.msra.mxu0 0.0
    %225 = vmatprep.subr.mxu0 0.0
    %226 = vmatpush1.msra.mxu0 0.0
    %227 = vmatprep.subr.mxu0 0.0
    %228 = vmatpush1.msra.mxu0 0.0
    %229 = vmatprep.subr.mxu0 0.0
    %230 = vmatpush1.msra.mxu0 0.0
    %231 = vmatprep.subr.mxu0 0.0
    %232 = vmatpush1.msra.mxu0 0.0
    %233 = vmatprep.subr.mxu0 0.0
    %234 = vmatpush1.msra.mxu0 0.0
    %235 = vmatprep.subr.mxu0 0.0
    %236 = vmatpush1.msra.mxu0 0.0
    %237 = vmatprep.subr.mxu0 0.0
    %238 = vmatpush1.msra.mxu0 0.0
    %239 = vmatprep.subr.mxu0 0.0
    %240 = vmatpush1.msra.mxu0 0.0
    %241 = vmatprep.subr.mxu0 0.0
    %242 = vmatpush1.msra.mxu0 0.0
    %243 = vmatprep.subr.mxu0 0.0
    %244 = vmatpush1.msra.mxu0 0.0
    %245 = vmatprep.subr.mxu0 0.0
    %246 = vmatpush1.msra.mxu0 0.0
    %247 = vmatprep.subr.mxu0 0.0
    %248 = vmatpush1.msra.mxu0 0.0
    %249 = vmatprep.subr.mxu0 0.0
    %250 = vmatpush1.msra.mxu0 0.0
    %251 = vmatprep.subr.mxu0 0.0
    %252 = vmatpush1.msra.mxu0 0.0
    %253 = vmatprep.subr.mxu0 0.0
    %254 = vmatpush1.msra.mxu0 0.0
    %255 = vmatprep.mubr.f32.mxu0 0.0
    %256 = vmatmul.mubr.f32.gmra.mrb[0].mxu0 %v189
    %v257 = vpop.f32.mrb[0].mxu0
    %v258 = vadd.f32 %v185, %v257
    %v259 = vpop.f32.mrb[0].mxu0
    %260 = vdwg.mxu0
    %v261 = vld [vmem:[%s2] sm:$0x1]
    %v263 = vlaneseq
    %v264 = vshrl.u32 %v263, 7
    %v265 = vsub.s32 0, %v264
    %v266 = vrot.slane %v261, %v265
    %v268 = vadd.f32 %v258, %v266
    %v269 = vmax.f32 %v268, 0.0
    %270 = vst [vmem:[#allocation2] sm:$0xff] %v269
    %v271 = vld [vmem:[%s99] sm:$0xff]
    %v272 = vld [vmem:[#allocation4] sm:$0xff]
    %v273 = vld [vmem:[#allocation4 + $0x8] sm:$0xff]
    %v274 = vld [vmem:[#allocation4 + $0x10] sm:$0xff]
    %v275 = vld [vmem:[#allocation4 + $0x18] sm:$0xff]
    %v276 = vld [vmem:[#allocation4 + $0x20] sm:$0xff]
    %v277 = vld [vmem:[#allocation4 + $0x28] sm:$0xff]
    %v278 = vld [vmem:[#allocation4 + $0x30] sm:$0xff]
    %v279 = vld [vmem:[#allocation4 + $0x38] sm:$0xff]
    %v280 = vld [vmem:[#allocation4 + $0x40] sm:$0xff]
    %v281 = vld [vmem:[#allocation4 + $0x48] sm:$0xff]
    %v282 = vld [vmem:[#allocation4 + $0x50] sm:$0xff]
    %v283 = vld [vmem:[#allocation4 + $0x58] sm:$0xff]
    %s284 = scalar_lea.vmem %s0, 16
    %v285 = vld [vmem:[%s284] sm:$0xff]
    %v286 = vld [vmem:[%s86] sm:$0xff]
    %v287 = vld [vmem:[%s86 + $0x8] sm:$0xff]
    %v288 = vld [vmem:[%s86 + $0x10] sm:$0xff]
    %v289 = vld [vmem:[%s86 + $0x18] sm:$0xff]
    %v290 = vld [vmem:[%s86 + $0x20] sm:$0xff]
    %v291 = vld [vmem:[%s86 + $0x28] sm:$0xff]
    %v292 = vld [vmem:[%s86 + $0x30] sm:$0xff]
    %v293 = vld [vmem:[%s86 + $0x38] sm:$0xff]
    %v294 = vld [vmem:[%s86 + $0x40] sm:$0xff]
    %v295 = vld [vmem:[%s86 + $0x48] sm:$0xff]
    %v296 = vld [vmem:[%s86 + $0x50] sm:$0xff]
    %v297 = vld [vmem:[%s86 + $0x58] sm:$0xff]
    %v299 = vsel %vm114, %v285, 0
    %301 = vmatprep.subr.mxu0 0.0
    %302 = vmatpush1.msra.mxu0 %v286
    %303 = vmatprep.subr.mxu0 0.0
    %304 = vmatpush1.msra.mxu0 %v287
    %305 = vmatprep.subr.mxu0 0.0
    %306 = vmatpush1.msra.mxu0 %v288
    %307 = vmatprep.subr.mxu0 0.0
    %308 = vmatpush1.msra.mxu0 %v289
    %309 = vmatprep.subr.mxu0 0.0
    %310 = vmatpush1.msra.mxu0 %v290
    %311 = vmatprep.subr.mxu0 0.0
    %312 = vmatpush1.msra.mxu0 %v291
    %313 = vmatprep.subr.mxu0 0.0
    %314 = vmatpush1.msra.mxu0 %v292
    %315 = vmatprep.subr.mxu0 0.0
    %316 = vmatpush1.msra.mxu0 %v293
    %317 = vmatprep.subr.mxu0 0.0
    %318 = vmatpush1.msra.mxu0 %v294
    %319 = vmatprep.subr.mxu0 0.0
    %320 = vmatpush1.msra.mxu0 %v295
    %321 = vmatprep.subr.mxu0 0.0
    %322 = vmatpush1.msra.mxu0 %v296
    %323 = vmatprep.subr.mxu0 0.0
    %324 = vmatpush1.msra.mxu0 %v297
    %325 = vmatprep.subr.mxu0 0.0
    %326 = vmatpush1.msra.mxu0 0.0
    %327 = vmatprep.subr.mxu0 0.0
    %328 = vmatpush1.msra.mxu0 0.0
    %329 = vmatprep.subr.mxu0 0.0
    %330 = vmatpush1.msra.mxu0 0.0
    %331 = vmatprep.subr.mxu0 0.0
    %332 = vmatpush1.msra.mxu0 0.0
    %333 = vmatprep.subr.mxu0 0.0
    %334 = vmatpush1.msra.mxu0 0.0
    %335 = vmatprep.subr.mxu0 0.0
    %336 = vmatpush1.msra.mxu0 0.0
    %337 = vmatprep.subr.mxu0 0.0
    %338 = vmatpush1.msra.mxu0 0.0
    %339 = vmatprep.subr.mxu0 0.0
    %340 = vmatpush1.msra.mxu0 0.0
    %341 = vmatprep.subr.mxu0 0.0
    %342 = vmatpush1.msra.mxu0 0.0
    %343 = vmatprep.subr.mxu0 0.0
    %344 = vmatpush1.msra.mxu0 0.0
    %345 = vmatprep.subr.mxu0 0.0
    %346 = vmatpush1.msra.mxu0 0.0
    %347 = vmatprep.subr.mxu0 0.0
    %348 = vmatpush1.msra.mxu0 0.0
    %349 = vmatprep.subr.mxu0 0.0
    %350 = vmatpush1.msra.mxu0 0.0
    %351 = vmatprep.subr.mxu0 0.0
    %352 = vmatpush1.msra.mxu0 0.0
    %353 = vmatprep.subr.mxu0 0.0
    %354 = vmatpush1.msra.mxu0 0.0
    %355 = vmatprep.subr.mxu0 0.0
    %356 = vmatpush1.msra.mxu0 0.0
    %357 = vmatprep.subr.mxu0 0.0
    %358 = vmatpush1.msra.mxu0 0.0
    %359 = vmatprep.subr.mxu0 0.0
    %360 = vmatpush1.msra.mxu0 0.0
    %361 = vmatprep.subr.mxu0 0.0
    %362 = vmatpush1.msra.mxu0 0.0
    %363 = vmatprep.subr.mxu0 0.0
    %364 = vmatpush1.msra.mxu0 0.0
    %365 = vmatprep.mubr.f32.mxu0 0.0
    %366 = vmatmul.mubr.f32.gmra.mrb[0].mxu0 %v299
    %v367 = vpop.f32.mrb[0].mxu0
    %v368 = vadd.f32 0.0, %v367
    %v369 = vpop.f32.mrb[0].mxu0
    %370 = vdwg.mxu0
    %v372 = vsel %vm114, %v271, 0
    %374 = vmatprep.subr.mxu0 0.0
    %375 = vmatpush1.msra.mxu0 %v272
    %376 = vmatprep.subr.mxu0 0.0
    %377 = vmatpush1.msra.mxu0 %v273
    %378 = vmatprep.subr.mxu0 0.0
    %379 = vmatpush1.msra.mxu0 %v274
    %380 = vmatprep.subr.mxu0 0.0
    %381 = vmatpush1.msra.mxu0 %v275
    %382 = vmatprep.subr.mxu0 0.0
    %383 = vmatpush1.msra.mxu0 %v276
    %384 = vmatprep.subr.mxu0 0.0
    %385 = vmatpush1.msra.mxu0 %v277
    %386 = vmatprep.subr.mxu0 0.0
    %387 = vmatpush1.msra.mxu0 %v278
    %388 = vmatprep.subr.mxu0 0.0
    %389 = vmatpush1.msra.mxu0 %v279
    %390 = vmatprep.subr.mxu0 0.0
    %391 = vmatpush1.msra.mxu0 %v280
    %392 = vmatprep.subr.mxu0 0.0
    %393 = vmatpush1.msra.mxu0 %v281
    %394 = vmatprep.subr.mxu0 0.0
    %395 = vmatpush1.msra.mxu0 %v282
    %396 = vmatprep.subr.mxu0 0.0
    %397 = vmatpush1.msra.mxu0 %v283
    %398 = vmatprep.subr.mxu0 0.0
    %399 = vmatpush1.msra.mxu0 0.0
    %400 = vmatprep.subr.mxu0 0.0
    %401 = vmatpush1.msra.mxu0 0.0
    %402 = vmatprep.subr.mxu0 0.0
    %403 = vmatpush1.msra.mxu0 0.0
    %404 = vmatprep.subr.mxu0 0.0
    %405 = vmatpush1.msra.mxu0 0.0
    %406 = vmatprep.subr.mxu0 0.0
    %407 = vmatpush1.msra.mxu0 0.0
    %408 = vmatprep.subr.mxu0 0.0
    %409 = vmatpush1.msra.mxu0 0.0
    %410 = vmatprep.subr.mxu0 0.0
    %411 = vmatpush1.msra.mxu0 0.0
    %412 = vmatprep.subr.mxu0 0.0
    %413 = vmatpush1.msra.mxu0 0.0
    %414 = vmatprep.subr.mxu0 0.0
    %415 = vmatpush1.msra.mxu0 0.0
    %416 = vmatprep.subr.mxu0 0.0
    %417 = vmatpush1.msra.mxu0 0.0
    %418 = vmatprep.subr.mxu0 0.0
    %419 = vmatpush1.msra.mxu0 0.0
    %420 = vmatprep.subr.mxu0 0.0
    %421 = vmatpush1.msra.mxu0 0.0
    %422 = vmatprep.subr.mxu0 0.0
    %423 = vmatpush1.msra.mxu0 0.0
    %424 = vmatprep.subr.mxu0 0.0
    %425 = vmatpush1.msra.mxu0 0.0
    %426 = vmatprep.subr.mxu0 0.0
    %427 = vmatpush1.msra.mxu0 0.0
    %428 = vmatprep.subr.mxu0 0.0
    %429 = vmatpush1.msra.mxu0 0.0
    %430 = vmatprep.subr.mxu0 0.0
    %431 = vmatpush1.msra.mxu0 0.0
    %432 = vmatprep.subr.mxu0 0.0
    %433 = vmatpush1.msra.mxu0 0.0
    %434 = vmatprep.subr.mxu0 0.0
    %435 = vmatpush1.msra.mxu0 0.0
    %436 = vmatprep.subr.mxu0 0.0
    %437 = vmatpush1.msra.mxu0 0.0
    %438 = vmatprep.mubr.f32.mxu0 0.0
    %439 = vmatmul.mubr.f32.gmra.mrb[0].mxu0 %v372
    %v440 = vpop.f32.mrb[0].mxu0
    %v441 = vadd.f32 %v368, %v440
    %v442 = vpop.f32.mrb[0].mxu0
    %443 = vdwg.mxu0
    %s444 = scalar_lea.vmem %s0, 24
    %v445 = vld [vmem:[%s444] sm:$0xff]
    %v446 = vld [vmem:[%s101] sm:$0xff]
    %v447 = vld [vmem:[%s101 + $0x8] sm:$0xff]
    %v448 = vld [vmem:[%s101 + $0x10] sm:$0xff]
    %v449 = vld [vmem:[%s101 + $0x18] sm:$0xff]
    %v450 = vld [vmem:[%s101 + $0x20] sm:$0xff]
    %v451 = vld [vmem:[%s101 + $0x28] sm:$0xff]
    %v452 = vld [vmem:[%s101 + $0x30] sm:$0xff]
    %v453 = vld [vmem:[%s101 + $0x38] sm:$0xff]
    %v454 = vld [vmem:[%s101 + $0x40] sm:$0xff]
    %v455 = vld [vmem:[%s101 + $0x48] sm:$0xff]
    %v456 = vld [vmem:[%s101 + $0x50] sm:$0xff]
    %v457 = vld [vmem:[%s101 + $0x58] sm:$0xff]
    %v459 = vsel %vm114, %v445, 0
    %461 = vmatprep.subr.mxu0 0.0
    %462 = vmatpush1.msra.mxu0 %v446
    %463 = vmatprep.subr.mxu0 0.0
    %464 = vmatpush1.msra.mxu0 %v447
    %465 = vmatprep.subr.mxu0 0.0
    %466 = vmatpush1.msra.mxu0 %v448
    %467 = vmatprep.subr.mxu0 0.0
    %468 = vmatpush1.msra.mxu0 %v449
    %469 = vmatprep.subr.mxu0 0.0
    %470 = vmatpush1.msra.mxu0 %v450
    %471 = vmatprep.subr.mxu0 0.0
    %472 = vmatpush1.msra.mxu0 %v451
    %473 = vmatprep.subr.mxu0 0.0
    %474 = vmatpush1.msra.mxu0 %v452
    %475 = vmatprep.subr.mxu0 0.0
    %476 = vmatpush1.msra.mxu0 %v453
    %477 = vmatprep.subr.mxu0 0.0
    %478 = vmatpush1.msra.mxu0 %v454
    %479 = vmatprep.subr.mxu0 0.0
    %480 = vmatpush1.msra.mxu0 %v455
    %481 = vmatprep.subr.mxu0 0.0
    %482 = vmatpush1.msra.mxu0 %v456
    %483 = vmatprep.subr.mxu0 0.0
    %484 = vmatpush1.msra.mxu0 %v457
    %485 = vmatprep.subr.mxu0 0.0
    %486 = vmatpush1.msra.mxu0 0.0
    %487 = vmatprep.subr.mxu0 0.0
    %488 = vmatpush1.msra.mxu0 0.0
    %489 = vmatprep.subr.mxu0 0.0
    %490 = vmatpush1.msra.mxu0 0.0
    %491 = vmatprep.subr.mxu0 0.0
    %492 = vmatpush1.msra.mxu0 0.0
    %493 = vmatprep.subr.mxu0 0.0
    %494 = vmatpush1.msra.mxu0 0.0
    %495 = vmatprep.subr.mxu0 0.0
    %496 = vmatpush1.msra.mxu0 0.0
    %497 = vmatprep.subr.mxu0 0.0
    %498 = vmatpush1.msra.mxu0 0.0
    %499 = vmatprep.subr.mxu0 0.0
    %500 = vmatpush1.msra.mxu0 0.0
    %501 = vmatprep.subr.mxu0 0.0
    %502 = vmatpush1.msra.mxu0 0.0
    %503 = vmatprep.subr.mxu0 0.0
    %504 = vmatpush1.msra.mxu0 0.0
    %505 = vmatprep.subr.mxu0 0.0
    %506 = vmatpush1.msra.mxu0 0.0
    %507 = vmatprep.subr.mxu0 0.0
    %508 = vmatpush1.msra.mxu0 0.0
    %509 = vmatprep.subr.mxu0 0.0
    %510 = vmatpush1.msra.mxu0 0.0
    %511 = vmatprep.subr.mxu0 0.0
    %512 = vmatpush1.msra.mxu0 0.0
    %513 = vmatprep.subr.mxu0 0.0
    %514 = vmatpush1.msra.mxu0 0.0
    %515 = vmatprep.subr.mxu0 0.0
    %516 = vmatpush1.msra.mxu0 0.0
    %517 = vmatprep.subr.mxu0 0.0
    %518 = vmatpush1.msra.mxu0 0.0
    %519 = vmatprep.subr.mxu0 0.0
    %520 = vmatpush1.msra.mxu0 0.0
    %521 = vmatprep.subr.mxu0 0.0
    %522 = vmatpush1.msra.mxu0 0.0
    %523 = vmatprep.subr.mxu0 0.0
    %524 = vmatpush1.msra.mxu0 0.0
    %525 = vmatprep.mubr.f32.mxu0 0.0
    %526 = vmatmul.mubr.f32.gmra.mrb[0].mxu0 %v459
    %v527 = vpop.f32.mrb[0].mxu0
    %v528 = vadd.f32 0.0, %v527
    %v529 = vpop.f32.mrb[0].mxu0
    %530 = vdwg.mxu0
    %v531 = vadd.f32 %v441, %v528
    %v532 = vld [vmem:[%s2] sm:$0x1]
    %v534 = vlaneseq
    %v535 = vshrl.u32 %v534, 7
    %v536 = vsub.s32 0, %v535
    %v537 = vrot.slane %v532, %v536
    %v539 = vadd.f32 %v531, %v537
    %v540 = vmax.f32 %v539, 0.0
    %s541 = scalar_lea.vmem [#allocation2], 8
    %542 = vst [vmem:[%s541] sm:$0xff] %v540
    %v543 = vld [vmem:[%s444] sm:$0xff]
    %v544 = vld [vmem:[#allocation4] sm:$0xff]
    %v545 = vld [vmem:[#allocation4 + $0x8] sm:$0xff]
    %v546 = vld [vmem:[#allocation4 + $0x10] sm:$0xff]
    %v547 = vld [vmem:[#allocation4 + $0x18] sm:$0xff]
    %v548 = vld [vmem:[#allocation4 + $0x20] sm:$0xff]
    %v549 = vld [vmem:[#allocation4 + $0x28] sm:$0xff]
    %v550 = vld [vmem:[#allocation4 + $0x30] sm:$0xff]
    %v551 = vld [vmem:[#allocation4 + $0x38] sm:$0xff]
    %v552 = vld [vmem:[#allocation4 + $0x40] sm:$0xff]
    %v553 = vld [vmem:[#allocation4 + $0x48] sm:$0xff]
    %v554 = vld [vmem:[#allocation4 + $0x50] sm:$0xff]
    %v555 = vld [vmem:[#allocation4 + $0x58] sm:$0xff]
    %s556 = scalar_lea.vmem %s0, 32
    %v557 = vld [vmem:[%s556] sm:$0xff]
    %v558 = vld [vmem:[%s86] sm:$0xff]
    %v559 = vld [vmem:[%s86 + $0x8] sm:$0xff]
    %v560 = vld [vmem:[%s86 + $0x10] sm:$0xff]
    %v561 = vld [vmem:[%s86 + $0x18] sm:$0xff]
    %v562 = vld [vmem:[%s86 + $0x20] sm:$0xff]
    %v563 = vld [vmem:[%s86 + $0x28] sm:$0xff]
    %v564 = vld [vmem:[%s86 + $0x30] sm:$0xff]
    %v565 = vld [vmem:[%s86 + $0x38] sm:$0xff]
    %v566 = vld [vmem:[%s86 + $0x40] sm:$0xff]
    %v567 = vld [vmem:[%s86 + $0x48] sm:$0xff]
    %v568 = vld [vmem:[%s86 + $0x50] sm:$0xff]
    %v569 = vld [vmem:[%s86 + $0x58] sm:$0xff]
    %v571 = vsel %vm114, %v557, 0
    %573 = vmatprep.subr.mxu0 0.0
    %574 = vmatpush1.msra.mxu0 %v558
    %575 = vmatprep.subr.mxu0 0.0
    %576 = vmatpush1.msra.mxu0 %v559
    %577 = vmatprep.subr.mxu0 0.0
    %578 = vmatpush1.msra.mxu0 %v560
    %579 = vmatprep.subr.mxu0 0.0
    %580 = vmatpush1.msra.mxu0 %v561
    %581 = vmatprep.subr.mxu0 0.0
    %582 = vmatpush1.msra.mxu0 %v562
    %583 = vmatprep.subr.mxu0 0.0
    %584 = vmatpush1.msra.mxu0 %v563
    %585 = vmatprep.subr.mxu0 0.0
    %586 = vmatpush1.msra.mxu0 %v564
    %587 = vmatprep.subr.mxu0 0.0
    %588 = vmatpush1.msra.mxu0 %v565
    %589 = vmatprep.subr.mxu0 0.0
    %590 = vmatpush1.msra.mxu0 %v566
    %591 = vmatprep.subr.mxu0 0.0
    %592 = vmatpush1.msra.mxu0 %v567
    %593 = vmatprep.subr.mxu0 0.0
    %594 = vmatpush1.msra.mxu0 %v568
    %595 = vmatprep.subr.mxu0 0.0
    %596 = vmatpush1.msra.mxu0 %v569
    %597 = vmatprep.subr.mxu0 0.0
    %598 = vmatpush1.msra.mxu0 0.0
    %599 = vmatprep.subr.mxu0 0.0
    %600 = vmatpush1.msra.mxu0 0.0
    %601 = vmatprep.subr.mxu0 0.0
    %602 = vmatpush1.msra.mxu0 0.0
    %603 = vmatprep.subr.mxu0 0.0
    %604 = vmatpush1.msra.mxu0 0.0
    %605 = vmatprep.subr.mxu0 0.0
    %606 = vmatpush1.msra.mxu0 0.0
    %607 = vmatprep.subr.mxu0 0.0
    %608 = vmatpush1.msra.mxu0 0.0
    %609 = vmatprep.subr.mxu0 0.0
    %610 = vmatpush1.msra.mxu0 0.0
    %611 = vmatprep.subr.mxu0 0.0
    %612 = vmatpush1.msra.mxu0 0.0
    %613 = vmatprep.subr.mxu0 0.0
    %614 = vmatpush1.msra.mxu0 0.0
    %615 = vmatprep.subr.mxu0 0.0
    %616 = vmatpush1.msra.mxu0 0.0
    %617 = vmatprep.subr.mxu0 0.0
    %618 = vmatpush1.msra.mxu0 0.0
    %619 = vmatprep.subr.mxu0 0.0
    %620 = vmatpush1.msra.mxu0 0.0
    %621 = vmatprep.subr.mxu0 0.0
    %622 = vmatpush1.msra.mxu0 0.0
    %623 = vmatprep.subr.mxu0 0.0
    %624 = vmatpush1.msra.mxu0 0.0
    %625 = vmatprep.subr.mxu0 0.0
    %626 = vmatpush1.msra.mxu0 0.0
    %627 = vmatprep.subr.mxu0 0.0
    %628 = vmatpush1.msra.mxu0 0.0
    %629 = vmatprep.subr.mxu0 0.0
    %630 = vmatpush1.msra.mxu0 0.0
    %631 = vmatprep.subr.mxu0 0.0
    %632 = vmatpush1.msra.mxu0 0.0
    %633 = vmatprep.subr.mxu0 0.0
    %634 = vmatpush1.msra.mxu0 0.0
    %635 = vmatprep.subr.mxu0 0.0
    %636 = vmatpush1.msra.mxu0 0.0
    %637 = vmatprep.mubr.f32.mxu0 0.0
    %638 = vmatmul.mubr.f32.gmra.mrb[0].mxu0 %v571
    %v639 = vpop.f32.mrb[0].mxu0
    %v640 = vadd.f32 0.0, %v639
    %v641 = vpop.f32.mrb[0].mxu0
    %642 = vdwg.mxu0
    %v644 = vsel %vm114, %v543, 0
    %646 = vmatprep.subr.mxu0 0.0
    %647 = vmatpush1.msra.mxu0 %v544
    %648 = vmatprep.subr.mxu0 0.0
    %649 = vmatpush1.msra.mxu0 %v545
    %650 = vmatprep.subr.mxu0 0.0
    %651 = vmatpush1.msra.mxu0 %v546
    %652 = vmatprep.subr.mxu0 0.0
    %653 = vmatpush1.msra.mxu0 %v547
    %654 = vmatprep.subr.mxu0 0.0
    %655 = vmatpush1.msra.mxu0 %v548
    %656 = vmatprep.subr.mxu0 0.0
    %657 = vmatpush1.msra.mxu0 %v549
    %658 = vmatprep.subr.mxu0 0.0
    %659 = vmatpush1.msra.mxu0 %v550
    %660 = vmatprep.subr.mxu0 0.0
    %661 = vmatpush1.msra.mxu0 %v551
    %662 = vmatprep.subr.mxu0 0.0
    %663 = vmatpush1.msra.mxu0 %v552
    %664 = vmatprep.subr.mxu0 0.0
    %665 = vmatpush1.msra.mxu0 %v553
    %666 = vmatprep.subr.mxu0 0.0
    %667 = vmatpush1.msra.mxu0 %v554
    %668 = vmatprep.subr.mxu0 0.0
    %669 = vmatpush1.msra.mxu0 %v555
    %670 = vmatprep.subr.mxu0 0.0
    %671 = vmatpush1.msra.mxu0 0.0
    %672 = vmatprep.subr.mxu0 0.0
    %673 = vmatpush1.msra.mxu0 0.0
    %674 = vmatprep.subr.mxu0 0.0
    %675 = vmatpush1.msra.mxu0 0.0
    %676 = vmatprep.subr.mxu0 0.0
    %677 = vmatpush1.msra.mxu0 0.0
    %678 = vmatprep.subr.mxu0 0.0
    %679 = vmatpush1.msra.mxu0 0.0
    %680 = vmatprep.subr.mxu0 0.0
    %681 = vmatpush1.msra.mxu0 0.0
    %682 = vmatprep.subr.mxu0 0.0
    %683 = vmatpush1.msra.mxu0 0.0
    %684 = vmatprep.subr.mxu0 0.0
    %685 = vmatpush1.msra.mxu0 0.0
    %686 = vmatprep.subr.mxu0 0.0
    %687 = vmatpush1.msra.mxu0 0.0
    %688 = vmatprep.subr.mxu0 0.0
    %689 = vmatpush1.msra.mxu0 0.0
    %690 = vmatprep.subr.mxu0 0.0
    %691 = vmatpush1.msra.mxu0 0.0
    %692 = vmatprep.subr.mxu0 0.0
    %693 = vmatpush1.msra.mxu0 0.0
    %694 = vmatprep.subr.mxu0 0.0
    %695 = vmatpush1.msra.mxu0 0.0
    %696 = vmatprep.subr.mxu0 0.0
    %697 = vmatpush1.msra.mxu0 0.0
    %698 = vmatprep.subr.mxu0 0.0
    %699 = vmatpush1.msra.mxu0 0.0
    %700 = vmatprep.subr.mxu0 0.0
    %701 = vmatpush1.msra.mxu0 0.0
    %702 = vmatprep.subr.mxu0 0.0
    %703 = vmatpush1.msra.mxu0 0.0
    %704 = vmatprep.subr.mxu0 0.0
    %705 = vmatpush1.msra.mxu0 0.0
    %706 = vmatprep.subr.mxu0 0.0
    %707 = vmatpush1.msra.mxu0 0.0
    %708 = vmatprep.subr.mxu0 0.0
    %709 = vmatpush1.msra.mxu0 0.0
    %710 = vmatprep.mubr.f32.mxu0 0.0
    %711 = vmatmul.mubr.f32.gmra.mrb[0].mxu0 %v644
    %v712 = vpop.f32.mrb[0].mxu0
    %v713 = vadd.f32 %v640, %v712
    %v714 = vpop.f32.mrb[0].mxu0
    %715 = vdwg.mxu0
    %s716 = scalar_lea.vmem %s0, 40
    %v717 = vld [vmem:[%s716] sm:$0xff]
    %v718 = vld [vmem:[%s101] sm:$0xff]
    %v719 = vld [vmem:[%s101 + $0x8] sm:$0xff]
    %v720 = vld [vmem:[%s101 + $0x10] sm:$0xff]
    %v721 = vld [vmem:[%s101 + $0x18] sm:$0xff]
    %v722 = vld [vmem:[%s101 + $0x20] sm:$0xff]
    %v723 = vld [vmem:[%s101 + $0x28] sm:$0xff]
    %v724 = vld [vmem:[%s101 + $0x30] sm:$0xff]
    %v725 = vld [vmem:[%s101 + $0x38] sm:$0xff]
    %v726 = vld [vmem:[%s101 + $0x40] sm:$0xff]
    %v727 = vld [vmem:[%s101 + $0x48] sm:$0xff]
    %v728 = vld [vmem:[%s101 + $0x50] sm:$0xff]
    %v729 = vld [vmem:[%s101 + $0x58] sm:$0xff]
    %v731 = vsel %vm114, %v717, 0
    %733 = vmatprep.subr.mxu0 0.0
    %734 = vmatpush1.msra.mxu0 %v718
    %735 = vmatprep.subr.mxu0 0.0
    %736 = vmatpush1.msra.mxu0 %v719
    %737 = vmatprep.subr.mxu0 0.0
    %738 = vmatpush1.msra.mxu0 %v720
    %739 = vmatprep.subr.mxu0 0.0
    %740 = vmatpush1.msra.mxu0 %v721
    %741 = vmatprep.subr.mxu0 0.0
    %742 = vmatpush1.msra.mxu0 %v722
    %743 = vmatprep.subr.mxu0 0.0
    %744 = vmatpush1.msra.mxu0 %v723
    %745 = vmatprep.subr.mxu0 0.0
    %746 = vmatpush1.msra.mxu0 %v724
    %747 = vmatprep.subr.mxu0 0.0
    %748 = vmatpush1.msra.mxu0 %v725
    %749 = vmatprep.subr.mxu0 0.0
    %750 = vmatpush1.msra.mxu0 %v726
    %751 = vmatprep.subr.mxu0 0.0
    %752 = vmatpush1.msra.mxu0 %v727
    %753 = vmatprep.subr.mxu0 0.0
    %754 = vmatpush1.msra.mxu0 %v728
    %755 = vmatprep.subr.mxu0 0.0
    %756 = vmatpush1.msra.mxu0 %v729
    %757 = vmatprep.subr.mxu0 0.0
    %758 = vmatpush1.msra.mxu0 0.0
    %759 = vmatprep.subr.mxu0 0.0
    %760 = vmatpush1.msra.mxu0 0.0
    %761 = vmatprep.subr.mxu0 0.0
    %762 = vmatpush1.msra.mxu0 0.0
    %763 = vmatprep.subr.mxu0 0.0
    %764 = vmatpush1.msra.mxu0 0.0
    %765 = vmatprep.subr.mxu0 0.0
    %766 = vmatpush1.msra.mxu0 0.0
    %767 = vmatprep.subr.mxu0 0.0
    %768 = vmatpush1.msra.mxu0 0.0
    %769 = vmatprep.subr.mxu0 0.0
    %770 = vmatpush1.msra.mxu0 0.0
    %771 = vmatprep.subr.mxu0 0.0
    %772 = vmatpush1.msra.mxu0 0.0
    %773 = vmatprep.subr.mxu0 0.0
    %774 = vmatpush1.msra.mxu0 0.0
    %775 = vmatprep.subr.mxu0 0.0
    %776 = vmatpush1.msra.mxu0 0.0
    %777 = vmatprep.subr.mxu0 0.0
    %778 = vmatpush1.msra.mxu0 0.0
    %779 = vmatprep.subr.mxu0 0.0
    %780 = vmatpush1.msra.mxu0 0.0
    %781 = vmatprep.subr.mxu0 0.0
    %782 = vmatpush1.msra.mxu0 0.0
    %783 = vmatprep.subr.mxu0 0.0
    %784 = vmatpush1.msra.mxu0 0.0
    %785 = vmatprep.subr.mxu0 0.0
    %786 = vmatpush1.msra.mxu0 0.0
    %787 = vmatprep.subr.mxu0 0.0
    %788 = vmatpush1.msra.mxu0 0.0
    %789 = vmatprep.subr.mxu0 0.0
    %790 = vmatpush1.msra.mxu0 0.0
    %791 = vmatprep.subr.mxu0 0.0
    %792 = vmatpush1.msra.mxu0 0.0
    %793 = vmatprep.subr.mxu0 0.0
    %794 = vmatpush1.msra.mxu0 0.0
    %795 = vmatprep.subr.mxu0 0.0
    %796 = vmatpush1.msra.mxu0 0.0
    %797 = vmatprep.mubr.f32.mxu0 0.0
    %798 = vmatmul.mubr.f32.gmra.mrb[0].mxu0 %v731
    %v799 = vpop.f32.mrb[0].mxu0
    %v800 = vadd.f32 0.0, %v799
    %v801 = vpop.f32.mrb[0].mxu0
    %802 = vdwg.mxu0
    %v803 = vadd.f32 %v713, %v800
    %v804 = vld [vmem:[%s2] sm:$0x1]
    %v806 = vlaneseq
    %v807 = vshrl.u32 %v806, 7
    %v808 = vsub.s32 0, %v807
    %v809 = vrot.slane %v804, %v808
    %v811 = vadd.f32 %v803, %v809
    %v812 = vmax.f32 %v811, 0.0
    %s813 = scalar_lea.vmem [#allocation2], 16
    %814 = vst [vmem:[%s813] sm:$0xff] %v812
    %v815 = vld [vmem:[%s716] sm:$0xff]
    %v816 = vld [vmem:[#allocation4] sm:$0xff]
    %v817 = vld [vmem:[#allocation4 + $0x8] sm:$0xff]
    %v818 = vld [vmem:[#allocation4 + $0x10] sm:$0xff]
    %v819 = vld [vmem:[#allocation4 + $0x18] sm:$0xff]
    %v820 = vld [vmem:[#allocation4 + $0x20] sm:$0xff]
    %v821 = vld [vmem:[#allocation4 + $0x28] sm:$0xff]
    %v822 = vld [vmem:[#allocation4 + $0x30] sm:$0xff]
    %v823 = vld [vmem:[#allocation4 + $0x38] sm:$0xff]
    %v824 = vld [vmem:[#allocation4 + $0x40] sm:$0xff]
    %v825 = vld [vmem:[#allocation4 + $0x48] sm:$0xff]
    %v826 = vld [vmem:[#allocation4 + $0x50] sm:$0xff]
    %v827 = vld [vmem:[#allocation4 + $0x58] sm:$0xff]
    %s828 = scalar_lea.vmem %s0, 48
    %v829 = vld [vmem:[%s828] sm:$0xff]
    %v830 = vld [vmem:[%s86] sm:$0xff]
    %v831 = vld [vmem:[%s86 + $0x8] sm:$0xff]
    %v832 = vld [vmem:[%s86 + $0x10] sm:$0xff]
    %v833 = vld [vmem:[%s86 + $0x18] sm:$0xff]
    %v834 = vld [vmem:[%s86 + $0x20] sm:$0xff]
    %v835 = vld [vmem:[%s86 + $0x28] sm:$0xff]
    %v836 = vld [vmem:[%s86 + $0x30] sm:$0xff]
    %v837 = vld [vmem:[%s86 + $0x38] sm:$0xff]
    %v838 = vld [vmem:[%s86 + $0x40] sm:$0xff]
    %v839 = vld [vmem:[%s86 + $0x48] sm:$0xff]
    %v840 = vld [vmem:[%s86 + $0x50] sm:$0xff]
    %v841 = vld [vmem:[%s86 + $0x58] sm:$0xff]
    %v843 = vsel %vm114, %v829, 0
    %845 = vmatprep.subr.mxu0 0.0
    %846 = vmatpush1.msra.mxu0 %v830
    %847 = vmatprep.subr.mxu0 0.0
    %848 = vmatpush1.msra.mxu0 %v831
    %849 = vmatprep.subr.mxu0 0.0
    %850 = vmatpush1.msra.mxu0 %v832
    %851 = vmatprep.subr.mxu0 0.0
    %852 = vmatpush1.msra.mxu0 %v833
    %853 = vmatprep.subr.mxu0 0.0
    %854 = vmatpush1.msra.mxu0 %v834
    %855 = vmatprep.subr.mxu0 0.0
    %856 = vmatpush1.msra.mxu0 %v835
    %857 = vmatprep.subr.mxu0 0.0
    %858 = vmatpush1.msra.mxu0 %v836
    %859 = vmatprep.subr.mxu0 0.0
    %860 = vmatpush1.msra.mxu0 %v837
    %861 = vmatprep.subr.mxu0 0.0
    %862 = vmatpush1.msra.mxu0 %v838
    %863 = vmatprep.subr.mxu0 0.0
    %864 = vmatpush1.msra.mxu0 %v839
    %865 = vmatprep.subr.mxu0 0.0
    %866 = vmatpush1.msra.mxu0 %v840
    %867 = vmatprep.subr.mxu0 0.0
    %868 = vmatpush1.msra.mxu0 %v841
    %869 = vmatprep.subr.mxu0 0.0
    %870 = vmatpush1.msra.mxu0 0.0
    %871 = vmatprep.subr.mxu0 0.0
    %872 = vmatpush1.msra.mxu0 0.0
    %873 = vmatprep.subr.mxu0 0.0
    %874 = vmatpush1.msra.mxu0 0.0
    %875 = vmatprep.subr.mxu0 0.0
    %876 = vmatpush1.msra.mxu0 0.0
    %877 = vmatprep.subr.mxu0 0.0
    %878 = vmatpush1.msra.mxu0 0.0
    %879 = vmatprep.subr.mxu0 0.0
    %880 = vmatpush1.msra.mxu0 0.0
    %881 = vmatprep.subr.mxu0 0.0
    %882 = vmatpush1.msra.mxu0 0.0
    %883 = vmatprep.subr.mxu0 0.0
    %884 = vmatpush1.msra.mxu0 0.0
    %885 = vmatprep.subr.mxu0 0.0
    %886 = vmatpush1.msra.mxu0 0.0
    %887 = vmatprep.subr.mxu0 0.0
    %888 = vmatpush1.msra.mxu0 0.0
    %889 = vmatprep.subr.mxu0 0.0
    %890 = vmatpush1.msra.mxu0 0.0
    %891 = vmatprep.subr.mxu0 0.0
    %892 = vmatpush1.msra.mxu0 0.0
    %893 = vmatprep.subr.mxu0 0.0
    %894 = vmatpush1.msra.mxu0 0.0
    %895 = vmatprep.subr.mxu0 0.0
    %896 = vmatpush1.msra.mxu0 0.0
    %897 = vmatprep.subr.mxu0 0.0
    %898 = vmatpush1.msra.mxu0 0.0
    %899 = vmatprep.subr.mxu0 0.0
    %900 = vmatpush1.msra.mxu0 0.0
    %901 = vmatprep.subr.mxu0 0.0
    %902 = vmatpush1.msra.mxu0 0.0
    %903 = vmatprep.subr.mxu0 0.0
    %904 = vmatpush1.msra.mxu0 0.0
    %905 = vmatprep.subr.mxu0 0.0
    %906 = vmatpush1.msra.mxu0 0.0
    %907 = vmatprep.subr.mxu0 0.0
    %908 = vmatpush1.msra.mxu0 0.0
    %909 = vmatprep.mubr.f32.mxu0 0.0
    %910 = vmatmul.mubr.f32.gmra.mrb[0].mxu0 %v843
    %v911 = vpop.f32.mrb[0].mxu0
    %v912 = vadd.f32 0.0, %v911
    %v913 = vpop.f32.mrb[0].mxu0
    %914 = vdwg.mxu0
    %v916 = vsel %vm114, %v815, 0
    %918 = vmatprep.subr.mxu0 0.0
    %919 = vmatpush1.msra.mxu0 %v816
    %920 = vmatprep.subr.mxu0 0.0
    %921 = vmatpush1.msra.mxu0 %v817
    %922 = vmatprep.subr.mxu0 0.0
    %923 = vmatpush1.msra.mxu0 %v818
    %924 = vmatprep.subr.mxu0 0.0
    %925 = vmatpush1.msra.mxu0 %v819
    %926 = vmatprep.subr.mxu0 0.0
    %927 = vmatpush1.msra.mxu0 %v820
    %928 = vmatprep.subr.mxu0 0.0
    %929 = vmatpush1.msra.mxu0 %v821
    %930 = vmatprep.subr.mxu0 0.0
    %931 = vmatpush1.msra.mxu0 %v822
    %932 = vmatprep.subr.mxu0 0.0
    %933 = vmatpush1.msra.mxu0 %v823
    %934 = vmatprep.subr.mxu0 0.0
    %935 = vmatpush1.msra.mxu0 %v824
    %936 = vmatprep.subr.mxu0 0.0
    %937 = vmatpush1.msra.mxu0 %v825
    %938 = vmatprep.subr.mxu0 0.0
    %939 = vmatpush1.msra.mxu0 %v826
    %940 = vmatprep.subr.mxu0 0.0
    %941 = vmatpush1.msra.mxu0 %v827
    %942 = vmatprep.subr.mxu0 0.0
    %943 = vmatpush1.msra.mxu0 0.0
    %944 = vmatprep.subr.mxu0 0.0
    %945 = vmatpush1.msra.mxu0 0.0
    %946 = vmatprep.subr.mxu0 0.0
    %947 = vmatpush1.msra.mxu0 0.0
    %948 = vmatprep.subr.mxu0 0.0
    %949 = vmatpush1.msra.mxu0 0.0
    %950 = vmatprep.subr.mxu0 0.0
    %951 = vmatpush1.msra.mxu0 0.0
    %952 = vmatprep.subr.mxu0 0.0
    %953 = vmatpush1.msra.mxu0 0.0
    %954 = vmatprep.subr.mxu0 0.0
    %955 = vmatpush1.msra.mxu0 0.0
    %956 = vmatprep.subr.mxu0 0.0
    %957 = vmatpush1.msra.mxu0 0.0
    %958 = vmatprep.subr.mxu0 0.0
    %959 = vmatpush1.msra.mxu0 0.0
    %960 = vmatprep.subr.mxu0 0.0
    %961 = vmatpush1.msra.mxu0 0.0
    %962 = vmatprep.subr.mxu0 0.0
    %963 = vmatpush1.msra.mxu0 0.0
    %964 = vmatprep.subr.mxu0 0.0
    %965 = vmatpush1.msra.mxu0 0.0
    %966 = vmatprep.subr.mxu0 0.0
    %967 = vmatpush1.msra.mxu0 0.0
    %968 = vmatprep.subr.mxu0 0.0
    %969 = vmatpush1.msra.mxu0 0.0
    %970 = vmatprep.subr.mxu0 0.0
    %971 = vmatpush1.msra.mxu0 0.0
    %972 = vmatprep.subr.mxu0 0.0
    %973 = vmatpush1.msra.mxu0 0.0
    %974 = vmatprep.subr.mxu0 0.0
    %975 = vmatpush1.msra.mxu0 0.0
    %976 = vmatprep.subr.mxu0 0.0
    %977 = vmatpush1.msra.mxu0 0.0
    %978 = vmatprep.subr.mxu0 0.0
    %979 = vmatpush1.msra.mxu0 0.0
    %980 = vmatprep.subr.mxu0 0.0
    %981 = vmatpush1.msra.mxu0 0.0
    %982 = vmatprep.mubr.f32.mxu0 0.0
    %983 = vmatmul.mubr.f32.gmra.mrb[0].mxu0 %v916
    %v984 = vpop.f32.mrb[0].mxu0
    %v985 = vadd.f32 %v912, %v984
    %v986 = vpop.f32.mrb[0].mxu0
    %987 = vdwg.mxu0
    %s988 = scalar_lea.vmem %s0, 56
    %v989 = vld [vmem:[%s988] sm:$0xff]
    %v990 = vld [vmem:[%s101] sm:$0xff]
    %v991 = vld [vmem:[%s101 + $0x8] sm:$0xff]
    %v992 = vld [vmem:[%s101 + $0x10] sm:$0xff]
    %v993 = vld [vmem:[%s101 + $0x18] sm:$0xff]
    %v994 = vld [vmem:[%s101 + $0x20] sm:$0xff]
    %v995 = vld [vmem:[%s101 + $0x28] sm:$0xff]
    %v996 = vld [vmem:[%s101 + $0x30] sm:$0xff]
    %v997 = vld [vmem:[%s101 + $0x38] sm:$0xff]
    %v998 = vld [vmem:[%s101 + $0x40] sm:$0xff]
    %v999 = vld [vmem:[%s101 + $0x48] sm:$0xff]
    %v1000 = vld [vmem:[%s101 + $0x50] sm:$0xff]
    %v1001 = vld [vmem:[%s101 + $0x58] sm:$0xff]
    %v1003 = vsel %vm114, %v989, 0
    %1005 = vmatprep.subr.mxu0 0.0
    %1006 = vmatpush1.msra.mxu0 %v990
    %1007 = vmatprep.subr.mxu0 0.0
    %1008 = vmatpush1.msra.mxu0 %v991
    %1009 = vmatprep.subr.mxu0 0.0
    %1010 = vmatpush1.msra.mxu0 %v992
    %1011 = vmatprep.subr.mxu0 0.0
    %1012 = vmatpush1.msra.mxu0 %v993
    %1013 = vmatprep.subr.mxu0 0.0
    %1014 = vmatpush1.msra.mxu0 %v994
    %1015 = vmatprep.subr.mxu0 0.0
    %1016 = vmatpush1.msra.mxu0 %v995
    %1017 = vmatprep.subr.mxu0 0.0
    %1018 = vmatpush1.msra.mxu0 %v996
    %1019 = vmatprep.subr.mxu0 0.0
    %1020 = vmatpush1.msra.mxu0 %v997
    %1021 = vmatprep.subr.mxu0 0.0
    %1022 = vmatpush1.msra.mxu0 %v998
    %1023 = vmatprep.subr.mxu0 0.0
    %1024 = vmatpush1.msra.mxu0 %v999
    %1025 = vmatprep.subr.mxu0 0.0
    %1026 = vmatpush1.msra.mxu0 %v1000
    %1027 = vmatprep.subr.mxu0 0.0
    %1028 = vmatpush1.msra.mxu0 %v1001
    %1029 = vmatprep.subr.mxu0 0.0
    %1030 = vmatpush1.msra.mxu0 0.0
    %1031 = vmatprep.subr.mxu0 0.0
    %1032 = vmatpush1.msra.mxu0 0.0
    %1033 = vmatprep.subr.mxu0 0.0
    %1034 = vmatpush1.msra.mxu0 0.0
    %1035 = vmatprep.subr.mxu0 0.0
    %1036 = vmatpush1.msra.mxu0 0.0
    %1037 = vmatprep.subr.mxu0 0.0
    %1038 = vmatpush1.msra.mxu0 0.0
    %1039 = vmatprep.subr.mxu0 0.0
    %1040 = vmatpush1.msra.mxu0 0.0
    %1041 = vmatprep.subr.mxu0 0.0
    %1042 = vmatpush1.msra.mxu0 0.0
    %1043 = vmatprep.subr.mxu0 0.0
    %1044 = vmatpush1.msra.mxu0 0.0
    %1045 = vmatprep.subr.mxu0 0.0
    %1046 = vmatpush1.msra.mxu0 0.0
    %1047 = vmatprep.subr.mxu0 0.0
    %1048 = vmatpush1.msra.mxu0 0.0
    %1049 = vmatprep.subr.mxu0 0.0
    %1050 = vmatpush1.msra.mxu0 0.0
    %1051 = vmatprep.subr.mxu0 0.0
    %1052 = vmatpush1.msra.mxu0 0.0
    %1053 = vmatprep.subr.mxu0 0.0
    %1054 = vmatpush1.msra.mxu0 0.0
    %1055 = vmatprep.subr.mxu0 0.0
    %1056 = vmatpush1.msra.mxu0 0.0
    %1057 = vmatprep.subr.mxu0 0.0
    %1058 = vmatpush1.msra.mxu0 0.0
    %1059 = vmatprep.subr.mxu0 0.0
    %1060 = vmatpush1.msra.mxu0 0.0
    %1061 = vmatprep.subr.mxu0 0.0
    %1062 = vmatpush1.msra.mxu0 0.0
    %1063 = vmatprep.subr.mxu0 0.0
    %1064 = vmatpush1.msra.mxu0 0.0
    %1065 = vmatprep.subr.mxu0 0.0
    %1066 = vmatpush1.msra.mxu0 0.0
    %1067 = vmatprep.subr.mxu0 0.0
    %1068 = vmatpush1.msra.mxu0 0.0
    %1069 = vmatprep.mubr.f32.mxu0 0.0
    %1070 = vmatmul.mubr.f32.gmra.mrb[0].mxu0 %v1003
    %v1071 = vpop.f32.mrb[0].mxu0
    %v1072 = vadd.f32 0.0, %v1071
    %v1073 = vpop.f32.mrb[0].mxu0
    %1074 = vdwg.mxu0
    %v1075 = vadd.f32 %v985, %v1072
    %v1076 = vld [vmem:[%s2] sm:$0x1]
    %v1078 = vlaneseq
    %v1079 = vshrl.u32 %v1078, 7
    %v1080 = vsub.s32 0, %v1079
    %v1081 = vrot.slane %v1076, %v1080
    %v1083 = vadd.f32 %v1075, %v1081
    %v1084 = vmax.f32 %v1083, 0.0
    %s1085 = scalar_lea.vmem [#allocation2], 24
    %1086 = vst [vmem:[%s1085] sm:$0xff] %v1084
    %v1087 = vld [vmem:[%s988] sm:$0xff]
    %v1088 = vld [vmem:[#allocation4] sm:$0xff]
    %v1089 = vld [vmem:[#allocation4 + $0x8] sm:$0xff]
    %v1090 = vld [vmem:[#allocation4 + $0x10] sm:$0xff]
    %v1091 = vld [vmem:[#allocation4 + $0x18] sm:$0xff]
    %v1092 = vld [vmem:[#allocation4 + $0x20] sm:$0xff]
    %v1093 = vld [vmem:[#allocation4 + $0x28] sm:$0xff]
    %v1094 = vld [vmem:[#allocation4 + $0x30] sm:$0xff]
    %v1095 = vld [vmem:[#allocation4 + $0x38] sm:$0xff]
    %v1096 = vld [vmem:[#allocation4 + $0x40] sm:$0xff]
    %v1097 = vld [vmem:[#allocation4 + $0x48] sm:$0xff]
    %v1098 = vld [vmem:[#allocation4 + $0x50] sm:$0xff]
    %v1099 = vld [vmem:[#allocation4 + $0x58] sm:$0xff]
    %s1100 = scalar_lea.vmem %s0, 64
    %v1101 = vld [vmem:[%s1100] sm:$0xff]
    %v1102 = vld [vmem:[%s86] sm:$0xff]
    %v1103 = vld [vmem:[%s86 + $0x8] sm:$0xff]
    %v1104 = vld [vmem:[%s86 + $0x10] sm:$0xff]
    %v1105 = vld [vmem:[%s86 + $0x18] sm:$0xff]
    %v1106 = vld [vmem:[%s86 + $0x20] sm:$0xff]
    %v1107 = vld [vmem:[%s86 + $0x28] sm:$0xff]
    %v1108 = vld [vmem:[%s86 + $0x30] sm:$0xff]
    %v1109 = vld [vmem:[%s86 + $0x38] sm:$0xff]
    %v1110 = vld [vmem:[%s86 + $0x40] sm:$0xff]
    %v1111 = vld [vmem:[%s86 + $0x48] sm:$0xff]
    %v1112 = vld [vmem:[%s86 + $0x50] sm:$0xff]
    %v1113 = vld [vmem:[%s86 + $0x58] sm:$0xff]
    %v1115 = vsel %vm114, %v1101, 0
    %1117 = vmatprep.subr.mxu0 0.0
    %1118 = vmatpush1.msra.mxu0 %v1102
    %1119 = vmatprep.subr.mxu0 0.0
    %1120 = vmatpush1.msra.mxu0 %v1103
    %1121 = vmatprep.subr.mxu0 0.0
    %1122 = vmatpush1.msra.mxu0 %v1104
    %1123 = vmatprep.subr.mxu0 0.0
    %1124 = vmatpush1.msra.mxu0 %v1105
    %1125 = vmatprep.subr.mxu0 0.0
    %1126 = vmatpush1.msra.mxu0 %v1106
    %1127 = vmatprep.subr.mxu0 0.0
    %1128 = vmatpush1.msra.mxu0 %v1107
    %1129 = vmatprep.subr.mxu0 0.0
    %1130 = vmatpush1.msra.mxu0 %v1108
    %1131 = vmatprep.subr.mxu0 0.0
    %1132 = vmatpush1.msra.mxu0 %v1109
    %1133 = vmatprep.subr.mxu0 0.0
    %1134 = vmatpush1.msra.mxu0 %v1110
    %1135 = vmatprep.subr.mxu0 0.0
    %1136 = vmatpush1.msra.mxu0 %v1111
    %1137 = vmatprep.subr.mxu0 0.0
    %1138 = vmatpush1.msra.mxu0 %v1112
    %1139 = vmatprep.subr.mxu0 0.0
    %1140 = vmatpush1.msra.mxu0 %v1113
    %1141 = vmatprep.subr.mxu0 0.0
    %1142 = vmatpush1.msra.mxu0 0.0
    %1143 = vmatprep.subr.mxu0 0.0
    %1144 = vmatpush1.msra.mxu0 0.0
    %1145 = vmatprep.subr.mxu0 0.0
    %1146 = vmatpush1.msra.mxu0 0.0
    %1147 = vmatprep.subr.mxu0 0.0
    %1148 = vmatpush1.msra.mxu0 0.0
    %1149 = vmatprep.subr.mxu0 0.0
    %1150 = vmatpush1.msra.mxu0 0.0
    %1151 = vmatprep.subr.mxu0 0.0
    %1152 = vmatpush1.msra.mxu0 0.0
    %1153 = vmatprep.subr.mxu0 0.0
    %1154 = vmatpush1.msra.mxu0 0.0
    %1155 = vmatprep.subr.mxu0 0.0
    %1156 = vmatpush1.msra.mxu0 0.0
    %1157 = vmatprep.subr.mxu0 0.0
    %1158 = vmatpush1.msra.mxu0 0.0
    %1159 = vmatprep.subr.mxu0 0.0
    %1160 = vmatpush1.msra.mxu0 0.0
    %1161 = vmatprep.subr.mxu0 0.0
    %1162 = vmatpush1.msra.mxu0 0.0
    %1163 = vmatprep.subr.mxu0 0.0
    %1164 = vmatpush1.msra.mxu0 0.0
    %1165 = vmatprep.subr.mxu0 0.0
    %1166 = vmatpush1.msra.mxu0 0.0
    %1167 = vmatprep.subr.mxu0 0.0
    %1168 = vmatpush1.msra.mxu0 0.0
    %1169 = vmatprep.subr.mxu0 0.0
    %1170 = vmatpush1.msra.mxu0 0.0
    %1171 = vmatprep.subr.mxu0 0.0
    %1172 = vmatpush1.msra.mxu0 0.0
    %1173 = vmatprep.subr.mxu0 0.0
    %1174 = vmatpush1.msra.mxu0 0.0
    %1175 = vmatprep.subr.mxu0 0.0
    %1176 = vmatpush1.msra.mxu0 0.0
    %1177 = vmatprep.subr.mxu0 0.0
    %1178 = vmatpush1.msra.mxu0 0.0
    %1179 = vmatprep.subr.mxu0 0.0
    %1180 = vmatpush1.msra.mxu0 0.0
    %1181 = vmatprep.mubr.f32.mxu0 0.0
    %1182 = vmatmul.mubr.f32.gmra.mrb[0].mxu0 %v1115
    %v1183 = vpop.f32.mrb[0].mxu0
    %v1184 = vadd.f32 0.0, %v1183
    %v1185 = vpop.f32.mrb[0].mxu0
    %1186 = vdwg.mxu0
    %v1188 = vsel %vm114, %v1087, 0
    %1190 = vmatprep.subr.mxu0 0.0
    %1191 = vmatpush1.msra.mxu0 %v1088
    %1192 = vmatprep.subr.mxu0 0.0
    %1193 = vmatpush1.msra.mxu0 %v1089
    %1194 = vmatprep.subr.mxu0 0.0
    %1195 = vmatpush1.msra.mxu0 %v1090
    %1196 = vmatprep.subr.mxu0 0.0
    %1197 = vmatpush1.msra.mxu0 %v1091
    %1198 = vmatprep.subr.mxu0 0.0
    %1199 = vmatpush1.msra.mxu0 %v1092
    %1200 = vmatprep.subr.mxu0 0.0
    %1201 = vmatpush1.msra.mxu0 %v1093
    %1202 = vmatprep.subr.mxu0 0.0
    %1203 = vmatpush1.msra.mxu0 %v1094
    %1204 = vmatprep.subr.mxu0 0.0
    %1205 = vmatpush1.msra.mxu0 %v1095
    %1206 = vmatprep.subr.mxu0 0.0
    %1207 = vmatpush1.msra.mxu0 %v1096
    %1208 = vmatprep.subr.mxu0 0.0
    %1209 = vmatpush1.msra.mxu0 %v1097
    %1210 = vmatprep.subr.mxu0 0.0
    %1211 = vmatpush1.msra.mxu0 %v1098
    %1212 = vmatprep.subr.mxu0 0.0
    %1213 = vmatpush1.msra.mxu0 %v1099
    %1214 = vmatprep.subr.mxu0 0.0
    %1215 = vmatpush1.msra.mxu0 0.0
    %1216 = vmatprep.subr.mxu0 0.0
    %1217 = vmatpush1.msra.mxu0 0.0
    %1218 = vmatprep.subr.mxu0 0.0
    %1219 = vmatpush1.msra.mxu0 0.0
    %1220 = vmatprep.subr.mxu0 0.0
    %1221 = vmatpush1.msra.mxu0 0.0
    %1222 = vmatprep.subr.mxu0 0.0
    %1223 = vmatpush1.msra.mxu0 0.0
    %1224 = vmatprep.subr.mxu0 0.0
    %1225 = vmatpush1.msra.mxu0 0.0
    %1226 = vmatprep.subr.mxu0 0.0
    %1227 = vmatpush1.msra.mxu0 0.0
    %1228 = vmatprep.subr.mxu0 0.0
    %1229 = vmatpush1.msra.mxu0 0.0
    %1230 = vmatprep.subr.mxu0 0.0
    %1231 = vmatpush1.msra.mxu0 0.0
    %1232 = vmatprep.subr.mxu0 0.0
    %1233 = vmatpush1.msra.mxu0 0.0
    %1234 = vmatprep.subr.mxu0 0.0
    %1235 = vmatpush1.msra.mxu0 0.0
    %1236 = vmatprep.subr.mxu0 0.0
    %1237 = vmatpush1.msra.mxu0 0.0
    %1238 = vmatprep.subr.mxu0 0.0
    %1239 = vmatpush1.msra.mxu0 0.0
    %1240 = vmatprep.subr.mxu0 0.0
    %1241 = vmatpush1.msra.mxu0 0.0
    %1242 = vmatprep.subr.mxu0 0.0
    %1243 = vmatpush1.msra.mxu0 0.0
    %1244 = vmatprep.subr.mxu0 0.0
    %1245 = vmatpush1.msra.mxu0 0.0
    %1246 = vmatprep.subr.mxu0 0.0
    %1247 = vmatpush1.msra.mxu0 0.0
    %1248 = vmatprep.subr.mxu0 0.0
    %1249 = vmatpush1.msra.mxu0 0.0
    %1250 = vmatprep.subr.mxu0 0.0
    %1251 = vmatpush1.msra.mxu0 0.0
    %1252 = vmatprep.subr.mxu0 0.0
    %1253 = vmatpush1.msra.mxu0 0.0
    %1254 = vmatprep.mubr.f32.mxu0 0.0
    %1255 = vmatmul.mubr.f32.gmra.mrb[0].mxu0 %v1188
    %v1256 = vpop.f32.mrb[0].mxu0
    %v1257 = vadd.f32 %v1184, %v1256
    %v1258 = vpop.f32.mrb[0].mxu0
    %1259 = vdwg.mxu0
    %s1260 = scalar_lea.vmem %s0, 72
    %v1261 = vld [vmem:[%s1260] sm:$0xff]
    %v1262 = vld [vmem:[%s101] sm:$0xff]
    %v1263 = vld [vmem:[%s101 + $0x8] sm:$0xff]
    %v1264 = vld [vmem:[%s101 + $0x10] sm:$0xff]
    %v1265 = vld [vmem:[%s101 + $0x18] sm:$0xff]
    %v1266 = vld [vmem:[%s101 + $0x20] sm:$0xff]
    %v1267 = vld [vmem:[%s101 + $0x28] sm:$0xff]
    %v1268 = vld [vmem:[%s101 + $0x30] sm:$0xff]
    %v1269 = vld [vmem:[%s101 + $0x38] sm:$0xff]
    %v1270 = vld [vmem:[%s101 + $0x40] sm:$0xff]
    %v1271 = vld [vmem:[%s101 + $0x48] sm:$0xff]
    %v1272 = vld [vmem:[%s101 + $0x50] sm:$0xff]
    %v1273 = vld [vmem:[%s101 + $0x58] sm:$0xff]
    %v1275 = vsel %vm114, %v1261, 0
    %1277 = vmatprep.subr.mxu0 0.0
    %1278 = vmatpush1.msra.mxu0 %v1262
    %1279 = vmatprep.subr.mxu0 0.0
    %1280 = vmatpush1.msra.mxu0 %v1263
    %1281 = vmatprep.subr.mxu0 0.0
    %1282 = vmatpush1.msra.mxu0 %v1264
    %1283 = vmatprep.subr.mxu0 0.0
    %1284 = vmatpush1.msra.mxu0 %v1265
    %1285 = vmatprep.subr.mxu0 0.0
    %1286 = vmatpush1.msra.mxu0 %v1266
    %1287 = vmatprep.subr.mxu0 0.0
    %1288 = vmatpush1.msra.mxu0 %v1267
    %1289 = vmatprep.subr.mxu0 0.0
    %1290 = vmatpush1.msra.mxu0 %v1268
    %1291 = vmatprep.subr.mxu0 0.0
    %1292 = vmatpush1.msra.mxu0 %v1269
    %1293 = vmatprep.subr.mxu0 0.0
    %1294 = vmatpush1.msra.mxu0 %v1270
    %1295 = vmatprep.subr.mxu0 0.0
    %1296 = vmatpush1.msra.mxu0 %v1271
    %1297 = vmatprep.subr.mxu0 0.0
    %1298 = vmatpush1.msra.mxu0 %v1272
    %1299 = vmatprep.subr.mxu0 0.0
    %1300 = vmatpush1.msra.mxu0 %v1273
    %1301 = vmatprep.subr.mxu0 0.0
    %1302 = vmatpush1.msra.mxu0 0.0
    %1303 = vmatprep.subr.mxu0 0.0
    %1304 = vmatpush1.msra.mxu0 0.0
    %1305 = vmatprep.subr.mxu0 0.0
    %1306 = vmatpush1.msra.mxu0 0.0
    %1307 = vmatprep.subr.mxu0 0.0
    %1308 = vmatpush1.msra.mxu0 0.0
    %1309 = vmatprep.subr.mxu0 0.0
    %1310 = vmatpush1.msra.mxu0 0.0
    %1311 = vmatprep.subr.mxu0 0.0
    %1312 = vmatpush1.msra.mxu0 0.0
    %1313 = vmatprep.subr.mxu0 0.0
    %1314 = vmatpush1.msra.mxu0 0.0
    %1315 = vmatprep.subr.mxu0 0.0
    %1316 = vmatpush1.msra.mxu0 0.0
    %1317 = vmatprep.subr.mxu0 0.0
    %1318 = vmatpush1.msra.mxu0 0.0
    %1319 = vmatprep.subr.mxu0 0.0
    %1320 = vmatpush1.msra.mxu0 0.0
    %1321 = vmatprep.subr.mxu0 0.0
    %1322 = vmatpush1.msra.mxu0 0.0
    %1323 = vmatprep.subr.mxu0 0.0
    %1324 = vmatpush1.msra.mxu0 0.0
    %1325 = vmatprep.subr.mxu0 0.0
    %1326 = vmatpush1.msra.mxu0 0.0
    %1327 = vmatprep.subr.mxu0 0.0
    %1328 = vmatpush1.msra.mxu0 0.0
    %1329 = vmatprep.subr.mxu0 0.0
    %1330 = vmatpush1.msra.mxu0 0.0
    %1331 = vmatprep.subr.mxu0 0.0
    %1332 = vmatpush1.msra.mxu0 0.0
    %1333 = vmatprep.subr.mxu0 0.0
    %1334 = vmatpush1.msra.mxu0 0.0
    %1335 = vmatprep.subr.mxu0 0.0
    %1336 = vmatpush1.msra.mxu0 0.0
    %1337 = vmatprep.subr.mxu0 0.0
    %1338 = vmatpush1.msra.mxu0 0.0
    %1339 = vmatprep.subr.mxu0 0.0
    %1340 = vmatpush1.msra.mxu0 0.0
    %1341 = vmatprep.mubr.f32.mxu0 0.0
    %1342 = vmatmul.mubr.f32.gmra.mrb[0].mxu0 %v1275
    %v1343 = vpop.f32.mrb[0].mxu0
    %v1344 = vadd.f32 0.0, %v1343
    %v1345 = vpop.f32.mrb[0].mxu0
    %1346 = vdwg.mxu0
    %v1347 = vadd.f32 %v1257, %v1344
    %v1348 = vld [vmem:[%s2] sm:$0x1]
    %v1350 = vlaneseq
    %v1351 = vshrl.u32 %v1350, 7
    %v1352 = vsub.s32 0, %v1351
    %v1353 = vrot.slane %v1348, %v1352
    %v1355 = vadd.f32 %v1347, %v1353
    %v1356 = vmax.f32 %v1355, 0.0
    %s1357 = scalar_lea.vmem [#allocation2], 32
    %1358 = vst [vmem:[%s1357] sm:$0xff] %v1356
    %v1359 = vld [vmem:[%s1260] sm:$0xff]
    %v1360 = vld [vmem:[#allocation4] sm:$0xff]
    %v1361 = vld [vmem:[#allocation4 + $0x8] sm:$0xff]
    %v1362 = vld [vmem:[#allocation4 + $0x10] sm:$0xff]
    %v1363 = vld [vmem:[#allocation4 + $0x18] sm:$0xff]
    %v1364 = vld [vmem:[#allocation4 + $0x20] sm:$0xff]
    %v1365 = vld [vmem:[#allocation4 + $0x28] sm:$0xff]
    %v1366 = vld [vmem:[#allocation4 + $0x30] sm:$0xff]
    %v1367 = vld [vmem:[#allocation4 + $0x38] sm:$0xff]
    %v1368 = vld [vmem:[#allocation4 + $0x40] sm:$0xff]
    %v1369 = vld [vmem:[#allocation4 + $0x48] sm:$0xff]
    %v1370 = vld [vmem:[#allocation4 + $0x50] sm:$0xff]
    %v1371 = vld [vmem:[#allocation4 + $0x58] sm:$0xff]
    %s1372 = scalar_lea.vmem %s0, 80
    %v1373 = vld [vmem:[%s1372] sm:$0xff]
    %v1374 = vld [vmem:[%s86] sm:$0xff]
    %v1375 = vld [vmem:[%s86 + $0x8] sm:$0xff]
    %v1376 = vld [vmem:[%s86 + $0x10] sm:$0xff]
    %v1377 = vld [vmem:[%s86 + $0x18] sm:$0xff]
    %v1378 = vld [vmem:[%s86 + $0x20] sm:$0xff]
    %v1379 = vld [vmem:[%s86 + $0x28] sm:$0xff]
    %v1380 = vld [vmem:[%s86 + $0x30] sm:$0xff]
    %v1381 = vld [vmem:[%s86 + $0x38] sm:$0xff]
    %v1382 = vld [vmem:[%s86 + $0x40] sm:$0xff]
    %v1383 = vld [vmem:[%s86 + $0x48] sm:$0xff]
    %v1384 = vld [vmem:[%s86 + $0x50] sm:$0xff]
    %v1385 = vld [vmem:[%s86 + $0x58] sm:$0xff]
    %v1387 = vsel %vm114, %v1373, 0
    %1389 = vmatprep.subr.mxu0 0.0
    %1390 = vmatpush1.msra.mxu0 %v1374
    %1391 = vmatprep.subr.mxu0 0.0
    %1392 = vmatpush1.msra.mxu0 %v1375
    %1393 = vmatprep.subr.mxu0 0.0
    %1394 = vmatpush1.msra.mxu0 %v1376
    %1395 = vmatprep.subr.mxu0 0.0
    %1396 = vmatpush1.msra.mxu0 %v1377
    %1397 = vmatprep.subr.mxu0 0.0
    %1398 = vmatpush1.msra.mxu0 %v1378
    %1399 = vmatprep.subr.mxu0 0.0
    %1400 = vmatpush1.msra.mxu0 %v1379
    %1401 = vmatprep.subr.mxu0 0.0
    %1402 = vmatpush1.msra.mxu0 %v1380
    %1403 = vmatprep.subr.mxu0 0.0
    %1404 = vmatpush1.msra.mxu0 %v1381
    %1405 = vmatprep.subr.mxu0 0.0
    %1406 = vmatpush1.msra.mxu0 %v1382
    %1407 = vmatprep.subr.mxu0 0.0
    %1408 = vmatpush1.msra.mxu0 %v1383
    %1409 = vmatprep.subr.mxu0 0.0
    %1410 = vmatpush1.msra.mxu0 %v1384
    %1411 = vmatprep.subr.mxu0 0.0
    %1412 = vmatpush1.msra.mxu0 %v1385
    %1413 = vmatprep.subr.mxu0 0.0
    %1414 = vmatpush1.msra.mxu0 0.0
    %1415 = vmatprep.subr.mxu0 0.0
    %1416 = vmatpush1.msra.mxu0 0.0
    %1417 = vmatprep.subr.mxu0 0.0
    %1418 = vmatpush1.msra.mxu0 0.0
    %1419 = vmatprep.subr.mxu0 0.0
    %1420 = vmatpush1.msra.mxu0 0.0
    %1421 = vmatprep.subr.mxu0 0.0
    %1422 = vmatpush1.msra.mxu0 0.0
    %1423 = vmatprep.subr.mxu0 0.0
    %1424 = vmatpush1.msra.mxu0 0.0
    %1425 = vmatprep.subr.mxu0 0.0
    %1426 = vmatpush1.msra.mxu0 0.0
    %1427 = vmatprep.subr.mxu0 0.0
    %1428 = vmatpush1.msra.mxu0 0.0
    %1429 = vmatprep.subr.mxu0 0.0
    %1430 = vmatpush1.msra.mxu0 0.0
    %1431 = vmatprep.subr.mxu0 0.0
    %1432 = vmatpush1.msra.mxu0 0.0
    %1433 = vmatprep.subr.mxu0 0.0
    %1434 = vmatpush1.msra.mxu0 0.0
    %1435 = vmatprep.subr.mxu0 0.0
    %1436 = vmatpush1.msra.mxu0 0.0
    %1437 = vmatprep.subr.mxu0 0.0
    %1438 = vmatpush1.msra.mxu0 0.0
    %1439 = vmatprep.subr.mxu0 0.0
    %1440 = vmatpush1.msra.mxu0 0.0
    %1441 = vmatprep.subr.mxu0 0.0
    %1442 = vmatpush1.msra.mxu0 0.0
    %1443 = vmatprep.subr.mxu0 0.0
    %1444 = vmatpush1.msra.mxu0 0.0
    %1445 = vmatprep.subr.mxu0 0.0
    %1446 = vmatpush1.msra.mxu0 0.0
    %1447 = vmatprep.subr.mxu0 0.0
    %1448 = vmatpush1.msra.mxu0 0.0
    %1449 = vmatprep.subr.mxu0 0.0
    %1450 = vmatpush1.msra.mxu0 0.0
    %1451 = vmatprep.subr.mxu0 0.0
    %1452 = vmatpush1.msra.mxu0 0.0
    %1453 = vmatprep.mubr.f32.mxu0 0.0
    %1454 = vmatmul.mubr.f32.gmra.mrb[0].mxu0 %v1387
    %v1455 = vpop.f32.mrb[0].mxu0
    %v1456 = vadd.f32 0.0, %v1455
    %v1457 = vpop.f32.mrb[0].mxu0
    %1458 = vdwg.mxu0
    %v1460 = vsel %vm114, %v1359, 0
    %1462 = vmatprep.subr.mxu0 0.0
    %1463 = vmatpush1.msra.mxu0 %v1360
    %1464 = vmatprep.subr.mxu0 0.0
    %1465 = vmatpush1.msra.mxu0 %v1361
    %1466 = vmatprep.subr.mxu0 0.0
    %1467 = vmatpush1.msra.mxu0 %v1362
    %1468 = vmatprep.subr.mxu0 0.0
    %1469 = vmatpush1.msra.mxu0 %v1363
    %1470 = vmatprep.subr.mxu0 0.0
    %1471 = vmatpush1.msra.mxu0 %v1364
    %1472 = vmatprep.subr.mxu0 0.0
    %1473 = vmatpush1.msra.mxu0 %v1365
    %1474 = vmatprep.subr.mxu0 0.0
    %1475 = vmatpush1.msra.mxu0 %v1366
    %1476 = vmatprep.subr.mxu0 0.0
    %1477 = vmatpush1.msra.mxu0 %v1367
    %1478 = vmatprep.subr.mxu0 0.0
    %1479 = vmatpush1.msra.mxu0 %v1368
    %1480 = vmatprep.subr.mxu0 0.0
    %1481 = vmatpush1.msra.mxu0 %v1369
    %1482 = vmatprep.subr.mxu0 0.0
    %1483 = vmatpush1.msra.mxu0 %v1370
    %1484 = vmatprep.subr.mxu0 0.0
    %1485 = vmatpush1.msra.mxu0 %v1371
    %1486 = vmatprep.subr.mxu0 0.0
    %1487 = vmatpush1.msra.mxu0 0.0
    %1488 = vmatprep.subr.mxu0 0.0
    %1489 = vmatpush1.msra.mxu0 0.0
    %1490 = vmatprep.subr.mxu0 0.0
    %1491 = vmatpush1.msra.mxu0 0.0
    %1492 = vmatprep.subr.mxu0 0.0
    %1493 = vmatpush1.msra.mxu0 0.0
    %1494 = vmatprep.subr.mxu0 0.0
    %1495 = vmatpush1.msra.mxu0 0.0
    %1496 = vmatprep.subr.mxu0 0.0
    %1497 = vmatpush1.msra.mxu0 0.0
    %1498 = vmatprep.subr.mxu0 0.0
    %1499 = vmatpush1.msra.mxu0 0.0
    %1500 = vmatprep.subr.mxu0 0.0
    %1501 = vmatpush1.msra.mxu0 0.0
    %1502 = vmatprep.subr.mxu0 0.0
    %1503 = vmatpush1.msra.mxu0 0.0
    %1504 = vmatprep.subr.mxu0 0.0
    %1505 = vmatpush1.msra.mxu0 0.0
    %1506 = vmatprep.subr.mxu0 0.0
    %1507 = vmatpush1.msra.mxu0 0.0
    %1508 = vmatprep.subr.mxu0 0.0
    %1509 = vmatpush1.msra.mxu0 0.0
    %1510 = vmatprep.subr.mxu0 0.0
    %1511 = vmatpush1.msra.mxu0 0.0
    %1512 = vmatprep.subr.mxu0 0.0
    %1513 = vmatpush1.msra.mxu0 0.0
    %1514 = vmatprep.subr.mxu0 0.0
    %1515 = vmatpush1.msra.mxu0 0.0
    %1516 = vmatprep.subr.mxu0 0.0
    %1517 = vmatpush1.msra.mxu0 0.0
    %1518 = vmatprep.subr.mxu0 0.0
    %1519 = vmatpush1.msra.mxu0 0.0
    %1520 = vmatprep.subr.mxu0 0.0
    %1521 = vmatpush1.msra.mxu0 0.0
    %1522 = vmatprep.subr.mxu0 0.0
    %1523 = vmatpush1.msra.mxu0 0.0
    %1524 = vmatprep.subr.mxu0 0.0
    %1525 = vmatpush1.msra.mxu0 0.0
    %1526 = vmatprep.mubr.f32.mxu0 0.0
    %1527 = vmatmul.mubr.f32.gmra.mrb[0].mxu0 %v1460
    %v1528 = vpop.f32.mrb[0].mxu0
    %v1529 = vadd.f32 %v1456, %v1528
    %v1530 = vpop.f32.mrb[0].mxu0
    %1531 = vdwg.mxu0
    %s1532 = scalar_lea.vmem %s0, 88
    %v1533 = vld [vmem:[%s1532] sm:$0xff]
    %v1534 = vld [vmem:[%s101] sm:$0xff]
    %v1535 = vld [vmem:[%s101 + $0x8] sm:$0xff]
    %v1536 = vld [vmem:[%s101 + $0x10] sm:$0xff]
    %v1537 = vld [vmem:[%s101 + $0x18] sm:$0xff]
    %v1538 = vld [vmem:[%s101 + $0x20] sm:$0xff]
    %v1539 = vld [vmem:[%s101 + $0x28] sm:$0xff]
    %v1540 = vld [vmem:[%s101 + $0x30] sm:$0xff]
    %v1541 = vld [vmem:[%s101 + $0x38] sm:$0xff]
    %v1542 = vld [vmem:[%s101 + $0x40] sm:$0xff]
    %v1543 = vld [vmem:[%s101 + $0x48] sm:$0xff]
    %v1544 = vld [vmem:[%s101 + $0x50] sm:$0xff]
    %v1545 = vld [vmem:[%s101 + $0x58] sm:$0xff]
    %v1547 = vsel %vm114, %v1533, 0
    %1549 = vmatprep.subr.mxu0 0.0
    %1550 = vmatpush1.msra.mxu0 %v1534
    %1551 = vmatprep.subr.mxu0 0.0
    %1552 = vmatpush1.msra.mxu0 %v1535
    %1553 = vmatprep.subr.mxu0 0.0
    %1554 = vmatpush1.msra.mxu0 %v1536
    %1555 = vmatprep.subr.mxu0 0.0
    %1556 = vmatpush1.msra.mxu0 %v1537
    %1557 = vmatprep.subr.mxu0 0.0
    %1558 = vmatpush1.msra.mxu0 %v1538
    %1559 = vmatprep.subr.mxu0 0.0
    %1560 = vmatpush1.msra.mxu0 %v1539
    %1561 = vmatprep.subr.mxu0 0.0
    %1562 = vmatpush1.msra.mxu0 %v1540
    %1563 = vmatprep.subr.mxu0 0.0
    %1564 = vmatpush1.msra.mxu0 %v1541
    %1565 = vmatprep.subr.mxu0 0.0
    %1566 = vmatpush1.msra.mxu0 %v1542
    %1567 = vmatprep.subr.mxu0 0.0
    %1568 = vmatpush1.msra.mxu0 %v1543
    %1569 = vmatprep.subr.mxu0 0.0
    %1570 = vmatpush1.msra.mxu0 %v1544
    %1571 = vmatprep.subr.mxu0 0.0
    %1572 = vmatpush1.msra.mxu0 %v1545
    %1573 = vmatprep.subr.mxu0 0.0
    %1574 = vmatpush1.msra.mxu0 0.0
    %1575 = vmatprep.subr.mxu0 0.0
    %1576 = vmatpush1.msra.mxu0 0.0
    %1577 = vmatprep.subr.mxu0 0.0
    %1578 = vmatpush1.msra.mxu0 0.0
    %1579 = vmatprep.subr.mxu0 0.0
    %1580 = vmatpush1.msra.mxu0 0.0
    %1581 = vmatprep.subr.mxu0 0.0
    %1582 = vmatpush1.msra.mxu0 0.0
    %1583 = vmatprep.subr.mxu0 0.0
    %1584 = vmatpush1.msra.mxu0 0.0
    %1585 = vmatprep.subr.mxu0 0.0
    %1586 = vmatpush1.msra.mxu0 0.0
    %1587 = vmatprep.subr.mxu0 0.0
    %1588 = vmatpush1.msra.mxu0 0.0
    %1589 = vmatprep.subr.mxu0 0.0
    %1590 = vmatpush1.msra.mxu0 0.0
    %1591 = vmatprep.subr.mxu0 0.0
    %1592 = vmatpush1.msra.mxu0 0.0
    %1593 = vmatprep.subr.mxu0 0.0
    %1594 = vmatpush1.msra.mxu0 0.0
    %1595 = vmatprep.subr.mxu0 0.0
    %1596 = vmatpush1.msra.mxu0 0.0
    %1597 = vmatprep.subr.mxu0 0.0
    %1598 = vmatpush1.msra.mxu0 0.0
    %1599 = vmatprep.subr.mxu0 0.0
    %1600 = vmatpush1.msra.mxu0 0.0
    %1601 = vmatprep.subr.mxu0 0.0
    %1602 = vmatpush1.msra.mxu0 0.0
    %1603 = vmatprep.subr.mxu0 0.0
    %1604 = vmatpush1.msra.mxu0 0.0
    %1605 = vmatprep.subr.mxu0 0.0
    %1606 = vmatpush1.msra.mxu0 0.0
    %1607 = vmatprep.subr.mxu0 0.0
    %1608 = vmatpush1.msra.mxu0 0.0
    %1609 = vmatprep.subr.mxu0 0.0
    %1610 = vmatpush1.msra.mxu0 0.0
    %1611 = vmatprep.subr.mxu0 0.0
    %1612 = vmatpush1.msra.mxu0 0.0
    %1613 = vmatprep.mubr.f32.mxu0 0.0
    %1614 = vmatmul.mubr.f32.gmra.mrb[0].mxu0 %v1547
    %v1615 = vpop.f32.mrb[0].mxu0
    %v1616 = vadd.f32 0.0, %v1615
    %v1617 = vpop.f32.mrb[0].mxu0
    %1618 = vdwg.mxu0
    %v1619 = vadd.f32 %v1529, %v1616
    %v1620 = vld [vmem:[%s2] sm:$0x1]
    %v1622 = vlaneseq
    %v1623 = vshrl.u32 %v1622, 7
    %v1624 = vsub.s32 0, %v1623
    %v1625 = vrot.slane %v1620, %v1624
    %v1627 = vadd.f32 %v1619, %v1625
    %v1628 = vmax.f32 %v1627, 0.0
    %s1629 = scalar_lea.vmem [#allocation2], 40
    %1630 = vst [vmem:[%s1629] sm:$0xff] %v1628
    %v1631 = vld [vmem:[%s1532] sm:$0xff]
    %v1632 = vld [vmem:[#allocation4] sm:$0xff]
    %v1633 = vld [vmem:[#allocation4 + $0x8] sm:$0xff]
    %v1634 = vld [vmem:[#allocation4 + $0x10] sm:$0xff]
    %v1635 = vld [vmem:[#allocation4 + $0x18] sm:$0xff]
    %v1636 = vld [vmem:[#allocation4 + $0x20] sm:$0xff]
    %v1637 = vld [vmem:[#allocation4 + $0x28] sm:$0xff]
    %v1638 = vld [vmem:[#allocation4 + $0x30] sm:$0xff]
    %v1639 = vld [vmem:[#allocation4 + $0x38] sm:$0xff]
    %v1640 = vld [vmem:[#allocation4 + $0x40] sm:$0xff]
    %v1641 = vld [vmem:[#allocation4 + $0x48] sm:$0xff]
    %v1642 = vld [vmem:[#allocation4 + $0x50] sm:$0xff]
    %v1643 = vld [vmem:[#allocation4 + $0x58] sm:$0xff]
    %s1644 = scalar_lea.vmem %s0, 96
    %v1645 = vld [vmem:[%s1644] sm:$0xff]
    %v1646 = vld [vmem:[%s86] sm:$0xff]
    %v1647 = vld [vmem:[%s86 + $0x8] sm:$0xff]
    %v1648 = vld [vmem:[%s86 + $0x10] sm:$0xff]
    %v1649 = vld [vmem:[%s86 + $0x18] sm:$0xff]
    %v1650 = vld [vmem:[%s86 + $0x20] sm:$0xff]
    %v1651 = vld [vmem:[%s86 + $0x28] sm:$0xff]
    %v1652 = vld [vmem:[%s86 + $0x30] sm:$0xff]
    %v1653 = vld [vmem:[%s86 + $0x38] sm:$0xff]
    %v1654 = vld [vmem:[%s86 + $0x40] sm:$0xff]
    %v1655 = vld [vmem:[%s86 + $0x48] sm:$0xff]
    %v1656 = vld [vmem:[%s86 + $0x50] sm:$0xff]
    %v1657 = vld [vmem:[%s86 + $0x58] sm:$0xff]
    %v1659 = vsel %vm114, %v1645, 0
    %1661 = vmatprep.subr.mxu0 0.0
    %1662 = vmatpush1.msra.mxu0 %v1646
    %1663 = vmatprep.subr.mxu0 0.0
    %1664 = vmatpush1.msra.mxu0 %v1647
    %1665 = vmatprep.subr.mxu0 0.0
    %1666 = vmatpush1.msra.mxu0 %v1648
    %1667 = vmatprep.subr.mxu0 0.0
    %1668 = vmatpush1.msra.mxu0 %v1649
    %1669 = vmatprep.subr.mxu0 0.0
    %1670 = vmatpush1.msra.mxu0 %v1650
    %1671 = vmatprep.subr.mxu0 0.0
    %1672 = vmatpush1.msra.mxu0 %v1651
    %1673 = vmatprep.subr.mxu0 0.0
    %1674 = vmatpush1.msra.mxu0 %v1652
    %1675 = vmatprep.subr.mxu0 0.0
    %1676 = vmatpush1.msra.mxu0 %v1653
    %1677 = vmatprep.subr.mxu0 0.0
    %1678 = vmatpush1.msra.mxu0 %v1654
    %1679 = vmatprep.subr.mxu0 0.0
    %1680 = vmatpush1.msra.mxu0 %v1655
    %1681 = vmatprep.subr.mxu0 0.0
    %1682 = vmatpush1.msra.mxu0 %v1656
    %1683 = vmatprep.subr.mxu0 0.0
    %1684 = vmatpush1.msra.mxu0 %v1657
    %1685 = vmatprep.subr.mxu0 0.0
    %1686 = vmatpush1.msra.mxu0 0.0
    %1687 = vmatprep.subr.mxu0 0.0
    %1688 = vmatpush1.msra.mxu0 0.0
    %1689 = vmatprep.subr.mxu0 0.0
    %1690 = vmatpush1.msra.mxu0 0.0
    %1691 = vmatprep.subr.mxu0 0.0
    %1692 = vmatpush1.msra.mxu0 0.0
    %1693 = vmatprep.subr.mxu0 0.0
    %1694 = vmatpush1.msra.mxu0 0.0
    %1695 = vmatprep.subr.mxu0 0.0
    %1696 = vmatpush1.msra.mxu0 0.0
    %1697 = vmatprep.subr.mxu0 0.0
    %1698 = vmatpush1.msra.mxu0 0.0
    %1699 = vmatprep.subr.mxu0 0.0
    %1700 = vmatpush1.msra.mxu0 0.0
    %1701 = vmatprep.subr.mxu0 0.0
    %1702 = vmatpush1.msra.mxu0 0.0
    %1703 = vmatprep.subr.mxu0 0.0
    %1704 = vmatpush1.msra.mxu0 0.0
    %1705 = vmatprep.subr.mxu0 0.0
    %1706 = vmatpush1.msra.mxu0 0.0
    %1707 = vmatprep.subr.mxu0 0.0
    %1708 = vmatpush1.msra.mxu0 0.0
    %1709 = vmatprep.subr.mxu0 0.0
    %1710 = vmatpush1.msra.mxu0 0.0
    %1711 = vmatprep.subr.mxu0 0.0
    %1712 = vmatpush1.msra.mxu0 0.0
    %1713 = vmatprep.subr.mxu0 0.0
    %1714 = vmatpush1.msra.mxu0 0.0
    %1715 = vmatprep.subr.mxu0 0.0
    %1716 = vmatpush1.msra.mxu0 0.0
    %1717 = vmatprep.subr.mxu0 0.0
    %1718 = vmatpush1.msra.mxu0 0.0
    %1719 = vmatprep.subr.mxu0 0.0
    %1720 = vmatpush1.msra.mxu0 0.0
    %1721 = vmatprep.subr.mxu0 0.0
    %1722 = vmatpush1.msra.mxu0 0.0
    %1723 = vmatprep.subr.mxu0 0.0
    %1724 = vmatpush1.msra.mxu0 0.0
    %1725 = vmatprep.mubr.f32.mxu0 0.0
    %1726 = vmatmul.mubr.f32.gmra.mrb[0].mxu0 %v1659
    %v1727 = vpop.f32.mrb[0].mxu0
    %v1728 = vadd.f32 0.0, %v1727
    %v1729 = vpop.f32.mrb[0].mxu0
    %1730 = vdwg.mxu0
    %v1732 = vsel %vm114, %v1631, 0
    %1734 = vmatprep.subr.mxu0 0.0
    %1735 = vmatpush1.msra.mxu0 %v1632
    %1736 = vmatprep.subr.mxu0 0.0
    %1737 = vmatpush1.msra.mxu0 %v1633
    %1738 = vmatprep.subr.mxu0 0.0
    %1739 = vmatpush1.msra.mxu0 %v1634
    %1740 = vmatprep.subr.mxu0 0.0
    %1741 = vmatpush1.msra.mxu0 %v1635
    %1742 = vmatprep.subr.mxu0 0.0
    %1743 = vmatpush1.msra.mxu0 %v1636
    %1744 = vmatprep.subr.mxu0 0.0
    %1745 = vmatpush1.msra.mxu0 %v1637
    %1746 = vmatprep.subr.mxu0 0.0
    %1747 = vmatpush1.msra.mxu0 %v1638
    %1748 = vmatprep.subr.mxu0 0.0
    %1749 = vmatpush1.msra.mxu0 %v1639
    %1750 = vmatprep.subr.mxu0 0.0
    %1751 = vmatpush1.msra.mxu0 %v1640
    %1752 = vmatprep.subr.mxu0 0.0
    %1753 = vmatpush1.msra.mxu0 %v1641
    %1754 = vmatprep.subr.mxu0 0.0
    %1755 = vmatpush1.msra.mxu0 %v1642
    %1756 = vmatprep.subr.mxu0 0.0
    %1757 = vmatpush1.msra.mxu0 %v1643
    %1758 = vmatprep.subr.mxu0 0.0
    %1759 = vmatpush1.msra.mxu0 0.0
    %1760 = vmatprep.subr.mxu0 0.0
    %1761 = vmatpush1.msra.mxu0 0.0
    %1762 = vmatprep.subr.mxu0 0.0
    %1763 = vmatpush1.msra.mxu0 0.0
    %1764 = vmatprep.subr.mxu0 0.0
    %1765 = vmatpush1.msra.mxu0 0.0
    %1766 = vmatprep.subr.mxu0 0.0
    %1767 = vmatpush1.msra.mxu0 0.0
    %1768 = vmatprep.subr.mxu0 0.0
    %1769 = vmatpush1.msra.mxu0 0.0
    %1770 = vmatprep.subr.mxu0 0.0
    %1771 = vmatpush1.msra.mxu0 0.0
    %1772 = vmatprep.subr.mxu0 0.0
    %1773 = vmatpush1.msra.mxu0 0.0
    %1774 = vmatprep.subr.mxu0 0.0
    %1775 = vmatpush1.msra.mxu0 0.0
    %1776 = vmatprep.subr.mxu0 0.0
    %1777 = vmatpush1.msra.mxu0 0.0
    %1778 = vmatprep.subr.mxu0 0.0
    %1779 = vmatpush1.msra.mxu0 0.0
    %1780 = vmatprep.subr.mxu0 0.0
    %1781 = vmatpush1.msra.mxu0 0.0
    %1782 = vmatprep.subr.mxu0 0.0
    %1783 = vmatpush1.msra.mxu0 0.0
    %1784 = vmatprep.subr.mxu0 0.0
    %1785 = vmatpush1.msra.mxu0 0.0
    %1786 = vmatprep.subr.mxu0 0.0
    %1787 = vmatpush1.msra.mxu0 0.0
    %1788 = vmatprep.subr.mxu0 0.0
    %1789 = vmatpush1.msra.mxu0 0.0
    %1790 = vmatprep.subr.mxu0 0.0
    %1791 = vmatpush1.msra.mxu0 0.0
    %1792 = vmatprep.subr.mxu0 0.0
    %1793 = vmatpush1.msra.mxu0 0.0
    %1794 = vmatprep.subr.mxu0 0.0
    %1795 = vmatpush1.msra.mxu0 0.0
    %1796 = vmatprep.subr.mxu0 0.0
    %1797 = vmatpush1.msra.mxu0 0.0
    %1798 = vmatprep.mubr.f32.mxu0 0.0
    %1799 = vmatmul.mubr.f32.gmra.mrb[0].mxu0 %v1732
    %v1800 = vpop.f32.mrb[0].mxu0
    %v1801 = vadd.f32 %v1728, %v1800
    %v1802 = vpop.f32.mrb[0].mxu0
    %1803 = vdwg.mxu0
    %s1804 = scalar_lea.vmem %s0, 104
    %v1805 = vld [vmem:[%s1804] sm:$0xff]
    %v1806 = vld [vmem:[%s101] sm:$0xff]
    %v1807 = vld [vmem:[%s101 + $0x8] sm:$0xff]
    %v1808 = vld [vmem:[%s101 + $0x10] sm:$0xff]
    %v1809 = vld [vmem:[%s101 + $0x18] sm:$0xff]
    %v1810 = vld [vmem:[%s101 + $0x20] sm:$0xff]
    %v1811 = vld [vmem:[%s101 + $0x28] sm:$0xff]
    %v1812 = vld [vmem:[%s101 + $0x30] sm:$0xff]
    %v1813 = vld [vmem:[%s101 + $0x38] sm:$0xff]
    %v1814 = vld [vmem:[%s101 + $0x40] sm:$0xff]
    %v1815 = vld [vmem:[%s101 + $0x48] sm:$0xff]
    %v1816 = vld [vmem:[%s101 + $0x50] sm:$0xff]
    %v1817 = vld [vmem:[%s101 + $0x58] sm:$0xff]
    %v1819 = vsel %vm114, %v1805, 0
    %1821 = vmatprep.subr.mxu0 0.0
    %1822 = vmatpush1.msra.mxu0 %v1806
    %1823 = vmatprep.subr.mxu0 0.0
    %1824 = vmatpush1.msra.mxu0 %v1807
    %1825 = vmatprep.subr.mxu0 0.0
    %1826 = vmatpush1.msra.mxu0 %v1808
    %1827 = vmatprep.subr.mxu0 0.0
    %1828 = vmatpush1.msra.mxu0 %v1809
    %1829 = vmatprep.subr.mxu0 0.0
    %1830 = vmatpush1.msra.mxu0 %v1810
    %1831 = vmatprep.subr.mxu0 0.0
    %1832 = vmatpush1.msra.mxu0 %v1811
    %1833 = vmatprep.subr.mxu0 0.0
    %1834 = vmatpush1.msra.mxu0 %v1812
    %1835 = vmatprep.subr.mxu0 0.0
    %1836 = vmatpush1.msra.mxu0 %v1813
    %1837 = vmatprep.subr.mxu0 0.0
    %1838 = vmatpush1.msra.mxu0 %v1814
    %1839 = vmatprep.subr.mxu0 0.0
    %1840 = vmatpush1.msra.mxu0 %v1815
    %1841 = vmatprep.subr.mxu0 0.0
    %1842 = vmatpush1.msra.mxu0 %v1816
    %1843 = vmatprep.subr.mxu0 0.0
    %1844 = vmatpush1.msra.mxu0 %v1817
    %1845 = vmatprep.subr.mxu0 0.0
    %1846 = vmatpush1.msra.mxu0 0.0
    %1847 = vmatprep.subr.mxu0 0.0
    %1848 = vmatpush1.msra.mxu0 0.0
    %1849 = vmatprep.subr.mxu0 0.0
    %1850 = vmatpush1.msra.mxu0 0.0
    %1851 = vmatprep.subr.mxu0 0.0
    %1852 = vmatpush1.msra.mxu0 0.0
    %1853 = vmatprep.subr.mxu0 0.0
    %1854 = vmatpush1.msra.mxu0 0.0
    %1855 = vmatprep.subr.mxu0 0.0
    %1856 = vmatpush1.msra.mxu0 0.0
    %1857 = vmatprep.subr.mxu0 0.0
    %1858 = vmatpush1.msra.mxu0 0.0
    %1859 = vmatprep.subr.mxu0 0.0
    %1860 = vmatpush1.msra.mxu0 0.0
    %1861 = vmatprep.subr.mxu0 0.0
    %1862 = vmatpush1.msra.mxu0 0.0
    %1863 = vmatprep.subr.mxu0 0.0
    %1864 = vmatpush1.msra.mxu0 0.0
    %1865 = vmatprep.subr.mxu0 0.0
    %1866 = vmatpush1.msra.mxu0 0.0
    %1867 = vmatprep.subr.mxu0 0.0
    %1868 = vmatpush1.msra.mxu0 0.0
    %1869 = vmatprep.subr.mxu0 0.0
    %1870 = vmatpush1.msra.mxu0 0.0
    %1871 = vmatprep.subr.mxu0 0.0
    %1872 = vmatpush1.msra.mxu0 0.0
    %1873 = vmatprep.subr.mxu0 0.0
    %1874 = vmatpush1.msra.mxu0 0.0
    %1875 = vmatprep.subr.mxu0 0.0
    %1876 = vmatpush1.msra.mxu0 0.0
    %1877 = vmatprep.subr.mxu0 0.0
    %1878 = vmatpush1.msra.mxu0 0.0
    %1879 = vmatprep.subr.mxu0 0.0
    %1880 = vmatpush1.msra.mxu0 0.0
    %1881 = vmatprep.subr.mxu0 0.0
    %1882 = vmatpush1.msra.mxu0 0.0
    %1883 = vmatprep.subr.mxu0 0.0
    %1884 = vmatpush1.msra.mxu0 0.0
    %1885 = vmatprep.mubr.f32.mxu0 0.0
    %1886 = vmatmul.mubr.f32.gmra.mrb[0].mxu0 %v1819
    %v1887 = vpop.f32.mrb[0].mxu0
    %v1888 = vadd.f32 0.0, %v1887
    %v1889 = vpop.f32.mrb[0].mxu0
    %1890 = vdwg.mxu0
    %v1891 = vadd.f32 %v1801, %v1888
    %v1892 = vld [vmem:[%s2] sm:$0x1]
    %v1894 = vlaneseq
    %v1895 = vshrl.u32 %v1894, 7
    %v1896 = vsub.s32 0, %v1895
    %v1897 = vrot.slane %v1892, %v1896
    %v1899 = vadd.f32 %v1891, %v1897
    %v1900 = vmax.f32 %v1899, 0.0
    %s1901 = scalar_lea.vmem [#allocation2], 48
    %1902 = vst [vmem:[%s1901] sm:$0xff] %v1900
    %v1903 = vld [vmem:[%s1804] sm:$0xff]
    %v1904 = vld [vmem:[#allocation4] sm:$0xff]
    %v1905 = vld [vmem:[#allocation4 + $0x8] sm:$0xff]
    %v1906 = vld [vmem:[#allocation4 + $0x10] sm:$0xff]
    %v1907 = vld [vmem:[#allocation4 + $0x18] sm:$0xff]
    %v1908 = vld [vmem:[#allocation4 + $0x20] sm:$0xff]
    %v1909 = vld [vmem:[#allocation4 + $0x28] sm:$0xff]
    %v1910 = vld [vmem:[#allocation4 + $0x30] sm:$0xff]
    %v1911 = vld [vmem:[#allocation4 + $0x38] sm:$0xff]
    %v1912 = vld [vmem:[#allocation4 + $0x40] sm:$0xff]
    %v1913 = vld [vmem:[#allocation4 + $0x48] sm:$0xff]
    %v1914 = vld [vmem:[#allocation4 + $0x50] sm:$0xff]
    %v1915 = vld [vmem:[#allocation4 + $0x58] sm:$0xff]
    %s1916 = scalar_lea.vmem %s0, 112
    %v1917 = vld [vmem:[%s1916] sm:$0xff]
    %v1918 = vld [vmem:[%s86] sm:$0xff]
    %v1919 = vld [vmem:[%s86 + $0x8] sm:$0xff]
    %v1920 = vld [vmem:[%s86 + $0x10] sm:$0xff]
    %v1921 = vld [vmem:[%s86 + $0x18] sm:$0xff]
    %v1922 = vld [vmem:[%s86 + $0x20] sm:$0xff]
    %v1923 = vld [vmem:[%s86 + $0x28] sm:$0xff]
    %v1924 = vld [vmem:[%s86 + $0x30] sm:$0xff]
    %v1925 = vld [vmem:[%s86 + $0x38] sm:$0xff]
    %v1926 = vld [vmem:[%s86 + $0x40] sm:$0xff]
    %v1927 = vld [vmem:[%s86 + $0x48] sm:$0xff]
    %v1928 = vld [vmem:[%s86 + $0x50] sm:$0xff]
    %v1929 = vld [vmem:[%s86 + $0x58] sm:$0xff]
    %v1931 = vsel %vm114, %v1917, 0
    %1933 = vmatprep.subr.mxu0 0.0
    %1934 = vmatpush1.msra.mxu0 %v1918
    %1935 = vmatprep.subr.mxu0 0.0
    %1936 = vmatpush1.msra.mxu0 %v1919
    %1937 = vmatprep.subr.mxu0 0.0
    %1938 = vmatpush1.msra.mxu0 %v1920
    %1939 = vmatprep.subr.mxu0 0.0
    %1940 = vmatpush1.msra.mxu0 %v1921
    %1941 = vmatprep.subr.mxu0 0.0
    %1942 = vmatpush1.msra.mxu0 %v1922
    %1943 = vmatprep.subr.mxu0 0.0
    %1944 = vmatpush1.msra.mxu0 %v1923
    %1945 = vmatprep.subr.mxu0 0.0
    %1946 = vmatpush1.msra.mxu0 %v1924
    %1947 = vmatprep.subr.mxu0 0.0
    %1948 = vmatpush1.msra.mxu0 %v1925
    %1949 = vmatprep.subr.mxu0 0.0
    %1950 = vmatpush1.msra.mxu0 %v1926
    %1951 = vmatprep.subr.mxu0 0.0
    %1952 = vmatpush1.msra.mxu0 %v1927
    %1953 = vmatprep.subr.mxu0 0.0
    %1954 = vmatpush1.msra.mxu0 %v1928
    %1955 = vmatprep.subr.mxu0 0.0
    %1956 = vmatpush1.msra.mxu0 %v1929
    %1957 = vmatprep.subr.mxu0 0.0
    %1958 = vmatpush1.msra.mxu0 0.0
    %1959 = vmatprep.subr.mxu0 0.0
    %1960 = vmatpush1.msra.mxu0 0.0
    %1961 = vmatprep.subr.mxu0 0.0
    %1962 = vmatpush1.msra.mxu0 0.0
    %1963 = vmatprep.subr.mxu0 0.0
    %1964 = vmatpush1.msra.mxu0 0.0
    %1965 = vmatprep.subr.mxu0 0.0
    %1966 = vmatpush1.msra.mxu0 0.0
    %1967 = vmatprep.subr.mxu0 0.0
    %1968 = vmatpush1.msra.mxu0 0.0
    %1969 = vmatprep.subr.mxu0 0.0
    %1970 = vmatpush1.msra.mxu0 0.0
    %1971 = vmatprep.subr.mxu0 0.0
    %1972 = vmatpush1.msra.mxu0 0.0
    %1973 = vmatprep.subr.mxu0 0.0
    %1974 = vmatpush1.msra.mxu0 0.0
    %1975 = vmatprep.subr.mxu0 0.0
    %1976 = vmatpush1.msra.mxu0 0.0
    %1977 = vmatprep.subr.mxu0 0.0
    %1978 = vmatpush1.msra.mxu0 0.0
    %1979 = vmatprep.subr.mxu0 0.0
    %1980 = vmatpush1.msra.mxu0 0.0
    %1981 = vmatprep.subr.mxu0 0.0
    %1982 = vmatpush1.msra.mxu0 0.0
    %1983 = vmatprep.subr.mxu0 0.0
    %1984 = vmatpush1.msra.mxu0 0.0
    %1985 = vmatprep.subr.mxu0 0.0
    %1986 = vmatpush1.msra.mxu0 0.0
    %1987 = vmatprep.subr.mxu0 0.0
    %1988 = vmatpush1.msra.mxu0 0.0
    %1989 = vmatprep.subr.mxu0 0.0
    %1990 = vmatpush1.msra.mxu0 0.0
    %1991 = vmatprep.subr.mxu0 0.0
    %1992 = vmatpush1.msra.mxu0 0.0
    %1993 = vmatprep.subr.mxu0 0.0
    %1994 = vmatpush1.msra.mxu0 0.0
    %1995 = vmatprep.subr.mxu0 0.0
    %1996 = vmatpush1.msra.mxu0 0.0
    %1997 = vmatprep.mubr.f32.mxu0 0.0
    %1998 = vmatmul.mubr.f32.gmra.mrb[0].mxu0 %v1931
    %v1999 = vpop.f32.mrb[0].mxu0
    %v2000 = vadd.f32 0.0, %v1999
    %v2001 = vpop.f32.mrb[0].mxu0
    %2002 = vdwg.mxu0
    %v2004 = vsel %vm114, %v1903, 0
    %2006 = vmatprep.subr.mxu0 0.0
    %2007 = vmatpush1.msra.mxu0 %v1904
    %2008 = vmatprep.subr.mxu0 0.0
    %2009 = vmatpush1.msra.mxu0 %v1905
    %2010 = vmatprep.subr.mxu0 0.0
    %2011 = vmatpush1.msra.mxu0 %v1906
    %2012 = vmatprep.subr.mxu0 0.0
    %2013 = vmatpush1.msra.mxu0 %v1907
    %2014 = vmatprep.subr.mxu0 0.0
    %2015 = vmatpush1.msra.mxu0 %v1908
    %2016 = vmatprep.subr.mxu0 0.0
    %2017 = vmatpush1.msra.mxu0 %v1909
    %2018 = vmatprep.subr.mxu0 0.0
    %2019 = vmatpush1.msra.mxu0 %v1910
    %2020 = vmatprep.subr.mxu0 0.0
    %2021 = vmatpush1.msra.mxu0 %v1911
    %2022 = vmatprep.subr.mxu0 0.0
    %2023 = vmatpush1.msra.mxu0 %v1912
    %2024 = vmatprep.subr.mxu0 0.0
    %2025 = vmatpush1.msra.mxu0 %v1913
    %2026 = vmatprep.subr.mxu0 0.0
    %2027 = vmatpush1.msra.mxu0 %v1914
    %2028 = vmatprep.subr.mxu0 0.0
    %2029 = vmatpush1.msra.mxu0 %v1915
    %2030 = vmatprep.subr.mxu0 0.0
    %2031 = vmatpush1.msra.mxu0 0.0
    %2032 = vmatprep.subr.mxu0 0.0
    %2033 = vmatpush1.msra.mxu0 0.0
    %2034 = vmatprep.subr.mxu0 0.0
    %2035 = vmatpush1.msra.mxu0 0.0
    %2036 = vmatprep.subr.mxu0 0.0
    %2037 = vmatpush1.msra.mxu0 0.0
    %2038 = vmatprep.subr.mxu0 0.0
    %2039 = vmatpush1.msra.mxu0 0.0
    %2040 = vmatprep.subr.mxu0 0.0
    %2041 = vmatpush1.msra.mxu0 0.0
    %2042 = vmatprep.subr.mxu0 0.0
    %2043 = vmatpush1.msra.mxu0 0.0
    %2044 = vmatprep.subr.mxu0 0.0
    %2045 = vmatpush1.msra.mxu0 0.0
    %2046 = vmatprep.subr.mxu0 0.0
    %2047 = vmatpush1.msra.mxu0 0.0
    %2048 = vmatprep.subr.mxu0 0.0
    %2049 = vmatpush1.msra.mxu0 0.0
    %2050 = vmatprep.subr.mxu0 0.0
    %2051 = vmatpush1.msra.mxu0 0.0
    %2052 = vmatprep.subr.mxu0 0.0
    %2053 = vmatpush1.msra.mxu0 0.0
    %2054 = vmatprep.subr.mxu0 0.0
    %2055 = vmatpush1.msra.mxu0 0.0
    %2056 = vmatprep.subr.mxu0 0.0
    %2057 = vmatpush1.msra.mxu0 0.0
    %2058 = vmatprep.subr.mxu0 0.0
    %2059 = vmatpush1.msra.mxu0 0.0
    %2060 = vmatprep.subr.mxu0 0.0
    %2061 = vmatpush1.msra.mxu0 0.0
    %2062 = vmatprep.subr.mxu0 0.0
    %2063 = vmatpush1.msra.mxu0 0.0
    %2064 = vmatprep.subr.mxu0 0.0
    %2065 = vmatpush1.msra.mxu0 0.0
    %2066 = vmatprep.subr.mxu0 0.0
    %2067 = vmatpush1.msra.mxu0 0.0
    %2068 = vmatprep.subr.mxu0 0.0
    %2069 = vmatpush1.msra.mxu0 0.0
    %2070 = vmatprep.mubr.f32.mxu0 0.0
    %2071 = vmatmul.mubr.f32.gmra.mrb[0].mxu0 %v2004
    %v2072 = vpop.f32.mrb[0].mxu0
    %v2073 = vadd.f32 %v2000, %v2072
    %v2074 = vpop.f32.mrb[0].mxu0
    %2075 = vdwg.mxu0
    %s2076 = scalar_lea.vmem %s0, 120
    %v2077 = vld [vmem:[%s2076] sm:$0xff]
    %v2078 = vld [vmem:[%s101] sm:$0xff]
    %v2079 = vld [vmem:[%s101 + $0x8] sm:$0xff]
    %v2080 = vld [vmem:[%s101 + $0x10] sm:$0xff]
    %v2081 = vld [vmem:[%s101 + $0x18] sm:$0xff]
    %v2082 = vld [vmem:[%s101 + $0x20] sm:$0xff]
    %v2083 = vld [vmem:[%s101 + $0x28] sm:$0xff]
    %v2084 = vld [vmem:[%s101 + $0x30] sm:$0xff]
    %v2085 = vld [vmem:[%s101 + $0x38] sm:$0xff]
    %v2086 = vld [vmem:[%s101 + $0x40] sm:$0xff]
    %v2087 = vld [vmem:[%s101 + $0x48] sm:$0xff]
    %v2088 = vld [vmem:[%s101 + $0x50] sm:$0xff]
    %v2089 = vld [vmem:[%s101 + $0x58] sm:$0xff]
    %v2091 = vsel %vm114, %v2077, 0
    %2093 = vmatprep.subr.mxu0 0.0
    %2094 = vmatpush1.msra.mxu0 %v2078
    %2095 = vmatprep.subr.mxu0 0.0
    %2096 = vmatpush1.msra.mxu0 %v2079
    %2097 = vmatprep.subr.mxu0 0.0
    %2098 = vmatpush1.msra.mxu0 %v2080
    %2099 = vmatprep.subr.mxu0 0.0
    %2100 = vmatpush1.msra.mxu0 %v2081
    %2101 = vmatprep.subr.mxu0 0.0
    %2102 = vmatpush1.msra.mxu0 %v2082
    %2103 = vmatprep.subr.mxu0 0.0
    %2104 = vmatpush1.msra.mxu0 %v2083
    %2105 = vmatprep.subr.mxu0 0.0
    %2106 = vmatpush1.msra.mxu0 %v2084
    %2107 = vmatprep.subr.mxu0 0.0
    %2108 = vmatpush1.msra.mxu0 %v2085
    %2109 = vmatprep.subr.mxu0 0.0
    %2110 = vmatpush1.msra.mxu0 %v2086
    %2111 = vmatprep.subr.mxu0 0.0
    %2112 = vmatpush1.msra.mxu0 %v2087
    %2113 = vmatprep.subr.mxu0 0.0
    %2114 = vmatpush1.msra.mxu0 %v2088
    %2115 = vmatprep.subr.mxu0 0.0
    %2116 = vmatpush1.msra.mxu0 %v2089
    %2117 = vmatprep.subr.mxu0 0.0
    %2118 = vmatpush1.msra.mxu0 0.0
    %2119 = vmatprep.subr.mxu0 0.0
    %2120 = vmatpush1.msra.mxu0 0.0
    %2121 = vmatprep.subr.mxu0 0.0
    %2122 = vmatpush1.msra.mxu0 0.0
    %2123 = vmatprep.subr.mxu0 0.0
    %2124 = vmatpush1.msra.mxu0 0.0
    %2125 = vmatprep.subr.mxu0 0.0
    %2126 = vmatpush1.msra.mxu0 0.0
    %2127 = vmatprep.subr.mxu0 0.0
    %2128 = vmatpush1.msra.mxu0 0.0
    %2129 = vmatprep.subr.mxu0 0.0
    %2130 = vmatpush1.msra.mxu0 0.0
    %2131 = vmatprep.subr.mxu0 0.0
    %2132 = vmatpush1.msra.mxu0 0.0
    %2133 = vmatprep.subr.mxu0 0.0
    %2134 = vmatpush1.msra.mxu0 0.0
    %2135 = vmatprep.subr.mxu0 0.0
    %2136 = vmatpush1.msra.mxu0 0.0
    %2137 = vmatprep.subr.mxu0 0.0
    %2138 = vmatpush1.msra.mxu0 0.0
    %2139 = vmatprep.subr.mxu0 0.0
    %2140 = vmatpush1.msra.mxu0 0.0
    %2141 = vmatprep.subr.mxu0 0.0
    %2142 = vmatpush1.msra.mxu0 0.0
    %2143 = vmatprep.subr.mxu0 0.0
    %2144 = vmatpush1.msra.mxu0 0.0
    %2145 = vmatprep.subr.mxu0 0.0
    %2146 = vmatpush1.msra.mxu0 0.0
    %2147 = vmatprep.subr.mxu0 0.0
    %2148 = vmatpush1.msra.mxu0 0.0
    %2149 = vmatprep.subr.mxu0 0.0
    %2150 = vmatpush1.msra.mxu0 0.0
    %2151 = vmatprep.subr.mxu0 0.0
    %2152 = vmatpush1.msra.mxu0 0.0
    %2153 = vmatprep.subr.mxu0 0.0
    %2154 = vmatpush1.msra.mxu0 0.0
    %2155 = vmatprep.subr.mxu0 0.0
    %2156 = vmatpush1.msra.mxu0 0.0
    %2157 = vmatprep.mubr.f32.mxu0 0.0
    %2158 = vmatmul.mubr.f32.gmra.mrb[0].mxu0 %v2091
    %v2159 = vpop.f32.mrb[0].mxu0
    %v2160 = vadd.f32 0.0, %v2159
    %v2161 = vpop.f32.mrb[0].mxu0
    %2162 = vdwg.mxu0
    %v2163 = vadd.f32 %v2073, %v2160
    %v2164 = vld [vmem:[%s2] sm:$0x1]
    %v2166 = vlaneseq
    %v2167 = vshrl.u32 %v2166, 7
    %v2168 = vsub.s32 0, %v2167
    %v2169 = vrot.slane %v2164, %v2168
    %v2171 = vadd.f32 %v2163, %v2169
    %v2172 = vmax.f32 %v2171, 0.0
    %s2173 = scalar_lea.vmem [#allocation2], 56
    %2174 = vst [vmem:[%s2173] sm:$0xff] %v2172
    %v2175 = vld [vmem:[%s2076] sm:$0xff]
    %v2176 = vld [vmem:[#allocation4] sm:$0xff]
    %v2177 = vld [vmem:[#allocation4 + $0x8] sm:$0xff]
    %v2178 = vld [vmem:[#allocation4 + $0x10] sm:$0xff]
    %v2179 = vld [vmem:[#allocation4 + $0x18] sm:$0xff]
    %v2180 = vld [vmem:[#allocation4 + $0x20] sm:$0xff]
    %v2181 = vld [vmem:[#allocation4 + $0x28] sm:$0xff]
    %v2182 = vld [vmem:[#allocation4 + $0x30] sm:$0xff]
    %v2183 = vld [vmem:[#allocation4 + $0x38] sm:$0xff]
    %v2184 = vld [vmem:[#allocation4 + $0x40] sm:$0xff]
    %v2185 = vld [vmem:[#allocation4 + $0x48] sm:$0xff]
    %v2186 = vld [vmem:[#allocation4 + $0x50] sm:$0xff]
    %v2187 = vld [vmem:[#allocation4 + $0x58] sm:$0xff]
    %s2188 = scalar_lea.vmem %s0, 128
    %v2189 = vld [vmem:[%s2188] sm:$0xff]
    %v2190 = vld [vmem:[%s86] sm:$0xff]
    %v2191 = vld [vmem:[%s86 + $0x8] sm:$0xff]
    %v2192 = vld [vmem:[%s86 + $0x10] sm:$0xff]
    %v2193 = vld [vmem:[%s86 + $0x18] sm:$0xff]
    %v2194 = vld [vmem:[%s86 + $0x20] sm:$0xff]
    %v2195 = vld [vmem:[%s86 + $0x28] sm:$0xff]
    %v2196 = vld [vmem:[%s86 + $0x30] sm:$0xff]
    %v2197 = vld [vmem:[%s86 + $0x38] sm:$0xff]
    %v2198 = vld [vmem:[%s86 + $0x40] sm:$0xff]
    %v2199 = vld [vmem:[%s86 + $0x48] sm:$0xff]
    %v2200 = vld [vmem:[%s86 + $0x50] sm:$0xff]
    %v2201 = vld [vmem:[%s86 + $0x58] sm:$0xff]
    %v2203 = vsel %vm114, %v2189, 0
    %2205 = vmatprep.subr.mxu0 0.0
    %2206 = vmatpush1.msra.mxu0 %v2190
    %2207 = vmatprep.subr.mxu0 0.0
    %2208 = vmatpush1.msra.mxu0 %v2191
    %2209 = vmatprep.subr.mxu0 0.0
    %2210 = vmatpush1.msra.mxu0 %v2192
    %2211 = vmatprep.subr.mxu0 0.0
    %2212 = vmatpush1.msra.mxu0 %v2193
    %2213 = vmatprep.subr.mxu0 0.0
    %2214 = vmatpush1.msra.mxu0 %v2194
    %2215 = vmatprep.subr.mxu0 0.0
    %2216 = vmatpush1.msra.mxu0 %v2195
    %2217 = vmatprep.subr.mxu0 0.0
    %2218 = vmatpush1.msra.mxu0 %v2196
    %2219 = vmatprep.subr.mxu0 0.0
    %2220 = vmatpush1.msra.mxu0 %v2197
    %2221 = vmatprep.subr.mxu0 0.0
    %2222 = vmatpush1.msra.mxu0 %v2198
    %2223 = vmatprep.subr.mxu0 0.0
    %2224 = vmatpush1.msra.mxu0 %v2199
    %2225 = vmatprep.subr.mxu0 0.0
    %2226 = vmatpush1.msra.mxu0 %v2200
    %2227 = vmatprep.subr.mxu0 0.0
    %2228 = vmatpush1.msra.mxu0 %v2201
    %2229 = vmatprep.subr.mxu0 0.0
    %2230 = vmatpush1.msra.mxu0 0.0
    %2231 = vmatprep.subr.mxu0 0.0
    %2232 = vmatpush1.msra.mxu0 0.0
    %2233 = vmatprep.subr.mxu0 0.0
    %2234 = vmatpush1.msra.mxu0 0.0
    %2235 = vmatprep.subr.mxu0 0.0
    %2236 = vmatpush1.msra.mxu0 0.0
    %2237 = vmatprep.subr.mxu0 0.0
    %2238 = vmatpush1.msra.mxu0 0.0
    %2239 = vmatprep.subr.mxu0 0.0
    %2240 = vmatpush1.msra.mxu0 0.0
    %2241 = vmatprep.subr.mxu0 0.0
    %2242 = vmatpush1.msra.mxu0 0.0
    %2243 = vmatprep.subr.mxu0 0.0
    %2244 = vmatpush1.msra.mxu0 0.0
    %2245 = vmatprep.subr.mxu0 0.0
    %2246 = vmatpush1.msra.mxu0 0.0
    %2247 = vmatprep.subr.mxu0 0.0
    %2248 = vmatpush1.msra.mxu0 0.0
    %2249 = vmatprep.subr.mxu0 0.0
    %2250 = vmatpush1.msra.mxu0 0.0
    %2251 = vmatprep.subr.mxu0 0.0
    %2252 = vmatpush1.msra.mxu0 0.0
    %2253 = vmatprep.subr.mxu0 0.0
    %2254 = vmatpush1.msra.mxu0 0.0
    %2255 = vmatprep.subr.mxu0 0.0
    %2256 = vmatpush1.msra.mxu0 0.0
    %2257 = vmatprep.subr.mxu0 0.0
    %2258 = vmatpush1.msra.mxu0 0.0
    %2259 = vmatprep.subr.mxu0 0.0
    %2260 = vmatpush1.msra.mxu0 0.0
    %2261 = vmatprep.subr.mxu0 0.0
    %2262 = vmatpush1.msra.mxu0 0.0
    %2263 = vmatprep.subr.mxu0 0.0
    %2264 = vmatpush1.msra.mxu0 0.0
    %2265 = vmatprep.subr.mxu0 0.0
    %2266 = vmatpush1.msra.mxu0 0.0
    %2267 = vmatprep.subr.mxu0 0.0
    %2268 = vmatpush1.msra.mxu0 0.0
    %2269 = vmatprep.mubr.f32.mxu0 0.0
    %2270 = vmatmul.mubr.f32.gmra.mrb[0].mxu0 %v2203
    %v2271 = vpop.f32.mrb[0].mxu0
    %v2272 = vadd.f32 0.0, %v2271
    %v2273 = vpop.f32.mrb[0].mxu0
    %2274 = vdwg.mxu0
    %v2276 = vsel %vm114, %v2175, 0
    %2278 = vmatprep.subr.mxu0 0.0
    %2279 = vmatpush1.msra.mxu0 %v2176
    %2280 = vmatprep.subr.mxu0 0.0
    %2281 = vmatpush1.msra.mxu0 %v2177
    %2282 = vmatprep.subr.mxu0 0.0
    %2283 = vmatpush1.msra.mxu0 %v2178
    %2284 = vmatprep.subr.mxu0 0.0
    %2285 = vmatpush1.msra.mxu0 %v2179
    %2286 = vmatprep.subr.mxu0 0.0
    %2287 = vmatpush1.msra.mxu0 %v2180
    %2288 = vmatprep.subr.mxu0 0.0
    %2289 = vmatpush1.msra.mxu0 %v2181
    %2290 = vmatprep.subr.mxu0 0.0
    %2291 = vmatpush1.msra.mxu0 %v2182
    %2292 = vmatprep.subr.mxu0 0.0
    %2293 = vmatpush1.msra.mxu0 %v2183
    %2294 = vmatprep.subr.mxu0 0.0
    %2295 = vmatpush1.msra.mxu0 %v2184
    %2296 = vmatprep.subr.mxu0 0.0
    %2297 = vmatpush1.msra.mxu0 %v2185
    %2298 = vmatprep.subr.mxu0 0.0
    %2299 = vmatpush1.msra.mxu0 %v2186
    %2300 = vmatprep.subr.mxu0 0.0
    %2301 = vmatpush1.msra.mxu0 %v2187
    %2302 = vmatprep.subr.mxu0 0.0
    %2303 = vmatpush1.msra.mxu0 0.0
    %2304 = vmatprep.subr.mxu0 0.0
    %2305 = vmatpush1.msra.mxu0 0.0
    %2306 = vmatprep.subr.mxu0 0.0
    %2307 = vmatpush1.msra.mxu0 0.0
    %2308 = vmatprep.subr.mxu0 0.0
    %2309 = vmatpush1.msra.mxu0 0.0
    %2310 = vmatprep.subr.mxu0 0.0
    %2311 = vmatpush1.msra.mxu0 0.0
    %2312 = vmatprep.subr.mxu0 0.0
    %2313 = vmatpush1.msra.mxu0 0.0
    %2314 = vmatprep.subr.mxu0 0.0
    %2315 = vmatpush1.msra.mxu0 0.0
    %2316 = vmatprep.subr.mxu0 0.0
    %2317 = vmatpush1.msra.mxu0 0.0
    %2318 = vmatprep.subr.mxu0 0.0
    %2319 = vmatpush1.msra.mxu0 0.0
    %2320 = vmatprep.subr.mxu0 0.0
    %2321 = vmatpush1.msra.mxu0 0.0
    %2322 = vmatprep.subr.mxu0 0.0
    %2323 = vmatpush1.msra.mxu0 0.0
    %2324 = vmatprep.subr.mxu0 0.0
    %2325 = vmatpush1.msra.mxu0 0.0
    %2326 = vmatprep.subr.mxu0 0.0
    %2327 = vmatpush1.msra.mxu0 0.0
    %2328 = vmatprep.subr.mxu0 0.0
    %2329 = vmatpush1.msra.mxu0 0.0
    %2330 = vmatprep.subr.mxu0 0.0
    %2331 = vmatpush1.msra.mxu0 0.0
    %2332 = vmatprep.subr.mxu0 0.0
    %2333 = vmatpush1.msra.mxu0 0.0
    %2334 = vmatprep.subr.mxu0 0.0
    %2335 = vmatpush1.msra.mxu0 0.0
    %2336 = vmatprep.subr.mxu0 0.0
    %2337 = vmatpush1.msra.mxu0 0.0
    %2338 = vmatprep.subr.mxu0 0.0
    %2339 = vmatpush1.msra.mxu0 0.0
    %2340 = vmatprep.subr.mxu0 0.0
    %2341 = vmatpush1.msra.mxu0 0.0
    %2342 = vmatprep.mubr.f32.mxu0 0.0
    %2343 = vmatmul.mubr.f32.gmra.mrb[0].mxu0 %v2276
    %v2344 = vpop.f32.mrb[0].mxu0
    %v2345 = vadd.f32 %v2272, %v2344
    %v2346 = vpop.f32.mrb[0].mxu0
    %2347 = vdwg.mxu0
    %s2348 = scalar_lea.vmem %s0, 136
    %v2349 = vld [vmem:[%s2348] sm:$0xff]
    %v2350 = vld [vmem:[%s101] sm:$0xff]
    %v2351 = vld [vmem:[%s101 + $0x8] sm:$0xff]
    %v2352 = vld [vmem:[%s101 + $0x10] sm:$0xff]
    %v2353 = vld [vmem:[%s101 + $0x18] sm:$0xff]
    %v2354 = vld [vmem:[%s101 + $0x20] sm:$0xff]
    %v2355 = vld [vmem:[%s101 + $0x28] sm:$0xff]
    %v2356 = vld [vmem:[%s101 + $0x30] sm:$0xff]
    %v2357 = vld [vmem:[%s101 + $0x38] sm:$0xff]
    %v2358 = vld [vmem:[%s101 + $0x40] sm:$0xff]
    %v2359 = vld [vmem:[%s101 + $0x48] sm:$0xff]
    %v2360 = vld [vmem:[%s101 + $0x50] sm:$0xff]
    %v2361 = vld [vmem:[%s101 + $0x58] sm:$0xff]
    %v2363 = vsel %vm114, %v2349, 0
    %2365 = vmatprep.subr.mxu0 0.0
    %2366 = vmatpush1.msra.mxu0 %v2350
    %2367 = vmatprep.subr.mxu0 0.0
    %2368 = vmatpush1.msra.mxu0 %v2351
    %2369 = vmatprep.subr.mxu0 0.0
    %2370 = vmatpush1.msra.mxu0 %v2352
    %2371 = vmatprep.subr.mxu0 0.0
    %2372 = vmatpush1.msra.mxu0 %v2353
    %2373 = vmatprep.subr.mxu0 0.0
    %2374 = vmatpush1.msra.mxu0 %v2354
    %2375 = vmatprep.subr.mxu0 0.0
    %2376 = vmatpush1.msra.mxu0 %v2355
    %2377 = vmatprep.subr.mxu0 0.0
    %2378 = vmatpush1.msra.mxu0 %v2356
    %2379 = vmatprep.subr.mxu0 0.0
    %2380 = vmatpush1.msra.mxu0 %v2357
    %2381 = vmatprep.subr.mxu0 0.0
    %2382 = vmatpush1.msra.mxu0 %v2358
    %2383 = vmatprep.subr.mxu0 0.0
    %2384 = vmatpush1.msra.mxu0 %v2359
    %2385 = vmatprep.subr.mxu0 0.0
    %2386 = vmatpush1.msra.mxu0 %v2360
    %2387 = vmatprep.subr.mxu0 0.0
    %2388 = vmatpush1.msra.mxu0 %v2361
    %2389 = vmatprep.subr.mxu0 0.0
    %2390 = vmatpush1.msra.mxu0 0.0
    %2391 = vmatprep.subr.mxu0 0.0
    %2392 = vmatpush1.msra.mxu0 0.0
    %2393 = vmatprep.subr.mxu0 0.0
    %2394 = vmatpush1.msra.mxu0 0.0
    %2395 = vmatprep.subr.mxu0 0.0
    %2396 = vmatpush1.msra.mxu0 0.0
    %2397 = vmatprep.subr.mxu0 0.0
    %2398 = vmatpush1.msra.mxu0 0.0
    %2399 = vmatprep.subr.mxu0 0.0
    %2400 = vmatpush1.msra.mxu0 0.0
    %2401 = vmatprep.subr.mxu0 0.0
    %2402 = vmatpush1.msra.mxu0 0.0
    %2403 = vmatprep.subr.mxu0 0.0
    %2404 = vmatpush1.msra.mxu0 0.0
    %2405 = vmatprep.subr.mxu0 0.0
    %2406 = vmatpush1.msra.mxu0 0.0
    %2407 = vmatprep.subr.mxu0 0.0
    %2408 = vmatpush1.msra.mxu0 0.0
    %2409 = vmatprep.subr.mxu0 0.0
    %2410 = vmatpush1.msra.mxu0 0.0
    %2411 = vmatprep.subr.mxu0 0.0
    %2412 = vmatpush1.msra.mxu0 0.0
    %2413 = vmatprep.subr.mxu0 0.0
    %2414 = vmatpush1.msra.mxu0 0.0
    %2415 = vmatprep.subr.mxu0 0.0
    %2416 = vmatpush1.msra.mxu0 0.0
    %2417 = vmatprep.subr.mxu0 0.0
    %2418 = vmatpush1.msra.mxu0 0.0
    %2419 = vmatprep.subr.mxu0 0.0
    %2420 = vmatpush1.msra.mxu0 0.0
    %2421 = vmatprep.subr.mxu0 0.0
    %2422 = vmatpush1.msra.mxu0 0.0
    %2423 = vmatprep.subr.mxu0 0.0
    %2424 = vmatpush1.msra.mxu0 0.0
    %2425 = vmatprep.subr.mxu0 0.0
    %2426 = vmatpush1.msra.mxu0 0.0
    %2427 = vmatprep.subr.mxu0 0.0
    %2428 = vmatpush1.msra.mxu0 0.0
    %2429 = vmatprep.mubr.f32.mxu0 0.0
    %2430 = vmatmul.mubr.f32.gmra.mrb[0].mxu0 %v2363
    %v2431 = vpop.f32.mrb[0].mxu0
    %v2432 = vadd.f32 0.0, %v2431
    %v2433 = vpop.f32.mrb[0].mxu0
    %2434 = vdwg.mxu0
    %v2435 = vadd.f32 %v2345, %v2432
    %v2436 = vld [vmem:[%s2] sm:$0x1]
    %v2438 = vlaneseq
    %v2439 = vshrl.u32 %v2438, 7
    %v2440 = vsub.s32 0, %v2439
    %v2441 = vrot.slane %v2436, %v2440
    %v2443 = vadd.f32 %v2435, %v2441
    %v2444 = vmax.f32 %v2443, 0.0
    %s2445 = scalar_lea.vmem [#allocation2], 64
    %2446 = vst [vmem:[%s2445] sm:$0xff] %v2444
    %v2447 = vld [vmem:[%s2348] sm:$0xff]
    %v2448 = vld [vmem:[#allocation4] sm:$0xff]
    %v2449 = vld [vmem:[#allocation4 + $0x8] sm:$0xff]
    %v2450 = vld [vmem:[#allocation4 + $0x10] sm:$0xff]
    %v2451 = vld [vmem:[#allocation4 + $0x18] sm:$0xff]
    %v2452 = vld [vmem:[#allocation4 + $0x20] sm:$0xff]
    %v2453 = vld [vmem:[#allocation4 + $0x28] sm:$0xff]
    %v2454 = vld [vmem:[#allocation4 + $0x30] sm:$0xff]
    %v2455 = vld [vmem:[#allocation4 + $0x38] sm:$0xff]
    %v2456 = vld [vmem:[#allocation4 + $0x40] sm:$0xff]
    %v2457 = vld [vmem:[#allocation4 + $0x48] sm:$0xff]
    %v2458 = vld [vmem:[#allocation4 + $0x50] sm:$0xff]
    %v2459 = vld [vmem:[#allocation4 + $0x58] sm:$0xff]
    %s2460 = scalar_lea.vmem %s0, 144
    %v2461 = vld [vmem:[%s2460] sm:$0xff]
    %v2462 = vld [vmem:[%s86] sm:$0xff]
    %v2463 = vld [vmem:[%s86 + $0x8] sm:$0xff]
    %v2464 = vld [vmem:[%s86 + $0x10] sm:$0xff]
    %v2465 = vld [vmem:[%s86 + $0x18] sm:$0xff]
    %v2466 = vld [vmem:[%s86 + $0x20] sm:$0xff]
    %v2467 = vld [vmem:[%s86 + $0x28] sm:$0xff]
    %v2468 = vld [vmem:[%s86 + $0x30] sm:$0xff]
    %v2469 = vld [vmem:[%s86 + $0x38] sm:$0xff]
    %v2470 = vld [vmem:[%s86 + $0x40] sm:$0xff]
    %v2471 = vld [vmem:[%s86 + $0x48] sm:$0xff]
    %v2472 = vld [vmem:[%s86 + $0x50] sm:$0xff]
    %v2473 = vld [vmem:[%s86 + $0x58] sm:$0xff]
    %v2475 = vsel %vm114, %v2461, 0
    %2477 = vmatprep.subr.mxu0 0.0
    %2478 = vmatpush1.msra.mxu0 %v2462
    %2479 = vmatprep.subr.mxu0 0.0
    %2480 = vmatpush1.msra.mxu0 %v2463
    %2481 = vmatprep.subr.mxu0 0.0
    %2482 = vmatpush1.msra.mxu0 %v2464
    %2483 = vmatprep.subr.mxu0 0.0
    %2484 = vmatpush1.msra.mxu0 %v2465
    %2485 = vmatprep.subr.mxu0 0.0
    %2486 = vmatpush1.msra.mxu0 %v2466
    %2487 = vmatprep.subr.mxu0 0.0
    %2488 = vmatpush1.msra.mxu0 %v2467
    %2489 = vmatprep.subr.mxu0 0.0
    %2490 = vmatpush1.msra.mxu0 %v2468
    %2491 = vmatprep.subr.mxu0 0.0
    %2492 = vmatpush1.msra.mxu0 %v2469
    %2493 = vmatprep.subr.mxu0 0.0
    %2494 = vmatpush1.msra.mxu0 %v2470
    %2495 = vmatprep.subr.mxu0 0.0
    %2496 = vmatpush1.msra.mxu0 %v2471
    %2497 = vmatprep.subr.mxu0 0.0
    %2498 = vmatpush1.msra.mxu0 %v2472
    %2499 = vmatprep.subr.mxu0 0.0
    %2500 = vmatpush1.msra.mxu0 %v2473
    %2501 = vmatprep.subr.mxu0 0.0
    %2502 = vmatpush1.msra.mxu0 0.0
    %2503 = vmatprep.subr.mxu0 0.0
    %2504 = vmatpush1.msra.mxu0 0.0
    %2505 = vmatprep.subr.mxu0 0.0
    %2506 = vmatpush1.msra.mxu0 0.0
    %2507 = vmatprep.subr.mxu0 0.0
    %2508 = vmatpush1.msra.mxu0 0.0
    %2509 = vmatprep.subr.mxu0 0.0
    %2510 = vmatpush1.msra.mxu0 0.0
    %2511 = vmatprep.subr.mxu0 0.0
    %2512 = vmatpush1.msra.mxu0 0.0
    %2513 = vmatprep.subr.mxu0 0.0
    %2514 = vmatpush1.msra.mxu0 0.0
    %2515 = vmatprep.subr.mxu0 0.0
    %2516 = vmatpush1.msra.mxu0 0.0
    %2517 = vmatprep.subr.mxu0 0.0
    %2518 = vmatpush1.msra.mxu0 0.0
    %2519 = vmatprep.subr.mxu0 0.0
    %2520 = vmatpush1.msra.mxu0 0.0
    %2521 = vmatprep.subr.mxu0 0.0
    %2522 = vmatpush1.msra.mxu0 0.0
    %2523 = vmatprep.subr.mxu0 0.0
    %2524 = vmatpush1.msra.mxu0 0.0
    %2525 = vmatprep.subr.mxu0 0.0
    %2526 = vmatpush1.msra.mxu0 0.0
    %2527 = vmatprep.subr.mxu0 0.0
    %2528 = vmatpush1.msra.mxu0 0.0
    %2529 = vmatprep.subr.mxu0 0.0
    %2530 = vmatpush1.msra.mxu0 0.0
    %2531 = vmatprep.subr.mxu0 0.0
    %2532 = vmatpush1.msra.mxu0 0.0
    %2533 = vmatprep.subr.mxu0 0.0
    %2534 = vmatpush1.msra.mxu0 0.0
    %2535 = vmatprep.subr.mxu0 0.0
    %2536 = vmatpush1.msra.mxu0 0.0
    %2537 = vmatprep.subr.mxu0 0.0
    %2538 = vmatpush1.msra.mxu0 0.0
    %2539 = vmatprep.subr.mxu0 0.0
    %2540 = vmatpush1.msra.mxu0 0.0
    %2541 = vmatprep.mubr.f32.mxu0 0.0
    %2542 = vmatmul.mubr.f32.gmra.mrb[0].mxu0 %v2475
    %v2543 = vpop.f32.mrb[0].mxu0
    %v2544 = vadd.f32 0.0, %v2543
    %v2545 = vpop.f32.mrb[0].mxu0
    %2546 = vdwg.mxu0
    %v2548 = vsel %vm114, %v2447, 0
    %2550 = vmatprep.subr.mxu0 0.0
    %2551 = vmatpush1.msra.mxu0 %v2448
    %2552 = vmatprep.subr.mxu0 0.0
    %2553 = vmatpush1.msra.mxu0 %v2449
    %2554 = vmatprep.subr.mxu0 0.0
    %2555 = vmatpush1.msra.mxu0 %v2450
    %2556 = vmatprep.subr.mxu0 0.0
    %2557 = vmatpush1.msra.mxu0 %v2451
    %2558 = vmatprep.subr.mxu0 0.0
    %2559 = vmatpush1.msra.mxu0 %v2452
    %2560 = vmatprep.subr.mxu0 0.0
    %2561 = vmatpush1.msra.mxu0 %v2453
    %2562 = vmatprep.subr.mxu0 0.0
    %2563 = vmatpush1.msra.mxu0 %v2454
    %2564 = vmatprep.subr.mxu0 0.0
    %2565 = vmatpush1.msra.mxu0 %v2455
    %2566 = vmatprep.subr.mxu0 0.0
    %2567 = vmatpush1.msra.mxu0 %v2456
    %2568 = vmatprep.subr.mxu0 0.0
    %2569 = vmatpush1.msra.mxu0 %v2457
    %2570 = vmatprep.subr.mxu0 0.0
    %2571 = vmatpush1.msra.mxu0 %v2458
    %2572 = vmatprep.subr.mxu0 0.0
    %2573 = vmatpush1.msra.mxu0 %v2459
    %2574 = vmatprep.subr.mxu0 0.0
    %2575 = vmatpush1.msra.mxu0 0.0
    %2576 = vmatprep.subr.mxu0 0.0
    %2577 = vmatpush1.msra.mxu0 0.0
    %2578 = vmatprep.subr.mxu0 0.0
    %2579 = vmatpush1.msra.mxu0 0.0
    %2580 = vmatprep.subr.mxu0 0.0
    %2581 = vmatpush1.msra.mxu0 0.0
    %2582 = vmatprep.subr.mxu0 0.0
    %2583 = vmatpush1.msra.mxu0 0.0
    %2584 = vmatprep.subr.mxu0 0.0
    %2585 = vmatpush1.msra.mxu0 0.0
    %2586 = vmatprep.subr.mxu0 0.0
    %2587 = vmatpush1.msra.mxu0 0.0
    %2588 = vmatprep.subr.mxu0 0.0
    %2589 = vmatpush1.msra.mxu0 0.0
    %2590 = vmatprep.subr.mxu0 0.0
    %2591 = vmatpush1.msra.mxu0 0.0
    %2592 = vmatprep.subr.mxu0 0.0
    %2593 = vmatpush1.msra.mxu0 0.0
    %2594 = vmatprep.subr.mxu0 0.0
    %2595 = vmatpush1.msra.mxu0 0.0
    %2596 = vmatprep.subr.mxu0 0.0
    %2597 = vmatpush1.msra.mxu0 0.0
    %2598 = vmatprep.subr.mxu0 0.0
    %2599 = vmatpush1.msra.mxu0 0.0
    %2600 = vmatprep.subr.mxu0 0.0
    %2601 = vmatpush1.msra.mxu0 0.0
    %2602 = vmatprep.subr.mxu0 0.0
    %2603 = vmatpush1.msra.mxu0 0.0
    %2604 = vmatprep.subr.mxu0 0.0
    %2605 = vmatpush1.msra.mxu0 0.0
    %2606 = vmatprep.subr.mxu0 0.0
    %2607 = vmatpush1.msra.mxu0 0.0
    %2608 = vmatprep.subr.mxu0 0.0
    %2609 = vmatpush1.msra.mxu0 0.0
    %2610 = vmatprep.subr.mxu0 0.0
    %2611 = vmatpush1.msra.mxu0 0.0
    %2612 = vmatprep.subr.mxu0 0.0
    %2613 = vmatpush1.msra.mxu0 0.0
    %2614 = vmatprep.mubr.f32.mxu0 0.0
    %2615 = vmatmul.mubr.f32.gmra.mrb[0].mxu0 %v2548
    %v2616 = vpop.f32.mrb[0].mxu0
    %v2617 = vadd.f32 %v2544, %v2616
    %v2618 = vpop.f32.mrb[0].mxu0
    %2619 = vdwg.mxu0
    %s2620 = scalar_lea.vmem %s0, 152
    %v2621 = vld [vmem:[%s2620] sm:$0xff]
    %v2622 = vld [vmem:[%s101] sm:$0xff]
    %v2623 = vld [vmem:[%s101 + $0x8] sm:$0xff]
    %v2624 = vld [vmem:[%s101 + $0x10] sm:$0xff]
    %v2625 = vld [vmem:[%s101 + $0x18] sm:$0xff]
    %v2626 = vld [vmem:[%s101 + $0x20] sm:$0xff]
    %v2627 = vld [vmem:[%s101 + $0x28] sm:$0xff]
    %v2628 = vld [vmem:[%s101 + $0x30] sm:$0xff]
    %v2629 = vld [vmem:[%s101 + $0x38] sm:$0xff]
    %v2630 = vld [vmem:[%s101 + $0x40] sm:$0xff]
    %v2631 = vld [vmem:[%s101 + $0x48] sm:$0xff]
    %v2632 = vld [vmem:[%s101 + $0x50] sm:$0xff]
    %v2633 = vld [vmem:[%s101 + $0x58] sm:$0xff]
    %v2635 = vsel %vm114, %v2621, 0
    %2637 = vmatprep.subr.mxu0 0.0
    %2638 = vmatpush1.msra.mxu0 %v2622
    %2639 = vmatprep.subr.mxu0 0.0
    %2640 = vmatpush1.msra.mxu0 %v2623
    %2641 = vmatprep.subr.mxu0 0.0
    %2642 = vmatpush1.msra.mxu0 %v2624
    %2643 = vmatprep.subr.mxu0 0.0
    %2644 = vmatpush1.msra.mxu0 %v2625
    %2645 = vmatprep.subr.mxu0 0.0
    %2646 = vmatpush1.msra.mxu0 %v2626
    %2647 = vmatprep.subr.mxu0 0.0
    %2648 = vmatpush1.msra.mxu0 %v2627
    %2649 = vmatprep.subr.mxu0 0.0
    %2650 = vmatpush1.msra.mxu0 %v2628
    %2651 = vmatprep.subr.mxu0 0.0
    %2652 = vmatpush1.msra.mxu0 %v2629
    %2653 = vmatprep.subr.mxu0 0.0
    %2654 = vmatpush1.msra.mxu0 %v2630
    %2655 = vmatprep.subr.mxu0 0.0
    %2656 = vmatpush1.msra.mxu0 %v2631
    %2657 = vmatprep.subr.mxu0 0.0
    %2658 = vmatpush1.msra.mxu0 %v2632
    %2659 = vmatprep.subr.mxu0 0.0
    %2660 = vmatpush1.msra.mxu0 %v2633
    %2661 = vmatprep.subr.mxu0 0.0
    %2662 = vmatpush1.msra.mxu0 0.0
    %2663 = vmatprep.subr.mxu0 0.0
    %2664 = vmatpush1.msra.mxu0 0.0
    %2665 = vmatprep.subr.mxu0 0.0
    %2666 = vmatpush1.msra.mxu0 0.0
    %2667 = vmatprep.subr.mxu0 0.0
    %2668 = vmatpush1.msra.mxu0 0.0
    %2669 = vmatprep.subr.mxu0 0.0
    %2670 = vmatpush1.msra.mxu0 0.0
    %2671 = vmatprep.subr.mxu0 0.0
    %2672 = vmatpush1.msra.mxu0 0.0
    %2673 = vmatprep.subr.mxu0 0.0
    %2674 = vmatpush1.msra.mxu0 0.0
    %2675 = vmatprep.subr.mxu0 0.0
    %2676 = vmatpush1.msra.mxu0 0.0
    %2677 = vmatprep.subr.mxu0 0.0
    %2678 = vmatpush1.msra.mxu0 0.0
    %2679 = vmatprep.subr.mxu0 0.0
    %2680 = vmatpush1.msra.mxu0 0.0
    %2681 = vmatprep.subr.mxu0 0.0
    %2682 = vmatpush1.msra.mxu0 0.0
    %2683 = vmatprep.subr.mxu0 0.0
    %2684 = vmatpush1.msra.mxu0 0.0
    %2685 = vmatprep.subr.mxu0 0.0
    %2686 = vmatpush1.msra.mxu0 0.0
    %2687 = vmatprep.subr.mxu0 0.0
    %2688 = vmatpush1.msra.mxu0 0.0
    %2689 = vmatprep.subr.mxu0 0.0
    %2690 = vmatpush1.msra.mxu0 0.0
    %2691 = vmatprep.subr.mxu0 0.0
    %2692 = vmatpush1.msra.mxu0 0.0
    %2693 = vmatprep.subr.mxu0 0.0
    %2694 = vmatpush1.msra.mxu0 0.0
    %2695 = vmatprep.subr.mxu0 0.0
    %2696 = vmatpush1.msra.mxu0 0.0
    %2697 = vmatprep.subr.mxu0 0.0
    %2698 = vmatpush1.msra.mxu0 0.0
    %2699 = vmatprep.subr.mxu0 0.0
    %2700 = vmatpush1.msra.mxu0 0.0
    %2701 = vmatprep.mubr.f32.mxu0 0.0
    %2702 = vmatmul.mubr.f32.gmra.mrb[0].mxu0 %v2635
    %v2703 = vpop.f32.mrb[0].mxu0
    %v2704 = vadd.f32 0.0, %v2703
    %v2705 = vpop.f32.mrb[0].mxu0
    %2706 = vdwg.mxu0
    %v2707 = vadd.f32 %v2617, %v2704
    %v2708 = vld [vmem:[%s2] sm:$0x1]
    %v2710 = vlaneseq
    %v2711 = vshrl.u32 %v2710, 7
    %v2712 = vsub.s32 0, %v2711
    %v2713 = vrot.slane %v2708, %v2712
    %v2715 = vadd.f32 %v2707, %v2713
    %v2716 = vmax.f32 %v2715, 0.0
    %s2717 = scalar_lea.vmem [#allocation2], 72
    %2718 = vst [vmem:[%s2717] sm:$0xff] %v2716
    %v2719 = vld [vmem:[%s2620] sm:$0xff]
    %v2720 = vld [vmem:[#allocation4] sm:$0xff]
    %v2721 = vld [vmem:[#allocation4 + $0x8] sm:$0xff]
    %v2722 = vld [vmem:[#allocation4 + $0x10] sm:$0xff]
    %v2723 = vld [vmem:[#allocation4 + $0x18] sm:$0xff]
    %v2724 = vld [vmem:[#allocation4 + $0x20] sm:$0xff]
    %v2725 = vld [vmem:[#allocation4 + $0x28] sm:$0xff]
    %v2726 = vld [vmem:[#allocation4 + $0x30] sm:$0xff]
    %v2727 = vld [vmem:[#allocation4 + $0x38] sm:$0xff]
    %v2728 = vld [vmem:[#allocation4 + $0x40] sm:$0xff]
    %v2729 = vld [vmem:[#allocation4 + $0x48] sm:$0xff]
    %v2730 = vld [vmem:[#allocation4 + $0x50] sm:$0xff]
    %v2731 = vld [vmem:[#allocation4 + $0x58] sm:$0xff]
    %s2732 = scalar_lea.vmem %s0, 160
    %v2733 = vld [vmem:[%s2732] sm:$0xff]
    %v2734 = vld [vmem:[%s86] sm:$0xff]
    %v2735 = vld [vmem:[%s86 + $0x8] sm:$0xff]
    %v2736 = vld [vmem:[%s86 + $0x10] sm:$0xff]
    %v2737 = vld [vmem:[%s86 + $0x18] sm:$0xff]
    %v2738 = vld [vmem:[%s86 + $0x20] sm:$0xff]
    %v2739 = vld [vmem:[%s86 + $0x28] sm:$0xff]
    %v2740 = vld [vmem:[%s86 + $0x30] sm:$0xff]
    %v2741 = vld [vmem:[%s86 + $0x38] sm:$0xff]
    %v2742 = vld [vmem:[%s86 + $0x40] sm:$0xff]
    %v2743 = vld [vmem:[%s86 + $0x48] sm:$0xff]
    %v2744 = vld [vmem:[%s86 + $0x50] sm:$0xff]
    %v2745 = vld [vmem:[%s86 + $0x58] sm:$0xff]
    %v2747 = vsel %vm114, %v2733, 0
    %2749 = vmatprep.subr.mxu0 0.0
    %2750 = vmatpush1.msra.mxu0 %v2734
    %2751 = vmatprep.subr.mxu0 0.0
    %2752 = vmatpush1.msra.mxu0 %v2735
    %2753 = vmatprep.subr.mxu0 0.0
    %2754 = vmatpush1.msra.mxu0 %v2736
    %2755 = vmatprep.subr.mxu0 0.0
    %2756 = vmatpush1.msra.mxu0 %v2737
    %2757 = vmatprep.subr.mxu0 0.0
    %2758 = vmatpush1.msra.mxu0 %v2738
    %2759 = vmatprep.subr.mxu0 0.0
    %2760 = vmatpush1.msra.mxu0 %v2739
    %2761 = vmatprep.subr.mxu0 0.0
    %2762 = vmatpush1.msra.mxu0 %v2740
    %2763 = vmatprep.subr.mxu0 0.0
    %2764 = vmatpush1.msra.mxu0 %v2741
    %2765 = vmatprep.subr.mxu0 0.0
    %2766 = vmatpush1.msra.mxu0 %v2742
    %2767 = vmatprep.subr.mxu0 0.0
    %2768 = vmatpush1.msra.mxu0 %v2743
    %2769 = vmatprep.subr.mxu0 0.0
    %2770 = vmatpush1.msra.mxu0 %v2744
    %2771 = vmatprep.subr.mxu0 0.0
    %2772 = vmatpush1.msra.mxu0 %v2745
    %2773 = vmatprep.subr.mxu0 0.0
    %2774 = vmatpush1.msra.mxu0 0.0
    %2775 = vmatprep.subr.mxu0 0.0
    %2776 = vmatpush1.msra.mxu0 0.0
    %2777 = vmatprep.subr.mxu0 0.0
    %2778 = vmatpush1.msra.mxu0 0.0
    %2779 = vmatprep.subr.mxu0 0.0
    %2780 = vmatpush1.msra.mxu0 0.0
    %2781 = vmatprep.subr.mxu0 0.0
    %2782 = vmatpush1.msra.mxu0 0.0
    %2783 = vmatprep.subr.mxu0 0.0
    %2784 = vmatpush1.msra.mxu0 0.0
    %2785 = vmatprep.subr.mxu0 0.0
    %2786 = vmatpush1.msra.mxu0 0.0
    %2787 = vmatprep.subr.mxu0 0.0
    %2788 = vmatpush1.msra.mxu0 0.0
    %2789 = vmatprep.subr.mxu0 0.0
    %2790 = vmatpush1.msra.mxu0 0.0
    %2791 = vmatprep.subr.mxu0 0.0
    %2792 = vmatpush1.msra.mxu0 0.0
    %2793 = vmatprep.subr.mxu0 0.0
    %2794 = vmatpush1.msra.mxu0 0.0
    %2795 = vmatprep.subr.mxu0 0.0
    %2796 = vmatpush1.msra.mxu0 0.0
    %2797 = vmatprep.subr.mxu0 0.0
    %2798 = vmatpush1.msra.mxu0 0.0
    %2799 = vmatprep.subr.mxu0 0.0
    %2800 = vmatpush1.msra.mxu0 0.0
    %2801 = vmatprep.subr.mxu0 0.0
    %2802 = vmatpush1.msra.mxu0 0.0
    %2803 = vmatprep.subr.mxu0 0.0
    %2804 = vmatpush1.msra.mxu0 0.0
    %2805 = vmatprep.subr.mxu0 0.0
    %2806 = vmatpush1.msra.mxu0 0.0
    %2807 = vmatprep.subr.mxu0 0.0
    %2808 = vmatpush1.msra.mxu0 0.0
    %2809 = vmatprep.subr.mxu0 0.0
    %2810 = vmatpush1.msra.mxu0 0.0
    %2811 = vmatprep.subr.mxu0 0.0
    %2812 = vmatpush1.msra.mxu0 0.0
    %2813 = vmatprep.mubr.f32.mxu0 0.0
    %2814 = vmatmul.mubr.f32.gmra.mrb[0].mxu0 %v2747
    %v2815 = vpop.f32.mrb[0].mxu0
    %v2816 = vadd.f32 0.0, %v2815
    %v2817 = vpop.f32.mrb[0].mxu0
    %2818 = vdwg.mxu0
    %v2820 = vsel %vm114, %v2719, 0
    %2822 = vmatprep.subr.mxu0 0.0
    %2823 = vmatpush1.msra.mxu0 %v2720
    %2824 = vmatprep.subr.mxu0 0.0
    %2825 = vmatpush1.msra.mxu0 %v2721
    %2826 = vmatprep.subr.mxu0 0.0
    %2827 = vmatpush1.msra.mxu0 %v2722
    %2828 = vmatprep.subr.mxu0 0.0
    %2829 = vmatpush1.msra.mxu0 %v2723
    %2830 = vmatprep.subr.mxu0 0.0
    %2831 = vmatpush1.msra.mxu0 %v2724
    %2832 = vmatprep.subr.mxu0 0.0
    %2833 = vmatpush1.msra.mxu0 %v2725
    %2834 = vmatprep.subr.mxu0 0.0
    %2835 = vmatpush1.msra.mxu0 %v2726
    %2836 = vmatprep.subr.mxu0 0.0
    %2837 = vmatpush1.msra.mxu0 %v2727
    %2838 = vmatprep.subr.mxu0 0.0
    %2839 = vmatpush1.msra.mxu0 %v2728
    %2840 = vmatprep.subr.mxu0 0.0
    %2841 = vmatpush1.msra.mxu0 %v2729
    %2842 = vmatprep.subr.mxu0 0.0
    %2843 = vmatpush1.msra.mxu0 %v2730
    %2844 = vmatprep.subr.mxu0 0.0
    %2845 = vmatpush1.msra.mxu0 %v2731
    %2846 = vmatprep.subr.mxu0 0.0
    %2847 = vmatpush1.msra.mxu0 0.0
    %2848 = vmatprep.subr.mxu0 0.0
    %2849 = vmatpush1.msra.mxu0 0.0
    %2850 = vmatprep.subr.mxu0 0.0
    %2851 = vmatpush1.msra.mxu0 0.0
    %2852 = vmatprep.subr.mxu0 0.0
    %2853 = vmatpush1.msra.mxu0 0.0
    %2854 = vmatprep.subr.mxu0 0.0
    %2855 = vmatpush1.msra.mxu0 0.0
    %2856 = vmatprep.subr.mxu0 0.0
    %2857 = vmatpush1.msra.mxu0 0.0
    %2858 = vmatprep.subr.mxu0 0.0
    %2859 = vmatpush1.msra.mxu0 0.0
    %2860 = vmatprep.subr.mxu0 0.0
    %2861 = vmatpush1.msra.mxu0 0.0
    %2862 = vmatprep.subr.mxu0 0.0
    %2863 = vmatpush1.msra.mxu0 0.0
    %2864 = vmatprep.subr.mxu0 0.0
    %2865 = vmatpush1.msra.mxu0 0.0
    %2866 = vmatprep.subr.mxu0 0.0
    %2867 = vmatpush1.msra.mxu0 0.0
    %2868 = vmatprep.subr.mxu0 0.0
    %2869 = vmatpush1.msra.mxu0 0.0
    %2870 = vmatprep.subr.mxu0 0.0
    %2871 = vmatpush1.msra.mxu0 0.0
    %2872 = vmatprep.subr.mxu0 0.0
    %2873 = vmatpush1.msra.mxu0 0.0
    %2874 = vmatprep.subr.mxu0 0.0
    %2875 = vmatpush1.msra.mxu0 0.0
    %2876 = vmatprep.subr.mxu0 0.0
    %2877 = vmatpush1.msra.mxu0 0.0
    %2878 = vmatprep.subr.mxu0 0.0
    %2879 = vmatpush1.msra.mxu0 0.0
    %2880 = vmatprep.subr.mxu0 0.0
    %2881 = vmatpush1.msra.mxu0 0.0
    %2882 = vmatprep.subr.mxu0 0.0
    %2883 = vmatpush1.msra.mxu0 0.0
    %2884 = vmatprep.subr.mxu0 0.0
    %2885 = vmatpush1.msra.mxu0 0.0
    %2886 = vmatprep.mubr.f32.mxu0 0.0
    %2887 = vmatmul.mubr.f32.gmra.mrb[0].mxu0 %v2820
    %v2888 = vpop.f32.mrb[0].mxu0
    %v2889 = vadd.f32 %v2816, %v2888
    %v2890 = vpop.f32.mrb[0].mxu0
    %2891 = vdwg.mxu0
    %s2892 = scalar_lea.vmem %s0, 168
    %v2893 = vld [vmem:[%s2892] sm:$0xff]
    %v2894 = vld [vmem:[%s101] sm:$0xff]
    %v2895 = vld [vmem:[%s101 + $0x8] sm:$0xff]
    %v2896 = vld [vmem:[%s101 + $0x10] sm:$0xff]
    %v2897 = vld [vmem:[%s101 + $0x18] sm:$0xff]
    %v2898 = vld [vmem:[%s101 + $0x20] sm:$0xff]
    %v2899 = vld [vmem:[%s101 + $0x28] sm:$0xff]
    %v2900 = vld [vmem:[%s101 + $0x30] sm:$0xff]
    %v2901 = vld [vmem:[%s101 + $0x38] sm:$0xff]
    %v2902 = vld [vmem:[%s101 + $0x40] sm:$0xff]
    %v2903 = vld [vmem:[%s101 + $0x48] sm:$0xff]
    %v2904 = vld [vmem:[%s101 + $0x50] sm:$0xff]
    %v2905 = vld [vmem:[%s101 + $0x58] sm:$0xff]
    %v2907 = vsel %vm114, %v2893, 0
    %2909 = vmatprep.subr.mxu0 0.0
    %2910 = vmatpush1.msra.mxu0 %v2894
    %2911 = vmatprep.subr.mxu0 0.0
    %2912 = vmatpush1.msra.mxu0 %v2895
    %2913 = vmatprep.subr.mxu0 0.0
    %2914 = vmatpush1.msra.mxu0 %v2896
    %2915 = vmatprep.subr.mxu0 0.0
    %2916 = vmatpush1.msra.mxu0 %v2897
    %2917 = vmatprep.subr.mxu0 0.0
    %2918 = vmatpush1.msra.mxu0 %v2898
    %2919 = vmatprep.subr.mxu0 0.0
    %2920 = vmatpush1.msra.mxu0 %v2899
    %2921 = vmatprep.subr.mxu0 0.0
    %2922 = vmatpush1.msra.mxu0 %v2900
    %2923 = vmatprep.subr.mxu0 0.0
    %2924 = vmatpush1.msra.mxu0 %v2901
    %2925 = vmatprep.subr.mxu0 0.0
    %2926 = vmatpush1.msra.mxu0 %v2902
    %2927 = vmatprep.subr.mxu0 0.0
    %2928 = vmatpush1.msra.mxu0 %v2903
    %2929 = vmatprep.subr.mxu0 0.0
    %2930 = vmatpush1.msra.mxu0 %v2904
    %2931 = vmatprep.subr.mxu0 0.0
    %2932 = vmatpush1.msra.mxu0 %v2905
    %2933 = vmatprep.subr.mxu0 0.0
    %2934 = vmatpush1.msra.mxu0 0.0
    %2935 = vmatprep.subr.mxu0 0.0
    %2936 = vmatpush1.msra.mxu0 0.0
    %2937 = vmatprep.subr.mxu0 0.0
    %2938 = vmatpush1.msra.mxu0 0.0
    %2939 = vmatprep.subr.mxu0 0.0
    %2940 = vmatpush1.msra.mxu0 0.0
    %2941 = vmatprep.subr.mxu0 0.0
    %2942 = vmatpush1.msra.mxu0 0.0
    %2943 = vmatprep.subr.mxu0 0.0
    %2944 = vmatpush1.msra.mxu0 0.0
    %2945 = vmatprep.subr.mxu0 0.0
    %2946 = vmatpush1.msra.mxu0 0.0
    %2947 = vmatprep.subr.mxu0 0.0
    %2948 = vmatpush1.msra.mxu0 0.0
    %2949 = vmatprep.subr.mxu0 0.0
    %2950 = vmatpush1.msra.mxu0 0.0
    %2951 = vmatprep.subr.mxu0 0.0
    %2952 = vmatpush1.msra.mxu0 0.0
    %2953 = vmatprep.subr.mxu0 0.0
    %2954 = vmatpush1.msra.mxu0 0.0
    %2955 = vmatprep.subr.mxu0 0.0
    %2956 = vmatpush1.msra.mxu0 0.0
    %2957 = vmatprep.subr.mxu0 0.0
    %2958 = vmatpush1.msra.mxu0 0.0
    %2959 = vmatprep.subr.mxu0 0.0
    %2960 = vmatpush1.msra.mxu0 0.0
    %2961 = vmatprep.subr.mxu0 0.0
    %2962 = vmatpush1.msra.mxu0 0.0
    %2963 = vmatprep.subr.mxu0 0.0
    %2964 = vmatpush1.msra.mxu0 0.0
    %2965 = vmatprep.subr.mxu0 0.0
    %2966 = vmatpush1.msra.mxu0 0.0
    %2967 = vmatprep.subr.mxu0 0.0
    %2968 = vmatpush1.msra.mxu0 0.0
    %2969 = vmatprep.subr.mxu0 0.0
    %2970 = vmatpush1.msra.mxu0 0.0
    %2971 = vmatprep.subr.mxu0 0.0
    %2972 = vmatpush1.msra.mxu0 0.0
    %2973 = vmatprep.mubr.f32.mxu0 0.0
    %2974 = vmatmul.mubr.f32.gmra.mrb[0].mxu0 %v2907
    %v2975 = vpop.f32.mrb[0].mxu0
    %v2976 = vadd.f32 0.0, %v2975
    %v2977 = vpop.f32.mrb[0].mxu0
    %2978 = vdwg.mxu0
    %v2979 = vadd.f32 %v2889, %v2976
    %v2980 = vld [vmem:[%s2] sm:$0x1]
    %v2982 = vlaneseq
    %v2983 = vshrl.u32 %v2982, 7
    %v2984 = vsub.s32 0, %v2983
    %v2985 = vrot.slane %v2980, %v2984
    %v2987 = vadd.f32 %v2979, %v2985
    %v2988 = vmax.f32 %v2987, 0.0
    %s2989 = scalar_lea.vmem [#allocation2], 80
    %2990 = vst [vmem:[%s2989] sm:$0xff] %v2988
    %v2991 = vld [vmem:[%s2892] sm:$0xff]
    %v2992 = vld [vmem:[#allocation4] sm:$0xff]
    %v2993 = vld [vmem:[#allocation4 + $0x8] sm:$0xff]
    %v2994 = vld [vmem:[#allocation4 + $0x10] sm:$0xff]
    %v2995 = vld [vmem:[#allocation4 + $0x18] sm:$0xff]
    %v2996 = vld [vmem:[#allocation4 + $0x20] sm:$0xff]
    %v2997 = vld [vmem:[#allocation4 + $0x28] sm:$0xff]
    %v2998 = vld [vmem:[#allocation4 + $0x30] sm:$0xff]
    %v2999 = vld [vmem:[#allocation4 + $0x38] sm:$0xff]
    %v3000 = vld [vmem:[#allocation4 + $0x40] sm:$0xff]
    %v3001 = vld [vmem:[#allocation4 + $0x48] sm:$0xff]
    %v3002 = vld [vmem:[#allocation4 + $0x50] sm:$0xff]
    %v3003 = vld [vmem:[#allocation4 + $0x58] sm:$0xff]
    %s3004 = scalar_lea.vmem %s0, 176
    %v3005 = vld [vmem:[%s3004] sm:$0xff]
    %v3006 = vld [vmem:[%s86] sm:$0xff]
    %v3007 = vld [vmem:[%s86 + $0x8] sm:$0xff]
    %v3008 = vld [vmem:[%s86 + $0x10] sm:$0xff]
    %v3009 = vld [vmem:[%s86 + $0x18] sm:$0xff]
    %v3010 = vld [vmem:[%s86 + $0x20] sm:$0xff]
    %v3011 = vld [vmem:[%s86 + $0x28] sm:$0xff]
    %v3012 = vld [vmem:[%s86 + $0x30] sm:$0xff]
    %v3013 = vld [vmem:[%s86 + $0x38] sm:$0xff]
    %v3014 = vld [vmem:[%s86 + $0x40] sm:$0xff]
    %v3015 = vld [vmem:[%s86 + $0x48] sm:$0xff]
    %v3016 = vld [vmem:[%s86 + $0x50] sm:$0xff]
    %v3017 = vld [vmem:[%s86 + $0x58] sm:$0xff]
    %v3019 = vsel %vm114, %v3005, 0
    %3021 = vmatprep.subr.mxu0 0.0
    %3022 = vmatpush1.msra.mxu0 %v3006
    %3023 = vmatprep.subr.mxu0 0.0
    %3024 = vmatpush1.msra.mxu0 %v3007
    %3025 = vmatprep.subr.mxu0 0.0
    %3026 = vmatpush1.msra.mxu0 %v3008
    %3027 = vmatprep.subr.mxu0 0.0
    %3028 = vmatpush1.msra.mxu0 %v3009
    %3029 = vmatprep.subr.mxu0 0.0
    %3030 = vmatpush1.msra.mxu0 %v3010
    %3031 = vmatprep.subr.mxu0 0.0
    %3032 = vmatpush1.msra.mxu0 %v3011
    %3033 = vmatprep.subr.mxu0 0.0
    %3034 = vmatpush1.msra.mxu0 %v3012
    %3035 = vmatprep.subr.mxu0 0.0
    %3036 = vmatpush1.msra.mxu0 %v3013
    %3037 = vmatprep.subr.mxu0 0.0
    %3038 = vmatpush1.msra.mxu0 %v3014
    %3039 = vmatprep.subr.mxu0 0.0
    %3040 = vmatpush1.msra.mxu0 %v3015
    %3041 = vmatprep.subr.mxu0 0.0
    %3042 = vmatpush1.msra.mxu0 %v3016
    %3043 = vmatprep.subr.mxu0 0.0
    %3044 = vmatpush1.msra.mxu0 %v3017
    %3045 = vmatprep.subr.mxu0 0.0
    %3046 = vmatpush1.msra.mxu0 0.0
    %3047 = vmatprep.subr.mxu0 0.0
    %3048 = vmatpush1.msra.mxu0 0.0
    %3049 = vmatprep.subr.mxu0 0.0
    %3050 = vmatpush1.msra.mxu0 0.0
    %3051 = vmatprep.subr.mxu0 0.0
    %3052 = vmatpush1.msra.mxu0 0.0
    %3053 = vmatprep.subr.mxu0 0.0
    %3054 = vmatpush1.msra.mxu0 0.0
    %3055 = vmatprep.subr.mxu0 0.0
    %3056 = vmatpush1.msra.mxu0 0.0
    %3057 = vmatprep.subr.mxu0 0.0
    %3058 = vmatpush1.msra.mxu0 0.0
    %3059 = vmatprep.subr.mxu0 0.0
    %3060 = vmatpush1.msra.mxu0 0.0
    %3061 = vmatprep.subr.mxu0 0.0
    %3062 = vmatpush1.msra.mxu0 0.0
    %3063 = vmatprep.subr.mxu0 0.0
    %3064 = vmatpush1.msra.mxu0 0.0
    %3065 = vmatprep.subr.mxu0 0.0
    %3066 = vmatpush1.msra.mxu0 0.0
    %3067 = vmatprep.subr.mxu0 0.0
    %3068 = vmatpush1.msra.mxu0 0.0
    %3069 = vmatprep.subr.mxu0 0.0
    %3070 = vmatpush1.msra.mxu0 0.0
    %3071 = vmatprep.subr.mxu0 0.0
    %3072 = vmatpush1.msra.mxu0 0.0
    %3073 = vmatprep.subr.mxu0 0.0
    %3074 = vmatpush1.msra.mxu0 0.0
    %3075 = vmatprep.subr.mxu0 0.0
    %3076 = vmatpush1.msra.mxu0 0.0
    %3077 = vmatprep.subr.mxu0 0.0
    %3078 = vmatpush1.msra.mxu0 0.0
    %3079 = vmatprep.subr.mxu0 0.0
    %3080 = vmatpush1.msra.mxu0 0.0
    %3081 = vmatprep.subr.mxu0 0.0
    %3082 = vmatpush1.msra.mxu0 0.0
    %3083 = vmatprep.subr.mxu0 0.0
    %3084 = vmatpush1.msra.mxu0 0.0
    %3085 = vmatprep.mubr.f32.mxu0 0.0
    %3086 = vmatmul.mubr.f32.gmra.mrb[0].mxu0 %v3019
    %v3087 = vpop.f32.mrb[0].mxu0
    %v3088 = vadd.f32 0.0, %v3087
    %v3089 = vpop.f32.mrb[0].mxu0
    %3090 = vdwg.mxu0
    %v3092 = vsel %vm114, %v2991, 0
    %3094 = vmatprep.subr.mxu0 0.0
    %3095 = vmatpush1.msra.mxu0 %v2992
    %3096 = vmatprep.subr.mxu0 0.0
    %3097 = vmatpush1.msra.mxu0 %v2993
    %3098 = vmatprep.subr.mxu0 0.0
    %3099 = vmatpush1.msra.mxu0 %v2994
    %3100 = vmatprep.subr.mxu0 0.0
    %3101 = vmatpush1.msra.mxu0 %v2995
    %3102 = vmatprep.subr.mxu0 0.0
    %3103 = vmatpush1.msra.mxu0 %v2996
    %3104 = vmatprep.subr.mxu0 0.0
    %3105 = vmatpush1.msra.mxu0 %v2997
    %3106 = vmatprep.subr.mxu0 0.0
    %3107 = vmatpush1.msra.mxu0 %v2998
    %3108 = vmatprep.subr.mxu0 0.0
    %3109 = vmatpush1.msra.mxu0 %v2999
    %3110 = vmatprep.subr.mxu0 0.0
    %3111 = vmatpush1.msra.mxu0 %v3000
    %3112 = vmatprep.subr.mxu0 0.0
    %3113 = vmatpush1.msra.mxu0 %v3001
    %3114 = vmatprep.subr.mxu0 0.0
    %3115 = vmatpush1.msra.mxu0 %v3002
    %3116 = vmatprep.subr.mxu0 0.0
    %3117 = vmatpush1.msra.mxu0 %v3003
    %3118 = vmatprep.subr.mxu0 0.0
    %3119 = vmatpush1.msra.mxu0 0.0
    %3120 = vmatprep.subr.mxu0 0.0
    %3121 = vmatpush1.msra.mxu0 0.0
    %3122 = vmatprep.subr.mxu0 0.0
    %3123 = vmatpush1.msra.mxu0 0.0
    %3124 = vmatprep.subr.mxu0 0.0
    %3125 = vmatpush1.msra.mxu0 0.0
    %3126 = vmatprep.subr.mxu0 0.0
    %3127 = vmatpush1.msra.mxu0 0.0
    %3128 = vmatprep.subr.mxu0 0.0
    %3129 = vmatpush1.msra.mxu0 0.0
    %3130 = vmatprep.subr.mxu0 0.0
    %3131 = vmatpush1.msra.mxu0 0.0
    %3132 = vmatprep.subr.mxu0 0.0
    %3133 = vmatpush1.msra.mxu0 0.0
    %3134 = vmatprep.subr.mxu0 0.0
    %3135 = vmatpush1.msra.mxu0 0.0
    %3136 = vmatprep.subr.mxu0 0.0
    %3137 = vmatpush1.msra.mxu0 0.0
    %3138 = vmatprep.subr.mxu0 0.0
    %3139 = vmatpush1.msra.mxu0 0.0
    %3140 = vmatprep.subr.mxu0 0.0
    %3141 = vmatpush1.msra.mxu0 0.0
    %3142 = vmatprep.subr.mxu0 0.0
    %3143 = vmatpush1.msra.mxu0 0.0
    %3144 = vmatprep.subr.mxu0 0.0
    %3145 = vmatpush1.msra.mxu0 0.0
    %3146 = vmatprep.subr.mxu0 0.0
    %3147 = vmatpush1.msra.mxu0 0.0
    %3148 = vmatprep.subr.mxu0 0.0
    %3149 = vmatpush1.msra.mxu0 0.0
    %3150 = vmatprep.subr.mxu0 0.0
    %3151 = vmatpush1.msra.mxu0 0.0
    %3152 = vmatprep.subr.mxu0 0.0
    %3153 = vmatpush1.msra.mxu0 0.0
    %3154 = vmatprep.subr.mxu0 0.0
    %3155 = vmatpush1.msra.mxu0 0.0
    %3156 = vmatprep.subr.mxu0 0.0
    %3157 = vmatpush1.msra.mxu0 0.0
    %3158 = vmatprep.mubr.f32.mxu0 0.0
    %3159 = vmatmul.mubr.f32.gmra.mrb[0].mxu0 %v3092
    %v3160 = vpop.f32.mrb[0].mxu0
    %v3161 = vadd.f32 %v3088, %v3160
    %v3162 = vpop.f32.mrb[0].mxu0
    %3163 = vdwg.mxu0
    %s3164 = scalar_lea.vmem %s0, 184
    %v3165 = vld [vmem:[%s3164] sm:$0xff]
    %v3166 = vld [vmem:[%s101] sm:$0xff]
    %v3167 = vld [vmem:[%s101 + $0x8] sm:$0xff]
    %v3168 = vld [vmem:[%s101 + $0x10] sm:$0xff]
    %v3169 = vld [vmem:[%s101 + $0x18] sm:$0xff]
    %v3170 = vld [vmem:[%s101 + $0x20] sm:$0xff]
    %v3171 = vld [vmem:[%s101 + $0x28] sm:$0xff]
    %v3172 = vld [vmem:[%s101 + $0x30] sm:$0xff]
    %v3173 = vld [vmem:[%s101 + $0x38] sm:$0xff]
    %v3174 = vld [vmem:[%s101 + $0x40] sm:$0xff]
    %v3175 = vld [vmem:[%s101 + $0x48] sm:$0xff]
    %v3176 = vld [vmem:[%s101 + $0x50] sm:$0xff]
    %v3177 = vld [vmem:[%s101 + $0x58] sm:$0xff]
    %v3179 = vsel %vm114, %v3165, 0
    %3181 = vmatprep.subr.mxu0 0.0
    %3182 = vmatpush1.msra.mxu0 %v3166
    %3183 = vmatprep.subr.mxu0 0.0
    %3184 = vmatpush1.msra.mxu0 %v3167
    %3185 = vmatprep.subr.mxu0 0.0
    %3186 = vmatpush1.msra.mxu0 %v3168
    %3187 = vmatprep.subr.mxu0 0.0
    %3188 = vmatpush1.msra.mxu0 %v3169
    %3189 = vmatprep.subr.mxu0 0.0
    %3190 = vmatpush1.msra.mxu0 %v3170
    %3191 = vmatprep.subr.mxu0 0.0
    %3192 = vmatpush1.msra.mxu0 %v3171
    %3193 = vmatprep.subr.mxu0 0.0
    %3194 = vmatpush1.msra.mxu0 %v3172
    %3195 = vmatprep.subr.mxu0 0.0
    %3196 = vmatpush1.msra.mxu0 %v3173
    %3197 = vmatprep.subr.mxu0 0.0
    %3198 = vmatpush1.msra.mxu0 %v3174
    %3199 = vmatprep.subr.mxu0 0.0
    %3200 = vmatpush1.msra.mxu0 %v3175
    %3201 = vmatprep.subr.mxu0 0.0
    %3202 = vmatpush1.msra.mxu0 %v3176
    %3203 = vmatprep.subr.mxu0 0.0
    %3204 = vmatpush1.msra.mxu0 %v3177
    %3205 = vmatprep.subr.mxu0 0.0
    %3206 = vmatpush1.msra.mxu0 0.0
    %3207 = vmatprep.subr.mxu0 0.0
    %3208 = vmatpush1.msra.mxu0 0.0
    %3209 = vmatprep.subr.mxu0 0.0
    %3210 = vmatpush1.msra.mxu0 0.0
    %3211 = vmatprep.subr.mxu0 0.0
    %3212 = vmatpush1.msra.mxu0 0.0
    %3213 = vmatprep.subr.mxu0 0.0
    %3214 = vmatpush1.msra.mxu0 0.0
    %3215 = vmatprep.subr.mxu0 0.0
    %3216 = vmatpush1.msra.mxu0 0.0
    %3217 = vmatprep.subr.mxu0 0.0
    %3218 = vmatpush1.msra.mxu0 0.0
    %3219 = vmatprep.subr.mxu0 0.0
    %3220 = vmatpush1.msra.mxu0 0.0
    %3221 = vmatprep.subr.mxu0 0.0
    %3222 = vmatpush1.msra.mxu0 0.0
    %3223 = vmatprep.subr.mxu0 0.0
    %3224 = vmatpush1.msra.mxu0 0.0
    %3225 = vmatprep.subr.mxu0 0.0
    %3226 = vmatpush1.msra.mxu0 0.0
    %3227 = vmatprep.subr.mxu0 0.0
    %3228 = vmatpush1.msra.mxu0 0.0
    %3229 = vmatprep.subr.mxu0 0.0
    %3230 = vmatpush1.msra.mxu0 0.0
    %3231 = vmatprep.subr.mxu0 0.0
    %3232 = vmatpush1.msra.mxu0 0.0
    %3233 = vmatprep.subr.mxu0 0.0
    %3234 = vmatpush1.msra.mxu0 0.0
    %3235 = vmatprep.subr.mxu0 0.0
    %3236 = vmatpush1.msra.mxu0 0.0
    %3237 = vmatprep.subr.mxu0 0.0
    %3238 = vmatpush1.msra.mxu0 0.0
    %3239 = vmatprep.subr.mxu0 0.0
    %3240 = vmatpush1.msra.mxu0 0.0
    %3241 = vmatprep.subr.mxu0 0.0
    %3242 = vmatpush1.msra.mxu0 0.0
    %3243 = vmatprep.subr.mxu0 0.0
    %3244 = vmatpush1.msra.mxu0 0.0
    %3245 = vmatprep.mubr.f32.mxu0 0.0
    %3246 = vmatmul.mubr.f32.gmra.mrb[0].mxu0 %v3179
    %v3247 = vpop.f32.mrb[0].mxu0
    %v3248 = vadd.f32 0.0, %v3247
    %v3249 = vpop.f32.mrb[0].mxu0
    %3250 = vdwg.mxu0
    %v3251 = vadd.f32 %v3161, %v3248
    %v3252 = vld [vmem:[%s2] sm:$0x1]
    %v3254 = vlaneseq
    %v3255 = vshrl.u32 %v3254, 7
    %v3256 = vsub.s32 0, %v3255
    %v3257 = vrot.slane %v3252, %v3256
    %v3259 = vadd.f32 %v3251, %v3257
    %v3260 = vmax.f32 %v3259, 0.0
    %s3261 = scalar_lea.vmem [#allocation2], 88
    %3262 = vst [vmem:[%s3261] sm:$0xff] %v3260
    %v3263 = vld [vmem:[%s3164] sm:$0xff]
    %v3264 = vld [vmem:[#allocation4] sm:$0xff]
    %v3265 = vld [vmem:[#allocation4 + $0x8] sm:$0xff]
    %v3266 = vld [vmem:[#allocation4 + $0x10] sm:$0xff]
    %v3267 = vld [vmem:[#allocation4 + $0x18] sm:$0xff]
    %v3268 = vld [vmem:[#allocation4 + $0x20] sm:$0xff]
    %v3269 = vld [vmem:[#allocation4 + $0x28] sm:$0xff]
    %v3270 = vld [vmem:[#allocation4 + $0x30] sm:$0xff]
    %v3271 = vld [vmem:[#allocation4 + $0x38] sm:$0xff]
    %v3272 = vld [vmem:[#allocation4 + $0x40] sm:$0xff]
    %v3273 = vld [vmem:[#allocation4 + $0x48] sm:$0xff]
    %v3274 = vld [vmem:[#allocation4 + $0x50] sm:$0xff]
    %v3275 = vld [vmem:[#allocation4 + $0x58] sm:$0xff]
    %s3276 = scalar_lea.vmem %s0, 192
    %v3277 = vld [vmem:[%s3276] sm:$0xff]
    %v3278 = vld [vmem:[%s86] sm:$0xff]
    %v3279 = vld [vmem:[%s86 + $0x8] sm:$0xff]
    %v3280 = vld [vmem:[%s86 + $0x10] sm:$0xff]
    %v3281 = vld [vmem:[%s86 + $0x18] sm:$0xff]
    %v3282 = vld [vmem:[%s86 + $0x20] sm:$0xff]
    %v3283 = vld [vmem:[%s86 + $0x28] sm:$0xff]
    %v3284 = vld [vmem:[%s86 + $0x30] sm:$0xff]
    %v3285 = vld [vmem:[%s86 + $0x38] sm:$0xff]
    %v3286 = vld [vmem:[%s86 + $0x40] sm:$0xff]
    %v3287 = vld [vmem:[%s86 + $0x48] sm:$0xff]
    %v3288 = vld [vmem:[%s86 + $0x50] sm:$0xff]
    %v3289 = vld [vmem:[%s86 + $0x58] sm:$0xff]
    %v3291 = vsel %vm114, %v3277, 0
    %3293 = vmatprep.subr.mxu0 0.0
    %3294 = vmatpush1.msra.mxu0 %v3278
    %3295 = vmatprep.subr.mxu0 0.0
    %3296 = vmatpush1.msra.mxu0 %v3279
    %3297 = vmatprep.subr.mxu0 0.0
    %3298 = vmatpush1.msra.mxu0 %v3280
    %3299 = vmatprep.subr.mxu0 0.0
    %3300 = vmatpush1.msra.mxu0 %v3281
    %3301 = vmatprep.subr.mxu0 0.0
    %3302 = vmatpush1.msra.mxu0 %v3282
    %3303 = vmatprep.subr.mxu0 0.0
    %3304 = vmatpush1.msra.mxu0 %v3283
    %3305 = vmatprep.subr.mxu0 0.0
    %3306 = vmatpush1.msra.mxu0 %v3284
    %3307 = vmatprep.subr.mxu0 0.0
    %3308 = vmatpush1.msra.mxu0 %v3285
    %3309 = vmatprep.subr.mxu0 0.0
    %3310 = vmatpush1.msra.mxu0 %v3286
    %3311 = vmatprep.subr.mxu0 0.0
    %3312 = vmatpush1.msra.mxu0 %v3287
    %3313 = vmatprep.subr.mxu0 0.0
    %3314 = vmatpush1.msra.mxu0 %v3288
    %3315 = vmatprep.subr.mxu0 0.0
    %3316 = vmatpush1.msra.mxu0 %v3289
    %3317 = vmatprep.subr.mxu0 0.0
    %3318 = vmatpush1.msra.mxu0 0.0
    %3319 = vmatprep.subr.mxu0 0.0
    %3320 = vmatpush1.msra.mxu0 0.0
    %3321 = vmatprep.subr.mxu0 0.0
    %3322 = vmatpush1.msra.mxu0 0.0
    %3323 = vmatprep.subr.mxu0 0.0
    %3324 = vmatpush1.msra.mxu0 0.0
    %3325 = vmatprep.subr.mxu0 0.0
    %3326 = vmatpush1.msra.mxu0 0.0
    %3327 = vmatprep.subr.mxu0 0.0
    %3328 = vmatpush1.msra.mxu0 0.0
    %3329 = vmatprep.subr.mxu0 0.0
    %3330 = vmatpush1.msra.mxu0 0.0
    %3331 = vmatprep.subr.mxu0 0.0
    %3332 = vmatpush1.msra.mxu0 0.0
    %3333 = vmatprep.subr.mxu0 0.0
    %3334 = vmatpush1.msra.mxu0 0.0
    %3335 = vmatprep.subr.mxu0 0.0
    %3336 = vmatpush1.msra.mxu0 0.0
    %3337 = vmatprep.subr.mxu0 0.0
    %3338 = vmatpush1.msra.mxu0 0.0
    %3339 = vmatprep.subr.mxu0 0.0
    %3340 = vmatpush1.msra.mxu0 0.0
    %3341 = vmatprep.subr.mxu0 0.0
    %3342 = vmatpush1.msra.mxu0 0.0
    %3343 = vmatprep.subr.mxu0 0.0
    %3344 = vmatpush1.msra.mxu0 0.0
    %3345 = vmatprep.subr.mxu0 0.0
    %3346 = vmatpush1.msra.mxu0 0.0
    %3347 = vmatprep.subr.mxu0 0.0
    %3348 = vmatpush1.msra.mxu0 0.0
    %3349 = vmatprep.subr.mxu0 0.0
    %3350 = vmatpush1.msra.mxu0 0.0
    %3351 = vmatprep.subr.mxu0 0.0
    %3352 = vmatpush1.msra.mxu0 0.0
    %3353 = vmatprep.subr.mxu0 0.0
    %3354 = vmatpush1.msra.mxu0 0.0
    %3355 = vmatprep.subr.mxu0 0.0
    %3356 = vmatpush1.msra.mxu0 0.0
    %3357 = vmatprep.mubr.f32.mxu0 0.0
    %3358 = vmatmul.mubr.f32.gmra.mrb[0].mxu0 %v3291
    %v3359 = vpop.f32.mrb[0].mxu0
    %v3360 = vadd.f32 0.0, %v3359
    %v3361 = vpop.f32.mrb[0].mxu0
    %3362 = vdwg.mxu0
    %v3364 = vsel %vm114, %v3263, 0
    %3366 = vmatprep.subr.mxu0 0.0
    %3367 = vmatpush1.msra.mxu0 %v3264
    %3368 = vmatprep.subr.mxu0 0.0
    %3369 = vmatpush1.msra.mxu0 %v3265
    %3370 = vmatprep.subr.mxu0 0.0
    %3371 = vmatpush1.msra.mxu0 %v3266
    %3372 = vmatprep.subr.mxu0 0.0
    %3373 = vmatpush1.msra.mxu0 %v3267
    %3374 = vmatprep.subr.mxu0 0.0
    %3375 = vmatpush1.msra.mxu0 %v3268
    %3376 = vmatprep.subr.mxu0 0.0
    %3377 = vmatpush1.msra.mxu0 %v3269
    %3378 = vmatprep.subr.mxu0 0.0
    %3379 = vmatpush1.msra.mxu0 %v3270
    %3380 = vmatprep.subr.mxu0 0.0
    %3381 = vmatpush1.msra.mxu0 %v3271
    %3382 = vmatprep.subr.mxu0 0.0
    %3383 = vmatpush1.msra.mxu0 %v3272
    %3384 = vmatprep.subr.mxu0 0.0
    %3385 = vmatpush1.msra.mxu0 %v3273
    %3386 = vmatprep.subr.mxu0 0.0
    %3387 = vmatpush1.msra.mxu0 %v3274
    %3388 = vmatprep.subr.mxu0 0.0
    %3389 = vmatpush1.msra.mxu0 %v3275
    %3390 = vmatprep.subr.mxu0 0.0
    %3391 = vmatpush1.msra.mxu0 0.0
    %3392 = vmatprep.subr.mxu0 0.0
    %3393 = vmatpush1.msra.mxu0 0.0
    %3394 = vmatprep.subr.mxu0 0.0
    %3395 = vmatpush1.msra.mxu0 0.0
    %3396 = vmatprep.subr.mxu0 0.0
    %3397 = vmatpush1.msra.mxu0 0.0
    %3398 = vmatprep.subr.mxu0 0.0
    %3399 = vmatpush1.msra.mxu0 0.0
    %3400 = vmatprep.subr.mxu0 0.0
    %3401 = vmatpush1.msra.mxu0 0.0
    %3402 = vmatprep.subr.mxu0 0.0
    %3403 = vmatpush1.msra.mxu0 0.0
    %3404 = vmatprep.subr.mxu0 0.0
    %3405 = vmatpush1.msra.mxu0 0.0
    %3406 = vmatprep.subr.mxu0 0.0
    %3407 = vmatpush1.msra.mxu0 0.0
    %3408 = vmatprep.subr.mxu0 0.0
    %3409 = vmatpush1.msra.mxu0 0.0
    %3410 = vmatprep.subr.mxu0 0.0
    %3411 = vmatpush1.msra.mxu0 0.0
    %3412 = vmatprep.subr.mxu0 0.0
    %3413 = vmatpush1.msra.mxu0 0.0
    %3414 = vmatprep.subr.mxu0 0.0
    %3415 = vmatpush1.msra.mxu0 0.0
    %3416 = vmatprep.subr.mxu0 0.0
    %3417 = vmatpush1.msra.mxu0 0.0
    %3418 = vmatprep.subr.mxu0 0.0
    %3419 = vmatpush1.msra.mxu0 0.0
    %3420 = vmatprep.subr.mxu0 0.0
    %3421 = vmatpush1.msra.mxu0 0.0
    %3422 = vmatprep.subr.mxu0 0.0
    %3423 = vmatpush1.msra.mxu0 0.0
    %3424 = vmatprep.subr.mxu0 0.0
    %3425 = vmatpush1.msra.mxu0 0.0
    %3426 = vmatprep.subr.mxu0 0.0
    %3427 = vmatpush1.msra.mxu0 0.0
    %3428 = vmatprep.subr.mxu0 0.0
    %3429 = vmatpush1.msra.mxu0 0.0
    %3430 = vmatprep.mubr.f32.mxu0 0.0
    %3431 = vmatmul.mubr.f32.gmra.mrb[0].mxu0 %v3364
    %v3432 = vpop.f32.mrb[0].mxu0
    %v3433 = vadd.f32 %v3360, %v3432
    %v3434 = vpop.f32.mrb[0].mxu0
    %3435 = vdwg.mxu0
    %s3436 = scalar_lea.vmem %s0, 200
    %v3437 = vld [vmem:[%s3436] sm:$0xff]
    %v3438 = vld [vmem:[%s101] sm:$0xff]
    %v3439 = vld [vmem:[%s101 + $0x8] sm:$0xff]
    %v3440 = vld [vmem:[%s101 + $0x10] sm:$0xff]
    %v3441 = vld [vmem:[%s101 + $0x18] sm:$0xff]
    %v3442 = vld [vmem:[%s101 + $0x20] sm:$0xff]
    %v3443 = vld [vmem:[%s101 + $0x28] sm:$0xff]
    %v3444 = vld [vmem:[%s101 + $0x30] sm:$0xff]
    %v3445 = vld [vmem:[%s101 + $0x38] sm:$0xff]
    %v3446 = vld [vmem:[%s101 + $0x40] sm:$0xff]
    %v3447 = vld [vmem:[%s101 + $0x48] sm:$0xff]
    %v3448 = vld [vmem:[%s101 + $0x50] sm:$0xff]
    %v3449 = vld [vmem:[%s101 + $0x58] sm:$0xff]
    %v3451 = vsel %vm114, %v3437, 0
    %3453 = vmatprep.subr.mxu0 0.0
    %3454 = vmatpush1.msra.mxu0 %v3438
    %3455 = vmatprep.subr.mxu0 0.0
    %3456 = vmatpush1.msra.mxu0 %v3439
    %3457 = vmatprep.subr.mxu0 0.0
    %3458 = vmatpush1.msra.mxu0 %v3440
    %3459 = vmatprep.subr.mxu0 0.0
    %3460 = vmatpush1.msra.mxu0 %v3441
    %3461 = vmatprep.subr.mxu0 0.0
    %3462 = vmatpush1.msra.mxu0 %v3442
    %3463 = vmatprep.subr.mxu0 0.0
    %3464 = vmatpush1.msra.mxu0 %v3443
    %3465 = vmatprep.subr.mxu0 0.0
    %3466 = vmatpush1.msra.mxu0 %v3444
    %3467 = vmatprep.subr.mxu0 0.0
    %3468 = vmatpush1.msra.mxu0 %v3445
    %3469 = vmatprep.subr.mxu0 0.0
    %3470 = vmatpush1.msra.mxu0 %v3446
    %3471 = vmatprep.subr.mxu0 0.0
    %3472 = vmatpush1.msra.mxu0 %v3447
    %3473 = vmatprep.subr.mxu0 0.0
    %3474 = vmatpush1.msra.mxu0 %v3448
    %3475 = vmatprep.subr.mxu0 0.0
    %3476 = vmatpush1.msra.mxu0 %v3449
    %3477 = vmatprep.subr.mxu0 0.0
    %3478 = vmatpush1.msra.mxu0 0.0
    %3479 = vmatprep.subr.mxu0 0.0
    %3480 = vmatpush1.msra.mxu0 0.0
    %3481 = vmatprep.subr.mxu0 0.0
    %3482 = vmatpush1.msra.mxu0 0.0
    %3483 = vmatprep.subr.mxu0 0.0
    %3484 = vmatpush1.msra.mxu0 0.0
    %3485 = vmatprep.subr.mxu0 0.0
    %3486 = vmatpush1.msra.mxu0 0.0
    %3487 = vmatprep.subr.mxu0 0.0
    %3488 = vmatpush1.msra.mxu0 0.0
    %3489 = vmatprep.subr.mxu0 0.0
    %3490 = vmatpush1.msra.mxu0 0.0
    %3491 = vmatprep.subr.mxu0 0.0
    %3492 = vmatpush1.msra.mxu0 0.0
    %3493 = vmatprep.subr.mxu0 0.0
    %3494 = vmatpush1.msra.mxu0 0.0
    %3495 = vmatprep.subr.mxu0 0.0
    %3496 = vmatpush1.msra.mxu0 0.0
    %3497 = vmatprep.subr.mxu0 0.0
    %3498 = vmatpush1.msra.mxu0 0.0
    %3499 = vmatprep.subr.mxu0 0.0
    %3500 = vmatpush1.msra.mxu0 0.0
    %3501 = vmatprep.subr.mxu0 0.0
    %3502 = vmatpush1.msra.mxu0 0.0
    %3503 = vmatprep.subr.mxu0 0.0
    %3504 = vmatpush1.msra.mxu0 0.0
    %3505 = vmatprep.subr.mxu0 0.0
    %3506 = vmatpush1.msra.mxu0 0.0
    %3507 = vmatprep.subr.mxu0 0.0
    %3508 = vmatpush1.msra.mxu0 0.0
    %3509 = vmatprep.subr.mxu0 0.0
    %3510 = vmatpush1.msra.mxu0 0.0
    %3511 = vmatprep.subr.mxu0 0.0
    %3512 = vmatpush1.msra.mxu0 0.0
    %3513 = vmatprep.subr.mxu0 0.0
    %3514 = vmatpush1.msra.mxu0 0.0
    %3515 = vmatprep.subr.mxu0 0.0
    %3516 = vmatpush1.msra.mxu0 0.0
    %3517 = vmatprep.mubr.f32.mxu0 0.0
    %3518 = vmatmul.mubr.f32.gmra.mrb[0].mxu0 %v3451
    %v3519 = vpop.f32.mrb[0].mxu0
    %v3520 = vadd.f32 0.0, %v3519
    %v3521 = vpop.f32.mrb[0].mxu0
    %3522 = vdwg.mxu0
    %v3523 = vadd.f32 %v3433, %v3520
    %v3524 = vld [vmem:[%s2] sm:$0x1]
    %v3526 = vlaneseq
    %v3527 = vshrl.u32 %v3526, 7
    %v3528 = vsub.s32 0, %v3527
    %v3529 = vrot.slane %v3524, %v3528
    %v3531 = vadd.f32 %v3523, %v3529
    %v3532 = vmax.f32 %v3531, 0.0
    %s3533 = scalar_lea.vmem [#allocation2], 96
    %3534 = vst [vmem:[%s3533] sm:$0xff] %v3532
    %v3535 = vld [vmem:[%s3436] sm:$0xff]
    %v3536 = vld [vmem:[#allocation4] sm:$0xff]
    %v3537 = vld [vmem:[#allocation4 + $0x8] sm:$0xff]
    %v3538 = vld [vmem:[#allocation4 + $0x10] sm:$0xff]
    %v3539 = vld [vmem:[#allocation4 + $0x18] sm:$0xff]
    %v3540 = vld [vmem:[#allocation4 + $0x20] sm:$0xff]
    %v3541 = vld [vmem:[#allocation4 + $0x28] sm:$0xff]
    %v3542 = vld [vmem:[#allocation4 + $0x30] sm:$0xff]
    %v3543 = vld [vmem:[#allocation4 + $0x38] sm:$0xff]
    %v3544 = vld [vmem:[#allocation4 + $0x40] sm:$0xff]
    %v3545 = vld [vmem:[#allocation4 + $0x48] sm:$0xff]
    %v3546 = vld [vmem:[#allocation4 + $0x50] sm:$0xff]
    %v3547 = vld [vmem:[#allocation4 + $0x58] sm:$0xff]
    %s3548 = scalar_lea.vmem %s0, 208
    %v3549 = vld [vmem:[%s3548] sm:$0xff]
    %v3550 = vld [vmem:[%s86] sm:$0xff]
    %v3551 = vld [vmem:[%s86 + $0x8] sm:$0xff]
    %v3552 = vld [vmem:[%s86 + $0x10] sm:$0xff]
    %v3553 = vld [vmem:[%s86 + $0x18] sm:$0xff]
    %v3554 = vld [vmem:[%s86 + $0x20] sm:$0xff]
    %v3555 = vld [vmem:[%s86 + $0x28] sm:$0xff]
    %v3556 = vld [vmem:[%s86 + $0x30] sm:$0xff]
    %v3557 = vld [vmem:[%s86 + $0x38] sm:$0xff]
    %v3558 = vld [vmem:[%s86 + $0x40] sm:$0xff]
    %v3559 = vld [vmem:[%s86 + $0x48] sm:$0xff]
    %v3560 = vld [vmem:[%s86 + $0x50] sm:$0xff]
    %v3561 = vld [vmem:[%s86 + $0x58] sm:$0xff]
    %v3563 = vsel %vm114, %v3549, 0
    %3565 = vmatprep.subr.mxu0 0.0
    %3566 = vmatpush1.msra.mxu0 %v3550
    %3567 = vmatprep.subr.mxu0 0.0
    %3568 = vmatpush1.msra.mxu0 %v3551
    %3569 = vmatprep.subr.mxu0 0.0
    %3570 = vmatpush1.msra.mxu0 %v3552
    %3571 = vmatprep.subr.mxu0 0.0
    %3572 = vmatpush1.msra.mxu0 %v3553
    %3573 = vmatprep.subr.mxu0 0.0
    %3574 = vmatpush1.msra.mxu0 %v3554
    %3575 = vmatprep.subr.mxu0 0.0
    %3576 = vmatpush1.msra.mxu0 %v3555
    %3577 = vmatprep.subr.mxu0 0.0
    %3578 = vmatpush1.msra.mxu0 %v3556
    %3579 = vmatprep.subr.mxu0 0.0
    %3580 = vmatpush1.msra.mxu0 %v3557
    %3581 = vmatprep.subr.mxu0 0.0
    %3582 = vmatpush1.msra.mxu0 %v3558
    %3583 = vmatprep.subr.mxu0 0.0
    %3584 = vmatpush1.msra.mxu0 %v3559
    %3585 = vmatprep.subr.mxu0 0.0
    %3586 = vmatpush1.msra.mxu0 %v3560
    %3587 = vmatprep.subr.mxu0 0.0
    %3588 = vmatpush1.msra.mxu0 %v3561
    %3589 = vmatprep.subr.mxu0 0.0
    %3590 = vmatpush1.msra.mxu0 0.0
    %3591 = vmatprep.subr.mxu0 0.0
    %3592 = vmatpush1.msra.mxu0 0.0
    %3593 = vmatprep.subr.mxu0 0.0
    %3594 = vmatpush1.msra.mxu0 0.0
    %3595 = vmatprep.subr.mxu0 0.0
    %3596 = vmatpush1.msra.mxu0 0.0
    %3597 = vmatprep.subr.mxu0 0.0
    %3598 = vmatpush1.msra.mxu0 0.0
    %3599 = vmatprep.subr.mxu0 0.0
    %3600 = vmatpush1.msra.mxu0 0.0
    %3601 = vmatprep.subr.mxu0 0.0
    %3602 = vmatpush1.msra.mxu0 0.0
    %3603 = vmatprep.subr.mxu0 0.0
    %3604 = vmatpush1.msra.mxu0 0.0
    %3605 = vmatprep.subr.mxu0 0.0
    %3606 = vmatpush1.msra.mxu0 0.0
    %3607 = vmatprep.subr.mxu0 0.0
    %3608 = vmatpush1.msra.mxu0 0.0
    %3609 = vmatprep.subr.mxu0 0.0
    %3610 = vmatpush1.msra.mxu0 0.0
    %3611 = vmatprep.subr.mxu0 0.0
    %3612 = vmatpush1.msra.mxu0 0.0
    %3613 = vmatprep.subr.mxu0 0.0
    %3614 = vmatpush1.msra.mxu0 0.0
    %3615 = vmatprep.subr.mxu0 0.0
    %3616 = vmatpush1.msra.mxu0 0.0
    %3617 = vmatprep.subr.mxu0 0.0
    %3618 = vmatpush1.msra.mxu0 0.0
    %3619 = vmatprep.subr.mxu0 0.0
    %3620 = vmatpush1.msra.mxu0 0.0
    %3621 = vmatprep.subr.mxu0 0.0
    %3622 = vmatpush1.msra.mxu0 0.0
    %3623 = vmatprep.subr.mxu0 0.0
    %3624 = vmatpush1.msra.mxu0 0.0
    %3625 = vmatprep.subr.mxu0 0.0
    %3626 = vmatpush1.msra.mxu0 0.0
    %3627 = vmatprep.subr.mxu0 0.0
    %3628 = vmatpush1.msra.mxu0 0.0
    %3629 = vmatprep.mubr.f32.mxu0 0.0
    %3630 = vmatmul.mubr.f32.gmra.mrb[0].mxu0 %v3563
    %v3631 = vpop.f32.mrb[0].mxu0
    %v3632 = vadd.f32 0.0, %v3631
    %v3633 = vpop.f32.mrb[0].mxu0
    %3634 = vdwg.mxu0
    %v3636 = vsel %vm114, %v3535, 0
    %3638 = vmatprep.subr.mxu0 0.0
    %3639 = vmatpush1.msra.mxu0 %v3536
    %3640 = vmatprep.subr.mxu0 0.0
    %3641 = vmatpush1.msra.mxu0 %v3537
    %3642 = vmatprep.subr.mxu0 0.0
    %3643 = vmatpush1.msra.mxu0 %v3538
    %3644 = vmatprep.subr.mxu0 0.0
    %3645 = vmatpush1.msra.mxu0 %v3539
    %3646 = vmatprep.subr.mxu0 0.0
    %3647 = vmatpush1.msra.mxu0 %v3540
    %3648 = vmatprep.subr.mxu0 0.0
    %3649 = vmatpush1.msra.mxu0 %v3541
    %3650 = vmatprep.subr.mxu0 0.0
    %3651 = vmatpush1.msra.mxu0 %v3542
    %3652 = vmatprep.subr.mxu0 0.0
    %3653 = vmatpush1.msra.mxu0 %v3543
    %3654 = vmatprep.subr.mxu0 0.0
    %3655 = vmatpush1.msra.mxu0 %v3544
    %3656 = vmatprep.subr.mxu0 0.0
    %3657 = vmatpush1.msra.mxu0 %v3545
    %3658 = vmatprep.subr.mxu0 0.0
    %3659 = vmatpush1.msra.mxu0 %v3546
    %3660 = vmatprep.subr.mxu0 0.0
    %3661 = vmatpush1.msra.mxu0 %v3547
    %3662 = vmatprep.subr.mxu0 0.0
    %3663 = vmatpush1.msra.mxu0 0.0
    %3664 = vmatprep.subr.mxu0 0.0
    %3665 = vmatpush1.msra.mxu0 0.0
    %3666 = vmatprep.subr.mxu0 0.0
    %3667 = vmatpush1.msra.mxu0 0.0
    %3668 = vmatprep.subr.mxu0 0.0
    %3669 = vmatpush1.msra.mxu0 0.0
    %3670 = vmatprep.subr.mxu0 0.0
    %3671 = vmatpush1.msra.mxu0 0.0
    %3672 = vmatprep.subr.mxu0 0.0
    %3673 = vmatpush1.msra.mxu0 0.0
    %3674 = vmatprep.subr.mxu0 0.0
    %3675 = vmatpush1.msra.mxu0 0.0
    %3676 = vmatprep.subr.mxu0 0.0
    %3677 = vmatpush1.msra.mxu0 0.0
    %3678 = vmatprep.subr.mxu0 0.0
    %3679 = vmatpush1.msra.mxu0 0.0
    %3680 = vmatprep.subr.mxu0 0.0
    %3681 = vmatpush1.msra.mxu0 0.0
    %3682 = vmatprep.subr.mxu0 0.0
    %3683 = vmatpush1.msra.mxu0 0.0
    %3684 = vmatprep.subr.mxu0 0.0
    %3685 = vmatpush1.msra.mxu0 0.0
    %3686 = vmatprep.subr.mxu0 0.0
    %3687 = vmatpush1.msra.mxu0 0.0
    %3688 = vmatprep.subr.mxu0 0.0
    %3689 = vmatpush1.msra.mxu0 0.0
    %3690 = vmatprep.subr.mxu0 0.0
    %3691 = vmatpush1.msra.mxu0 0.0
    %3692 = vmatprep.subr.mxu0 0.0
    %3693 = vmatpush1.msra.mxu0 0.0
    %3694 = vmatprep.subr.mxu0 0.0
    %3695 = vmatpush1.msra.mxu0 0.0
    %3696 = vmatprep.subr.mxu0 0.0
    %3697 = vmatpush1.msra.mxu0 0.0
    %3698 = vmatprep.subr.mxu0 0.0
    %3699 = vmatpush1.msra.mxu0 0.0
    %3700 = vmatprep.subr.mxu0 0.0
    %3701 = vmatpush1.msra.mxu0 0.0
    %3702 = vmatprep.mubr.f32.mxu0 0.0
    %3703 = vmatmul.mubr.f32.gmra.mrb[0].mxu0 %v3636
    %v3704 = vpop.f32.mrb[0].mxu0
    %v3705 = vadd.f32 %v3632, %v3704
    %v3706 = vpop.f32.mrb[0].mxu0
    %3707 = vdwg.mxu0
    %s3708 = scalar_lea.vmem %s0, 216
    %v3709 = vld [vmem:[%s3708] sm:$0xff]
    %v3710 = vld [vmem:[%s101] sm:$0xff]
    %v3711 = vld [vmem:[%s101 + $0x8] sm:$0xff]
    %v3712 = vld [vmem:[%s101 + $0x10] sm:$0xff]
    %v3713 = vld [vmem:[%s101 + $0x18] sm:$0xff]
    %v3714 = vld [vmem:[%s101 + $0x20] sm:$0xff]
    %v3715 = vld [vmem:[%s101 + $0x28] sm:$0xff]
    %v3716 = vld [vmem:[%s101 + $0x30] sm:$0xff]
    %v3717 = vld [vmem:[%s101 + $0x38] sm:$0xff]
    %v3718 = vld [vmem:[%s101 + $0x40] sm:$0xff]
    %v3719 = vld [vmem:[%s101 + $0x48] sm:$0xff]
    %v3720 = vld [vmem:[%s101 + $0x50] sm:$0xff]
    %v3721 = vld [vmem:[%s101 + $0x58] sm:$0xff]
    %v3723 = vsel %vm114, %v3709, 0
    %3725 = vmatprep.subr.mxu0 0.0
    %3726 = vmatpush1.msra.mxu0 %v3710
    %3727 = vmatprep.subr.mxu0 0.0
    %3728 = vmatpush1.msra.mxu0 %v3711
    %3729 = vmatprep.subr.mxu0 0.0
    %3730 = vmatpush1.msra.mxu0 %v3712
    %3731 = vmatprep.subr.mxu0 0.0
    %3732 = vmatpush1.msra.mxu0 %v3713
    %3733 = vmatprep.subr.mxu0 0.0
    %3734 = vmatpush1.msra.mxu0 %v3714
    %3735 = vmatprep.subr.mxu0 0.0
    %3736 = vmatpush1.msra.mxu0 %v3715
    %3737 = vmatprep.subr.mxu0 0.0
    %3738 = vmatpush1.msra.mxu0 %v3716
    %3739 = vmatprep.subr.mxu0 0.0
    %3740 = vmatpush1.msra.mxu0 %v3717
    %3741 = vmatprep.subr.mxu0 0.0
    %3742 = vmatpush1.msra.mxu0 %v3718
    %3743 = vmatprep.subr.mxu0 0.0
    %3744 = vmatpush1.msra.mxu0 %v3719
    %3745 = vmatprep.subr.mxu0 0.0
    %3746 = vmatpush1.msra.mxu0 %v3720
    %3747 = vmatprep.subr.mxu0 0.0
    %3748 = vmatpush1.msra.mxu0 %v3721
    %3749 = vmatprep.subr.mxu0 0.0
    %3750 = vmatpush1.msra.mxu0 0.0
    %3751 = vmatprep.subr.mxu0 0.0
    %3752 = vmatpush1.msra.mxu0 0.0
    %3753 = vmatprep.subr.mxu0 0.0
    %3754 = vmatpush1.msra.mxu0 0.0
    %3755 = vmatprep.subr.mxu0 0.0
    %3756 = vmatpush1.msra.mxu0 0.0
    %3757 = vmatprep.subr.mxu0 0.0
    %3758 = vmatpush1.msra.mxu0 0.0
    %3759 = vmatprep.subr.mxu0 0.0
    %3760 = vmatpush1.msra.mxu0 0.0
    %3761 = vmatprep.subr.mxu0 0.0
    %3762 = vmatpush1.msra.mxu0 0.0
    %3763 = vmatprep.subr.mxu0 0.0
    %3764 = vmatpush1.msra.mxu0 0.0
    %3765 = vmatprep.subr.mxu0 0.0
    %3766 = vmatpush1.msra.mxu0 0.0
    %3767 = vmatprep.subr.mxu0 0.0
    %3768 = vmatpush1.msra.mxu0 0.0
    %3769 = vmatprep.subr.mxu0 0.0
    %3770 = vmatpush1.msra.mxu0 0.0
    %3771 = vmatprep.subr.mxu0 0.0
    %3772 = vmatpush1.msra.mxu0 0.0
    %3773 = vmatprep.subr.mxu0 0.0
    %3774 = vmatpush1.msra.mxu0 0.0
    %3775 = vmatprep.subr.mxu0 0.0
    %3776 = vmatpush1.msra.mxu0 0.0
    %3777 = vmatprep.subr.mxu0 0.0
    %3778 = vmatpush1.msra.mxu0 0.0
    %3779 = vmatprep.subr.mxu0 0.0
    %3780 = vmatpush1.msra.mxu0 0.0
    %3781 = vmatprep.subr.mxu0 0.0
    %3782 = vmatpush1.msra.mxu0 0.0
    %3783 = vmatprep.subr.mxu0 0.0
    %3784 = vmatpush1.msra.mxu0 0.0
    %3785 = vmatprep.subr.mxu0 0.0
    %3786 = vmatpush1.msra.mxu0 0.0
    %3787 = vmatprep.subr.mxu0 0.0
    %3788 = vmatpush1.msra.mxu0 0.0
    %3789 = vmatprep.mubr.f32.mxu0 0.0
    %3790 = vmatmul.mubr.f32.gmra.mrb[0].mxu0 %v3723
    %v3791 = vpop.f32.mrb[0].mxu0
    %v3792 = vadd.f32 0.0, %v3791
    %v3793 = vpop.f32.mrb[0].mxu0
    %3794 = vdwg.mxu0
    %v3795 = vadd.f32 %v3705, %v3792
    %v3796 = vld [vmem:[%s2] sm:$0x1]
    %v3798 = vlaneseq
    %v3799 = vshrl.u32 %v3798, 7
    %v3800 = vsub.s32 0, %v3799
    %v3801 = vrot.slane %v3796, %v3800
    %v3803 = vadd.f32 %v3795, %v3801
    %v3804 = vmax.f32 %v3803, 0.0
    %s3805 = scalar_lea.vmem [#allocation2], 104
    %3806 = vst [vmem:[%s3805] sm:$0xff] %v3804
    %v3807 = vld [vmem:[%s3708] sm:$0xff]
    %v3808 = vld [vmem:[#allocation4] sm:$0xff]
    %v3809 = vld [vmem:[#allocation4 + $0x8] sm:$0xff]
    %v3810 = vld [vmem:[#allocation4 + $0x10] sm:$0xff]
    %v3811 = vld [vmem:[#allocation4 + $0x18] sm:$0xff]
    %v3812 = vld [vmem:[#allocation4 + $0x20] sm:$0xff]
    %v3813 = vld [vmem:[#allocation4 + $0x28] sm:$0xff]
    %v3814 = vld [vmem:[#allocation4 + $0x30] sm:$0xff]
    %v3815 = vld [vmem:[#allocation4 + $0x38] sm:$0xff]
    %v3816 = vld [vmem:[#allocation4 + $0x40] sm:$0xff]
    %v3817 = vld [vmem:[#allocation4 + $0x48] sm:$0xff]
    %v3818 = vld [vmem:[#allocation4 + $0x50] sm:$0xff]
    %v3819 = vld [vmem:[#allocation4 + $0x58] sm:$0xff]
    %s3820 = scalar_lea.vmem %s0, 224
    %v3821 = vld [vmem:[%s3820] sm:$0xff]
    %v3822 = vld [vmem:[%s86] sm:$0xff]
    %v3823 = vld [vmem:[%s86 + $0x8] sm:$0xff]
    %v3824 = vld [vmem:[%s86 + $0x10] sm:$0xff]
    %v3825 = vld [vmem:[%s86 + $0x18] sm:$0xff]
    %v3826 = vld [vmem:[%s86 + $0x20] sm:$0xff]
    %v3827 = vld [vmem:[%s86 + $0x28] sm:$0xff]
    %v3828 = vld [vmem:[%s86 + $0x30] sm:$0xff]
    %v3829 = vld [vmem:[%s86 + $0x38] sm:$0xff]
    %v3830 = vld [vmem:[%s86 + $0x40] sm:$0xff]
    %v3831 = vld [vmem:[%s86 + $0x48] sm:$0xff]
    %v3832 = vld [vmem:[%s86 + $0x50] sm:$0xff]
    %v3833 = vld [vmem:[%s86 + $0x58] sm:$0xff]
    %v3835 = vsel %vm114, %v3821, 0
    %3837 = vmatprep.subr.mxu0 0.0
    %3838 = vmatpush1.msra.mxu0 %v3822
    %3839 = vmatprep.subr.mxu0 0.0
    %3840 = vmatpush1.msra.mxu0 %v3823
    %3841 = vmatprep.subr.mxu0 0.0
    %3842 = vmatpush1.msra.mxu0 %v3824
    %3843 = vmatprep.subr.mxu0 0.0
    %3844 = vmatpush1.msra.mxu0 %v3825
    %3845 = vmatprep.subr.mxu0 0.0
    %3846 = vmatpush1.msra.mxu0 %v3826
    %3847 = vmatprep.subr.mxu0 0.0
    %3848 = vmatpush1.msra.mxu0 %v3827
    %3849 = vmatprep.subr.mxu0 0.0
    %3850 = vmatpush1.msra.mxu0 %v3828
    %3851 = vmatprep.subr.mxu0 0.0
    %3852 = vmatpush1.msra.mxu0 %v3829
    %3853 = vmatprep.subr.mxu0 0.0
    %3854 = vmatpush1.msra.mxu0 %v3830
    %3855 = vmatprep.subr.mxu0 0.0
    %3856 = vmatpush1.msra.mxu0 %v3831
    %3857 = vmatprep.subr.mxu0 0.0
    %3858 = vmatpush1.msra.mxu0 %v3832
    %3859 = vmatprep.subr.mxu0 0.0
    %3860 = vmatpush1.msra.mxu0 %v3833
    %3861 = vmatprep.subr.mxu0 0.0
    %3862 = vmatpush1.msra.mxu0 0.0
    %3863 = vmatprep.subr.mxu0 0.0
    %3864 = vmatpush1.msra.mxu0 0.0
    %3865 = vmatprep.subr.mxu0 0.0
    %3866 = vmatpush1.msra.mxu0 0.0
    %3867 = vmatprep.subr.mxu0 0.0
    %3868 = vmatpush1.msra.mxu0 0.0
    %3869 = vmatprep.subr.mxu0 0.0
    %3870 = vmatpush1.msra.mxu0 0.0
    %3871 = vmatprep.subr.mxu0 0.0
    %3872 = vmatpush1.msra.mxu0 0.0
    %3873 = vmatprep.subr.mxu0 0.0
    %3874 = vmatpush1.msra.mxu0 0.0
    %3875 = vmatprep.subr.mxu0 0.0
    %3876 = vmatpush1.msra.mxu0 0.0
    %3877 = vmatprep.subr.mxu0 0.0
    %3878 = vmatpush1.msra.mxu0 0.0
    %3879 = vmatprep.subr.mxu0 0.0
    %3880 = vmatpush1.msra.mxu0 0.0
    %3881 = vmatprep.subr.mxu0 0.0
    %3882 = vmatpush1.msra.mxu0 0.0
    %3883 = vmatprep.subr.mxu0 0.0
    %3884 = vmatpush1.msra.mxu0 0.0
    %3885 = vmatprep.subr.mxu0 0.0
    %3886 = vmatpush1.msra.mxu0 0.0
    %3887 = vmatprep.subr.mxu0 0.0
    %3888 = vmatpush1.msra.mxu0 0.0
    %3889 = vmatprep.subr.mxu0 0.0
    %3890 = vmatpush1.msra.mxu0 0.0
    %3891 = vmatprep.subr.mxu0 0.0
    %3892 = vmatpush1.msra.mxu0 0.0
    %3893 = vmatprep.subr.mxu0 0.0
    %3894 = vmatpush1.msra.mxu0 0.0
    %3895 = vmatprep.subr.mxu0 0.0
    %3896 = vmatpush1.msra.mxu0 0.0
    %3897 = vmatprep.subr.mxu0 0.0
    %3898 = vmatpush1.msra.mxu0 0.0
    %3899 = vmatprep.subr.mxu0 0.0
    %3900 = vmatpush1.msra.mxu0 0.0
    %3901 = vmatprep.mubr.f32.mxu0 0.0
    %3902 = vmatmul.mubr.f32.gmra.mrb[0].mxu0 %v3835
    %v3903 = vpop.f32.mrb[0].mxu0
    %v3904 = vadd.f32 0.0, %v3903
    %v3905 = vpop.f32.mrb[0].mxu0
    %3906 = vdwg.mxu0
    %v3908 = vsel %vm114, %v3807, 0
    %3910 = vmatprep.subr.mxu0 0.0
    %3911 = vmatpush1.msra.mxu0 %v3808
    %3912 = vmatprep.subr.mxu0 0.0
    %3913 = vmatpush1.msra.mxu0 %v3809
    %3914 = vmatprep.subr.mxu0 0.0
    %3915 = vmatpush1.msra.mxu0 %v3810
    %3916 = vmatprep.subr.mxu0 0.0
    %3917 = vmatpush1.msra.mxu0 %v3811
    %3918 = vmatprep.subr.mxu0 0.0
    %3919 = vmatpush1.msra.mxu0 %v3812
    %3920 = vmatprep.subr.mxu0 0.0
    %3921 = vmatpush1.msra.mxu0 %v3813
    %3922 = vmatprep.subr.mxu0 0.0
    %3923 = vmatpush1.msra.mxu0 %v3814
    %3924 = vmatprep.subr.mxu0 0.0
    %3925 = vmatpush1.msra.mxu0 %v3815
    %3926 = vmatprep.subr.mxu0 0.0
    %3927 = vmatpush1.msra.mxu0 %v3816
    %3928 = vmatprep.subr.mxu0 0.0
    %3929 = vmatpush1.msra.mxu0 %v3817
    %3930 = vmatprep.subr.mxu0 0.0
    %3931 = vmatpush1.msra.mxu0 %v3818
    %3932 = vmatprep.subr.mxu0 0.0
    %3933 = vmatpush1.msra.mxu0 %v3819
    %3934 = vmatprep.subr.mxu0 0.0
    %3935 = vmatpush1.msra.mxu0 0.0
    %3936 = vmatprep.subr.mxu0 0.0
    %3937 = vmatpush1.msra.mxu0 0.0
    %3938 = vmatprep.subr.mxu0 0.0
    %3939 = vmatpush1.msra.mxu0 0.0
    %3940 = vmatprep.subr.mxu0 0.0
    %3941 = vmatpush1.msra.mxu0 0.0
    %3942 = vmatprep.subr.mxu0 0.0
    %3943 = vmatpush1.msra.mxu0 0.0
    %3944 = vmatprep.subr.mxu0 0.0
    %3945 = vmatpush1.msra.mxu0 0.0
    %3946 = vmatprep.subr.mxu0 0.0
    %3947 = vmatpush1.msra.mxu0 0.0
    %3948 = vmatprep.subr.mxu0 0.0
    %3949 = vmatpush1.msra.mxu0 0.0
    %3950 = vmatprep.subr.mxu0 0.0
    %3951 = vmatpush1.msra.mxu0 0.0
    %3952 = vmatprep.subr.mxu0 0.0
    %3953 = vmatpush1.msra.mxu0 0.0
    %3954 = vmatprep.subr.mxu0 0.0
    %3955 = vmatpush1.msra.mxu0 0.0
    %3956 = vmatprep.subr.mxu0 0.0
    %3957 = vmatpush1.msra.mxu0 0.0
    %3958 = vmatprep.subr.mxu0 0.0
    %3959 = vmatpush1.msra.mxu0 0.0
    %3960 = vmatprep.subr.mxu0 0.0
    %3961 = vmatpush1.msra.mxu0 0.0
    %3962 = vmatprep.subr.mxu0 0.0
    %3963 = vmatpush1.msra.mxu0 0.0
    %3964 = vmatprep.subr.mxu0 0.0
    %3965 = vmatpush1.msra.mxu0 0.0
    %3966 = vmatprep.subr.mxu0 0.0
    %3967 = vmatpush1.msra.mxu0 0.0
    %3968 = vmatprep.subr.mxu0 0.0
    %3969 = vmatpush1.msra.mxu0 0.0
    %3970 = vmatprep.subr.mxu0 0.0
    %3971 = vmatpush1.msra.mxu0 0.0
    %3972 = vmatprep.subr.mxu0 0.0
    %3973 = vmatpush1.msra.mxu0 0.0
    %3974 = vmatprep.mubr.f32.mxu0 0.0
    %3975 = vmatmul.mubr.f32.gmra.mrb[0].mxu0 %v3908
    %v3976 = vpop.f32.mrb[0].mxu0
    %v3977 = vadd.f32 %v3904, %v3976
    %v3978 = vpop.f32.mrb[0].mxu0
    %3979 = vdwg.mxu0
    %s3980 = scalar_lea.vmem %s0, 232
    %v3981 = vld [vmem:[%s3980] sm:$0xff]
    %v3982 = vld [vmem:[%s101] sm:$0xff]
    %v3983 = vld [vmem:[%s101 + $0x8] sm:$0xff]
    %v3984 = vld [vmem:[%s101 + $0x10] sm:$0xff]
    %v3985 = vld [vmem:[%s101 + $0x18] sm:$0xff]
    %v3986 = vld [vmem:[%s101 + $0x20] sm:$0xff]
    %v3987 = vld [vmem:[%s101 + $0x28] sm:$0xff]
    %v3988 = vld [vmem:[%s101 + $0x30] sm:$0xff]
    %v3989 = vld [vmem:[%s101 + $0x38] sm:$0xff]
    %v3990 = vld [vmem:[%s101 + $0x40] sm:$0xff]
    %v3991 = vld [vmem:[%s101 + $0x48] sm:$0xff]
    %v3992 = vld [vmem:[%s101 + $0x50] sm:$0xff]
    %v3993 = vld [vmem:[%s101 + $0x58] sm:$0xff]
    %v3995 = vsel %vm114, %v3981, 0
    %3997 = vmatprep.subr.mxu0 0.0
    %3998 = vmatpush1.msra.mxu0 %v3982
    %3999 = vmatprep.subr.mxu0 0.0
    %4000 = vmatpush1.msra.mxu0 %v3983
    %4001 = vmatprep.subr.mxu0 0.0
    %4002 = vmatpush1.msra.mxu0 %v3984
    %4003 = vmatprep.subr.mxu0 0.0
    %4004 = vmatpush1.msra.mxu0 %v3985
    %4005 = vmatprep.subr.mxu0 0.0
    %4006 = vmatpush1.msra.mxu0 %v3986
    %4007 = vmatprep.subr.mxu0 0.0
    %4008 = vmatpush1.msra.mxu0 %v3987
    %4009 = vmatprep.subr.mxu0 0.0
    %4010 = vmatpush1.msra.mxu0 %v3988
    %4011 = vmatprep.subr.mxu0 0.0
    %4012 = vmatpush1.msra.mxu0 %v3989
    %4013 = vmatprep.subr.mxu0 0.0
    %4014 = vmatpush1.msra.mxu0 %v3990
    %4015 = vmatprep.subr.mxu0 0.0
    %4016 = vmatpush1.msra.mxu0 %v3991
    %4017 = vmatprep.subr.mxu0 0.0
    %4018 = vmatpush1.msra.mxu0 %v3992
    %4019 = vmatprep.subr.mxu0 0.0
    %4020 = vmatpush1.msra.mxu0 %v3993
    %4021 = vmatprep.subr.mxu0 0.0
    %4022 = vmatpush1.msra.mxu0 0.0
    %4023 = vmatprep.subr.mxu0 0.0
    %4024 = vmatpush1.msra.mxu0 0.0
    %4025 = vmatprep.subr.mxu0 0.0
    %4026 = vmatpush1.msra.mxu0 0.0
    %4027 = vmatprep.subr.mxu0 0.0
    %4028 = vmatpush1.msra.mxu0 0.0
    %4029 = vmatprep.subr.mxu0 0.0
    %4030 = vmatpush1.msra.mxu0 0.0
    %4031 = vmatprep.subr.mxu0 0.0
    %4032 = vmatpush1.msra.mxu0 0.0
    %4033 = vmatprep.subr.mxu0 0.0
    %4034 = vmatpush1.msra.mxu0 0.0
    %4035 = vmatprep.subr.mxu0 0.0
    %4036 = vmatpush1.msra.mxu0 0.0
    %4037 = vmatprep.subr.mxu0 0.0
    %4038 = vmatpush1.msra.mxu0 0.0
    %4039 = vmatprep.subr.mxu0 0.0
    %4040 = vmatpush1.msra.mxu0 0.0
    %4041 = vmatprep.subr.mxu0 0.0
    %4042 = vmatpush1.msra.mxu0 0.0
    %4043 = vmatprep.subr.mxu0 0.0
    %4044 = vmatpush1.msra.mxu0 0.0
    %4045 = vmatprep.subr.mxu0 0.0
    %4046 = vmatpush1.msra.mxu0 0.0
    %4047 = vmatprep.subr.mxu0 0.0
    %4048 = vmatpush1.msra.mxu0 0.0
    %4049 = vmatprep.subr.mxu0 0.0
    %4050 = vmatpush1.msra.mxu0 0.0
    %4051 = vmatprep.subr.mxu0 0.0
    %4052 = vmatpush1.msra.mxu0 0.0
    %4053 = vmatprep.subr.mxu0 0.0
    %4054 = vmatpush1.msra.mxu0 0.0
    %4055 = vmatprep.subr.mxu0 0.0
    %4056 = vmatpush1.msra.mxu0 0.0
    %4057 = vmatprep.subr.mxu0 0.0
    %4058 = vmatpush1.msra.mxu0 0.0
    %4059 = vmatprep.subr.mxu0 0.0
    %4060 = vmatpush1.msra.mxu0 0.0
    %4061 = vmatprep.mubr.f32.mxu0 0.0
    %4062 = vmatmul.mubr.f32.gmra.mrb[0].mxu0 %v3995
    %v4063 = vpop.f32.mrb[0].mxu0
    %v4064 = vadd.f32 0.0, %v4063
    %v4065 = vpop.f32.mrb[0].mxu0
    %4066 = vdwg.mxu0
    %v4067 = vadd.f32 %v3977, %v4064
    %v4068 = vld [vmem:[%s2] sm:$0x1]
    %v4070 = vlaneseq
    %v4071 = vshrl.u32 %v4070, 7
    %v4072 = vsub.s32 0, %v4071
    %v4073 = vrot.slane %v4068, %v4072
    %v4075 = vadd.f32 %v4067, %v4073
    %v4076 = vmax.f32 %v4075, 0.0
    %s4077 = scalar_lea.vmem [#allocation2], 112
    %4078 = vst [vmem:[%s4077] sm:$0xff] %v4076
    %v4079 = vld [vmem:[%s3980] sm:$0xff]
    %v4080 = vld [vmem:[#allocation4] sm:$0xff]
    %v4081 = vld [vmem:[#allocation4 + $0x8] sm:$0xff]
    %v4082 = vld [vmem:[#allocation4 + $0x10] sm:$0xff]
    %v4083 = vld [vmem:[#allocation4 + $0x18] sm:$0xff]
    %v4084 = vld [vmem:[#allocation4 + $0x20] sm:$0xff]
    %v4085 = vld [vmem:[#allocation4 + $0x28] sm:$0xff]
    %v4086 = vld [vmem:[#allocation4 + $0x30] sm:$0xff]
    %v4087 = vld [vmem:[#allocation4 + $0x38] sm:$0xff]
    %v4088 = vld [vmem:[#allocation4 + $0x40] sm:$0xff]
    %v4089 = vld [vmem:[#allocation4 + $0x48] sm:$0xff]
    %v4090 = vld [vmem:[#allocation4 + $0x50] sm:$0xff]
    %v4091 = vld [vmem:[#allocation4 + $0x58] sm:$0xff]
    %s4092 = scalar_lea.vmem %s0, 240
    %v4093 = vld [vmem:[%s4092] sm:$0xff]
    %v4094 = vld [vmem:[%s86] sm:$0xff]
    %v4095 = vld [vmem:[%s86 + $0x8] sm:$0xff]
    %v4096 = vld [vmem:[%s86 + $0x10] sm:$0xff]
    %v4097 = vld [vmem:[%s86 + $0x18] sm:$0xff]
    %v4098 = vld [vmem:[%s86 + $0x20] sm:$0xff]
    %v4099 = vld [vmem:[%s86 + $0x28] sm:$0xff]
    %v4100 = vld [vmem:[%s86 + $0x30] sm:$0xff]
    %v4101 = vld [vmem:[%s86 + $0x38] sm:$0xff]
    %v4102 = vld [vmem:[%s86 + $0x40] sm:$0xff]
    %v4103 = vld [vmem:[%s86 + $0x48] sm:$0xff]
    %v4104 = vld [vmem:[%s86 + $0x50] sm:$0xff]
    %v4105 = vld [vmem:[%s86 + $0x58] sm:$0xff]
    %v4107 = vsel %vm114, %v4093, 0
    %4109 = vmatprep.subr.mxu0 0.0
    %4110 = vmatpush1.msra.mxu0 %v4094
    %4111 = vmatprep.subr.mxu0 0.0
    %4112 = vmatpush1.msra.mxu0 %v4095
    %4113 = vmatprep.subr.mxu0 0.0
    %4114 = vmatpush1.msra.mxu0 %v4096
    %4115 = vmatprep.subr.mxu0 0.0
    %4116 = vmatpush1.msra.mxu0 %v4097
    %4117 = vmatprep.subr.mxu0 0.0
    %4118 = vmatpush1.msra.mxu0 %v4098
    %4119 = vmatprep.subr.mxu0 0.0
    %4120 = vmatpush1.msra.mxu0 %v4099
    %4121 = vmatprep.subr.mxu0 0.0
    %4122 = vmatpush1.msra.mxu0 %v4100
    %4123 = vmatprep.subr.mxu0 0.0
    %4124 = vmatpush1.msra.mxu0 %v4101
    %4125 = vmatprep.subr.mxu0 0.0
    %4126 = vmatpush1.msra.mxu0 %v4102
    %4127 = vmatprep.subr.mxu0 0.0
    %4128 = vmatpush1.msra.mxu0 %v4103
    %4129 = vmatprep.subr.mxu0 0.0
    %4130 = vmatpush1.msra.mxu0 %v4104
    %4131 = vmatprep.subr.mxu0 0.0
    %4132 = vmatpush1.msra.mxu0 %v4105
    %4133 = vmatprep.subr.mxu0 0.0
    %4134 = vmatpush1.msra.mxu0 0.0
    %4135 = vmatprep.subr.mxu0 0.0
    %4136 = vmatpush1.msra.mxu0 0.0
    %4137 = vmatprep.subr.mxu0 0.0
    %4138 = vmatpush1.msra.mxu0 0.0
    %4139 = vmatprep.subr.mxu0 0.0
    %4140 = vmatpush1.msra.mxu0 0.0
    %4141 = vmatprep.subr.mxu0 0.0
    %4142 = vmatpush1.msra.mxu0 0.0
    %4143 = vmatprep.subr.mxu0 0.0
    %4144 = vmatpush1.msra.mxu0 0.0
    %4145 = vmatprep.subr.mxu0 0.0
    %4146 = vmatpush1.msra.mxu0 0.0
    %4147 = vmatprep.subr.mxu0 0.0
    %4148 = vmatpush1.msra.mxu0 0.0
    %4149 = vmatprep.subr.mxu0 0.0
    %4150 = vmatpush1.msra.mxu0 0.0
    %4151 = vmatprep.subr.mxu0 0.0
    %4152 = vmatpush1.msra.mxu0 0.0
    %4153 = vmatprep.subr.mxu0 0.0
    %4154 = vmatpush1.msra.mxu0 0.0
    %4155 = vmatprep.subr.mxu0 0.0
    %4156 = vmatpush1.msra.mxu0 0.0
    %4157 = vmatprep.subr.mxu0 0.0
    %4158 = vmatpush1.msra.mxu0 0.0
    %4159 = vmatprep.subr.mxu0 0.0
    %4160 = vmatpush1.msra.mxu0 0.0
    %4161 = vmatprep.subr.mxu0 0.0
    %4162 = vmatpush1.msra.mxu0 0.0
    %4163 = vmatprep.subr.mxu0 0.0
    %4164 = vmatpush1.msra.mxu0 0.0
    %4165 = vmatprep.subr.mxu0 0.0
    %4166 = vmatpush1.msra.mxu0 0.0
    %4167 = vmatprep.subr.mxu0 0.0
    %4168 = vmatpush1.msra.mxu0 0.0
    %4169 = vmatprep.subr.mxu0 0.0
    %4170 = vmatpush1.msra.mxu0 0.0
    %4171 = vmatprep.subr.mxu0 0.0
    %4172 = vmatpush1.msra.mxu0 0.0
    %4173 = vmatprep.mubr.f32.mxu0 0.0
    %4174 = vmatmul.mubr.f32.gmra.mrb[0].mxu0 %v4107
    %v4175 = vpop.f32.mrb[0].mxu0
    %v4176 = vadd.f32 0.0, %v4175
    %v4177 = vpop.f32.mrb[0].mxu0
    %4178 = vdwg.mxu0
    %v4180 = vsel %vm114, %v4079, 0
    %4182 = vmatprep.subr.mxu0 0.0
    %4183 = vmatpush1.msra.mxu0 %v4080
    %4184 = vmatprep.subr.mxu0 0.0
    %4185 = vmatpush1.msra.mxu0 %v4081
    %4186 = vmatprep.subr.mxu0 0.0
    %4187 = vmatpush1.msra.mxu0 %v4082
    %4188 = vmatprep.subr.mxu0 0.0
    %4189 = vmatpush1.msra.mxu0 %v4083
    %4190 = vmatprep.subr.mxu0 0.0
    %4191 = vmatpush1.msra.mxu0 %v4084
    %4192 = vmatprep.subr.mxu0 0.0
    %4193 = vmatpush1.msra.mxu0 %v4085
    %4194 = vmatprep.subr.mxu0 0.0
    %4195 = vmatpush1.msra.mxu0 %v4086
    %4196 = vmatprep.subr.mxu0 0.0
    %4197 = vmatpush1.msra.mxu0 %v4087
    %4198 = vmatprep.subr.mxu0 0.0
    %4199 = vmatpush1.msra.mxu0 %v4088
    %4200 = vmatprep.subr.mxu0 0.0
    %4201 = vmatpush1.msra.mxu0 %v4089
    %4202 = vmatprep.subr.mxu0 0.0
    %4203 = vmatpush1.msra.mxu0 %v4090
    %4204 = vmatprep.subr.mxu0 0.0
    %4205 = vmatpush1.msra.mxu0 %v4091
    %4206 = vmatprep.subr.mxu0 0.0
    %4207 = vmatpush1.msra.mxu0 0.0
    %4208 = vmatprep.subr.mxu0 0.0
    %4209 = vmatpush1.msra.mxu0 0.0
    %4210 = vmatprep.subr.mxu0 0.0
    %4211 = vmatpush1.msra.mxu0 0.0
    %4212 = vmatprep.subr.mxu0 0.0
    %4213 = vmatpush1.msra.mxu0 0.0
    %4214 = vmatprep.subr.mxu0 0.0
    %4215 = vmatpush1.msra.mxu0 0.0
    %4216 = vmatprep.subr.mxu0 0.0
    %4217 = vmatpush1.msra.mxu0 0.0
    %4218 = vmatprep.subr.mxu0 0.0
    %4219 = vmatpush1.msra.mxu0 0.0
    %4220 = vmatprep.subr.mxu0 0.0
    %4221 = vmatpush1.msra.mxu0 0.0
    %4222 = vmatprep.subr.mxu0 0.0
    %4223 = vmatpush1.msra.mxu0 0.0
    %4224 = vmatprep.subr.mxu0 0.0
    %4225 = vmatpush1.msra.mxu0 0.0
    %4226 = vmatprep.subr.mxu0 0.0
    %4227 = vmatpush1.msra.mxu0 0.0
    %4228 = vmatprep.subr.mxu0 0.0
    %4229 = vmatpush1.msra.mxu0 0.0
    %4230 = vmatprep.subr.mxu0 0.0
    %4231 = vmatpush1.msra.mxu0 0.0
    %4232 = vmatprep.subr.mxu0 0.0
    %4233 = vmatpush1.msra.mxu0 0.0
    %4234 = vmatprep.subr.mxu0 0.0
    %4235 = vmatpush1.msra.mxu0 0.0
    %4236 = vmatprep.subr.mxu0 0.0
    %4237 = vmatpush1.msra.mxu0 0.0
    %4238 = vmatprep.subr.mxu0 0.0
    %4239 = vmatpush1.msra.mxu0 0.0
    %4240 = vmatprep.subr.mxu0 0.0
    %4241 = vmatpush1.msra.mxu0 0.0
    %4242 = vmatprep.subr.mxu0 0.0
    %4243 = vmatpush1.msra.mxu0 0.0
    %4244 = vmatprep.subr.mxu0 0.0
    %4245 = vmatpush1.msra.mxu0 0.0
    %4246 = vmatprep.mubr.f32.mxu0 0.0
    %4247 = vmatmul.mubr.f32.gmra.mrb[0].mxu0 %v4180
    %v4248 = vpop.f32.mrb[0].mxu0
    %v4249 = vadd.f32 %v4176, %v4248
    %v4250 = vpop.f32.mrb[0].mxu0
    %4251 = vdwg.mxu0
    %s4252 = scalar_lea.vmem %s0, 248
    %v4253 = vld [vmem:[%s4252] sm:$0xff]
    %v4254 = vld [vmem:[%s101] sm:$0xff]
    %v4255 = vld [vmem:[%s101 + $0x8] sm:$0xff]
    %v4256 = vld [vmem:[%s101 + $0x10] sm:$0xff]
    %v4257 = vld [vmem:[%s101 + $0x18] sm:$0xff]
    %v4258 = vld [vmem:[%s101 + $0x20] sm:$0xff]
    %v4259 = vld [vmem:[%s101 + $0x28] sm:$0xff]
    %v4260 = vld [vmem:[%s101 + $0x30] sm:$0xff]
    %v4261 = vld [vmem:[%s101 + $0x38] sm:$0xff]
    %v4262 = vld [vmem:[%s101 + $0x40] sm:$0xff]
    %v4263 = vld [vmem:[%s101 + $0x48] sm:$0xff]
    %v4264 = vld [vmem:[%s101 + $0x50] sm:$0xff]
    %v4265 = vld [vmem:[%s101 + $0x58] sm:$0xff]
    %v4267 = vsel %vm114, %v4253, 0
    %4269 = vmatprep.subr.mxu0 0.0
    %4270 = vmatpush1.msra.mxu0 %v4254
    %4271 = vmatprep.subr.mxu0 0.0
    %4272 = vmatpush1.msra.mxu0 %v4255
    %4273 = vmatprep.subr.mxu0 0.0
    %4274 = vmatpush1.msra.mxu0 %v4256
    %4275 = vmatprep.subr.mxu0 0.0
    %4276 = vmatpush1.msra.mxu0 %v4257
    %4277 = vmatprep.subr.mxu0 0.0
    %4278 = vmatpush1.msra.mxu0 %v4258
    %4279 = vmatprep.subr.mxu0 0.0
    %4280 = vmatpush1.msra.mxu0 %v4259
    %4281 = vmatprep.subr.mxu0 0.0
    %4282 = vmatpush1.msra.mxu0 %v4260
    %4283 = vmatprep.subr.mxu0 0.0
    %4284 = vmatpush1.msra.mxu0 %v4261
    %4285 = vmatprep.subr.mxu0 0.0
    %4286 = vmatpush1.msra.mxu0 %v4262
    %4287 = vmatprep.subr.mxu0 0.0
    %4288 = vmatpush1.msra.mxu0 %v4263
    %4289 = vmatprep.subr.mxu0 0.0
    %4290 = vmatpush1.msra.mxu0 %v4264
    %4291 = vmatprep.subr.mxu0 0.0
    %4292 = vmatpush1.msra.mxu0 %v4265
    %4293 = vmatprep.subr.mxu0 0.0
    %4294 = vmatpush1.msra.mxu0 0.0
    %4295 = vmatprep.subr.mxu0 0.0
    %4296 = vmatpush1.msra.mxu0 0.0
    %4297 = vmatprep.subr.mxu0 0.0
    %4298 = vmatpush1.msra.mxu0 0.0
    %4299 = vmatprep.subr.mxu0 0.0
    %4300 = vmatpush1.msra.mxu0 0.0
    %4301 = vmatprep.subr.mxu0 0.0
    %4302 = vmatpush1.msra.mxu0 0.0
    %4303 = vmatprep.subr.mxu0 0.0
    %4304 = vmatpush1.msra.mxu0 0.0
    %4305 = vmatprep.subr.mxu0 0.0
    %4306 = vmatpush1.msra.mxu0 0.0
    %4307 = vmatprep.subr.mxu0 0.0
    %4308 = vmatpush1.msra.mxu0 0.0
    %4309 = vmatprep.subr.mxu0 0.0
    %4310 = vmatpush1.msra.mxu0 0.0
    %4311 = vmatprep.subr.mxu0 0.0
    %4312 = vmatpush1.msra.mxu0 0.0
    %4313 = vmatprep.subr.mxu0 0.0
    %4314 = vmatpush1.msra.mxu0 0.0
    %4315 = vmatprep.subr.mxu0 0.0
    %4316 = vmatpush1.msra.mxu0 0.0
    %4317 = vmatprep.subr.mxu0 0.0
    %4318 = vmatpush1.msra.mxu0 0.0
    %4319 = vmatprep.subr.mxu0 0.0
    %4320 = vmatpush1.msra.mxu0 0.0
    %4321 = vmatprep.subr.mxu0 0.0
    %4322 = vmatpush1.msra.mxu0 0.0
    %4323 = vmatprep.subr.mxu0 0.0
    %4324 = vmatpush1.msra.mxu0 0.0
    %4325 = vmatprep.subr.mxu0 0.0
    %4326 = vmatpush1.msra.mxu0 0.0
    %4327 = vmatprep.subr.mxu0 0.0
    %4328 = vmatpush1.msra.mxu0 0.0
    %4329 = vmatprep.subr.mxu0 0.0
    %4330 = vmatpush1.msra.mxu0 0.0
    %4331 = vmatprep.subr.mxu0 0.0
    %4332 = vmatpush1.msra.mxu0 0.0
    %4333 = vmatprep.mubr.f32.mxu0 0.0
    %4334 = vmatmul.mubr.f32.gmra.mrb[0].mxu0 %v4267
    %v4335 = vpop.f32.mrb[0].mxu0
    %v4336 = vadd.f32 0.0, %v4335
    %v4337 = vpop.f32.mrb[0].mxu0
    %4338 = vdwg.mxu0
    %v4339 = vadd.f32 %v4249, %v4336
    %v4340 = vld [vmem:[%s2] sm:$0x1]
    %v4342 = vlaneseq
    %v4343 = vshrl.u32 %v4342, 7
    %v4344 = vsub.s32 0, %v4343
    %v4345 = vrot.slane %v4340, %v4344
    %v4347 = vadd.f32 %v4339, %v4345
    %v4348 = vmax.f32 %v4347, 0.0
    %s4349 = scalar_lea.vmem [#allocation2], 120
    %4350 = vst [vmem:[%s4349] sm:$0xff] %v4348
    %v4351 = vld [vmem:[#allocation2] sm:$0xff]
    %s4352 = scalar_lea.vmem [#allocation6], 128
    %v4353 = vld [vmem:[%s4352] sm:$0xff]
    %v4354 = vld [vmem:[%s4352 + $0x8] sm:$0xff]
    %v4355 = vld [vmem:[%s4352 + $0x10] sm:$0xff]
    %v4356 = vld [vmem:[%s4352 + $0x18] sm:$0xff]
    %v4357 = vld [vmem:[%s4352 + $0x20] sm:$0xff]
    %v4358 = vld [vmem:[%s4352 + $0x28] sm:$0xff]
    %v4359 = vld [vmem:[%s4352 + $0x30] sm:$0xff]
    %v4360 = vld [vmem:[%s4352 + $0x38] sm:$0xff]
    %v4361 = vld [vmem:[%s4352 + $0x40] sm:$0xff]
    %v4362 = vld [vmem:[%s4352 + $0x48] sm:$0xff]
    %v4363 = vld [vmem:[%s4352 + $0x50] sm:$0xff]
    %v4364 = vld [vmem:[%s4352 + $0x58] sm:$0xff]
    %v4365 = vld [vmem:[%s4352 + $0x60] sm:$0xff]
    %v4366 = vld [vmem:[%s4352 + $0x68] sm:$0xff]
    %v4367 = vld [vmem:[%s4352 + $0x70] sm:$0xff]
    %v4368 = vld [vmem:[%s4352 + $0x78] sm:$0xff]
    %v4369 = vld [vmem:[%s541] sm:$0xff]
    %s4370 = scalar_lea.vmem [#allocation6], 256
    %v4371 = vld [vmem:[%s4370] sm:$0xff]
    %v4372 = vld [vmem:[%s4370 + $0x8] sm:$0xff]
    %v4373 = vld [vmem:[%s4370 + $0x10] sm:$0xff]
    %v4374 = vld [vmem:[%s4370 + $0x18] sm:$0xff]
    %v4375 = vld [vmem:[%s4370 + $0x20] sm:$0xff]
    %v4376 = vld [vmem:[%s4370 + $0x28] sm:$0xff]
    %v4377 = vld [vmem:[%s4370 + $0x30] sm:$0xff]
    %v4378 = vld [vmem:[%s4370 + $0x38] sm:$0xff]
    %v4379 = vld [vmem:[%s4370 + $0x40] sm:$0xff]
    %v4380 = vld [vmem:[%s4370 + $0x48] sm:$0xff]
    %v4381 = vld [vmem:[%s4370 + $0x50] sm:$0xff]
    %v4382 = vld [vmem:[%s4370 + $0x58] sm:$0xff]
    %v4383 = vld [vmem:[%s4370 + $0x60] sm:$0xff]
    %v4384 = vld [vmem:[%s4370 + $0x68] sm:$0xff]
    %v4385 = vld [vmem:[%s4370 + $0x70] sm:$0xff]
    %v4386 = vld [vmem:[%s4370 + $0x78] sm:$0xff]
    %4387 = vmatprep.subr.mxu0 0.0
    %4388 = vmatpush1.msra.mxu0 %v4371
    %4389 = vmatprep.subr.mxu0 0.0
    %4390 = vmatpush1.msra.mxu0 %v4372
    %4391 = vmatprep.subr.mxu0 0.0
    %4392 = vmatpush1.msra.mxu0 %v4373
    %4393 = vmatprep.subr.mxu0 0.0
    %4394 = vmatpush1.msra.mxu0 %v4374
    %4395 = vmatprep.subr.mxu0 0.0
    %4396 = vmatpush1.msra.mxu0 %v4375
    %4397 = vmatprep.subr.mxu0 0.0
    %4398 = vmatpush1.msra.mxu0 %v4376
    %4399 = vmatprep.subr.mxu0 0.0
    %4400 = vmatpush1.msra.mxu0 %v4377
    %4401 = vmatprep.subr.mxu0 0.0
    %4402 = vmatpush1.msra.mxu0 %v4378
    %4403 = vmatprep.subr.mxu0 0.0
    %4404 = vmatpush1.msra.mxu0 %v4379
    %4405 = vmatprep.subr.mxu0 0.0
    %4406 = vmatpush1.msra.mxu0 %v4380
    %4407 = vmatprep.subr.mxu0 0.0
    %4408 = vmatpush1.msra.mxu0 %v4381
    %4409 = vmatprep.subr.mxu0 0.0
    %4410 = vmatpush1.msra.mxu0 %v4382
    %4411 = vmatprep.subr.mxu0 0.0
    %4412 = vmatpush1.msra.mxu0 %v4383
    %4413 = vmatprep.subr.mxu0 0.0
    %4414 = vmatpush1.msra.mxu0 %v4384
    %4415 = vmatprep.subr.mxu0 0.0
    %4416 = vmatpush1.msra.mxu0 %v4385
    %4417 = vmatprep.subr.mxu0 0.0
    %4418 = vmatpush1.msra.mxu0 %v4386
    %4419 = vmatprep.subr.mxu0 0.0
    %4420 = vmatpush1.msra.mxu0 0.0
    %4421 = vmatprep.subr.mxu0 0.0
    %4422 = vmatpush1.msra.mxu0 0.0
    %4423 = vmatprep.subr.mxu0 0.0
    %4424 = vmatpush1.msra.mxu0 0.0
    %4425 = vmatprep.subr.mxu0 0.0
    %4426 = vmatpush1.msra.mxu0 0.0
    %4427 = vmatprep.subr.mxu0 0.0
    %4428 = vmatpush1.msra.mxu0 0.0
    %4429 = vmatprep.subr.mxu0 0.0
    %4430 = vmatpush1.msra.mxu0 0.0
    %4431 = vmatprep.subr.mxu0 0.0
    %4432 = vmatpush1.msra.mxu0 0.0
    %4433 = vmatprep.subr.mxu0 0.0
    %4434 = vmatpush1.msra.mxu0 0.0
    %4435 = vmatprep.subr.mxu0 0.0
    %4436 = vmatpush1.msra.mxu0 0.0
    %4437 = vmatprep.subr.mxu0 0.0
    %4438 = vmatpush1.msra.mxu0 0.0
    %4439 = vmatprep.subr.mxu0 0.0
    %4440 = vmatpush1.msra.mxu0 0.0
    %4441 = vmatprep.subr.mxu0 0.0
    %4442 = vmatpush1.msra.mxu0 0.0
    %4443 = vmatprep.subr.mxu0 0.0
    %4444 = vmatpush1.msra.mxu0 0.0
    %4445 = vmatprep.subr.mxu0 0.0
    %4446 = vmatpush1.msra.mxu0 0.0
    %4447 = vmatprep.subr.mxu0 0.0
    %4448 = vmatpush1.msra.mxu0 0.0
    %4449 = vmatprep.subr.mxu0 0.0
    %4450 = vmatpush1.msra.mxu0 0.0
    %4451 = vmatprep.mubr.f32.mxu0 0.0
    %4452 = vmatmul.mubr.f32.gmra.mrb[0].mxu0 %v4369
    %v4453 = vpop.f32.mrb[0].mxu0
    %v4454 = vadd.f32 0.0, %v4453
    %v4455 = vpop.f32.mrb[0].mxu0
    %4456 = vdwg.mxu0
    %4457 = vmatprep.subr.mxu0 0.0
    %4458 = vmatpush1.msra.mxu0 %v4353
    %4459 = vmatprep.subr.mxu0 0.0
    %4460 = vmatpush1.msra.mxu0 %v4354
    %4461 = vmatprep.subr.mxu0 0.0
    %4462 = vmatpush1.msra.mxu0 %v4355
    %4463 = vmatprep.subr.mxu0 0.0
    %4464 = vmatpush1.msra.mxu0 %v4356
    %4465 = vmatprep.subr.mxu0 0.0
    %4466 = vmatpush1.msra.mxu0 %v4357
    %4467 = vmatprep.subr.mxu0 0.0
    %4468 = vmatpush1.msra.mxu0 %v4358
    %4469 = vmatprep.subr.mxu0 0.0
    %4470 = vmatpush1.msra.mxu0 %v4359
    %4471 = vmatprep.subr.mxu0 0.0
    %4472 = vmatpush1.msra.mxu0 %v4360
    %4473 = vmatprep.subr.mxu0 0.0
    %4474 = vmatpush1.msra.mxu0 %v4361
    %4475 = vmatprep.subr.mxu0 0.0
    %4476 = vmatpush1.msra.mxu0 %v4362
    %4477 = vmatprep.subr.mxu0 0.0
    %4478 = vmatpush1.msra.mxu0 %v4363
    %4479 = vmatprep.subr.mxu0 0.0
    %4480 = vmatpush1.msra.mxu0 %v4364
    %4481 = vmatprep.subr.mxu0 0.0
    %4482 = vmatpush1.msra.mxu0 %v4365
    %4483 = vmatprep.subr.mxu0 0.0
    %4484 = vmatpush1.msra.mxu0 %v4366
    %4485 = vmatprep.subr.mxu0 0.0
    %4486 = vmatpush1.msra.mxu0 %v4367
    %4487 = vmatprep.subr.mxu0 0.0
    %4488 = vmatpush1.msra.mxu0 %v4368
    %4489 = vmatprep.subr.mxu0 0.0
    %4490 = vmatpush1.msra.mxu0 0.0
    %4491 = vmatprep.subr.mxu0 0.0
    %4492 = vmatpush1.msra.mxu0 0.0
    %4493 = vmatprep.subr.mxu0 0.0
    %4494 = vmatpush1.msra.mxu0 0.0
    %4495 = vmatprep.subr.mxu0 0.0
    %4496 = vmatpush1.msra.mxu0 0.0
    %4497 = vmatprep.subr.mxu0 0.0
    %4498 = vmatpush1.msra.mxu0 0.0
    %4499 = vmatprep.subr.mxu0 0.0
    %4500 = vmatpush1.msra.mxu0 0.0
    %4501 = vmatprep.subr.mxu0 0.0
    %4502 = vmatpush1.msra.mxu0 0.0
    %4503 = vmatprep.subr.mxu0 0.0
    %4504 = vmatpush1.msra.mxu0 0.0
    %4505 = vmatprep.subr.mxu0 0.0
    %4506 = vmatpush1.msra.mxu0 0.0
    %4507 = vmatprep.subr.mxu0 0.0
    %4508 = vmatpush1.msra.mxu0 0.0
    %4509 = vmatprep.subr.mxu0 0.0
    %4510 = vmatpush1.msra.mxu0 0.0
    %4511 = vmatprep.subr.mxu0 0.0
    %4512 = vmatpush1.msra.mxu0 0.0
    %4513 = vmatprep.subr.mxu0 0.0
    %4514 = vmatpush1.msra.mxu0 0.0
    %4515 = vmatprep.subr.mxu0 0.0
    %4516 = vmatpush1.msra.mxu0 0.0
    %4517 = vmatprep.subr.mxu0 0.0
    %4518 = vmatpush1.msra.mxu0 0.0
    %4519 = vmatprep.subr.mxu0 0.0
    %4520 = vmatpush1.msra.mxu0 0.0
    %4521 = vmatprep.mubr.f32.mxu0 0.0
    %4522 = vmatmul.mubr.f32.gmra.mrb[0].mxu0 %v4351
    %v4523 = vpop.f32.mrb[0].mxu0
    %v4524 = vadd.f32 %v4454, %v4523
    %v4525 = vpop.f32.mrb[0].mxu0
    %4526 = vdwg.mxu0
    %v4527 = vld [vmem:[%s4] sm:$0x1]
    %v4529 = vlaneseq
    %v4530 = vshrl.u32 %v4529, 7
    %v4531 = vsub.s32 0, %v4530
    %v4532 = vrot.slane %v4527, %v4531
    %v4534 = vadd.f32 %v4524, %v4532
    %v4535 = vmax.f32 %v4534, 0.0
    %4536 = vst [vmem:[#allocation3] sm:$0xff] %v4535
    %v4537 = vld [vmem:[%s541] sm:$0xff]
    %v4538 = vld [vmem:[#allocation6] sm:$0xff]
    %v4539 = vld [vmem:[#allocation6 + $0x8] sm:$0xff]
    %v4540 = vld [vmem:[#allocation6 + $0x10] sm:$0xff]
    %v4541 = vld [vmem:[#allocation6 + $0x18] sm:$0xff]
    %v4542 = vld [vmem:[#allocation6 + $0x20] sm:$0xff]
    %v4543 = vld [vmem:[#allocation6 + $0x28] sm:$0xff]
    %v4544 = vld [vmem:[#allocation6 + $0x30] sm:$0xff]
    %v4545 = vld [vmem:[#allocation6 + $0x38] sm:$0xff]
    %v4546 = vld [vmem:[#allocation6 + $0x40] sm:$0xff]
    %v4547 = vld [vmem:[#allocation6 + $0x48] sm:$0xff]
    %v4548 = vld [vmem:[#allocation6 + $0x50] sm:$0xff]
    %v4549 = vld [vmem:[#allocation6 + $0x58] sm:$0xff]
    %v4550 = vld [vmem:[#allocation6 + $0x60] sm:$0xff]
    %v4551 = vld [vmem:[#allocation6 + $0x68] sm:$0xff]
    %v4552 = vld [vmem:[#allocation6 + $0x70] sm:$0xff]
    %v4553 = vld [vmem:[#allocation6 + $0x78] sm:$0xff]
    %v4554 = vld [vmem:[%s813] sm:$0xff]
    %v4555 = vld [vmem:[%s4352] sm:$0xff]
    %v4556 = vld [vmem:[%s4352 + $0x8] sm:$0xff]
    %v4557 = vld [vmem:[%s4352 + $0x10] sm:$0xff]
    %v4558 = vld [vmem:[%s4352 + $0x18] sm:$0xff]
    %v4559 = vld [vmem:[%s4352 + $0x20] sm:$0xff]
    %v4560 = vld [vmem:[%s4352 + $0x28] sm:$0xff]
    %v4561 = vld [vmem:[%s4352 + $0x30] sm:$0xff]
    %v4562 = vld [vmem:[%s4352 + $0x38] sm:$0xff]
    %v4563 = vld [vmem:[%s4352 + $0x40] sm:$0xff]
    %v4564 = vld [vmem:[%s4352 + $0x48] sm:$0xff]
    %v4565 = vld [vmem:[%s4352 + $0x50] sm:$0xff]
    %v4566 = vld [vmem:[%s4352 + $0x58] sm:$0xff]
    %v4567 = vld [vmem:[%s4352 + $0x60] sm:$0xff]
    %v4568 = vld [vmem:[%s4352 + $0x68] sm:$0xff]
    %v4569 = vld [vmem:[%s4352 + $0x70] sm:$0xff]
    %v4570 = vld [vmem:[%s4352 + $0x78] sm:$0xff]
    %4571 = vmatprep.subr.mxu0 0.0
    %4572 = vmatpush1.msra.mxu0 %v4555
    %4573 = vmatprep.subr.mxu0 0.0
    %4574 = vmatpush1.msra.mxu0 %v4556
    %4575 = vmatprep.subr.mxu0 0.0
    %4576 = vmatpush1.msra.mxu0 %v4557
    %4577 = vmatprep.subr.mxu0 0.0
    %4578 = vmatpush1.msra.mxu0 %v4558
    %4579 = vmatprep.subr.mxu0 0.0
    %4580 = vmatpush1.msra.mxu0 %v4559
    %4581 = vmatprep.subr.mxu0 0.0
    %4582 = vmatpush1.msra.mxu0 %v4560
    %4583 = vmatprep.subr.mxu0 0.0
    %4584 = vmatpush1.msra.mxu0 %v4561
    %4585 = vmatprep.subr.mxu0 0.0
    %4586 = vmatpush1.msra.mxu0 %v4562
    %4587 = vmatprep.subr.mxu0 0.0
    %4588 = vmatpush1.msra.mxu0 %v4563
    %4589 = vmatprep.subr.mxu0 0.0
    %4590 = vmatpush1.msra.mxu0 %v4564
    %4591 = vmatprep.subr.mxu0 0.0
    %4592 = vmatpush1.msra.mxu0 %v4565
    %4593 = vmatprep.subr.mxu0 0.0
    %4594 = vmatpush1.msra.mxu0 %v4566
    %4595 = vmatprep.subr.mxu0 0.0
    %4596 = vmatpush1.msra.mxu0 %v4567
    %4597 = vmatprep.subr.mxu0 0.0
    %4598 = vmatpush1.msra.mxu0 %v4568
    %4599 = vmatprep.subr.mxu0 0.0
    %4600 = vmatpush1.msra.mxu0 %v4569
    %4601 = vmatprep.subr.mxu0 0.0
    %4602 = vmatpush1.msra.mxu0 %v4570
    %4603 = vmatprep.subr.mxu0 0.0
    %4604 = vmatpush1.msra.mxu0 0.0
    %4605 = vmatprep.subr.mxu0 0.0
    %4606 = vmatpush1.msra.mxu0 0.0
    %4607 = vmatprep.subr.mxu0 0.0
    %4608 = vmatpush1.msra.mxu0 0.0
    %4609 = vmatprep.subr.mxu0 0.0
    %4610 = vmatpush1.msra.mxu0 0.0
    %4611 = vmatprep.subr.mxu0 0.0
    %4612 = vmatpush1.msra.mxu0 0.0
    %4613 = vmatprep.subr.mxu0 0.0
    %4614 = vmatpush1.msra.mxu0 0.0
    %4615 = vmatprep.subr.mxu0 0.0
    %4616 = vmatpush1.msra.mxu0 0.0
    %4617 = vmatprep.subr.mxu0 0.0
    %4618 = vmatpush1.msra.mxu0 0.0
    %4619 = vmatprep.subr.mxu0 0.0
    %4620 = vmatpush1.msra.mxu0 0.0
    %4621 = vmatprep.subr.mxu0 0.0
    %4622 = vmatpush1.msra.mxu0 0.0
    %4623 = vmatprep.subr.mxu0 0.0
    %4624 = vmatpush1.msra.mxu0 0.0
    %4625 = vmatprep.subr.mxu0 0.0
    %4626 = vmatpush1.msra.mxu0 0.0
    %4627 = vmatprep.subr.mxu0 0.0
    %4628 = vmatpush1.msra.mxu0 0.0
    %4629 = vmatprep.subr.mxu0 0.0
    %4630 = vmatpush1.msra.mxu0 0.0
    %4631 = vmatprep.subr.mxu0 0.0
    %4632 = vmatpush1.msra.mxu0 0.0
    %4633 = vmatprep.subr.mxu0 0.0
    %4634 = vmatpush1.msra.mxu0 0.0
    %4635 = vmatprep.mubr.f32.mxu0 0.0
    %4636 = vmatmul.mubr.f32.gmra.mrb[0].mxu0 %v4554
    %v4637 = vpop.f32.mrb[0].mxu0
    %v4638 = vadd.f32 0.0, %v4637
    %v4639 = vpop.f32.mrb[0].mxu0
    %4640 = vdwg.mxu0
    %4641 = vmatprep.subr.mxu0 0.0
    %4642 = vmatpush1.msra.mxu0 %v4538
    %4643 = vmatprep.subr.mxu0 0.0
    %4644 = vmatpush1.msra.mxu0 %v4539
    %4645 = vmatprep.subr.mxu0 0.0
    %4646 = vmatpush1.msra.mxu0 %v4540
    %4647 = vmatprep.subr.mxu0 0.0
    %4648 = vmatpush1.msra.mxu0 %v4541
    %4649 = vmatprep.subr.mxu0 0.0
    %4650 = vmatpush1.msra.mxu0 %v4542
    %4651 = vmatprep.subr.mxu0 0.0
    %4652 = vmatpush1.msra.mxu0 %v4543
    %4653 = vmatprep.subr.mxu0 0.0
    %4654 = vmatpush1.msra.mxu0 %v4544
    %4655 = vmatprep.subr.mxu0 0.0
    %4656 = vmatpush1.msra.mxu0 %v4545
    %4657 = vmatprep.subr.mxu0 0.0
    %4658 = vmatpush1.msra.mxu0 %v4546
    %4659 = vmatprep.subr.mxu0 0.0
    %4660 = vmatpush1.msra.mxu0 %v4547
    %4661 = vmatprep.subr.mxu0 0.0
    %4662 = vmatpush1.msra.mxu0 %v4548
    %4663 = vmatprep.subr.mxu0 0.0
    %4664 = vmatpush1.msra.mxu0 %v4549
    %4665 = vmatprep.subr.mxu0 0.0
    %4666 = vmatpush1.msra.mxu0 %v4550
    %4667 = vmatprep.subr.mxu0 0.0
    %4668 = vmatpush1.msra.mxu0 %v4551
    %4669 = vmatprep.subr.mxu0 0.0
    %4670 = vmatpush1.msra.mxu0 %v4552
    %4671 = vmatprep.subr.mxu0 0.0
    %4672 = vmatpush1.msra.mxu0 %v4553
    %4673 = vmatprep.subr.mxu0 0.0
    %4674 = vmatpush1.msra.mxu0 0.0
    %4675 = vmatprep.subr.mxu0 0.0
    %4676 = vmatpush1.msra.mxu0 0.0
    %4677 = vmatprep.subr.mxu0 0.0
    %4678 = vmatpush1.msra.mxu0 0.0
    %4679 = vmatprep.subr.mxu0 0.0
    %4680 = vmatpush1.msra.mxu0 0.0
    %4681 = vmatprep.subr.mxu0 0.0
    %4682 = vmatpush1.msra.mxu0 0.0
    %4683 = vmatprep.subr.mxu0 0.0
    %4684 = vmatpush1.msra.mxu0 0.0
    %4685 = vmatprep.subr.mxu0 0.0
    %4686 = vmatpush1.msra.mxu0 0.0
    %4687 = vmatprep.subr.mxu0 0.0
    %4688 = vmatpush1.msra.mxu0 0.0
    %4689 = vmatprep.subr.mxu0 0.0
    %4690 = vmatpush1.msra.mxu0 0.0
    %4691 = vmatprep.subr.mxu0 0.0
    %4692 = vmatpush1.msra.mxu0 0.0
    %4693 = vmatprep.subr.mxu0 0.0
    %4694 = vmatpush1.msra.mxu0 0.0
    %4695 = vmatprep.subr.mxu0 0.0
    %4696 = vmatpush1.msra.mxu0 0.0
    %4697 = vmatprep.subr.mxu0 0.0
    %4698 = vmatpush1.msra.mxu0 0.0
    %4699 = vmatprep.subr.mxu0 0.0
    %4700 = vmatpush1.msra.mxu0 0.0
    %4701 = vmatprep.subr.mxu0 0.0
    %4702 = vmatpush1.msra.mxu0 0.0
    %4703 = vmatprep.subr.mxu0 0.0
    %4704 = vmatpush1.msra.mxu0 0.0
    %4705 = vmatprep.mubr.f32.mxu0 0.0
    %4706 = vmatmul.mubr.f32.gmra.mrb[0].mxu0 %v4537
    %v4707 = vpop.f32.mrb[0].mxu0
    %v4708 = vadd.f32 %v4638, %v4707
    %v4709 = vpop.f32.mrb[0].mxu0
    %4710 = vdwg.mxu0
    %v4711 = vld [vmem:[%s1085] sm:$0xff]
    %v4712 = vld [vmem:[%s4370] sm:$0xff]
    %v4713 = vld [vmem:[%s4370 + $0x8] sm:$0xff]
    %v4714 = vld [vmem:[%s4370 + $0x10] sm:$0xff]
    %v4715 = vld [vmem:[%s4370 + $0x18] sm:$0xff]
    %v4716 = vld [vmem:[%s4370 + $0x20] sm:$0xff]
    %v4717 = vld [vmem:[%s4370 + $0x28] sm:$0xff]
    %v4718 = vld [vmem:[%s4370 + $0x30] sm:$0xff]
    %v4719 = vld [vmem:[%s4370 + $0x38] sm:$0xff]
    %v4720 = vld [vmem:[%s4370 + $0x40] sm:$0xff]
    %v4721 = vld [vmem:[%s4370 + $0x48] sm:$0xff]
    %v4722 = vld [vmem:[%s4370 + $0x50] sm:$0xff]
    %v4723 = vld [vmem:[%s4370 + $0x58] sm:$0xff]
    %v4724 = vld [vmem:[%s4370 + $0x60] sm:$0xff]
    %v4725 = vld [vmem:[%s4370 + $0x68] sm:$0xff]
    %v4726 = vld [vmem:[%s4370 + $0x70] sm:$0xff]
    %v4727 = vld [vmem:[%s4370 + $0x78] sm:$0xff]
    %4728 = vmatprep.subr.mxu0 0.0
    %4729 = vmatpush1.msra.mxu0 %v4712
    %4730 = vmatprep.subr.mxu0 0.0
    %4731 = vmatpush1.msra.mxu0 %v4713
    %4732 = vmatprep.subr.mxu0 0.0
    %4733 = vmatpush1.msra.mxu0 %v4714
    %4734 = vmatprep.subr.mxu0 0.0
    %4735 = vmatpush1.msra.mxu0 %v4715
    %4736 = vmatprep.subr.mxu0 0.0
    %4737 = vmatpush1.msra.mxu0 %v4716
    %4738 = vmatprep.subr.mxu0 0.0
    %4739 = vmatpush1.msra.mxu0 %v4717
    %4740 = vmatprep.subr.mxu0 0.0
    %4741 = vmatpush1.msra.mxu0 %v4718
    %4742 = vmatprep.subr.mxu0 0.0
    %4743 = vmatpush1.msra.mxu0 %v4719
    %4744 = vmatprep.subr.mxu0 0.0
    %4745 = vmatpush1.msra.mxu0 %v4720
    %4746 = vmatprep.subr.mxu0 0.0
    %4747 = vmatpush1.msra.mxu0 %v4721
    %4748 = vmatprep.subr.mxu0 0.0
    %4749 = vmatpush1.msra.mxu0 %v4722
    %4750 = vmatprep.subr.mxu0 0.0
    %4751 = vmatpush1.msra.mxu0 %v4723
    %4752 = vmatprep.subr.mxu0 0.0
    %4753 = vmatpush1.msra.mxu0 %v4724
    %4754 = vmatprep.subr.mxu0 0.0
    %4755 = vmatpush1.msra.mxu0 %v4725
    %4756 = vmatprep.subr.mxu0 0.0
    %4757 = vmatpush1.msra.mxu0 %v4726
    %4758 = vmatprep.subr.mxu0 0.0
    %4759 = vmatpush1.msra.mxu0 %v4727
    %4760 = vmatprep.subr.mxu0 0.0
    %4761 = vmatpush1.msra.mxu0 0.0
    %4762 = vmatprep.subr.mxu0 0.0
    %4763 = vmatpush1.msra.mxu0 0.0
    %4764 = vmatprep.subr.mxu0 0.0
    %4765 = vmatpush1.msra.mxu0 0.0
    %4766 = vmatprep.subr.mxu0 0.0
    %4767 = vmatpush1.msra.mxu0 0.0
    %4768 = vmatprep.subr.mxu0 0.0
    %4769 = vmatpush1.msra.mxu0 0.0
    %4770 = vmatprep.subr.mxu0 0.0
    %4771 = vmatpush1.msra.mxu0 0.0
    %4772 = vmatprep.subr.mxu0 0.0
    %4773 = vmatpush1.msra.mxu0 0.0
    %4774 = vmatprep.subr.mxu0 0.0
    %4775 = vmatpush1.msra.mxu0 0.0
    %4776 = vmatprep.subr.mxu0 0.0
    %4777 = vmatpush1.msra.mxu0 0.0
    %4778 = vmatprep.subr.mxu0 0.0
    %4779 = vmatpush1.msra.mxu0 0.0
    %4780 = vmatprep.subr.mxu0 0.0
    %4781 = vmatpush1.msra.mxu0 0.0
    %4782 = vmatprep.subr.mxu0 0.0
    %4783 = vmatpush1.msra.mxu0 0.0
    %4784 = vmatprep.subr.mxu0 0.0
    %4785 = vmatpush1.msra.mxu0 0.0
    %4786 = vmatprep.subr.mxu0 0.0
    %4787 = vmatpush1.msra.mxu0 0.0
    %4788 = vmatprep.subr.mxu0 0.0
    %4789 = vmatpush1.msra.mxu0 0.0
    %4790 = vmatprep.subr.mxu0 0.0
    %4791 = vmatpush1.msra.mxu0 0.0
    %4792 = vmatprep.mubr.f32.mxu0 0.0
    %4793 = vmatmul.mubr.f32.gmra.mrb[0].mxu0 %v4711
    %v4794 = vpop.f32.mrb[0].mxu0
    %v4795 = vadd.f32 0.0, %v4794
    %v4796 = vpop.f32.mrb[0].mxu0
    %4797 = vdwg.mxu0
    %v4798 = vadd.f32 %v4708, %v4795
    %v4799 = vld [vmem:[%s4] sm:$0x1]
    %v4801 = vlaneseq
    %v4802 = vshrl.u32 %v4801, 7
    %v4803 = vsub.s32 0, %v4802
    %v4804 = vrot.slane %v4799, %v4803
    %v4806 = vadd.f32 %v4798, %v4804
    %v4807 = vmax.f32 %v4806, 0.0
    %s4808 = scalar_lea.vmem [#allocation3], 8
    %4809 = vst [vmem:[%s4808] sm:$0xff] %v4807
    %v4810 = vld [vmem:[%s1085] sm:$0xff]
    %v4811 = vld [vmem:[#allocation6] sm:$0xff]
    %v4812 = vld [vmem:[#allocation6 + $0x8] sm:$0xff]
    %v4813 = vld [vmem:[#allocation6 + $0x10] sm:$0xff]
    %v4814 = vld [vmem:[#allocation6 + $0x18] sm:$0xff]
    %v4815 = vld [vmem:[#allocation6 + $0x20] sm:$0xff]
    %v4816 = vld [vmem:[#allocation6 + $0x28] sm:$0xff]
    %v4817 = vld [vmem:[#allocation6 + $0x30] sm:$0xff]
    %v4818 = vld [vmem:[#allocation6 + $0x38] sm:$0xff]
    %v4819 = vld [vmem:[#allocation6 + $0x40] sm:$0xff]
    %v4820 = vld [vmem:[#allocation6 + $0x48] sm:$0xff]
    %v4821 = vld [vmem:[#allocation6 + $0x50] sm:$0xff]
    %v4822 = vld [vmem:[#allocation6 + $0x58] sm:$0xff]
    %v4823 = vld [vmem:[#allocation6 + $0x60] sm:$0xff]
    %v4824 = vld [vmem:[#allocation6 + $0x68] sm:$0xff]
    %v4825 = vld [vmem:[#allocation6 + $0x70] sm:$0xff]
    %v4826 = vld [vmem:[#allocation6 + $0x78] sm:$0xff]
    %v4827 = vld [vmem:[%s1357] sm:$0xff]
    %v4828 = vld [vmem:[%s4352] sm:$0xff]
    %v4829 = vld [vmem:[%s4352 + $0x8] sm:$0xff]
    %v4830 = vld [vmem:[%s4352 + $0x10] sm:$0xff]
    %v4831 = vld [vmem:[%s4352 + $0x18] sm:$0xff]
    %v4832 = vld [vmem:[%s4352 + $0x20] sm:$0xff]
    %v4833 = vld [vmem:[%s4352 + $0x28] sm:$0xff]
    %v4834 = vld [vmem:[%s4352 + $0x30] sm:$0xff]
    %v4835 = vld [vmem:[%s4352 + $0x38] sm:$0xff]
    %v4836 = vld [vmem:[%s4352 + $0x40] sm:$0xff]
    %v4837 = vld [vmem:[%s4352 + $0x48] sm:$0xff]
    %v4838 = vld [vmem:[%s4352 + $0x50] sm:$0xff]
    %v4839 = vld [vmem:[%s4352 + $0x58] sm:$0xff]
    %v4840 = vld [vmem:[%s4352 + $0x60] sm:$0xff]
    %v4841 = vld [vmem:[%s4352 + $0x68] sm:$0xff]
    %v4842 = vld [vmem:[%s4352 + $0x70] sm:$0xff]
    %v4843 = vld [vmem:[%s4352 + $0x78] sm:$0xff]
    %4844 = vmatprep.subr.mxu0 0.0
    %4845 = vmatpush1.msra.mxu0 %v4828
    %4846 = vmatprep.subr.mxu0 0.0
    %4847 = vmatpush1.msra.mxu0 %v4829
    %4848 = vmatprep.subr.mxu0 0.0
    %4849 = vmatpush1.msra.mxu0 %v4830
    %4850 = vmatprep.subr.mxu0 0.0
    %4851 = vmatpush1.msra.mxu0 %v4831
    %4852 = vmatprep.subr.mxu0 0.0
    %4853 = vmatpush1.msra.mxu0 %v4832
    %4854 = vmatprep.subr.mxu0 0.0
    %4855 = vmatpush1.msra.mxu0 %v4833
    %4856 = vmatprep.subr.mxu0 0.0
    %4857 = vmatpush1.msra.mxu0 %v4834
    %4858 = vmatprep.subr.mxu0 0.0
    %4859 = vmatpush1.msra.mxu0 %v4835
    %4860 = vmatprep.subr.mxu0 0.0
    %4861 = vmatpush1.msra.mxu0 %v4836
    %4862 = vmatprep.subr.mxu0 0.0
    %4863 = vmatpush1.msra.mxu0 %v4837
    %4864 = vmatprep.subr.mxu0 0.0
    %4865 = vmatpush1.msra.mxu0 %v4838
    %4866 = vmatprep.subr.mxu0 0.0
    %4867 = vmatpush1.msra.mxu0 %v4839
    %4868 = vmatprep.subr.mxu0 0.0
    %4869 = vmatpush1.msra.mxu0 %v4840
    %4870 = vmatprep.subr.mxu0 0.0
    %4871 = vmatpush1.msra.mxu0 %v4841
    %4872 = vmatprep.subr.mxu0 0.0
    %4873 = vmatpush1.msra.mxu0 %v4842
    %4874 = vmatprep.subr.mxu0 0.0
    %4875 = vmatpush1.msra.mxu0 %v4843
    %4876 = vmatprep.subr.mxu0 0.0
    %4877 = vmatpush1.msra.mxu0 0.0
    %4878 = vmatprep.subr.mxu0 0.0
    %4879 = vmatpush1.msra.mxu0 0.0
    %4880 = vmatprep.subr.mxu0 0.0
    %4881 = vmatpush1.msra.mxu0 0.0
    %4882 = vmatprep.subr.mxu0 0.0
    %4883 = vmatpush1.msra.mxu0 0.0
    %4884 = vmatprep.subr.mxu0 0.0
    %4885 = vmatpush1.msra.mxu0 0.0
    %4886 = vmatprep.subr.mxu0 0.0
    %4887 = vmatpush1.msra.mxu0 0.0
    %4888 = vmatprep.subr.mxu0 0.0
    %4889 = vmatpush1.msra.mxu0 0.0
    %4890 = vmatprep.subr.mxu0 0.0
    %4891 = vmatpush1.msra.mxu0 0.0
    %4892 = vmatprep.subr.mxu0 0.0
    %4893 = vmatpush1.msra.mxu0 0.0
    %4894 = vmatprep.subr.mxu0 0.0
    %4895 = vmatpush1.msra.mxu0 0.0
    %4896 = vmatprep.subr.mxu0 0.0
    %4897 = vmatpush1.msra.mxu0 0.0
    %4898 = vmatprep.subr.mxu0 0.0
    %4899 = vmatpush1.msra.mxu0 0.0
    %4900 = vmatprep.subr.mxu0 0.0
    %4901 = vmatpush1.msra.mxu0 0.0
    %4902 = vmatprep.subr.mxu0 0.0
    %4903 = vmatpush1.msra.mxu0 0.0
    %4904 = vmatprep.subr.mxu0 0.0
    %4905 = vmatpush1.msra.mxu0 0.0
    %4906 = vmatprep.subr.mxu0 0.0
    %4907 = vmatpush1.msra.mxu0 0.0
    %4908 = vmatprep.mubr.f32.mxu0 0.0
    %4909 = vmatmul.mubr.f32.gmra.mrb[0].mxu0 %v4827
    %v4910 = vpop.f32.mrb[0].mxu0
    %v4911 = vadd.f32 0.0, %v4910
    %v4912 = vpop.f32.mrb[0].mxu0
    %4913 = vdwg.mxu0
    %4914 = vmatprep.subr.mxu0 0.0
    %4915 = vmatpush1.msra.mxu0 %v4811
    %4916 = vmatprep.subr.mxu0 0.0
    %4917 = vmatpush1.msra.mxu0 %v4812
    %4918 = vmatprep.subr.mxu0 0.0
    %4919 = vmatpush1.msra.mxu0 %v4813
    %4920 = vmatprep.subr.mxu0 0.0
    %4921 = vmatpush1.msra.mxu0 %v4814
    %4922 = vmatprep.subr.mxu0 0.0
    %4923 = vmatpush1.msra.mxu0 %v4815
    %4924 = vmatprep.subr.mxu0 0.0
    %4925 = vmatpush1.msra.mxu0 %v4816
    %4926 = vmatprep.subr.mxu0 0.0
    %4927 = vmatpush1.msra.mxu0 %v4817
    %4928 = vmatprep.subr.mxu0 0.0
    %4929 = vmatpush1.msra.mxu0 %v4818
    %4930 = vmatprep.subr.mxu0 0.0
    %4931 = vmatpush1.msra.mxu0 %v4819
    %4932 = vmatprep.subr.mxu0 0.0
    %4933 = vmatpush1.msra.mxu0 %v4820
    %4934 = vmatprep.subr.mxu0 0.0
    %4935 = vmatpush1.msra.mxu0 %v4821
    %4936 = vmatprep.subr.mxu0 0.0
    %4937 = vmatpush1.msra.mxu0 %v4822
    %4938 = vmatprep.subr.mxu0 0.0
    %4939 = vmatpush1.msra.mxu0 %v4823
    %4940 = vmatprep.subr.mxu0 0.0
    %4941 = vmatpush1.msra.mxu0 %v4824
    %4942 = vmatprep.subr.mxu0 0.0
    %4943 = vmatpush1.msra.mxu0 %v4825
    %4944 = vmatprep.subr.mxu0 0.0
    %4945 = vmatpush1.msra.mxu0 %v4826
    %4946 = vmatprep.subr.mxu0 0.0
    %4947 = vmatpush1.msra.mxu0 0.0
    %4948 = vmatprep.subr.mxu0 0.0
    %4949 = vmatpush1.msra.mxu0 0.0
    %4950 = vmatprep.subr.mxu0 0.0
    %4951 = vmatpush1.msra.mxu0 0.0
    %4952 = vmatprep.subr.mxu0 0.0
    %4953 = vmatpush1.msra.mxu0 0.0
    %4954 = vmatprep.subr.mxu0 0.0
    %4955 = vmatpush1.msra.mxu0 0.0
    %4956 = vmatprep.subr.mxu0 0.0
    %4957 = vmatpush1.msra.mxu0 0.0
    %4958 = vmatprep.subr.mxu0 0.0
    %4959 = vmatpush1.msra.mxu0 0.0
    %4960 = vmatprep.subr.mxu0 0.0
    %4961 = vmatpush1.msra.mxu0 0.0
    %4962 = vmatprep.subr.mxu0 0.0
    %4963 = vmatpush1.msra.mxu0 0.0
    %4964 = vmatprep.subr.mxu0 0.0
    %4965 = vmatpush1.msra.mxu0 0.0
    %4966 = vmatprep.subr.mxu0 0.0
    %4967 = vmatpush1.msra.mxu0 0.0
    %4968 = vmatprep.subr.mxu0 0.0
    %4969 = vmatpush1.msra.mxu0 0.0
    %4970 = vmatprep.subr.mxu0 0.0
    %4971 = vmatpush1.msra.mxu0 0.0
    %4972 = vmatprep.subr.mxu0 0.0
    %4973 = vmatpush1.msra.mxu0 0.0
    %4974 = vmatprep.subr.mxu0 0.0
    %4975 = vmatpush1.msra.mxu0 0.0
    %4976 = vmatprep.subr.mxu0 0.0
    %4977 = vmatpush1.msra.mxu0 0.0
    %4978 = vmatprep.mubr.f32.mxu0 0.0
    %4979 = vmatmul.mubr.f32.gmra.mrb[0].mxu0 %v4810
    %v4980 = vpop.f32.mrb[0].mxu0
    %v4981 = vadd.f32 %v4911, %v4980
    %v4982 = vpop.f32.mrb[0].mxu0
    %4983 = vdwg.mxu0
    %v4984 = vld [vmem:[%s1629] sm:$0xff]
    %v4985 = vld [vmem:[%s4370] sm:$0xff]
    %v4986 = vld [vmem:[%s4370 + $0x8] sm:$0xff]
    %v4987 = vld [vmem:[%s4370 + $0x10] sm:$0xff]
    %v4988 = vld [vmem:[%s4370 + $0x18] sm:$0xff]
    %v4989 = vld [vmem:[%s4370 + $0x20] sm:$0xff]
    %v4990 = vld [vmem:[%s4370 + $0x28] sm:$0xff]
    %v4991 = vld [vmem:[%s4370 + $0x30] sm:$0xff]
    %v4992 = vld [vmem:[%s4370 + $0x38] sm:$0xff]
    %v4993 = vld [vmem:[%s4370 + $0x40] sm:$0xff]
    %v4994 = vld [vmem:[%s4370 + $0x48] sm:$0xff]
    %v4995 = vld [vmem:[%s4370 + $0x50] sm:$0xff]
    %v4996 = vld [vmem:[%s4370 + $0x58] sm:$0xff]
    %v4997 = vld [vmem:[%s4370 + $0x60] sm:$0xff]
    %v4998 = vld [vmem:[%s4370 + $0x68] sm:$0xff]
    %v4999 = vld [vmem:[%s4370 + $0x70] sm:$0xff]
    %v5000 = vld [vmem:[%s4370 + $0x78] sm:$0xff]
    %5001 = vmatprep.subr.mxu0 0.0
    %5002 = vmatpush1.msra.mxu0 %v4985
    %5003 = vmatprep.subr.mxu0 0.0
    %5004 = vmatpush1.msra.mxu0 %v4986
    %5005 = vmatprep.subr.mxu0 0.0
    %5006 = vmatpush1.msra.mxu0 %v4987
    %5007 = vmatprep.subr.mxu0 0.0
    %5008 = vmatpush1.msra.mxu0 %v4988
    %5009 = vmatprep.subr.mxu0 0.0
    %5010 = vmatpush1.msra.mxu0 %v4989
    %5011 = vmatprep.subr.mxu0 0.0
    %5012 = vmatpush1.msra.mxu0 %v4990
    %5013 = vmatprep.subr.mxu0 0.0
    %5014 = vmatpush1.msra.mxu0 %v4991
    %5015 = vmatprep.subr.mxu0 0.0
    %5016 = vmatpush1.msra.mxu0 %v4992
    %5017 = vmatprep.subr.mxu0 0.0
    %5018 = vmatpush1.msra.mxu0 %v4993
    %5019 = vmatprep.subr.mxu0 0.0
    %5020 = vmatpush1.msra.mxu0 %v4994
    %5021 = vmatprep.subr.mxu0 0.0
    %5022 = vmatpush1.msra.mxu0 %v4995
    %5023 = vmatprep.subr.mxu0 0.0
    %5024 = vmatpush1.msra.mxu0 %v4996
    %5025 = vmatprep.subr.mxu0 0.0
    %5026 = vmatpush1.msra.mxu0 %v4997
    %5027 = vmatprep.subr.mxu0 0.0
    %5028 = vmatpush1.msra.mxu0 %v4998
    %5029 = vmatprep.subr.mxu0 0.0
    %5030 = vmatpush1.msra.mxu0 %v4999
    %5031 = vmatprep.subr.mxu0 0.0
    %5032 = vmatpush1.msra.mxu0 %v5000
    %5033 = vmatprep.subr.mxu0 0.0
    %5034 = vmatpush1.msra.mxu0 0.0
    %5035 = vmatprep.subr.mxu0 0.0
    %5036 = vmatpush1.msra.mxu0 0.0
    %5037 = vmatprep.subr.mxu0 0.0
    %5038 = vmatpush1.msra.mxu0 0.0
    %5039 = vmatprep.subr.mxu0 0.0
    %5040 = vmatpush1.msra.mxu0 0.0
    %5041 = vmatprep.subr.mxu0 0.0
    %5042 = vmatpush1.msra.mxu0 0.0
    %5043 = vmatprep.subr.mxu0 0.0
    %5044 = vmatpush1.msra.mxu0 0.0
    %5045 = vmatprep.subr.mxu0 0.0
    %5046 = vmatpush1.msra.mxu0 0.0
    %5047 = vmatprep.subr.mxu0 0.0
    %5048 = vmatpush1.msra.mxu0 0.0
    %5049 = vmatprep.subr.mxu0 0.0
    %5050 = vmatpush1.msra.mxu0 0.0
    %5051 = vmatprep.subr.mxu0 0.0
    %5052 = vmatpush1.msra.mxu0 0.0
    %5053 = vmatprep.subr.mxu0 0.0
    %5054 = vmatpush1.msra.mxu0 0.0
    %5055 = vmatprep.subr.mxu0 0.0
    %5056 = vmatpush1.msra.mxu0 0.0
    %5057 = vmatprep.subr.mxu0 0.0
    %5058 = vmatpush1.msra.mxu0 0.0
    %5059 = vmatprep.subr.mxu0 0.0
    %5060 = vmatpush1.msra.mxu0 0.0
    %5061 = vmatprep.subr.mxu0 0.0
    %5062 = vmatpush1.msra.mxu0 0.0
    %5063 = vmatprep.subr.mxu0 0.0
    %5064 = vmatpush1.msra.mxu0 0.0
    %5065 = vmatprep.mubr.f32.mxu0 0.0
    %5066 = vmatmul.mubr.f32.gmra.mrb[0].mxu0 %v4984
    %v5067 = vpop.f32.mrb[0].mxu0
    %v5068 = vadd.f32 0.0, %v5067
    %v5069 = vpop.f32.mrb[0].mxu0
    %5070 = vdwg.mxu0
    %v5071 = vadd.f32 %v4981, %v5068
    %v5072 = vld [vmem:[%s4] sm:$0x1]
    %v5074 = vlaneseq
    %v5075 = vshrl.u32 %v5074, 7
    %v5076 = vsub.s32 0, %v5075
    %v5077 = vrot.slane %v5072, %v5076
    %v5079 = vadd.f32 %v5071, %v5077
    %v5080 = vmax.f32 %v5079, 0.0
    %s5081 = scalar_lea.vmem [#allocation3], 16
    %5082 = vst [vmem:[%s5081] sm:$0xff] %v5080
    %v5083 = vld [vmem:[%s1629] sm:$0xff]
    %v5084 = vld [vmem:[#allocation6] sm:$0xff]
    %v5085 = vld [vmem:[#allocation6 + $0x8] sm:$0xff]
    %v5086 = vld [vmem:[#allocation6 + $0x10] sm:$0xff]
    %v5087 = vld [vmem:[#allocation6 + $0x18] sm:$0xff]
    %v5088 = vld [vmem:[#allocation6 + $0x20] sm:$0xff]
    %v5089 = vld [vmem:[#allocation6 + $0x28] sm:$0xff]
    %v5090 = vld [vmem:[#allocation6 + $0x30] sm:$0xff]
    %v5091 = vld [vmem:[#allocation6 + $0x38] sm:$0xff]
    %v5092 = vld [vmem:[#allocation6 + $0x40] sm:$0xff]
    %v5093 = vld [vmem:[#allocation6 + $0x48] sm:$0xff]
    %v5094 = vld [vmem:[#allocation6 + $0x50] sm:$0xff]
    %v5095 = vld [vmem:[#allocation6 + $0x58] sm:$0xff]
    %v5096 = vld [vmem:[#allocation6 + $0x60] sm:$0xff]
    %v5097 = vld [vmem:[#allocation6 + $0x68] sm:$0xff]
    %v5098 = vld [vmem:[#allocation6 + $0x70] sm:$0xff]
    %v5099 = vld [vmem:[#allocation6 + $0x78] sm:$0xff]
    %v5100 = vld [vmem:[%s1901] sm:$0xff]
    %v5101 = vld [vmem:[%s4352] sm:$0xff]
    %v5102 = vld [vmem:[%s4352 + $0x8] sm:$0xff]
    %v5103 = vld [vmem:[%s4352 + $0x10] sm:$0xff]
    %v5104 = vld [vmem:[%s4352 + $0x18] sm:$0xff]
    %v5105 = vld [vmem:[%s4352 + $0x20] sm:$0xff]
    %v5106 = vld [vmem:[%s4352 + $0x28] sm:$0xff]
    %v5107 = vld [vmem:[%s4352 + $0x30] sm:$0xff]
    %v5108 = vld [vmem:[%s4352 + $0x38] sm:$0xff]
    %v5109 = vld [vmem:[%s4352 + $0x40] sm:$0xff]
    %v5110 = vld [vmem:[%s4352 + $0x48] sm:$0xff]
    %v5111 = vld [vmem:[%s4352 + $0x50] sm:$0xff]
    %v5112 = vld [vmem:[%s4352 + $0x58] sm:$0xff]
    %v5113 = vld [vmem:[%s4352 + $0x60] sm:$0xff]
    %v5114 = vld [vmem:[%s4352 + $0x68] sm:$0xff]
    %v5115 = vld [vmem:[%s4352 + $0x70] sm:$0xff]
    %v5116 = vld [vmem:[%s4352 + $0x78] sm:$0xff]
    %5117 = vmatprep.subr.mxu0 0.0
    %5118 = vmatpush1.msra.mxu0 %v5101
    %5119 = vmatprep.subr.mxu0 0.0
    %5120 = vmatpush1.msra.mxu0 %v5102
    %5121 = vmatprep.subr.mxu0 0.0
    %5122 = vmatpush1.msra.mxu0 %v5103
    %5123 = vmatprep.subr.mxu0 0.0
    %5124 = vmatpush1.msra.mxu0 %v5104
    %5125 = vmatprep.subr.mxu0 0.0
    %5126 = vmatpush1.msra.mxu0 %v5105
    %5127 = vmatprep.subr.mxu0 0.0
    %5128 = vmatpush1.msra.mxu0 %v5106
    %5129 = vmatprep.subr.mxu0 0.0
    %5130 = vmatpush1.msra.mxu0 %v5107
    %5131 = vmatprep.subr.mxu0 0.0
    %5132 = vmatpush1.msra.mxu0 %v5108
    %5133 = vmatprep.subr.mxu0 0.0
    %5134 = vmatpush1.msra.mxu0 %v5109
    %5135 = vmatprep.subr.mxu0 0.0
    %5136 = vmatpush1.msra.mxu0 %v5110
    %5137 = vmatprep.subr.mxu0 0.0
    %5138 = vmatpush1.msra.mxu0 %v5111
    %5139 = vmatprep.subr.mxu0 0.0
    %5140 = vmatpush1.msra.mxu0 %v5112
    %5141 = vmatprep.subr.mxu0 0.0
    %5142 = vmatpush1.msra.mxu0 %v5113
    %5143 = vmatprep.subr.mxu0 0.0
    %5144 = vmatpush1.msra.mxu0 %v5114
    %5145 = vmatprep.subr.mxu0 0.0
    %5146 = vmatpush1.msra.mxu0 %v5115
    %5147 = vmatprep.subr.mxu0 0.0
    %5148 = vmatpush1.msra.mxu0 %v5116
    %5149 = vmatprep.subr.mxu0 0.0
    %5150 = vmatpush1.msra.mxu0 0.0
    %5151 = vmatprep.subr.mxu0 0.0
    %5152 = vmatpush1.msra.mxu0 0.0
    %5153 = vmatprep.subr.mxu0 0.0
    %5154 = vmatpush1.msra.mxu0 0.0
    %5155 = vmatprep.subr.mxu0 0.0
    %5156 = vmatpush1.msra.mxu0 0.0
    %5157 = vmatprep.subr.mxu0 0.0
    %5158 = vmatpush1.msra.mxu0 0.0
    %5159 = vmatprep.subr.mxu0 0.0
    %5160 = vmatpush1.msra.mxu0 0.0
    %5161 = vmatprep.subr.mxu0 0.0
    %5162 = vmatpush1.msra.mxu0 0.0
    %5163 = vmatprep.subr.mxu0 0.0
    %5164 = vmatpush1.msra.mxu0 0.0
    %5165 = vmatprep.subr.mxu0 0.0
    %5166 = vmatpush1.msra.mxu0 0.0
    %5167 = vmatprep.subr.mxu0 0.0
    %5168 = vmatpush1.msra.mxu0 0.0
    %5169 = vmatprep.subr.mxu0 0.0
    %5170 = vmatpush1.msra.mxu0 0.0
    %5171 = vmatprep.subr.mxu0 0.0
    %5172 = vmatpush1.msra.mxu0 0.0
    %5173 = vmatprep.subr.mxu0 0.0
    %5174 = vmatpush1.msra.mxu0 0.0
    %5175 = vmatprep.subr.mxu0 0.0
    %5176 = vmatpush1.msra.mxu0 0.0
    %5177 = vmatprep.subr.mxu0 0.0
    %5178 = vmatpush1.msra.mxu0 0.0
    %5179 = vmatprep.subr.mxu0 0.0
    %5180 = vmatpush1.msra.mxu0 0.0
    %5181 = vmatprep.mubr.f32.mxu0 0.0
    %5182 = vmatmul.mubr.f32.gmra.mrb[0].mxu0 %v5100
    %v5183 = vpop.f32.mrb[0].mxu0
    %v5184 = vadd.f32 0.0, %v5183
    %v5185 = vpop.f32.mrb[0].mxu0
    %5186 = vdwg.mxu0
    %5187 = vmatprep.subr.mxu0 0.0
    %5188 = vmatpush1.msra.mxu0 %v5084
    %5189 = vmatprep.subr.mxu0 0.0
    %5190 = vmatpush1.msra.mxu0 %v5085
    %5191 = vmatprep.subr.mxu0 0.0
    %5192 = vmatpush1.msra.mxu0 %v5086
    %5193 = vmatprep.subr.mxu0 0.0
    %5194 = vmatpush1.msra.mxu0 %v5087
    %5195 = vmatprep.subr.mxu0 0.0
    %5196 = vmatpush1.msra.mxu0 %v5088
    %5197 = vmatprep.subr.mxu0 0.0
    %5198 = vmatpush1.msra.mxu0 %v5089
    %5199 = vmatprep.subr.mxu0 0.0
    %5200 = vmatpush1.msra.mxu0 %v5090
    %5201 = vmatprep.subr.mxu0 0.0
    %5202 = vmatpush1.msra.mxu0 %v5091
    %5203 = vmatprep.subr.mxu0 0.0
    %5204 = vmatpush1.msra.mxu0 %v5092
    %5205 = vmatprep.subr.mxu0 0.0
    %5206 = vmatpush1.msra.mxu0 %v5093
    %5207 = vmatprep.subr.mxu0 0.0
    %5208 = vmatpush1.msra.mxu0 %v5094
    %5209 = vmatprep.subr.mxu0 0.0
    %5210 = vmatpush1.msra.mxu0 %v5095
    %5211 = vmatprep.subr.mxu0 0.0
    %5212 = vmatpush1.msra.mxu0 %v5096
    %5213 = vmatprep.subr.mxu0 0.0
    %5214 = vmatpush1.msra.mxu0 %v5097
    %5215 = vmatprep.subr.mxu0 0.0
    %5216 = vmatpush1.msra.mxu0 %v5098
    %5217 = vmatprep.subr.mxu0 0.0
    %5218 = vmatpush1.msra.mxu0 %v5099
    %5219 = vmatprep.subr.mxu0 0.0
    %5220 = vmatpush1.msra.mxu0 0.0
    %5221 = vmatprep.subr.mxu0 0.0
    %5222 = vmatpush1.msra.mxu0 0.0
    %5223 = vmatprep.subr.mxu0 0.0
    %5224 = vmatpush1.msra.mxu0 0.0
    %5225 = vmatprep.subr.mxu0 0.0
    %5226 = vmatpush1.msra.mxu0 0.0
    %5227 = vmatprep.subr.mxu0 0.0
    %5228 = vmatpush1.msra.mxu0 0.0
    %5229 = vmatprep.subr.mxu0 0.0
    %5230 = vmatpush1.msra.mxu0 0.0
    %5231 = vmatprep.subr.mxu0 0.0
    %5232 = vmatpush1.msra.mxu0 0.0
    %5233 = vmatprep.subr.mxu0 0.0
    %5234 = vmatpush1.msra.mxu0 0.0
    %5235 = vmatprep.subr.mxu0 0.0
    %5236 = vmatpush1.msra.mxu0 0.0
    %5237 = vmatprep.subr.mxu0 0.0
    %5238 = vmatpush1.msra.mxu0 0.0
    %5239 = vmatprep.subr.mxu0 0.0
    %5240 = vmatpush1.msra.mxu0 0.0
    %5241 = vmatprep.subr.mxu0 0.0
    %5242 = vmatpush1.msra.mxu0 0.0
    %5243 = vmatprep.subr.mxu0 0.0
    %5244 = vmatpush1.msra.mxu0 0.0
    %5245 = vmatprep.subr.mxu0 0.0
    %5246 = vmatpush1.msra.mxu0 0.0
    %5247 = vmatprep.subr.mxu0 0.0
    %5248 = vmatpush1.msra.mxu0 0.0
    %5249 = vmatprep.subr.mxu0 0.0
    %5250 = vmatpush1.msra.mxu0 0.0
    %5251 = vmatprep.mubr.f32.mxu0 0.0
    %5252 = vmatmul.mubr.f32.gmra.mrb[0].mxu0 %v5083
    %v5253 = vpop.f32.mrb[0].mxu0
    %v5254 = vadd.f32 %v5184, %v5253
    %v5255 = vpop.f32.mrb[0].mxu0
    %5256 = vdwg.mxu0
    %v5257 = vld [vmem:[%s2173] sm:$0xff]
    %v5258 = vld [vmem:[%s4370] sm:$0xff]
    %v5259 = vld [vmem:[%s4370 + $0x8] sm:$0xff]
    %v5260 = vld [vmem:[%s4370 + $0x10] sm:$0xff]
    %v5261 = vld [vmem:[%s4370 + $0x18] sm:$0xff]
    %v5262 = vld [vmem:[%s4370 + $0x20] sm:$0xff]
    %v5263 = vld [vmem:[%s4370 + $0x28] sm:$0xff]
    %v5264 = vld [vmem:[%s4370 + $0x30] sm:$0xff]
    %v5265 = vld [vmem:[%s4370 + $0x38] sm:$0xff]
    %v5266 = vld [vmem:[%s4370 + $0x40] sm:$0xff]
    %v5267 = vld [vmem:[%s4370 + $0x48] sm:$0xff]
    %v5268 = vld [vmem:[%s4370 + $0x50] sm:$0xff]
    %v5269 = vld [vmem:[%s4370 + $0x58] sm:$0xff]
    %v5270 = vld [vmem:[%s4370 + $0x60] sm:$0xff]
    %v5271 = vld [vmem:[%s4370 + $0x68] sm:$0xff]
    %v5272 = vld [vmem:[%s4370 + $0x70] sm:$0xff]
    %v5273 = vld [vmem:[%s4370 + $0x78] sm:$0xff]
    %5274 = vmatprep.subr.mxu0 0.0
    %5275 = vmatpush1.msra.mxu0 %v5258
    %5276 = vmatprep.subr.mxu0 0.0
    %5277 = vmatpush1.msra.mxu0 %v5259
    %5278 = vmatprep.subr.mxu0 0.0
    %5279 = vmatpush1.msra.mxu0 %v5260
    %5280 = vmatprep.subr.mxu0 0.0
    %5281 = vmatpush1.msra.mxu0 %v5261
    %5282 = vmatprep.subr.mxu0 0.0
    %5283 = vmatpush1.msra.mxu0 %v5262
    %5284 = vmatprep.subr.mxu0 0.0
    %5285 = vmatpush1.msra.mxu0 %v5263
    %5286 = vmatprep.subr.mxu0 0.0
    %5287 = vmatpush1.msra.mxu0 %v5264
    %5288 = vmatprep.subr.mxu0 0.0
    %5289 = vmatpush1.msra.mxu0 %v5265
    %5290 = vmatprep.subr.mxu0 0.0
    %5291 = vmatpush1.msra.mxu0 %v5266
    %5292 = vmatprep.subr.mxu0 0.0
    %5293 = vmatpush1.msra.mxu0 %v5267
    %5294 = vmatprep.subr.mxu0 0.0
    %5295 = vmatpush1.msra.mxu0 %v5268
    %5296 = vmatprep.subr.mxu0 0.0
    %5297 = vmatpush1.msra.mxu0 %v5269
    %5298 = vmatprep.subr.mxu0 0.0
    %5299 = vmatpush1.msra.mxu0 %v5270
    %5300 = vmatprep.subr.mxu0 0.0
    %5301 = vmatpush1.msra.mxu0 %v5271
    %5302 = vmatprep.subr.mxu0 0.0
    %5303 = vmatpush1.msra.mxu0 %v5272
    %5304 = vmatprep.subr.mxu0 0.0
    %5305 = vmatpush1.msra.mxu0 %v5273
    %5306 = vmatprep.subr.mxu0 0.0
    %5307 = vmatpush1.msra.mxu0 0.0
    %5308 = vmatprep.subr.mxu0 0.0
    %5309 = vmatpush1.msra.mxu0 0.0
    %5310 = vmatprep.subr.mxu0 0.0
    %5311 = vmatpush1.msra.mxu0 0.0
    %5312 = vmatprep.subr.mxu0 0.0
    %5313 = vmatpush1.msra.mxu0 0.0
    %5314 = vmatprep.subr.mxu0 0.0
    %5315 = vmatpush1.msra.mxu0 0.0
    %5316 = vmatprep.subr.mxu0 0.0
    %5317 = vmatpush1.msra.mxu0 0.0
    %5318 = vmatprep.subr.mxu0 0.0
    %5319 = vmatpush1.msra.mxu0 0.0
    %5320 = vmatprep.subr.mxu0 0.0
    %5321 = vmatpush1.msra.mxu0 0.0
    %5322 = vmatprep.subr.mxu0 0.0
    %5323 = vmatpush1.msra.mxu0 0.0
    %5324 = vmatprep.subr.mxu0 0.0
    %5325 = vmatpush1.msra.mxu0 0.0
    %5326 = vmatprep.subr.mxu0 0.0
    %5327 = vmatpush1.msra.mxu0 0.0
    %5328 = vmatprep.subr.mxu0 0.0
    %5329 = vmatpush1.msra.mxu0 0.0
    %5330 = vmatprep.subr.mxu0 0.0
    %5331 = vmatpush1.msra.mxu0 0.0
    %5332 = vmatprep.subr.mxu0 0.0
    %5333 = vmatpush1.msra.mxu0 0.0
    %5334 = vmatprep.subr.mxu0 0.0
    %5335 = vmatpush1.msra.mxu0 0.0
    %5336 = vmatprep.subr.mxu0 0.0
    %5337 = vmatpush1.msra.mxu0 0.0
    %5338 = vmatprep.mubr.f32.mxu0 0.0
    %5339 = vmatmul.mubr.f32.gmra.mrb[0].mxu0 %v5257
    %v5340 = vpop.f32.mrb[0].mxu0
    %v5341 = vadd.f32 0.0, %v5340
    %v5342 = vpop.f32.mrb[0].mxu0
    %5343 = vdwg.mxu0
    %v5344 = vadd.f32 %v5254, %v5341
    %v5345 = vld [vmem:[%s4] sm:$0x1]
    %v5347 = vlaneseq
    %v5348 = vshrl.u32 %v5347, 7
    %v5349 = vsub.s32 0, %v5348
    %v5350 = vrot.slane %v5345, %v5349
    %v5352 = vadd.f32 %v5344, %v5350
    %v5353 = vmax.f32 %v5352, 0.0
    %s5354 = scalar_lea.vmem [#allocation3], 24
    %5355 = vst [vmem:[%s5354] sm:$0xff] %v5353
    %v5356 = vld [vmem:[%s2173] sm:$0xff]
    %v5357 = vld [vmem:[#allocation6] sm:$0xff]
    %v5358 = vld [vmem:[#allocation6 + $0x8] sm:$0xff]
    %v5359 = vld [vmem:[#allocation6 + $0x10] sm:$0xff]
    %v5360 = vld [vmem:[#allocation6 + $0x18] sm:$0xff]
    %v5361 = vld [vmem:[#allocation6 + $0x20] sm:$0xff]
    %v5362 = vld [vmem:[#allocation6 + $0x28] sm:$0xff]
    %v5363 = vld [vmem:[#allocation6 + $0x30] sm:$0xff]
    %v5364 = vld [vmem:[#allocation6 + $0x38] sm:$0xff]
    %v5365 = vld [vmem:[#allocation6 + $0x40] sm:$0xff]
    %v5366 = vld [vmem:[#allocation6 + $0x48] sm:$0xff]
    %v5367 = vld [vmem:[#allocation6 + $0x50] sm:$0xff]
    %v5368 = vld [vmem:[#allocation6 + $0x58] sm:$0xff]
    %v5369 = vld [vmem:[#allocation6 + $0x60] sm:$0xff]
    %v5370 = vld [vmem:[#allocation6 + $0x68] sm:$0xff]
    %v5371 = vld [vmem:[#allocation6 + $0x70] sm:$0xff]
    %v5372 = vld [vmem:[#allocation6 + $0x78] sm:$0xff]
    %v5373 = vld [vmem:[%s2445] sm:$0xff]
    %v5374 = vld [vmem:[%s4352] sm:$0xff]
    %v5375 = vld [vmem:[%s4352 + $0x8] sm:$0xff]
    %v5376 = vld [vmem:[%s4352 + $0x10] sm:$0xff]
    %v5377 = vld [vmem:[%s4352 + $0x18] sm:$0xff]
    %v5378 = vld [vmem:[%s4352 + $0x20] sm:$0xff]
    %v5379 = vld [vmem:[%s4352 + $0x28] sm:$0xff]
    %v5380 = vld [vmem:[%s4352 + $0x30] sm:$0xff]
    %v5381 = vld [vmem:[%s4352 + $0x38] sm:$0xff]
    %v5382 = vld [vmem:[%s4352 + $0x40] sm:$0xff]
    %v5383 = vld [vmem:[%s4352 + $0x48] sm:$0xff]
    %v5384 = vld [vmem:[%s4352 + $0x50] sm:$0xff]
    %v5385 = vld [vmem:[%s4352 + $0x58] sm:$0xff]
    %v5386 = vld [vmem:[%s4352 + $0x60] sm:$0xff]
    %v5387 = vld [vmem:[%s4352 + $0x68] sm:$0xff]
    %v5388 = vld [vmem:[%s4352 + $0x70] sm:$0xff]
    %v5389 = vld [vmem:[%s4352 + $0x78] sm:$0xff]
    %5390 = vmatprep.subr.mxu0 0.0
    %5391 = vmatpush1.msra.mxu0 %v5374
    %5392 = vmatprep.subr.mxu0 0.0
    %5393 = vmatpush1.msra.mxu0 %v5375
    %5394 = vmatprep.subr.mxu0 0.0
    %5395 = vmatpush1.msra.mxu0 %v5376
    %5396 = vmatprep.subr.mxu0 0.0
    %5397 = vmatpush1.msra.mxu0 %v5377
    %5398 = vmatprep.subr.mxu0 0.0
    %5399 = vmatpush1.msra.mxu0 %v5378
    %5400 = vmatprep.subr.mxu0 0.0
    %5401 = vmatpush1.msra.mxu0 %v5379
    %5402 = vmatprep.subr.mxu0 0.0
    %5403 = vmatpush1.msra.mxu0 %v5380
    %5404 = vmatprep.subr.mxu0 0.0
    %5405 = vmatpush1.msra.mxu0 %v5381
    %5406 = vmatprep.subr.mxu0 0.0
    %5407 = vmatpush1.msra.mxu0 %v5382
    %5408 = vmatprep.subr.mxu0 0.0
    %5409 = vmatpush1.msra.mxu0 %v5383
    %5410 = vmatprep.subr.mxu0 0.0
    %5411 = vmatpush1.msra.mxu0 %v5384
    %5412 = vmatprep.subr.mxu0 0.0
    %5413 = vmatpush1.msra.mxu0 %v5385
    %5414 = vmatprep.subr.mxu0 0.0
    %5415 = vmatpush1.msra.mxu0 %v5386
    %5416 = vmatprep.subr.mxu0 0.0
    %5417 = vmatpush1.msra.mxu0 %v5387
    %5418 = vmatprep.subr.mxu0 0.0
    %5419 = vmatpush1.msra.mxu0 %v5388
    %5420 = vmatprep.subr.mxu0 0.0
    %5421 = vmatpush1.msra.mxu0 %v5389
    %5422 = vmatprep.subr.mxu0 0.0
    %5423 = vmatpush1.msra.mxu0 0.0
    %5424 = vmatprep.subr.mxu0 0.0
    %5425 = vmatpush1.msra.mxu0 0.0
    %5426 = vmatprep.subr.mxu0 0.0
    %5427 = vmatpush1.msra.mxu0 0.0
    %5428 = vmatprep.subr.mxu0 0.0
    %5429 = vmatpush1.msra.mxu0 0.0
    %5430 = vmatprep.subr.mxu0 0.0
    %5431 = vmatpush1.msra.mxu0 0.0
    %5432 = vmatprep.subr.mxu0 0.0
    %5433 = vmatpush1.msra.mxu0 0.0
    %5434 = vmatprep.subr.mxu0 0.0
    %5435 = vmatpush1.msra.mxu0 0.0
    %5436 = vmatprep.subr.mxu0 0.0
    %5437 = vmatpush1.msra.mxu0 0.0
    %5438 = vmatprep.subr.mxu0 0.0
    %5439 = vmatpush1.msra.mxu0 0.0
    %5440 = vmatprep.subr.mxu0 0.0
    %5441 = vmatpush1.msra.mxu0 0.0
    %5442 = vmatprep.subr.mxu0 0.0
    %5443 = vmatpush1.msra.mxu0 0.0
    %5444 = vmatprep.subr.mxu0 0.0
    %5445 = vmatpush1.msra.mxu0 0.0
    %5446 = vmatprep.subr.mxu0 0.0
    %5447 = vmatpush1.msra.mxu0 0.0
    %5448 = vmatprep.subr.mxu0 0.0
    %5449 = vmatpush1.msra.mxu0 0.0
    %5450 = vmatprep.subr.mxu0 0.0
    %5451 = vmatpush1.msra.mxu0 0.0
    %5452 = vmatprep.subr.mxu0 0.0
    %5453 = vmatpush1.msra.mxu0 0.0
    %5454 = vmatprep.mubr.f32.mxu0 0.0
    %5455 = vmatmul.mubr.f32.gmra.mrb[0].mxu0 %v5373
    %v5456 = vpop.f32.mrb[0].mxu0
    %v5457 = vadd.f32 0.0, %v5456
    %v5458 = vpop.f32.mrb[0].mxu0
    %5459 = vdwg.mxu0
    %5460 = vmatprep.subr.mxu0 0.0
    %5461 = vmatpush1.msra.mxu0 %v5357
    %5462 = vmatprep.subr.mxu0 0.0
    %5463 = vmatpush1.msra.mxu0 %v5358
    %5464 = vmatprep.subr.mxu0 0.0
    %5465 = vmatpush1.msra.mxu0 %v5359
    %5466 = vmatprep.subr.mxu0 0.0
    %5467 = vmatpush1.msra.mxu0 %v5360
    %5468 = vmatprep.subr.mxu0 0.0
    %5469 = vmatpush1.msra.mxu0 %v5361
    %5470 = vmatprep.subr.mxu0 0.0
    %5471 = vmatpush1.msra.mxu0 %v5362
    %5472 = vmatprep.subr.mxu0 0.0
    %5473 = vmatpush1.msra.mxu0 %v5363
    %5474 = vmatprep.subr.mxu0 0.0
    %5475 = vmatpush1.msra.mxu0 %v5364
    %5476 = vmatprep.subr.mxu0 0.0
    %5477 = vmatpush1.msra.mxu0 %v5365
    %5478 = vmatprep.subr.mxu0 0.0
    %5479 = vmatpush1.msra.mxu0 %v5366
    %5480 = vmatprep.subr.mxu0 0.0
    %5481 = vmatpush1.msra.mxu0 %v5367
    %5482 = vmatprep.subr.mxu0 0.0
    %5483 = vmatpush1.msra.mxu0 %v5368
    %5484 = vmatprep.subr.mxu0 0.0
    %5485 = vmatpush1.msra.mxu0 %v5369
    %5486 = vmatprep.subr.mxu0 0.0
    %5487 = vmatpush1.msra.mxu0 %v5370
    %5488 = vmatprep.subr.mxu0 0.0
    %5489 = vmatpush1.msra.mxu0 %v5371
    %5490 = vmatprep.subr.mxu0 0.0
    %5491 = vmatpush1.msra.mxu0 %v5372
    %5492 = vmatprep.subr.mxu0 0.0
    %5493 = vmatpush1.msra.mxu0 0.0
    %5494 = vmatprep.subr.mxu0 0.0
    %5495 = vmatpush1.msra.mxu0 0.0
    %5496 = vmatprep.subr.mxu0 0.0
    %5497 = vmatpush1.msra.mxu0 0.0
    %5498 = vmatprep.subr.mxu0 0.0
    %5499 = vmatpush1.msra.mxu0 0.0
    %5500 = vmatprep.subr.mxu0 0.0
    %5501 = vmatpush1.msra.mxu0 0.0
    %5502 = vmatprep.subr.mxu0 0.0
    %5503 = vmatpush1.msra.mxu0 0.0
    %5504 = vmatprep.subr.mxu0 0.0
    %5505 = vmatpush1.msra.mxu0 0.0
    %5506 = vmatprep.subr.mxu0 0.0
    %5507 = vmatpush1.msra.mxu0 0.0
    %5508 = vmatprep.subr.mxu0 0.0
    %5509 = vmatpush1.msra.mxu0 0.0
    %5510 = vmatprep.subr.mxu0 0.0
    %5511 = vmatpush1.msra.mxu0 0.0
    %5512 = vmatprep.subr.mxu0 0.0
    %5513 = vmatpush1.msra.mxu0 0.0
    %5514 = vmatprep.subr.mxu0 0.0
    %5515 = vmatpush1.msra.mxu0 0.0
    %5516 = vmatprep.subr.mxu0 0.0
    %5517 = vmatpush1.msra.mxu0 0.0
    %5518 = vmatprep.subr.mxu0 0.0
    %5519 = vmatpush1.msra.mxu0 0.0
    %5520 = vmatprep.subr.mxu0 0.0
    %5521 = vmatpush1.msra.mxu0 0.0
    %5522 = vmatprep.subr.mxu0 0.0
    %5523 = vmatpush1.msra.mxu0 0.0
    %5524 = vmatprep.mubr.f32.mxu0 0.0
    %5525 = vmatmul.mubr.f32.gmra.mrb[0].mxu0 %v5356
    %v5526 = vpop.f32.mrb[0].mxu0
    %v5527 = vadd.f32 %v5457, %v5526
    %v5528 = vpop.f32.mrb[0].mxu0
    %5529 = vdwg.mxu0
    %v5530 = vld [vmem:[%s2717] sm:$0xff]
    %v5531 = vld [vmem:[%s4370] sm:$0xff]
    %v5532 = vld [vmem:[%s4370 + $0x8] sm:$0xff]
    %v5533 = vld [vmem:[%s4370 + $0x10] sm:$0xff]
    %v5534 = vld [vmem:[%s4370 + $0x18] sm:$0xff]
    %v5535 = vld [vmem:[%s4370 + $0x20] sm:$0xff]
    %v5536 = vld [vmem:[%s4370 + $0x28] sm:$0xff]
    %v5537 = vld [vmem:[%s4370 + $0x30] sm:$0xff]
    %v5538 = vld [vmem:[%s4370 + $0x38] sm:$0xff]
    %v5539 = vld [vmem:[%s4370 + $0x40] sm:$0xff]
    %v5540 = vld [vmem:[%s4370 + $0x48] sm:$0xff]
    %v5541 = vld [vmem:[%s4370 + $0x50] sm:$0xff]
    %v5542 = vld [vmem:[%s4370 + $0x58] sm:$0xff]
    %v5543 = vld [vmem:[%s4370 + $0x60] sm:$0xff]
    %v5544 = vld [vmem:[%s4370 + $0x68] sm:$0xff]
    %v5545 = vld [vmem:[%s4370 + $0x70] sm:$0xff]
    %v5546 = vld [vmem:[%s4370 + $0x78] sm:$0xff]
    %5547 = vmatprep.subr.mxu0 0.0
    %5548 = vmatpush1.msra.mxu0 %v5531
    %5549 = vmatprep.subr.mxu0 0.0
    %5550 = vmatpush1.msra.mxu0 %v5532
    %5551 = vmatprep.subr.mxu0 0.0
    %5552 = vmatpush1.msra.mxu0 %v5533
    %5553 = vmatprep.subr.mxu0 0.0
    %5554 = vmatpush1.msra.mxu0 %v5534
    %5555 = vmatprep.subr.mxu0 0.0
    %5556 = vmatpush1.msra.mxu0 %v5535
    %5557 = vmatprep.subr.mxu0 0.0
    %5558 = vmatpush1.msra.mxu0 %v5536
    %5559 = vmatprep.subr.mxu0 0.0
    %5560 = vmatpush1.msra.mxu0 %v5537
    %5561 = vmatprep.subr.mxu0 0.0
    %5562 = vmatpush1.msra.mxu0 %v5538
    %5563 = vmatprep.subr.mxu0 0.0
    %5564 = vmatpush1.msra.mxu0 %v5539
    %5565 = vmatprep.subr.mxu0 0.0
    %5566 = vmatpush1.msra.mxu0 %v5540
    %5567 = vmatprep.subr.mxu0 0.0
    %5568 = vmatpush1.msra.mxu0 %v5541
    %5569 = vmatprep.subr.mxu0 0.0
    %5570 = vmatpush1.msra.mxu0 %v5542
    %5571 = vmatprep.subr.mxu0 0.0
    %5572 = vmatpush1.msra.mxu0 %v5543
    %5573 = vmatprep.subr.mxu0 0.0
    %5574 = vmatpush1.msra.mxu0 %v5544
    %5575 = vmatprep.subr.mxu0 0.0
    %5576 = vmatpush1.msra.mxu0 %v5545
    %5577 = vmatprep.subr.mxu0 0.0
    %5578 = vmatpush1.msra.mxu0 %v5546
    %5579 = vmatprep.subr.mxu0 0.0
    %5580 = vmatpush1.msra.mxu0 0.0
    %5581 = vmatprep.subr.mxu0 0.0
    %5582 = vmatpush1.msra.mxu0 0.0
    %5583 = vmatprep.subr.mxu0 0.0
    %5584 = vmatpush1.msra.mxu0 0.0
    %5585 = vmatprep.subr.mxu0 0.0
    %5586 = vmatpush1.msra.mxu0 0.0
    %5587 = vmatprep.subr.mxu0 0.0
    %5588 = vmatpush1.msra.mxu0 0.0
    %5589 = vmatprep.subr.mxu0 0.0
    %5590 = vmatpush1.msra.mxu0 0.0
    %5591 = vmatprep.subr.mxu0 0.0
    %5592 = vmatpush1.msra.mxu0 0.0
    %5593 = vmatprep.subr.mxu0 0.0
    %5594 = vmatpush1.msra.mxu0 0.0
    %5595 = vmatprep.subr.mxu0 0.0
    %5596 = vmatpush1.msra.mxu0 0.0
    %5597 = vmatprep.subr.mxu0 0.0
    %5598 = vmatpush1.msra.mxu0 0.0
    %5599 = vmatprep.subr.mxu0 0.0
    %5600 = vmatpush1.msra.mxu0 0.0
    %5601 = vmatprep.subr.mxu0 0.0
    %5602 = vmatpush1.msra.mxu0 0.0
    %5603 = vmatprep.subr.mxu0 0.0
    %5604 = vmatpush1.msra.mxu0 0.0
    %5605 = vmatprep.subr.mxu0 0.0
    %5606 = vmatpush1.msra.mxu0 0.0
    %5607 = vmatprep.subr.mxu0 0.0
    %5608 = vmatpush1.msra.mxu0 0.0
    %5609 = vmatprep.subr.mxu0 0.0
    %5610 = vmatpush1.msra.mxu0 0.0
    %5611 = vmatprep.mubr.f32.mxu0 0.0
    %5612 = vmatmul.mubr.f32.gmra.mrb[0].mxu0 %v5530
    %v5613 = vpop.f32.mrb[0].mxu0
    %v5614 = vadd.f32 0.0, %v5613
    %v5615 = vpop.f32.mrb[0].mxu0
    %5616 = vdwg.mxu0
    %v5617 = vadd.f32 %v5527, %v5614
    %v5618 = vld [vmem:[%s4] sm:$0x1]
    %v5620 = vlaneseq
    %v5621 = vshrl.u32 %v5620, 7
    %v5622 = vsub.s32 0, %v5621
    %v5623 = vrot.slane %v5618, %v5622
    %v5625 = vadd.f32 %v5617, %v5623
    %v5626 = vmax.f32 %v5625, 0.0
    %s5627 = scalar_lea.vmem [#allocation3], 32
    %5628 = vst [vmem:[%s5627] sm:$0xff] %v5626
    %v5629 = vld [vmem:[%s2717] sm:$0xff]
    %v5630 = vld [vmem:[#allocation6] sm:$0xff]
    %v5631 = vld [vmem:[#allocation6 + $0x8] sm:$0xff]
    %v5632 = vld [vmem:[#allocation6 + $0x10] sm:$0xff]
    %v5633 = vld [vmem:[#allocation6 + $0x18] sm:$0xff]
    %v5634 = vld [vmem:[#allocation6 + $0x20] sm:$0xff]
    %v5635 = vld [vmem:[#allocation6 + $0x28] sm:$0xff]
    %v5636 = vld [vmem:[#allocation6 + $0x30] sm:$0xff]
    %v5637 = vld [vmem:[#allocation6 + $0x38] sm:$0xff]
    %v5638 = vld [vmem:[#allocation6 + $0x40] sm:$0xff]
    %v5639 = vld [vmem:[#allocation6 + $0x48] sm:$0xff]
    %v5640 = vld [vmem:[#allocation6 + $0x50] sm:$0xff]
    %v5641 = vld [vmem:[#allocation6 + $0x58] sm:$0xff]
    %v5642 = vld [vmem:[#allocation6 + $0x60] sm:$0xff]
    %v5643 = vld [vmem:[#allocation6 + $0x68] sm:$0xff]
    %v5644 = vld [vmem:[#allocation6 + $0x70] sm:$0xff]
    %v5645 = vld [vmem:[#allocation6 + $0x78] sm:$0xff]
    %v5646 = vld [vmem:[%s2989] sm:$0xff]
    %v5647 = vld [vmem:[%s4352] sm:$0xff]
    %v5648 = vld [vmem:[%s4352 + $0x8] sm:$0xff]
    %v5649 = vld [vmem:[%s4352 + $0x10] sm:$0xff]
    %v5650 = vld [vmem:[%s4352 + $0x18] sm:$0xff]
    %v5651 = vld [vmem:[%s4352 + $0x20] sm:$0xff]
    %v5652 = vld [vmem:[%s4352 + $0x28] sm:$0xff]
    %v5653 = vld [vmem:[%s4352 + $0x30] sm:$0xff]
    %v5654 = vld [vmem:[%s4352 + $0x38] sm:$0xff]
    %v5655 = vld [vmem:[%s4352 + $0x40] sm:$0xff]
    %v5656 = vld [vmem:[%s4352 + $0x48] sm:$0xff]
    %v5657 = vld [vmem:[%s4352 + $0x50] sm:$0xff]
    %v5658 = vld [vmem:[%s4352 + $0x58] sm:$0xff]
    %v5659 = vld [vmem:[%s4352 + $0x60] sm:$0xff]
    %v5660 = vld [vmem:[%s4352 + $0x68] sm:$0xff]
    %v5661 = vld [vmem:[%s4352 + $0x70] sm:$0xff]
    %v5662 = vld [vmem:[%s4352 + $0x78] sm:$0xff]
    %5663 = vmatprep.subr.mxu0 0.0
    %5664 = vmatpush1.msra.mxu0 %v5647
    %5665 = vmatprep.subr.mxu0 0.0
    %5666 = vmatpush1.msra.mxu0 %v5648
    %5667 = vmatprep.subr.mxu0 0.0
    %5668 = vmatpush1.msra.mxu0 %v5649
    %5669 = vmatprep.subr.mxu0 0.0
    %5670 = vmatpush1.msra.mxu0 %v5650
    %5671 = vmatprep.subr.mxu0 0.0
    %5672 = vmatpush1.msra.mxu0 %v5651
    %5673 = vmatprep.subr.mxu0 0.0
    %5674 = vmatpush1.msra.mxu0 %v5652
    %5675 = vmatprep.subr.mxu0 0.0
    %5676 = vmatpush1.msra.mxu0 %v5653
    %5677 = vmatprep.subr.mxu0 0.0
    %5678 = vmatpush1.msra.mxu0 %v5654
    %5679 = vmatprep.subr.mxu0 0.0
    %5680 = vmatpush1.msra.mxu0 %v5655
    %5681 = vmatprep.subr.mxu0 0.0
    %5682 = vmatpush1.msra.mxu0 %v5656
    %5683 = vmatprep.subr.mxu0 0.0
    %5684 = vmatpush1.msra.mxu0 %v5657
    %5685 = vmatprep.subr.mxu0 0.0
    %5686 = vmatpush1.msra.mxu0 %v5658
    %5687 = vmatprep.subr.mxu0 0.0
    %5688 = vmatpush1.msra.mxu0 %v5659
    %5689 = vmatprep.subr.mxu0 0.0
    %5690 = vmatpush1.msra.mxu0 %v5660
    %5691 = vmatprep.subr.mxu0 0.0
    %5692 = vmatpush1.msra.mxu0 %v5661
    %5693 = vmatprep.subr.mxu0 0.0
    %5694 = vmatpush1.msra.mxu0 %v5662
    %5695 = vmatprep.subr.mxu0 0.0
    %5696 = vmatpush1.msra.mxu0 0.0
    %5697 = vmatprep.subr.mxu0 0.0
    %5698 = vmatpush1.msra.mxu0 0.0
    %5699 = vmatprep.subr.mxu0 0.0
    %5700 = vmatpush1.msra.mxu0 0.0
    %5701 = vmatprep.subr.mxu0 0.0
    %5702 = vmatpush1.msra.mxu0 0.0
    %5703 = vmatprep.subr.mxu0 0.0
    %5704 = vmatpush1.msra.mxu0 0.0
    %5705 = vmatprep.subr.mxu0 0.0
    %5706 = vmatpush1.msra.mxu0 0.0
    %5707 = vmatprep.subr.mxu0 0.0
    %5708 = vmatpush1.msra.mxu0 0.0
    %5709 = vmatprep.subr.mxu0 0.0
    %5710 = vmatpush1.msra.mxu0 0.0
    %5711 = vmatprep.subr.mxu0 0.0
    %5712 = vmatpush1.msra.mxu0 0.0
    %5713 = vmatprep.subr.mxu0 0.0
    %5714 = vmatpush1.msra.mxu0 0.0
    %5715 = vmatprep.subr.mxu0 0.0
    %5716 = vmatpush1.msra.mxu0 0.0
    %5717 = vmatprep.subr.mxu0 0.0
    %5718 = vmatpush1.msra.mxu0 0.0
    %5719 = vmatprep.subr.mxu0 0.0
    %5720 = vmatpush1.msra.mxu0 0.0
    %5721 = vmatprep.subr.mxu0 0.0
    %5722 = vmatpush1.msra.mxu0 0.0
    %5723 = vmatprep.subr.mxu0 0.0
    %5724 = vmatpush1.msra.mxu0 0.0
    %5725 = vmatprep.subr.mxu0 0.0
    %5726 = vmatpush1.msra.mxu0 0.0
    %5727 = vmatprep.mubr.f32.mxu0 0.0
    %5728 = vmatmul.mubr.f32.gmra.mrb[0].mxu0 %v5646
    %v5729 = vpop.f32.mrb[0].mxu0
    %v5730 = vadd.f32 0.0, %v5729
    %v5731 = vpop.f32.mrb[0].mxu0
    %5732 = vdwg.mxu0
    %5733 = vmatprep.subr.mxu0 0.0
    %5734 = vmatpush1.msra.mxu0 %v5630
    %5735 = vmatprep.subr.mxu0 0.0
    %5736 = vmatpush1.msra.mxu0 %v5631
    %5737 = vmatprep.subr.mxu0 0.0
    %5738 = vmatpush1.msra.mxu0 %v5632
    %5739 = vmatprep.subr.mxu0 0.0
    %5740 = vmatpush1.msra.mxu0 %v5633
    %5741 = vmatprep.subr.mxu0 0.0
    %5742 = vmatpush1.msra.mxu0 %v5634
    %5743 = vmatprep.subr.mxu0 0.0
    %5744 = vmatpush1.msra.mxu0 %v5635
    %5745 = vmatprep.subr.mxu0 0.0
    %5746 = vmatpush1.msra.mxu0 %v5636
    %5747 = vmatprep.subr.mxu0 0.0
    %5748 = vmatpush1.msra.mxu0 %v5637
    %5749 = vmatprep.subr.mxu0 0.0
    %5750 = vmatpush1.msra.mxu0 %v5638
    %5751 = vmatprep.subr.mxu0 0.0
    %5752 = vmatpush1.msra.mxu0 %v5639
    %5753 = vmatprep.subr.mxu0 0.0
    %5754 = vmatpush1.msra.mxu0 %v5640
    %5755 = vmatprep.subr.mxu0 0.0
    %5756 = vmatpush1.msra.mxu0 %v5641
    %5757 = vmatprep.subr.mxu0 0.0
    %5758 = vmatpush1.msra.mxu0 %v5642
    %5759 = vmatprep.subr.mxu0 0.0
    %5760 = vmatpush1.msra.mxu0 %v5643
    %5761 = vmatprep.subr.mxu0 0.0
    %5762 = vmatpush1.msra.mxu0 %v5644
    %5763 = vmatprep.subr.mxu0 0.0
    %5764 = vmatpush1.msra.mxu0 %v5645
    %5765 = vmatprep.subr.mxu0 0.0
    %5766 = vmatpush1.msra.mxu0 0.0
    %5767 = vmatprep.subr.mxu0 0.0
    %5768 = vmatpush1.msra.mxu0 0.0
    %5769 = vmatprep.subr.mxu0 0.0
    %5770 = vmatpush1.msra.mxu0 0.0
    %5771 = vmatprep.subr.mxu0 0.0
    %5772 = vmatpush1.msra.mxu0 0.0
    %5773 = vmatprep.subr.mxu0 0.0
    %5774 = vmatpush1.msra.mxu0 0.0
    %5775 = vmatprep.subr.mxu0 0.0
    %5776 = vmatpush1.msra.mxu0 0.0
    %5777 = vmatprep.subr.mxu0 0.0
    %5778 = vmatpush1.msra.mxu0 0.0
    %5779 = vmatprep.subr.mxu0 0.0
    %5780 = vmatpush1.msra.mxu0 0.0
    %5781 = vmatprep.subr.mxu0 0.0
    %5782 = vmatpush1.msra.mxu0 0.0
    %5783 = vmatprep.subr.mxu0 0.0
    %5784 = vmatpush1.msra.mxu0 0.0
    %5785 = vmatprep.subr.mxu0 0.0
    %5786 = vmatpush1.msra.mxu0 0.0
    %5787 = vmatprep.subr.mxu0 0.0
    %5788 = vmatpush1.msra.mxu0 0.0
    %5789 = vmatprep.subr.mxu0 0.0
    %5790 = vmatpush1.msra.mxu0 0.0
    %5791 = vmatprep.subr.mxu0 0.0
    %5792 = vmatpush1.msra.mxu0 0.0
    %5793 = vmatprep.subr.mxu0 0.0
    %5794 = vmatpush1.msra.mxu0 0.0
    %5795 = vmatprep.subr.mxu0 0.0
    %5796 = vmatpush1.msra.mxu0 0.0
    %5797 = vmatprep.mubr.f32.mxu0 0.0
    %5798 = vmatmul.mubr.f32.gmra.mrb[0].mxu0 %v5629
    %v5799 = vpop.f32.mrb[0].mxu0
    %v5800 = vadd.f32 %v5730, %v5799
    %v5801 = vpop.f32.mrb[0].mxu0
    %5802 = vdwg.mxu0
    %v5803 = vld [vmem:[%s3261] sm:$0xff]
    %v5804 = vld [vmem:[%s4370] sm:$0xff]
    %v5805 = vld [vmem:[%s4370 + $0x8] sm:$0xff]
    %v5806 = vld [vmem:[%s4370 + $0x10] sm:$0xff]
    %v5807 = vld [vmem:[%s4370 + $0x18] sm:$0xff]
    %v5808 = vld [vmem:[%s4370 + $0x20] sm:$0xff]
    %v5809 = vld [vmem:[%s4370 + $0x28] sm:$0xff]
    %v5810 = vld [vmem:[%s4370 + $0x30] sm:$0xff]
    %v5811 = vld [vmem:[%s4370 + $0x38] sm:$0xff]
    %v5812 = vld [vmem:[%s4370 + $0x40] sm:$0xff]
    %v5813 = vld [vmem:[%s4370 + $0x48] sm:$0xff]
    %v5814 = vld [vmem:[%s4370 + $0x50] sm:$0xff]
    %v5815 = vld [vmem:[%s4370 + $0x58] sm:$0xff]
    %v5816 = vld [vmem:[%s4370 + $0x60] sm:$0xff]
    %v5817 = vld [vmem:[%s4370 + $0x68] sm:$0xff]
    %v5818 = vld [vmem:[%s4370 + $0x70] sm:$0xff]
    %v5819 = vld [vmem:[%s4370 + $0x78] sm:$0xff]
    %5820 = vmatprep.subr.mxu0 0.0
    %5821 = vmatpush1.msra.mxu0 %v5804
    %5822 = vmatprep.subr.mxu0 0.0
    %5823 = vmatpush1.msra.mxu0 %v5805
    %5824 = vmatprep.subr.mxu0 0.0
    %5825 = vmatpush1.msra.mxu0 %v5806
    %5826 = vmatprep.subr.mxu0 0.0
    %5827 = vmatpush1.msra.mxu0 %v5807
    %5828 = vmatprep.subr.mxu0 0.0
    %5829 = vmatpush1.msra.mxu0 %v5808
    %5830 = vmatprep.subr.mxu0 0.0
    %5831 = vmatpush1.msra.mxu0 %v5809
    %5832 = vmatprep.subr.mxu0 0.0
    %5833 = vmatpush1.msra.mxu0 %v5810
    %5834 = vmatprep.subr.mxu0 0.0
    %5835 = vmatpush1.msra.mxu0 %v5811
    %5836 = vmatprep.subr.mxu0 0.0
    %5837 = vmatpush1.msra.mxu0 %v5812
    %5838 = vmatprep.subr.mxu0 0.0
    %5839 = vmatpush1.msra.mxu0 %v5813
    %5840 = vmatprep.subr.mxu0 0.0
    %5841 = vmatpush1.msra.mxu0 %v5814
    %5842 = vmatprep.subr.mxu0 0.0
    %5843 = vmatpush1.msra.mxu0 %v5815
    %5844 = vmatprep.subr.mxu0 0.0
    %5845 = vmatpush1.msra.mxu0 %v5816
    %5846 = vmatprep.subr.mxu0 0.0
    %5847 = vmatpush1.msra.mxu0 %v5817
    %5848 = vmatprep.subr.mxu0 0.0
    %5849 = vmatpush1.msra.mxu0 %v5818
    %5850 = vmatprep.subr.mxu0 0.0
    %5851 = vmatpush1.msra.mxu0 %v5819
    %5852 = vmatprep.subr.mxu0 0.0
    %5853 = vmatpush1.msra.mxu0 0.0
    %5854 = vmatprep.subr.mxu0 0.0
    %5855 = vmatpush1.msra.mxu0 0.0
    %5856 = vmatprep.subr.mxu0 0.0
    %5857 = vmatpush1.msra.mxu0 0.0
    %5858 = vmatprep.subr.mxu0 0.0
    %5859 = vmatpush1.msra.mxu0 0.0
    %5860 = vmatprep.subr.mxu0 0.0
    %5861 = vmatpush1.msra.mxu0 0.0
    %5862 = vmatprep.subr.mxu0 0.0
    %5863 = vmatpush1.msra.mxu0 0.0
    %5864 = vmatprep.subr.mxu0 0.0
    %5865 = vmatpush1.msra.mxu0 0.0
    %5866 = vmatprep.subr.mxu0 0.0
    %5867 = vmatpush1.msra.mxu0 0.0
    %5868 = vmatprep.subr.mxu0 0.0
    %5869 = vmatpush1.msra.mxu0 0.0
    %5870 = vmatprep.subr.mxu0 0.0
    %5871 = vmatpush1.msra.mxu0 0.0
    %5872 = vmatprep.subr.mxu0 0.0
    %5873 = vmatpush1.msra.mxu0 0.0
    %5874 = vmatprep.subr.mxu0 0.0
    %5875 = vmatpush1.msra.mxu0 0.0
    %5876 = vmatprep.subr.mxu0 0.0
    %5877 = vmatpush1.msra.mxu0 0.0
    %5878 = vmatprep.subr.mxu0 0.0
    %5879 = vmatpush1.msra.mxu0 0.0
    %5880 = vmatprep.subr.mxu0 0.0
    %5881 = vmatpush1.msra.mxu0 0.0
    %5882 = vmatprep.subr.mxu0 0.0
    %5883 = vmatpush1.msra.mxu0 0.0
    %5884 = vmatprep.mubr.f32.mxu0 0.0
    %5885 = vmatmul.mubr.f32.gmra.mrb[0].mxu0 %v5803
    %v5886 = vpop.f32.mrb[0].mxu0
    %v5887 = vadd.f32 0.0, %v5886
    %v5888 = vpop.f32.mrb[0].mxu0
    %5889 = vdwg.mxu0
    %v5890 = vadd.f32 %v5800, %v5887
    %v5891 = vld [vmem:[%s4] sm:$0x1]
    %v5893 = vlaneseq
    %v5894 = vshrl.u32 %v5893, 7
    %v5895 = vsub.s32 0, %v5894
    %v5896 = vrot.slane %v5891, %v5895
    %v5898 = vadd.f32 %v5890, %v5896
    %v5899 = vmax.f32 %v5898, 0.0
    %s5900 = scalar_lea.vmem [#allocation3], 40
    %5901 = vst [vmem:[%s5900] sm:$0xff] %v5899
    %v5902 = vld [vmem:[%s3261] sm:$0xff]
    %v5903 = vld [vmem:[#allocation6] sm:$0xff]
    %v5904 = vld [vmem:[#allocation6 + $0x8] sm:$0xff]
    %v5905 = vld [vmem:[#allocation6 + $0x10] sm:$0xff]
    %v5906 = vld [vmem:[#allocation6 + $0x18] sm:$0xff]
    %v5907 = vld [vmem:[#allocation6 + $0x20] sm:$0xff]
    %v5908 = vld [vmem:[#allocation6 + $0x28] sm:$0xff]
    %v5909 = vld [vmem:[#allocation6 + $0x30] sm:$0xff]
    %v5910 = vld [vmem:[#allocation6 + $0x38] sm:$0xff]
    %v5911 = vld [vmem:[#allocation6 + $0x40] sm:$0xff]
    %v5912 = vld [vmem:[#allocation6 + $0x48] sm:$0xff]
    %v5913 = vld [vmem:[#allocation6 + $0x50] sm:$0xff]
    %v5914 = vld [vmem:[#allocation6 + $0x58] sm:$0xff]
    %v5915 = vld [vmem:[#allocation6 + $0x60] sm:$0xff]
    %v5916 = vld [vmem:[#allocation6 + $0x68] sm:$0xff]
    %v5917 = vld [vmem:[#allocation6 + $0x70] sm:$0xff]
    %v5918 = vld [vmem:[#allocation6 + $0x78] sm:$0xff]
    %v5919 = vld [vmem:[%s3533] sm:$0xff]
    %v5920 = vld [vmem:[%s4352] sm:$0xff]
    %v5921 = vld [vmem:[%s4352 + $0x8] sm:$0xff]
    %v5922 = vld [vmem:[%s4352 + $0x10] sm:$0xff]
    %v5923 = vld [vmem:[%s4352 + $0x18] sm:$0xff]
    %v5924 = vld [vmem:[%s4352 + $0x20] sm:$0xff]
    %v5925 = vld [vmem:[%s4352 + $0x28] sm:$0xff]
    %v5926 = vld [vmem:[%s4352 + $0x30] sm:$0xff]
    %v5927 = vld [vmem:[%s4352 + $0x38] sm:$0xff]
    %v5928 = vld [vmem:[%s4352 + $0x40] sm:$0xff]
    %v5929 = vld [vmem:[%s4352 + $0x48] sm:$0xff]
    %v5930 = vld [vmem:[%s4352 + $0x50] sm:$0xff]
    %v5931 = vld [vmem:[%s4352 + $0x58] sm:$0xff]
    %v5932 = vld [vmem:[%s4352 + $0x60] sm:$0xff]
    %v5933 = vld [vmem:[%s4352 + $0x68] sm:$0xff]
    %v5934 = vld [vmem:[%s4352 + $0x70] sm:$0xff]
    %v5935 = vld [vmem:[%s4352 + $0x78] sm:$0xff]
    %5936 = vmatprep.subr.mxu0 0.0
    %5937 = vmatpush1.msra.mxu0 %v5920
    %5938 = vmatprep.subr.mxu0 0.0
    %5939 = vmatpush1.msra.mxu0 %v5921
    %5940 = vmatprep.subr.mxu0 0.0
    %5941 = vmatpush1.msra.mxu0 %v5922
    %5942 = vmatprep.subr.mxu0 0.0
    %5943 = vmatpush1.msra.mxu0 %v5923
    %5944 = vmatprep.subr.mxu0 0.0
    %5945 = vmatpush1.msra.mxu0 %v5924
    %5946 = vmatprep.subr.mxu0 0.0
    %5947 = vmatpush1.msra.mxu0 %v5925
    %5948 = vmatprep.subr.mxu0 0.0
    %5949 = vmatpush1.msra.mxu0 %v5926
    %5950 = vmatprep.subr.mxu0 0.0
    %5951 = vmatpush1.msra.mxu0 %v5927
    %5952 = vmatprep.subr.mxu0 0.0
    %5953 = vmatpush1.msra.mxu0 %v5928
    %5954 = vmatprep.subr.mxu0 0.0
    %5955 = vmatpush1.msra.mxu0 %v5929
    %5956 = vmatprep.subr.mxu0 0.0
    %5957 = vmatpush1.msra.mxu0 %v5930
    %5958 = vmatprep.subr.mxu0 0.0
    %5959 = vmatpush1.msra.mxu0 %v5931
    %5960 = vmatprep.subr.mxu0 0.0
    %5961 = vmatpush1.msra.mxu0 %v5932
    %5962 = vmatprep.subr.mxu0 0.0
    %5963 = vmatpush1.msra.mxu0 %v5933
    %5964 = vmatprep.subr.mxu0 0.0
    %5965 = vmatpush1.msra.mxu0 %v5934
    %5966 = vmatprep.subr.mxu0 0.0
    %5967 = vmatpush1.msra.mxu0 %v5935
    %5968 = vmatprep.subr.mxu0 0.0
    %5969 = vmatpush1.msra.mxu0 0.0
    %5970 = vmatprep.subr.mxu0 0.0
    %5971 = vmatpush1.msra.mxu0 0.0
    %5972 = vmatprep.subr.mxu0 0.0
    %5973 = vmatpush1.msra.mxu0 0.0
    %5974 = vmatprep.subr.mxu0 0.0
    %5975 = vmatpush1.msra.mxu0 0.0
    %5976 = vmatprep.subr.mxu0 0.0
    %5977 = vmatpush1.msra.mxu0 0.0
    %5978 = vmatprep.subr.mxu0 0.0
    %5979 = vmatpush1.msra.mxu0 0.0
    %5980 = vmatprep.subr.mxu0 0.0
    %5981 = vmatpush1.msra.mxu0 0.0
    %5982 = vmatprep.subr.mxu0 0.0
    %5983 = vmatpush1.msra.mxu0 0.0
    %5984 = vmatprep.subr.mxu0 0.0
    %5985 = vmatpush1.msra.mxu0 0.0
    %5986 = vmatprep.subr.mxu0 0.0
    %5987 = vmatpush1.msra.mxu0 0.0
    %5988 = vmatprep.subr.mxu0 0.0
    %5989 = vmatpush1.msra.mxu0 0.0
    %5990 = vmatprep.subr.mxu0 0.0
    %5991 = vmatpush1.msra.mxu0 0.0
    %5992 = vmatprep.subr.mxu0 0.0
    %5993 = vmatpush1.msra.mxu0 0.0
    %5994 = vmatprep.subr.mxu0 0.0
    %5995 = vmatpush1.msra.mxu0 0.0
    %5996 = vmatprep.subr.mxu0 0.0
    %5997 = vmatpush1.msra.mxu0 0.0
    %5998 = vmatprep.subr.mxu0 0.0
    %5999 = vmatpush1.msra.mxu0 0.0
    %6000 = vmatprep.mubr.f32.mxu0 0.0
    %6001 = vmatmul.mubr.f32.gmra.mrb[0].mxu0 %v5919
    %v6002 = vpop.f32.mrb[0].mxu0
    %v6003 = vadd.f32 0.0, %v6002
    %v6004 = vpop.f32.mrb[0].mxu0
    %6005 = vdwg.mxu0
    %6006 = vmatprep.subr.mxu0 0.0
    %6007 = vmatpush1.msra.mxu0 %v5903
    %6008 = vmatprep.subr.mxu0 0.0
    %6009 = vmatpush1.msra.mxu0 %v5904
    %6010 = vmatprep.subr.mxu0 0.0
    %6011 = vmatpush1.msra.mxu0 %v5905
    %6012 = vmatprep.subr.mxu0 0.0
    %6013 = vmatpush1.msra.mxu0 %v5906
    %6014 = vmatprep.subr.mxu0 0.0
    %6015 = vmatpush1.msra.mxu0 %v5907
    %6016 = vmatprep.subr.mxu0 0.0
    %6017 = vmatpush1.msra.mxu0 %v5908
    %6018 = vmatprep.subr.mxu0 0.0
    %6019 = vmatpush1.msra.mxu0 %v5909
    %6020 = vmatprep.subr.mxu0 0.0
    %6021 = vmatpush1.msra.mxu0 %v5910
    %6022 = vmatprep.subr.mxu0 0.0
    %6023 = vmatpush1.msra.mxu0 %v5911
    %6024 = vmatprep.subr.mxu0 0.0
    %6025 = vmatpush1.msra.mxu0 %v5912
    %6026 = vmatprep.subr.mxu0 0.0
    %6027 = vmatpush1.msra.mxu0 %v5913
    %6028 = vmatprep.subr.mxu0 0.0
    %6029 = vmatpush1.msra.mxu0 %v5914
    %6030 = vmatprep.subr.mxu0 0.0
    %6031 = vmatpush1.msra.mxu0 %v5915
    %6032 = vmatprep.subr.mxu0 0.0
    %6033 = vmatpush1.msra.mxu0 %v5916
    %6034 = vmatprep.subr.mxu0 0.0
    %6035 = vmatpush1.msra.mxu0 %v5917
    %6036 = vmatprep.subr.mxu0 0.0
    %6037 = vmatpush1.msra.mxu0 %v5918
    %6038 = vmatprep.subr.mxu0 0.0
    %6039 = vmatpush1.msra.mxu0 0.0
    %6040 = vmatprep.subr.mxu0 0.0
    %6041 = vmatpush1.msra.mxu0 0.0
    %6042 = vmatprep.subr.mxu0 0.0
    %6043 = vmatpush1.msra.mxu0 0.0
    %6044 = vmatprep.subr.mxu0 0.0
    %6045 = vmatpush1.msra.mxu0 0.0
    %6046 = vmatprep.subr.mxu0 0.0
    %6047 = vmatpush1.msra.mxu0 0.0
    %6048 = vmatprep.subr.mxu0 0.0
    %6049 = vmatpush1.msra.mxu0 0.0
    %6050 = vmatprep.subr.mxu0 0.0
    %6051 = vmatpush1.msra.mxu0 0.0
    %6052 = vmatprep.subr.mxu0 0.0
    %6053 = vmatpush1.msra.mxu0 0.0
    %6054 = vmatprep.subr.mxu0 0.0
    %6055 = vmatpush1.msra.mxu0 0.0
    %6056 = vmatprep.subr.mxu0 0.0
    %6057 = vmatpush1.msra.mxu0 0.0
    %6058 = vmatprep.subr.mxu0 0.0
    %6059 = vmatpush1.msra.mxu0 0.0
    %6060 = vmatprep.subr.mxu0 0.0
    %6061 = vmatpush1.msra.mxu0 0.0
    %6062 = vmatprep.subr.mxu0 0.0
    %6063 = vmatpush1.msra.mxu0 0.0
    %6064 = vmatprep.subr.mxu0 0.0
    %6065 = vmatpush1.msra.mxu0 0.0
    %6066 = vmatprep.subr.mxu0 0.0
    %6067 = vmatpush1.msra.mxu0 0.0
    %6068 = vmatprep.subr.mxu0 0.0
    %6069 = vmatpush1.msra.mxu0 0.0
    %6070 = vmatprep.mubr.f32.mxu0 0.0
    %6071 = vmatmul.mubr.f32.gmra.mrb[0].mxu0 %v5902
    %v6072 = vpop.f32.mrb[0].mxu0
    %v6073 = vadd.f32 %v6003, %v6072
    %v6074 = vpop.f32.mrb[0].mxu0
    %6075 = vdwg.mxu0
    %v6076 = vld [vmem:[%s3805] sm:$0xff]
    %v6077 = vld [vmem:[%s4370] sm:$0xff]
    %v6078 = vld [vmem:[%s4370 + $0x8] sm:$0xff]
    %v6079 = vld [vmem:[%s4370 + $0x10] sm:$0xff]
    %v6080 = vld [vmem:[%s4370 + $0x18] sm:$0xff]
    %v6081 = vld [vmem:[%s4370 + $0x20] sm:$0xff]
    %v6082 = vld [vmem:[%s4370 + $0x28] sm:$0xff]
    %v6083 = vld [vmem:[%s4370 + $0x30] sm:$0xff]
    %v6084 = vld [vmem:[%s4370 + $0x38] sm:$0xff]
    %v6085 = vld [vmem:[%s4370 + $0x40] sm:$0xff]
    %v6086 = vld [vmem:[%s4370 + $0x48] sm:$0xff]
    %v6087 = vld [vmem:[%s4370 + $0x50] sm:$0xff]
    %v6088 = vld [vmem:[%s4370 + $0x58] sm:$0xff]
    %v6089 = vld [vmem:[%s4370 + $0x60] sm:$0xff]
    %v6090 = vld [vmem:[%s4370 + $0x68] sm:$0xff]
    %v6091 = vld [vmem:[%s4370 + $0x70] sm:$0xff]
    %v6092 = vld [vmem:[%s4370 + $0x78] sm:$0xff]
    %6093 = vmatprep.subr.mxu0 0.0
    %6094 = vmatpush1.msra.mxu0 %v6077
    %6095 = vmatprep.subr.mxu0 0.0
    %6096 = vmatpush1.msra.mxu0 %v6078
    %6097 = vmatprep.subr.mxu0 0.0
    %6098 = vmatpush1.msra.mxu0 %v6079
    %6099 = vmatprep.subr.mxu0 0.0
    %6100 = vmatpush1.msra.mxu0 %v6080
    %6101 = vmatprep.subr.mxu0 0.0
    %6102 = vmatpush1.msra.mxu0 %v6081
    %6103 = vmatprep.subr.mxu0 0.0
    %6104 = vmatpush1.msra.mxu0 %v6082
    %6105 = vmatprep.subr.mxu0 0.0
    %6106 = vmatpush1.msra.mxu0 %v6083
    %6107 = vmatprep.subr.mxu0 0.0
    %6108 = vmatpush1.msra.mxu0 %v6084
    %6109 = vmatprep.subr.mxu0 0.0
    %6110 = vmatpush1.msra.mxu0 %v6085
    %6111 = vmatprep.subr.mxu0 0.0
    %6112 = vmatpush1.msra.mxu0 %v6086
    %6113 = vmatprep.subr.mxu0 0.0
    %6114 = vmatpush1.msra.mxu0 %v6087
    %6115 = vmatprep.subr.mxu0 0.0
    %6116 = vmatpush1.msra.mxu0 %v6088
    %6117 = vmatprep.subr.mxu0 0.0
    %6118 = vmatpush1.msra.mxu0 %v6089
    %6119 = vmatprep.subr.mxu0 0.0
    %6120 = vmatpush1.msra.mxu0 %v6090
    %6121 = vmatprep.subr.mxu0 0.0
    %6122 = vmatpush1.msra.mxu0 %v6091
    %6123 = vmatprep.subr.mxu0 0.0
    %6124 = vmatpush1.msra.mxu0 %v6092
    %6125 = vmatprep.subr.mxu0 0.0
    %6126 = vmatpush1.msra.mxu0 0.0
    %6127 = vmatprep.subr.mxu0 0.0
    %6128 = vmatpush1.msra.mxu0 0.0
    %6129 = vmatprep.subr.mxu0 0.0
    %6130 = vmatpush1.msra.mxu0 0.0
    %6131 = vmatprep.subr.mxu0 0.0
    %6132 = vmatpush1.msra.mxu0 0.0
    %6133 = vmatprep.subr.mxu0 0.0
    %6134 = vmatpush1.msra.mxu0 0.0
    %6135 = vmatprep.subr.mxu0 0.0
    %6136 = vmatpush1.msra.mxu0 0.0
    %6137 = vmatprep.subr.mxu0 0.0
    %6138 = vmatpush1.msra.mxu0 0.0
    %6139 = vmatprep.subr.mxu0 0.0
    %6140 = vmatpush1.msra.mxu0 0.0
    %6141 = vmatprep.subr.mxu0 0.0
    %6142 = vmatpush1.msra.mxu0 0.0
    %6143 = vmatprep.subr.mxu0 0.0
    %6144 = vmatpush1.msra.mxu0 0.0
    %6145 = vmatprep.subr.mxu0 0.0
    %6146 = vmatpush1.msra.mxu0 0.0
    %6147 = vmatprep.subr.mxu0 0.0
    %6148 = vmatpush1.msra.mxu0 0.0
    %6149 = vmatprep.subr.mxu0 0.0
    %6150 = vmatpush1.msra.mxu0 0.0
    %6151 = vmatprep.subr.mxu0 0.0
    %6152 = vmatpush1.msra.mxu0 0.0
    %6153 = vmatprep.subr.mxu0 0.0
    %6154 = vmatpush1.msra.mxu0 0.0
    %6155 = vmatprep.subr.mxu0 0.0
    %6156 = vmatpush1.msra.mxu0 0.0
    %6157 = vmatprep.mubr.f32.mxu0 0.0
    %6158 = vmatmul.mubr.f32.gmra.mrb[0].mxu0 %v6076
    %v6159 = vpop.f32.mrb[0].mxu0
    %v6160 = vadd.f32 0.0, %v6159
    %v6161 = vpop.f32.mrb[0].mxu0
    %6162 = vdwg.mxu0
    %v6163 = vadd.f32 %v6073, %v6160
    %v6164 = vld [vmem:[%s4] sm:$0x1]
    %v6166 = vlaneseq
    %v6167 = vshrl.u32 %v6166, 7
    %v6168 = vsub.s32 0, %v6167
    %v6169 = vrot.slane %v6164, %v6168
    %v6171 = vadd.f32 %v6163, %v6169
    %v6172 = vmax.f32 %v6171, 0.0
    %s6173 = scalar_lea.vmem [#allocation3], 48
    %6174 = vst [vmem:[%s6173] sm:$0xff] %v6172
    %v6175 = vld [vmem:[%s3805] sm:$0xff]
    %v6176 = vld [vmem:[#allocation6] sm:$0xff]
    %v6177 = vld [vmem:[#allocation6 + $0x8] sm:$0xff]
    %v6178 = vld [vmem:[#allocation6 + $0x10] sm:$0xff]
    %v6179 = vld [vmem:[#allocation6 + $0x18] sm:$0xff]
    %v6180 = vld [vmem:[#allocation6 + $0x20] sm:$0xff]
    %v6181 = vld [vmem:[#allocation6 + $0x28] sm:$0xff]
    %v6182 = vld [vmem:[#allocation6 + $0x30] sm:$0xff]
    %v6183 = vld [vmem:[#allocation6 + $0x38] sm:$0xff]
    %v6184 = vld [vmem:[#allocation6 + $0x40] sm:$0xff]
    %v6185 = vld [vmem:[#allocation6 + $0x48] sm:$0xff]
    %v6186 = vld [vmem:[#allocation6 + $0x50] sm:$0xff]
    %v6187 = vld [vmem:[#allocation6 + $0x58] sm:$0xff]
    %v6188 = vld [vmem:[#allocation6 + $0x60] sm:$0xff]
    %v6189 = vld [vmem:[#allocation6 + $0x68] sm:$0xff]
    %v6190 = vld [vmem:[#allocation6 + $0x70] sm:$0xff]
    %v6191 = vld [vmem:[#allocation6 + $0x78] sm:$0xff]
    %v6192 = vld [vmem:[%s4077] sm:$0xff]
    %v6193 = vld [vmem:[%s4352] sm:$0xff]
    %v6194 = vld [vmem:[%s4352 + $0x8] sm:$0xff]
    %v6195 = vld [vmem:[%s4352 + $0x10] sm:$0xff]
    %v6196 = vld [vmem:[%s4352 + $0x18] sm:$0xff]
    %v6197 = vld [vmem:[%s4352 + $0x20] sm:$0xff]
    %v6198 = vld [vmem:[%s4352 + $0x28] sm:$0xff]
    %v6199 = vld [vmem:[%s4352 + $0x30] sm:$0xff]
    %v6200 = vld [vmem:[%s4352 + $0x38] sm:$0xff]
    %v6201 = vld [vmem:[%s4352 + $0x40] sm:$0xff]
    %v6202 = vld [vmem:[%s4352 + $0x48] sm:$0xff]
    %v6203 = vld [vmem:[%s4352 + $0x50] sm:$0xff]
    %v6204 = vld [vmem:[%s4352 + $0x58] sm:$0xff]
    %v6205 = vld [vmem:[%s4352 + $0x60] sm:$0xff]
    %v6206 = vld [vmem:[%s4352 + $0x68] sm:$0xff]
    %v6207 = vld [vmem:[%s4352 + $0x70] sm:$0xff]
    %v6208 = vld [vmem:[%s4352 + $0x78] sm:$0xff]
    %6209 = vmatprep.subr.mxu0 0.0
    %6210 = vmatpush1.msra.mxu0 %v6193
    %6211 = vmatprep.subr.mxu0 0.0
    %6212 = vmatpush1.msra.mxu0 %v6194
    %6213 = vmatprep.subr.mxu0 0.0
    %6214 = vmatpush1.msra.mxu0 %v6195
    %6215 = vmatprep.subr.mxu0 0.0
    %6216 = vmatpush1.msra.mxu0 %v6196
    %6217 = vmatprep.subr.mxu0 0.0
    %6218 = vmatpush1.msra.mxu0 %v6197
    %6219 = vmatprep.subr.mxu0 0.0
    %6220 = vmatpush1.msra.mxu0 %v6198
    %6221 = vmatprep.subr.mxu0 0.0
    %6222 = vmatpush1.msra.mxu0 %v6199
    %6223 = vmatprep.subr.mxu0 0.0
    %6224 = vmatpush1.msra.mxu0 %v6200
    %6225 = vmatprep.subr.mxu0 0.0
    %6226 = vmatpush1.msra.mxu0 %v6201
    %6227 = vmatprep.subr.mxu0 0.0
    %6228 = vmatpush1.msra.mxu0 %v6202
    %6229 = vmatprep.subr.mxu0 0.0
    %6230 = vmatpush1.msra.mxu0 %v6203
    %6231 = vmatprep.subr.mxu0 0.0
    %6232 = vmatpush1.msra.mxu0 %v6204
    %6233 = vmatprep.subr.mxu0 0.0
    %6234 = vmatpush1.msra.mxu0 %v6205
    %6235 = vmatprep.subr.mxu0 0.0
    %6236 = vmatpush1.msra.mxu0 %v6206
    %6237 = vmatprep.subr.mxu0 0.0
    %6238 = vmatpush1.msra.mxu0 %v6207
    %6239 = vmatprep.subr.mxu0 0.0
    %6240 = vmatpush1.msra.mxu0 %v6208
    %6241 = vmatprep.subr.mxu0 0.0
    %6242 = vmatpush1.msra.mxu0 0.0
    %6243 = vmatprep.subr.mxu0 0.0
    %6244 = vmatpush1.msra.mxu0 0.0
    %6245 = vmatprep.subr.mxu0 0.0
    %6246 = vmatpush1.msra.mxu0 0.0
    %6247 = vmatprep.subr.mxu0 0.0
    %6248 = vmatpush1.msra.mxu0 0.0
    %6249 = vmatprep.subr.mxu0 0.0
    %6250 = vmatpush1.msra.mxu0 0.0
    %6251 = vmatprep.subr.mxu0 0.0
    %6252 = vmatpush1.msra.mxu0 0.0
    %6253 = vmatprep.subr.mxu0 0.0
    %6254 = vmatpush1.msra.mxu0 0.0
    %6255 = vmatprep.subr.mxu0 0.0
    %6256 = vmatpush1.msra.mxu0 0.0
    %6257 = vmatprep.subr.mxu0 0.0
    %6258 = vmatpush1.msra.mxu0 0.0
    %6259 = vmatprep.subr.mxu0 0.0
    %6260 = vmatpush1.msra.mxu0 0.0
    %6261 = vmatprep.subr.mxu0 0.0
    %6262 = vmatpush1.msra.mxu0 0.0
    %6263 = vmatprep.subr.mxu0 0.0
    %6264 = vmatpush1.msra.mxu0 0.0
    %6265 = vmatprep.subr.mxu0 0.0
    %6266 = vmatpush1.msra.mxu0 0.0
    %6267 = vmatprep.subr.mxu0 0.0
    %6268 = vmatpush1.msra.mxu0 0.0
    %6269 = vmatprep.subr.mxu0 0.0
    %6270 = vmatpush1.msra.mxu0 0.0
    %6271 = vmatprep.subr.mxu0 0.0
    %6272 = vmatpush1.msra.mxu0 0.0
    %6273 = vmatprep.mubr.f32.mxu0 0.0
    %6274 = vmatmul.mubr.f32.gmra.mrb[0].mxu0 %v6192
    %v6275 = vpop.f32.mrb[0].mxu0
    %v6276 = vadd.f32 0.0, %v6275
    %v6277 = vpop.f32.mrb[0].mxu0
    %6278 = vdwg.mxu0
    %6279 = vmatprep.subr.mxu0 0.0
    %6280 = vmatpush1.msra.mxu0 %v6176
    %6281 = vmatprep.subr.mxu0 0.0
    %6282 = vmatpush1.msra.mxu0 %v6177
    %6283 = vmatprep.subr.mxu0 0.0
    %6284 = vmatpush1.msra.mxu0 %v6178
    %6285 = vmatprep.subr.mxu0 0.0
    %6286 = vmatpush1.msra.mxu0 %v6179
    %6287 = vmatprep.subr.mxu0 0.0
    %6288 = vmatpush1.msra.mxu0 %v6180
    %6289 = vmatprep.subr.mxu0 0.0
    %6290 = vmatpush1.msra.mxu0 %v6181
    %6291 = vmatprep.subr.mxu0 0.0
    %6292 = vmatpush1.msra.mxu0 %v6182
    %6293 = vmatprep.subr.mxu0 0.0
    %6294 = vmatpush1.msra.mxu0 %v6183
    %6295 = vmatprep.subr.mxu0 0.0
    %6296 = vmatpush1.msra.mxu0 %v6184
    %6297 = vmatprep.subr.mxu0 0.0
    %6298 = vmatpush1.msra.mxu0 %v6185
    %6299 = vmatprep.subr.mxu0 0.0
    %6300 = vmatpush1.msra.mxu0 %v6186
    %6301 = vmatprep.subr.mxu0 0.0
    %6302 = vmatpush1.msra.mxu0 %v6187
    %6303 = vmatprep.subr.mxu0 0.0
    %6304 = vmatpush1.msra.mxu0 %v6188
    %6305 = vmatprep.subr.mxu0 0.0
    %6306 = vmatpush1.msra.mxu0 %v6189
    %6307 = vmatprep.subr.mxu0 0.0
    %6308 = vmatpush1.msra.mxu0 %v6190
    %6309 = vmatprep.subr.mxu0 0.0
    %6310 = vmatpush1.msra.mxu0 %v6191
    %6311 = vmatprep.subr.mxu0 0.0
    %6312 = vmatpush1.msra.mxu0 0.0
    %6313 = vmatprep.subr.mxu0 0.0
    %6314 = vmatpush1.msra.mxu0 0.0
    %6315 = vmatprep.subr.mxu0 0.0
    %6316 = vmatpush1.msra.mxu0 0.0
    %6317 = vmatprep.subr.mxu0 0.0
    %6318 = vmatpush1.msra.mxu0 0.0
    %6319 = vmatprep.subr.mxu0 0.0
    %6320 = vmatpush1.msra.mxu0 0.0
    %6321 = vmatprep.subr.mxu0 0.0
    %6322 = vmatpush1.msra.mxu0 0.0
    %6323 = vmatprep.subr.mxu0 0.0
    %6324 = vmatpush1.msra.mxu0 0.0
    %6325 = vmatprep.subr.mxu0 0.0
    %6326 = vmatpush1.msra.mxu0 0.0
    %6327 = vmatprep.subr.mxu0 0.0
    %6328 = vmatpush1.msra.mxu0 0.0
    %6329 = vmatprep.subr.mxu0 0.0
    %6330 = vmatpush1.msra.mxu0 0.0
    %6331 = vmatprep.subr.mxu0 0.0
    %6332 = vmatpush1.msra.mxu0 0.0
    %6333 = vmatprep.subr.mxu0 0.0
    %6334 = vmatpush1.msra.mxu0 0.0
    %6335 = vmatprep.subr.mxu0 0.0
    %6336 = vmatpush1.msra.mxu0 0.0
    %6337 = vmatprep.subr.mxu0 0.0
    %6338 = vmatpush1.msra.mxu0 0.0
    %6339 = vmatprep.subr.mxu0 0.0
    %6340 = vmatpush1.msra.mxu0 0.0
    %6341 = vmatprep.subr.mxu0 0.0
    %6342 = vmatpush1.msra.mxu0 0.0
    %6343 = vmatprep.mubr.f32.mxu0 0.0
    %6344 = vmatmul.mubr.f32.gmra.mrb[0].mxu0 %v6175
    %v6345 = vpop.f32.mrb[0].mxu0
    %v6346 = vadd.f32 %v6276, %v6345
    %v6347 = vpop.f32.mrb[0].mxu0
    %6348 = vdwg.mxu0
    %v6349 = vld [vmem:[%s4349] sm:$0xff]
    %v6350 = vld [vmem:[%s4370] sm:$0xff]
    %v6351 = vld [vmem:[%s4370 + $0x8] sm:$0xff]
    %v6352 = vld [vmem:[%s4370 + $0x10] sm:$0xff]
    %v6353 = vld [vmem:[%s4370 + $0x18] sm:$0xff]
    %v6354 = vld [vmem:[%s4370 + $0x20] sm:$0xff]
    %v6355 = vld [vmem:[%s4370 + $0x28] sm:$0xff]
    %v6356 = vld [vmem:[%s4370 + $0x30] sm:$0xff]
    %v6357 = vld [vmem:[%s4370 + $0x38] sm:$0xff]
    %v6358 = vld [vmem:[%s4370 + $0x40] sm:$0xff]
    %v6359 = vld [vmem:[%s4370 + $0x48] sm:$0xff]
    %v6360 = vld [vmem:[%s4370 + $0x50] sm:$0xff]
    %v6361 = vld [vmem:[%s4370 + $0x58] sm:$0xff]
    %v6362 = vld [vmem:[%s4370 + $0x60] sm:$0xff]
    %v6363 = vld [vmem:[%s4370 + $0x68] sm:$0xff]
    %v6364 = vld [vmem:[%s4370 + $0x70] sm:$0xff]
    %v6365 = vld [vmem:[%s4370 + $0x78] sm:$0xff]
    %6366 = vmatprep.subr.mxu0 0.0
    %6367 = vmatpush1.msra.mxu0 %v6350
    %6368 = vmatprep.subr.mxu0 0.0
    %6369 = vmatpush1.msra.mxu0 %v6351
    %6370 = vmatprep.subr.mxu0 0.0
    %6371 = vmatpush1.msra.mxu0 %v6352
    %6372 = vmatprep.subr.mxu0 0.0
    %6373 = vmatpush1.msra.mxu0 %v6353
    %6374 = vmatprep.subr.mxu0 0.0
    %6375 = vmatpush1.msra.mxu0 %v6354
    %6376 = vmatprep.subr.mxu0 0.0
    %6377 = vmatpush1.msra.mxu0 %v6355
    %6378 = vmatprep.subr.mxu0 0.0
    %6379 = vmatpush1.msra.mxu0 %v6356
    %6380 = vmatprep.subr.mxu0 0.0
    %6381 = vmatpush1.msra.mxu0 %v6357
    %6382 = vmatprep.subr.mxu0 0.0
    %6383 = vmatpush1.msra.mxu0 %v6358
    %6384 = vmatprep.subr.mxu0 0.0
    %6385 = vmatpush1.msra.mxu0 %v6359
    %6386 = vmatprep.subr.mxu0 0.0
    %6387 = vmatpush1.msra.mxu0 %v6360
    %6388 = vmatprep.subr.mxu0 0.0
    %6389 = vmatpush1.msra.mxu0 %v6361
    %6390 = vmatprep.subr.mxu0 0.0
    %6391 = vmatpush1.msra.mxu0 %v6362
    %6392 = vmatprep.subr.mxu0 0.0
    %6393 = vmatpush1.msra.mxu0 %v6363
    %6394 = vmatprep.subr.mxu0 0.0
    %6395 = vmatpush1.msra.mxu0 %v6364
    %6396 = vmatprep.subr.mxu0 0.0
    %6397 = vmatpush1.msra.mxu0 %v6365
    %6398 = vmatprep.subr.mxu0 0.0
    %6399 = vmatpush1.msra.mxu0 0.0
    %6400 = vmatprep.subr.mxu0 0.0
    %6401 = vmatpush1.msra.mxu0 0.0
    %6402 = vmatprep.subr.mxu0 0.0
    %6403 = vmatpush1.msra.mxu0 0.0
    %6404 = vmatprep.subr.mxu0 0.0
    %6405 = vmatpush1.msra.mxu0 0.0
    %6406 = vmatprep.subr.mxu0 0.0
    %6407 = vmatpush1.msra.mxu0 0.0
    %6408 = vmatprep.subr.mxu0 0.0
    %6409 = vmatpush1.msra.mxu0 0.0
    %6410 = vmatprep.subr.mxu0 0.0
    %6411 = vmatpush1.msra.mxu0 0.0
    %6412 = vmatprep.subr.mxu0 0.0
    %6413 = vmatpush1.msra.mxu0 0.0
    %6414 = vmatprep.subr.mxu0 0.0
    %6415 = vmatpush1.msra.mxu0 0.0
    %6416 = vmatprep.subr.mxu0 0.0
    %6417 = vmatpush1.msra.mxu0 0.0
    %6418 = vmatprep.subr.mxu0 0.0
    %6419 = vmatpush1.msra.mxu0 0.0
    %6420 = vmatprep.subr.mxu0 0.0
    %6421 = vmatpush1.msra.mxu0 0.0
    %6422 = vmatprep.subr.mxu0 0.0
    %6423 = vmatpush1.msra.mxu0 0.0
    %6424 = vmatprep.subr.mxu0 0.0
    %6425 = vmatpush1.msra.mxu0 0.0
    %6426 = vmatprep.subr.mxu0 0.0
    %6427 = vmatpush1.msra.mxu0 0.0
    %6428 = vmatprep.subr.mxu0 0.0
    %6429 = vmatpush1.msra.mxu0 0.0
    %6430 = vmatprep.mubr.f32.mxu0 0.0
    %6431 = vmatmul.mubr.f32.gmra.mrb[0].mxu0 %v6349
    %v6432 = vpop.f32.mrb[0].mxu0
    %v6433 = vadd.f32 0.0, %v6432
    %v6434 = vpop.f32.mrb[0].mxu0
    %6435 = vdwg.mxu0
    %v6436 = vadd.f32 %v6346, %v6433
    %v6437 = vld [vmem:[%s4] sm:$0x1]
    %v6439 = vlaneseq
    %v6440 = vshrl.u32 %v6439, 7
    %v6441 = vsub.s32 0, %v6440
    %v6442 = vrot.slane %v6437, %v6441
    %v6444 = vadd.f32 %v6436, %v6442
    %v6445 = vmax.f32 %v6444, 0.0
    %s6446 = scalar_lea.vmem [#allocation3], 56
    %6447 = vst [vmem:[%s6446] sm:$0xff] %v6445
    %v6448 = vld [vmem:[#allocation3] sm:$0xff]
    %s6449 = scalar_lea.vmem [#allocation8], 128
    %v6450 = vld [vmem:[%s6449] sm:$0xff]
    %v6451 = vld [vmem:[%s6449 + $0x8] sm:$0xff]
    %v6452 = vld [vmem:[%s6449 + $0x10] sm:$0xff]
    %v6453 = vld [vmem:[%s6449 + $0x18] sm:$0xff]
    %v6454 = vld [vmem:[%s6449 + $0x20] sm:$0xff]
    %v6455 = vld [vmem:[%s6449 + $0x28] sm:$0xff]
    %v6456 = vld [vmem:[%s6449 + $0x30] sm:$0xff]
    %v6457 = vld [vmem:[%s6449 + $0x38] sm:$0xff]
    %v6458 = vld [vmem:[%s6449 + $0x40] sm:$0xff]
    %v6459 = vld [vmem:[%s6449 + $0x48] sm:$0xff]
    %v6460 = vld [vmem:[%s6449 + $0x50] sm:$0xff]
    %v6461 = vld [vmem:[%s6449 + $0x58] sm:$0xff]
    %v6462 = vld [vmem:[%s6449 + $0x60] sm:$0xff]
    %v6463 = vld [vmem:[%s6449 + $0x68] sm:$0xff]
    %v6464 = vld [vmem:[%s6449 + $0x70] sm:$0xff]
    %v6465 = vld [vmem:[%s6449 + $0x78] sm:$0xff]
    %v6466 = vld [vmem:[%s4808] sm:$0xff]
    %s6467 = scalar_lea.vmem [#allocation8], 256
    %v6468 = vld [vmem:[%s6467] sm:$0xff]
    %v6469 = vld [vmem:[%s6467 + $0x8] sm:$0xff]
    %v6470 = vld [vmem:[%s6467 + $0x10] sm:$0xff]
    %v6471 = vld [vmem:[%s6467 + $0x18] sm:$0xff]
    %v6472 = vld [vmem:[%s6467 + $0x20] sm:$0xff]
    %v6473 = vld [vmem:[%s6467 + $0x28] sm:$0xff]
    %v6474 = vld [vmem:[%s6467 + $0x30] sm:$0xff]
    %v6475 = vld [vmem:[%s6467 + $0x38] sm:$0xff]
    %v6476 = vld [vmem:[%s6467 + $0x40] sm:$0xff]
    %v6477 = vld [vmem:[%s6467 + $0x48] sm:$0xff]
    %v6478 = vld [vmem:[%s6467 + $0x50] sm:$0xff]
    %v6479 = vld [vmem:[%s6467 + $0x58] sm:$0xff]
    %v6480 = vld [vmem:[%s6467 + $0x60] sm:$0xff]
    %v6481 = vld [vmem:[%s6467 + $0x68] sm:$0xff]
    %v6482 = vld [vmem:[%s6467 + $0x70] sm:$0xff]
    %v6483 = vld [vmem:[%s6467 + $0x78] sm:$0xff]
    %6484 = vmatprep.subr.mxu0 0.0
    %6485 = vmatpush1.msra.mxu0 %v6468
    %6486 = vmatprep.subr.mxu0 0.0
    %6487 = vmatpush1.msra.mxu0 %v6469
    %6488 = vmatprep.subr.mxu0 0.0
    %6489 = vmatpush1.msra.mxu0 %v6470
    %6490 = vmatprep.subr.mxu0 0.0
    %6491 = vmatpush1.msra.mxu0 %v6471
    %6492 = vmatprep.subr.mxu0 0.0
    %6493 = vmatpush1.msra.mxu0 %v6472
    %6494 = vmatprep.subr.mxu0 0.0
    %6495 = vmatpush1.msra.mxu0 %v6473
    %6496 = vmatprep.subr.mxu0 0.0
    %6497 = vmatpush1.msra.mxu0 %v6474
    %6498 = vmatprep.subr.mxu0 0.0
    %6499 = vmatpush1.msra.mxu0 %v6475
    %6500 = vmatprep.subr.mxu0 0.0
    %6501 = vmatpush1.msra.mxu0 %v6476
    %6502 = vmatprep.subr.mxu0 0.0
    %6503 = vmatpush1.msra.mxu0 %v6477
    %6504 = vmatprep.subr.mxu0 0.0
    %6505 = vmatpush1.msra.mxu0 %v6478
    %6506 = vmatprep.subr.mxu0 0.0
    %6507 = vmatpush1.msra.mxu0 %v6479
    %6508 = vmatprep.subr.mxu0 0.0
    %6509 = vmatpush1.msra.mxu0 %v6480
    %6510 = vmatprep.subr.mxu0 0.0
    %6511 = vmatpush1.msra.mxu0 %v6481
    %6512 = vmatprep.subr.mxu0 0.0
    %6513 = vmatpush1.msra.mxu0 %v6482
    %6514 = vmatprep.subr.mxu0 0.0
    %6515 = vmatpush1.msra.mxu0 %v6483
    %6516 = vmatprep.subr.mxu0 0.0
    %6517 = vmatpush1.msra.mxu0 0.0
    %6518 = vmatprep.subr.mxu0 0.0
    %6519 = vmatpush1.msra.mxu0 0.0
    %6520 = vmatprep.subr.mxu0 0.0
    %6521 = vmatpush1.msra.mxu0 0.0
    %6522 = vmatprep.subr.mxu0 0.0
    %6523 = vmatpush1.msra.mxu0 0.0
    %6524 = vmatprep.subr.mxu0 0.0
    %6525 = vmatpush1.msra.mxu0 0.0
    %6526 = vmatprep.subr.mxu0 0.0
    %6527 = vmatpush1.msra.mxu0 0.0
    %6528 = vmatprep.subr.mxu0 0.0
    %6529 = vmatpush1.msra.mxu0 0.0
    %6530 = vmatprep.subr.mxu0 0.0
    %6531 = vmatpush1.msra.mxu0 0.0
    %6532 = vmatprep.subr.mxu0 0.0
    %6533 = vmatpush1.msra.mxu0 0.0
    %6534 = vmatprep.subr.mxu0 0.0
    %6535 = vmatpush1.msra.mxu0 0.0
    %6536 = vmatprep.subr.mxu0 0.0
    %6537 = vmatpush1.msra.mxu0 0.0
    %6538 = vmatprep.subr.mxu0 0.0
    %6539 = vmatpush1.msra.mxu0 0.0
    %6540 = vmatprep.subr.mxu0 0.0
    %6541 = vmatpush1.msra.mxu0 0.0
    %6542 = vmatprep.subr.mxu0 0.0
    %6543 = vmatpush1.msra.mxu0 0.0
    %6544 = vmatprep.subr.mxu0 0.0
    %6545 = vmatpush1.msra.mxu0 0.0
    %6546 = vmatprep.subr.mxu0 0.0
    %6547 = vmatpush1.msra.mxu0 0.0
    %6548 = vmatprep.mubr.f32.mxu0 0.0
    %6549 = vmatmul.mubr.f32.gmra.mrb[0].mxu0 %v6466
    %v6550 = vpop.f32.mrb[0].mxu0
    %v6551 = vadd.f32 0.0, %v6550
    %v6552 = vpop.f32.mrb[0].mxu0
    %6553 = vdwg.mxu0
    %6554 = vmatprep.subr.mxu0 0.0
    %6555 = vmatpush1.msra.mxu0 %v6450
    %6556 = vmatprep.subr.mxu0 0.0
    %6557 = vmatpush1.msra.mxu0 %v6451
    %6558 = vmatprep.subr.mxu0 0.0
    %6559 = vmatpush1.msra.mxu0 %v6452
    %6560 = vmatprep.subr.mxu0 0.0
    %6561 = vmatpush1.msra.mxu0 %v6453
    %6562 = vmatprep.subr.mxu0 0.0
    %6563 = vmatpush1.msra.mxu0 %v6454
    %6564 = vmatprep.subr.mxu0 0.0
    %6565 = vmatpush1.msra.mxu0 %v6455
    %6566 = vmatprep.subr.mxu0 0.0
    %6567 = vmatpush1.msra.mxu0 %v6456
    %6568 = vmatprep.subr.mxu0 0.0
    %6569 = vmatpush1.msra.mxu0 %v6457
    %6570 = vmatprep.subr.mxu0 0.0
    %6571 = vmatpush1.msra.mxu0 %v6458
    %6572 = vmatprep.subr.mxu0 0.0
    %6573 = vmatpush1.msra.mxu0 %v6459
    %6574 = vmatprep.subr.mxu0 0.0
    %6575 = vmatpush1.msra.mxu0 %v6460
    %6576 = vmatprep.subr.mxu0 0.0
    %6577 = vmatpush1.msra.mxu0 %v6461
    %6578 = vmatprep.subr.mxu0 0.0
    %6579 = vmatpush1.msra.mxu0 %v6462
    %6580 = vmatprep.subr.mxu0 0.0
    %6581 = vmatpush1.msra.mxu0 %v6463
    %6582 = vmatprep.subr.mxu0 0.0
    %6583 = vmatpush1.msra.mxu0 %v6464
    %6584 = vmatprep.subr.mxu0 0.0
    %6585 = vmatpush1.msra.mxu0 %v6465
    %6586 = vmatprep.subr.mxu0 0.0
    %6587 = vmatpush1.msra.mxu0 0.0
    %6588 = vmatprep.subr.mxu0 0.0
    %6589 = vmatpush1.msra.mxu0 0.0
    %6590 = vmatprep.subr.mxu0 0.0
    %6591 = vmatpush1.msra.mxu0 0.0
    %6592 = vmatprep.subr.mxu0 0.0
    %6593 = vmatpush1.msra.mxu0 0.0
    %6594 = vmatprep.subr.mxu0 0.0
    %6595 = vmatpush1.msra.mxu0 0.0
    %6596 = vmatprep.subr.mxu0 0.0
    %6597 = vmatpush1.msra.mxu0 0.0
    %6598 = vmatprep.subr.mxu0 0.0
    %6599 = vmatpush1.msra.mxu0 0.0
    %6600 = vmatprep.subr.mxu0 0.0
    %6601 = vmatpush1.msra.mxu0 0.0
    %6602 = vmatprep.subr.mxu0 0.0
    %6603 = vmatpush1.msra.mxu0 0.0
    %6604 = vmatprep.subr.mxu0 0.0
    %6605 = vmatpush1.msra.mxu0 0.0
    %6606 = vmatprep.subr.mxu0 0.0
    %6607 = vmatpush1.msra.mxu0 0.0
    %6608 = vmatprep.subr.mxu0 0.0
    %6609 = vmatpush1.msra.mxu0 0.0
    %6610 = vmatprep.subr.mxu0 0.0
    %6611 = vmatpush1.msra.mxu0 0.0
    %6612 = vmatprep.subr.mxu0 0.0
    %6613 = vmatpush1.msra.mxu0 0.0
    %6614 = vmatprep.subr.mxu0 0.0
    %6615 = vmatpush1.msra.mxu0 0.0
    %6616 = vmatprep.subr.mxu0 0.0
    %6617 = vmatpush1.msra.mxu0 0.0
    %6618 = vmatprep.mubr.f32.mxu0 0.0
    %6619 = vmatmul.mubr.f32.gmra.mrb[0].mxu0 %v6448
    %v6620 = vpop.f32.mrb[0].mxu0
    %v6621 = vadd.f32 %v6551, %v6620
    %v6622 = vpop.f32.mrb[0].mxu0
    %6623 = vdwg.mxu0
    %v6624 = vld [vmem:[%s6] sm:$0x1]
    %v6626 = vlaneseq
    %v6627 = vshrl.u32 %v6626, 7
    %v6628 = vsub.s32 0, %v6627
    %v6629 = vrot.slane %v6624, %v6628
    %v6631 = vadd.f32 %v6621, %v6629
    %v6632 = vmax.f32 %v6631, 0.0
    %6633 = vst [vmem:[#allocation2] sm:$0xff] %v6632
    %v6634 = vld [vmem:[%s4808] sm:$0xff]
    %v6635 = vld [vmem:[#allocation8] sm:$0xff]
    %v6636 = vld [vmem:[#allocation8 + $0x8] sm:$0xff]
    %v6637 = vld [vmem:[#allocation8 + $0x10] sm:$0xff]
    %v6638 = vld [vmem:[#allocation8 + $0x18] sm:$0xff]
    %v6639 = vld [vmem:[#allocation8 + $0x20] sm:$0xff]
    %v6640 = vld [vmem:[#allocation8 + $0x28] sm:$0xff]
    %v6641 = vld [vmem:[#allocation8 + $0x30] sm:$0xff]
    %v6642 = vld [vmem:[#allocation8 + $0x38] sm:$0xff]
    %v6643 = vld [vmem:[#allocation8 + $0x40] sm:$0xff]
    %v6644 = vld [vmem:[#allocation8 + $0x48] sm:$0xff]
    %v6645 = vld [vmem:[#allocation8 + $0x50] sm:$0xff]
    %v6646 = vld [vmem:[#allocation8 + $0x58] sm:$0xff]
    %v6647 = vld [vmem:[#allocation8 + $0x60] sm:$0xff]
    %v6648 = vld [vmem:[#allocation8 + $0x68] sm:$0xff]
    %v6649 = vld [vmem:[#allocation8 + $0x70] sm:$0xff]
    %v6650 = vld [vmem:[#allocation8 + $0x78] sm:$0xff]
    %v6651 = vld [vmem:[%s5081] sm:$0xff]
    %v6652 = vld [vmem:[%s6449] sm:$0xff]
    %v6653 = vld [vmem:[%s6449 + $0x8] sm:$0xff]
    %v6654 = vld [vmem:[%s6449 + $0x10] sm:$0xff]
    %v6655 = vld [vmem:[%s6449 + $0x18] sm:$0xff]
    %v6656 = vld [vmem:[%s6449 + $0x20] sm:$0xff]
    %v6657 = vld [vmem:[%s6449 + $0x28] sm:$0xff]
    %v6658 = vld [vmem:[%s6449 + $0x30] sm:$0xff]
    %v6659 = vld [vmem:[%s6449 + $0x38] sm:$0xff]
    %v6660 = vld [vmem:[%s6449 + $0x40] sm:$0xff]
    %v6661 = vld [vmem:[%s6449 + $0x48] sm:$0xff]
    %v6662 = vld [vmem:[%s6449 + $0x50] sm:$0xff]
    %v6663 = vld [vmem:[%s6449 + $0x58] sm:$0xff]
    %v6664 = vld [vmem:[%s6449 + $0x60] sm:$0xff]
    %v6665 = vld [vmem:[%s6449 + $0x68] sm:$0xff]
    %v6666 = vld [vmem:[%s6449 + $0x70] sm:$0xff]
    %v6667 = vld [vmem:[%s6449 + $0x78] sm:$0xff]
    %6668 = vmatprep.subr.mxu0 0.0
    %6669 = vmatpush1.msra.mxu0 %v6652
    %6670 = vmatprep.subr.mxu0 0.0
    %6671 = vmatpush1.msra.mxu0 %v6653
    %6672 = vmatprep.subr.mxu0 0.0
    %6673 = vmatpush1.msra.mxu0 %v6654
    %6674 = vmatprep.subr.mxu0 0.0
    %6675 = vmatpush1.msra.mxu0 %v6655
    %6676 = vmatprep.subr.mxu0 0.0
    %6677 = vmatpush1.msra.mxu0 %v6656
    %6678 = vmatprep.subr.mxu0 0.0
    %6679 = vmatpush1.msra.mxu0 %v6657
    %6680 = vmatprep.subr.mxu0 0.0
    %6681 = vmatpush1.msra.mxu0 %v6658
    %6682 = vmatprep.subr.mxu0 0.0
    %6683 = vmatpush1.msra.mxu0 %v6659
    %6684 = vmatprep.subr.mxu0 0.0
    %6685 = vmatpush1.msra.mxu0 %v6660
    %6686 = vmatprep.subr.mxu0 0.0
    %6687 = vmatpush1.msra.mxu0 %v6661
    %6688 = vmatprep.subr.mxu0 0.0
    %6689 = vmatpush1.msra.mxu0 %v6662
    %6690 = vmatprep.subr.mxu0 0.0
    %6691 = vmatpush1.msra.mxu0 %v6663
    %6692 = vmatprep.subr.mxu0 0.0
    %6693 = vmatpush1.msra.mxu0 %v6664
    %6694 = vmatprep.subr.mxu0 0.0
    %6695 = vmatpush1.msra.mxu0 %v6665
    %6696 = vmatprep.subr.mxu0 0.0
    %6697 = vmatpush1.msra.mxu0 %v6666
    %6698 = vmatprep.subr.mxu0 0.0
    %6699 = vmatpush1.msra.mxu0 %v6667
    %6700 = vmatprep.subr.mxu0 0.0
    %6701 = vmatpush1.msra.mxu0 0.0
    %6702 = vmatprep.subr.mxu0 0.0
    %6703 = vmatpush1.msra.mxu0 0.0
    %6704 = vmatprep.subr.mxu0 0.0
    %6705 = vmatpush1.msra.mxu0 0.0
    %6706 = vmatprep.subr.mxu0 0.0
    %6707 = vmatpush1.msra.mxu0 0.0
    %6708 = vmatprep.subr.mxu0 0.0
    %6709 = vmatpush1.msra.mxu0 0.0
    %6710 = vmatprep.subr.mxu0 0.0
    %6711 = vmatpush1.msra.mxu0 0.0
    %6712 = vmatprep.subr.mxu0 0.0
    %6713 = vmatpush1.msra.mxu0 0.0
    %6714 = vmatprep.subr.mxu0 0.0
    %6715 = vmatpush1.msra.mxu0 0.0
    %6716 = vmatprep.subr.mxu0 0.0
    %6717 = vmatpush1.msra.mxu0 0.0
    %6718 = vmatprep.subr.mxu0 0.0
    %6719 = vmatpush1.msra.mxu0 0.0
    %6720 = vmatprep.subr.mxu0 0.0
    %6721 = vmatpush1.msra.mxu0 0.0
    %6722 = vmatprep.subr.mxu0 0.0
    %6723 = vmatpush1.msra.mxu0 0.0
    %6724 = vmatprep.subr.mxu0 0.0
    %6725 = vmatpush1.msra.mxu0 0.0
    %6726 = vmatprep.subr.mxu0 0.0
    %6727 = vmatpush1.msra.mxu0 0.0
    %6728 = vmatprep.subr.mxu0 0.0
    %6729 = vmatpush1.msra.mxu0 0.0
    %6730 = vmatprep.subr.mxu0 0.0
    %6731 = vmatpush1.msra.mxu0 0.0
    %6732 = vmatprep.mubr.f32.mxu0 0.0
    %6733 = vmatmul.mubr.f32.gmra.mrb[0].mxu0 %v6651
    %v6734 = vpop.f32.mrb[0].mxu0
    %v6735 = vadd.f32 0.0, %v6734
    %v6736 = vpop.f32.mrb[0].mxu0
    %6737 = vdwg.mxu0
    %6738 = vmatprep.subr.mxu0 0.0
    %6739 = vmatpush1.msra.mxu0 %v6635
    %6740 = vmatprep.subr.mxu0 0.0
    %6741 = vmatpush1.msra.mxu0 %v6636
    %6742 = vmatprep.subr.mxu0 0.0
    %6743 = vmatpush1.msra.mxu0 %v6637
    %6744 = vmatprep.subr.mxu0 0.0
    %6745 = vmatpush1.msra.mxu0 %v6638
    %6746 = vmatprep.subr.mxu0 0.0
    %6747 = vmatpush1.msra.mxu0 %v6639
    %6748 = vmatprep.subr.mxu0 0.0
    %6749 = vmatpush1.msra.mxu0 %v6640
    %6750 = vmatprep.subr.mxu0 0.0
    %6751 = vmatpush1.msra.mxu0 %v6641
    %6752 = vmatprep.subr.mxu0 0.0
    %6753 = vmatpush1.msra.mxu0 %v6642
    %6754 = vmatprep.subr.mxu0 0.0
    %6755 = vmatpush1.msra.mxu0 %v6643
    %6756 = vmatprep.subr.mxu0 0.0
    %6757 = vmatpush1.msra.mxu0 %v6644
    %6758 = vmatprep.subr.mxu0 0.0
    %6759 = vmatpush1.msra.mxu0 %v6645
    %6760 = vmatprep.subr.mxu0 0.0
    %6761 = vmatpush1.msra.mxu0 %v6646
    %6762 = vmatprep.subr.mxu0 0.0
    %6763 = vmatpush1.msra.mxu0 %v6647
    %6764 = vmatprep.subr.mxu0 0.0
    %6765 = vmatpush1.msra.mxu0 %v6648
    %6766 = vmatprep.subr.mxu0 0.0
    %6767 = vmatpush1.msra.mxu0 %v6649
    %6768 = vmatprep.subr.mxu0 0.0
    %6769 = vmatpush1.msra.mxu0 %v6650
    %6770 = vmatprep.subr.mxu0 0.0
    %6771 = vmatpush1.msra.mxu0 0.0
    %6772 = vmatprep.subr.mxu0 0.0
    %6773 = vmatpush1.msra.mxu0 0.0
    %6774 = vmatprep.subr.mxu0 0.0
    %6775 = vmatpush1.msra.mxu0 0.0
    %6776 = vmatprep.subr.mxu0 0.0
    %6777 = vmatpush1.msra.mxu0 0.0
    %6778 = vmatprep.subr.mxu0 0.0
    %6779 = vmatpush1.msra.mxu0 0.0
    %6780 = vmatprep.subr.mxu0 0.0
    %6781 = vmatpush1.msra.mxu0 0.0
    %6782 = vmatprep.subr.mxu0 0.0
    %6783 = vmatpush1.msra.mxu0 0.0
    %6784 = vmatprep.subr.mxu0 0.0
    %6785 = vmatpush1.msra.mxu0 0.0
    %6786 = vmatprep.subr.mxu0 0.0
    %6787 = vmatpush1.msra.mxu0 0.0
    %6788 = vmatprep.subr.mxu0 0.0
    %6789 = vmatpush1.msra.mxu0 0.0
    %6790 = vmatprep.subr.mxu0 0.0
    %6791 = vmatpush1.msra.mxu0 0.0
    %6792 = vmatprep.subr.mxu0 0.0
    %6793 = vmatpush1.msra.mxu0 0.0
    %6794 = vmatprep.subr.mxu0 0.0
    %6795 = vmatpush1.msra.mxu0 0.0
    %6796 = vmatprep.subr.mxu0 0.0
    %6797 = vmatpush1.msra.mxu0 0.0
    %6798 = vmatprep.subr.mxu0 0.0
    %6799 = vmatpush1.msra.mxu0 0.0
    %6800 = vmatprep.subr.mxu0 0.0
    %6801 = vmatpush1.msra.mxu0 0.0
    %6802 = vmatprep.mubr.f32.mxu0 0.0
    %6803 = vmatmul.mubr.f32.gmra.mrb[0].mxu0 %v6634
    %v6804 = vpop.f32.mrb[0].mxu0
    %v6805 = vadd.f32 %v6735, %v6804
    %v6806 = vpop.f32.mrb[0].mxu0
    %6807 = vdwg.mxu0
    %v6808 = vld [vmem:[%s5354] sm:$0xff]
    %v6809 = vld [vmem:[%s6467] sm:$0xff]
    %v6810 = vld [vmem:[%s6467 + $0x8] sm:$0xff]
    %v6811 = vld [vmem:[%s6467 + $0x10] sm:$0xff]
    %v6812 = vld [vmem:[%s6467 + $0x18] sm:$0xff]
    %v6813 = vld [vmem:[%s6467 + $0x20] sm:$0xff]
    %v6814 = vld [vmem:[%s6467 + $0x28] sm:$0xff]
    %v6815 = vld [vmem:[%s6467 + $0x30] sm:$0xff]
    %v6816 = vld [vmem:[%s6467 + $0x38] sm:$0xff]
    %v6817 = vld [vmem:[%s6467 + $0x40] sm:$0xff]
    %v6818 = vld [vmem:[%s6467 + $0x48] sm:$0xff]
    %v6819 = vld [vmem:[%s6467 + $0x50] sm:$0xff]
    %v6820 = vld [vmem:[%s6467 + $0x58] sm:$0xff]
    %v6821 = vld [vmem:[%s6467 + $0x60] sm:$0xff]
    %v6822 = vld [vmem:[%s6467 + $0x68] sm:$0xff]
    %v6823 = vld [vmem:[%s6467 + $0x70] sm:$0xff]
    %v6824 = vld [vmem:[%s6467 + $0x78] sm:$0xff]
    %6825 = vmatprep.subr.mxu0 0.0
    %6826 = vmatpush1.msra.mxu0 %v6809
    %6827 = vmatprep.subr.mxu0 0.0
    %6828 = vmatpush1.msra.mxu0 %v6810
    %6829 = vmatprep.subr.mxu0 0.0
    %6830 = vmatpush1.msra.mxu0 %v6811
    %6831 = vmatprep.subr.mxu0 0.0
    %6832 = vmatpush1.msra.mxu0 %v6812
    %6833 = vmatprep.subr.mxu0 0.0
    %6834 = vmatpush1.msra.mxu0 %v6813
    %6835 = vmatprep.subr.mxu0 0.0
    %6836 = vmatpush1.msra.mxu0 %v6814
    %6837 = vmatprep.subr.mxu0 0.0
    %6838 = vmatpush1.msra.mxu0 %v6815
    %6839 = vmatprep.subr.mxu0 0.0
    %6840 = vmatpush1.msra.mxu0 %v6816
    %6841 = vmatprep.subr.mxu0 0.0
    %6842 = vmatpush1.msra.mxu0 %v6817
    %6843 = vmatprep.subr.mxu0 0.0
    %6844 = vmatpush1.msra.mxu0 %v6818
    %6845 = vmatprep.subr.mxu0 0.0
    %6846 = vmatpush1.msra.mxu0 %v6819
    %6847 = vmatprep.subr.mxu0 0.0
    %6848 = vmatpush1.msra.mxu0 %v6820
    %6849 = vmatprep.subr.mxu0 0.0
    %6850 = vmatpush1.msra.mxu0 %v6821
    %6851 = vmatprep.subr.mxu0 0.0
    %6852 = vmatpush1.msra.mxu0 %v6822
    %6853 = vmatprep.subr.mxu0 0.0
    %6854 = vmatpush1.msra.mxu0 %v6823
    %6855 = vmatprep.subr.mxu0 0.0
    %6856 = vmatpush1.msra.mxu0 %v6824
    %6857 = vmatprep.subr.mxu0 0.0
    %6858 = vmatpush1.msra.mxu0 0.0
    %6859 = vmatprep.subr.mxu0 0.0
    %6860 = vmatpush1.msra.mxu0 0.0
    %6861 = vmatprep.subr.mxu0 0.0
    %6862 = vmatpush1.msra.mxu0 0.0
    %6863 = vmatprep.subr.mxu0 0.0
    %6864 = vmatpush1.msra.mxu0 0.0
    %6865 = vmatprep.subr.mxu0 0.0
    %6866 = vmatpush1.msra.mxu0 0.0
    %6867 = vmatprep.subr.mxu0 0.0
    %6868 = vmatpush1.msra.mxu0 0.0
    %6869 = vmatprep.subr.mxu0 0.0
    %6870 = vmatpush1.msra.mxu0 0.0
    %6871 = vmatprep.subr.mxu0 0.0
    %6872 = vmatpush1.msra.mxu0 0.0
    %6873 = vmatprep.subr.mxu0 0.0
    %6874 = vmatpush1.msra.mxu0 0.0
    %6875 = vmatprep.subr.mxu0 0.0
    %6876 = vmatpush1.msra.mxu0 0.0
    %6877 = vmatprep.subr.mxu0 0.0
    %6878 = vmatpush1.msra.mxu0 0.0
    %6879 = vmatprep.subr.mxu0 0.0
    %6880 = vmatpush1.msra.mxu0 0.0
    %6881 = vmatprep.subr.mxu0 0.0
    %6882 = vmatpush1.msra.mxu0 0.0
    %6883 = vmatprep.subr.mxu0 0.0
    %6884 = vmatpush1.msra.mxu0 0.0
    %6885 = vmatprep.subr.mxu0 0.0
    %6886 = vmatpush1.msra.mxu0 0.0
    %6887 = vmatprep.subr.mxu0 0.0
    %6888 = vmatpush1.msra.mxu0 0.0
    %6889 = vmatprep.mubr.f32.mxu0 0.0
    %6890 = vmatmul.mubr.f32.gmra.mrb[0].mxu0 %v6808
    %v6891 = vpop.f32.mrb[0].mxu0
    %v6892 = vadd.f32 0.0, %v6891
    %v6893 = vpop.f32.mrb[0].mxu0
    %6894 = vdwg.mxu0
    %v6895 = vadd.f32 %v6805, %v6892
    %v6896 = vld [vmem:[%s6] sm:$0x1]
    %v6898 = vlaneseq
    %v6899 = vshrl.u32 %v6898, 7
    %v6900 = vsub.s32 0, %v6899
    %v6901 = vrot.slane %v6896, %v6900
    %v6903 = vadd.f32 %v6895, %v6901
    %v6904 = vmax.f32 %v6903, 0.0
    %6905 = vst [vmem:[%s541] sm:$0xff] %v6904
    %v6906 = vld [vmem:[%s5354] sm:$0xff]
    %v6907 = vld [vmem:[#allocation8] sm:$0xff]
    %v6908 = vld [vmem:[#allocation8 + $0x8] sm:$0xff]
    %v6909 = vld [vmem:[#allocation8 + $0x10] sm:$0xff]
    %v6910 = vld [vmem:[#allocation8 + $0x18] sm:$0xff]
    %v6911 = vld [vmem:[#allocation8 + $0x20] sm:$0xff]
    %v6912 = vld [vmem:[#allocation8 + $0x28] sm:$0xff]
    %v6913 = vld [vmem:[#allocation8 + $0x30] sm:$0xff]
    %v6914 = vld [vmem:[#allocation8 + $0x38] sm:$0xff]
    %v6915 = vld [vmem:[#allocation8 + $0x40] sm:$0xff]
    %v6916 = vld [vmem:[#allocation8 + $0x48] sm:$0xff]
    %v6917 = vld [vmem:[#allocation8 + $0x50] sm:$0xff]
    %v6918 = vld [vmem:[#allocation8 + $0x58] sm:$0xff]
    %v6919 = vld [vmem:[#allocation8 + $0x60] sm:$0xff]
    %v6920 = vld [vmem:[#allocation8 + $0x68] sm:$0xff]
    %v6921 = vld [vmem:[#allocation8 + $0x70] sm:$0xff]
    %v6922 = vld [vmem:[#allocation8 + $0x78] sm:$0xff]
    %v6923 = vld [vmem:[%s5627] sm:$0xff]
    %v6924 = vld [vmem:[%s6449] sm:$0xff]
    %v6925 = vld [vmem:[%s6449 + $0x8] sm:$0xff]
    %v6926 = vld [vmem:[%s6449 + $0x10] sm:$0xff]
    %v6927 = vld [vmem:[%s6449 + $0x18] sm:$0xff]
    %v6928 = vld [vmem:[%s6449 + $0x20] sm:$0xff]
    %v6929 = vld [vmem:[%s6449 + $0x28] sm:$0xff]
    %v6930 = vld [vmem:[%s6449 + $0x30] sm:$0xff]
    %v6931 = vld [vmem:[%s6449 + $0x38] sm:$0xff]
    %v6932 = vld [vmem:[%s6449 + $0x40] sm:$0xff]
    %v6933 = vld [vmem:[%s6449 + $0x48] sm:$0xff]
    %v6934 = vld [vmem:[%s6449 + $0x50] sm:$0xff]
    %v6935 = vld [vmem:[%s6449 + $0x58] sm:$0xff]
    %v6936 = vld [vmem:[%s6449 + $0x60] sm:$0xff]
    %v6937 = vld [vmem:[%s6449 + $0x68] sm:$0xff]
    %v6938 = vld [vmem:[%s6449 + $0x70] sm:$0xff]
    %v6939 = vld [vmem:[%s6449 + $0x78] sm:$0xff]
    %6940 = vmatprep.subr.mxu0 0.0
    %6941 = vmatpush1.msra.mxu0 %v6924
    %6942 = vmatprep.subr.mxu0 0.0
    %6943 = vmatpush1.msra.mxu0 %v6925
    %6944 = vmatprep.subr.mxu0 0.0
    %6945 = vmatpush1.msra.mxu0 %v6926
    %6946 = vmatprep.subr.mxu0 0.0
    %6947 = vmatpush1.msra.mxu0 %v6927
    %6948 = vmatprep.subr.mxu0 0.0
    %6949 = vmatpush1.msra.mxu0 %v6928
    %6950 = vmatprep.subr.mxu0 0.0
    %6951 = vmatpush1.msra.mxu0 %v6929
    %6952 = vmatprep.subr.mxu0 0.0
    %6953 = vmatpush1.msra.mxu0 %v6930
    %6954 = vmatprep.subr.mxu0 0.0
    %6955 = vmatpush1.msra.mxu0 %v6931
    %6956 = vmatprep.subr.mxu0 0.0
    %6957 = vmatpush1.msra.mxu0 %v6932
    %6958 = vmatprep.subr.mxu0 0.0
    %6959 = vmatpush1.msra.mxu0 %v6933
    %6960 = vmatprep.subr.mxu0 0.0
    %6961 = vmatpush1.msra.mxu0 %v6934
    %6962 = vmatprep.subr.mxu0 0.0
    %6963 = vmatpush1.msra.mxu0 %v6935
    %6964 = vmatprep.subr.mxu0 0.0
    %6965 = vmatpush1.msra.mxu0 %v6936
    %6966 = vmatprep.subr.mxu0 0.0
    %6967 = vmatpush1.msra.mxu0 %v6937
    %6968 = vmatprep.subr.mxu0 0.0
    %6969 = vmatpush1.msra.mxu0 %v6938
    %6970 = vmatprep.subr.mxu0 0.0
    %6971 = vmatpush1.msra.mxu0 %v6939
    %6972 = vmatprep.subr.mxu0 0.0
    %6973 = vmatpush1.msra.mxu0 0.0
    %6974 = vmatprep.subr.mxu0 0.0
    %6975 = vmatpush1.msra.mxu0 0.0
    %6976 = vmatprep.subr.mxu0 0.0
    %6977 = vmatpush1.msra.mxu0 0.0
    %6978 = vmatprep.subr.mxu0 0.0
    %6979 = vmatpush1.msra.mxu0 0.0
    %6980 = vmatprep.subr.mxu0 0.0
    %6981 = vmatpush1.msra.mxu0 0.0
    %6982 = vmatprep.subr.mxu0 0.0
    %6983 = vmatpush1.msra.mxu0 0.0
    %6984 = vmatprep.subr.mxu0 0.0
    %6985 = vmatpush1.msra.mxu0 0.0
    %6986 = vmatprep.subr.mxu0 0.0
    %6987 = vmatpush1.msra.mxu0 0.0
    %6988 = vmatprep.subr.mxu0 0.0
    %6989 = vmatpush1.msra.mxu0 0.0
    %6990 = vmatprep.subr.mxu0 0.0
    %6991 = vmatpush1.msra.mxu0 0.0
    %6992 = vmatprep.subr.mxu0 0.0
    %6993 = vmatpush1.msra.mxu0 0.0
    %6994 = vmatprep.subr.mxu0 0.0
    %6995 = vmatpush1.msra.mxu0 0.0
    %6996 = vmatprep.subr.mxu0 0.0
    %6997 = vmatpush1.msra.mxu0 0.0
    %6998 = vmatprep.subr.mxu0 0.0
    %6999 = vmatpush1.msra.mxu0 0.0
    %7000 = vmatprep.subr.mxu0 0.0
    %7001 = vmatpush1.msra.mxu0 0.0
    %7002 = vmatprep.subr.mxu0 0.0
    %7003 = vmatpush1.msra.mxu0 0.0
    %7004 = vmatprep.mubr.f32.mxu0 0.0
    %7005 = vmatmul.mubr.f32.gmra.mrb[0].mxu0 %v6923
    %v7006 = vpop.f32.mrb[0].mxu0
    %v7007 = vadd.f32 0.0, %v7006
    %v7008 = vpop.f32.mrb[0].mxu0
    %7009 = vdwg.mxu0
    %7010 = vmatprep.subr.mxu0 0.0
    %7011 = vmatpush1.msra.mxu0 %v6907
    %7012 = vmatprep.subr.mxu0 0.0
    %7013 = vmatpush1.msra.mxu0 %v6908
    %7014 = vmatprep.subr.mxu0 0.0
    %7015 = vmatpush1.msra.mxu0 %v6909
    %7016 = vmatprep.subr.mxu0 0.0
    %7017 = vmatpush1.msra.mxu0 %v6910
    %7018 = vmatprep.subr.mxu0 0.0
    %7019 = vmatpush1.msra.mxu0 %v6911
    %7020 = vmatprep.subr.mxu0 0.0
    %7021 = vmatpush1.msra.mxu0 %v6912
    %7022 = vmatprep.subr.mxu0 0.0
    %7023 = vmatpush1.msra.mxu0 %v6913
    %7024 = vmatprep.subr.mxu0 0.0
    %7025 = vmatpush1.msra.mxu0 %v6914
    %7026 = vmatprep.subr.mxu0 0.0
    %7027 = vmatpush1.msra.mxu0 %v6915
    %7028 = vmatprep.subr.mxu0 0.0
    %7029 = vmatpush1.msra.mxu0 %v6916
    %7030 = vmatprep.subr.mxu0 0.0
    %7031 = vmatpush1.msra.mxu0 %v6917
    %7032 = vmatprep.subr.mxu0 0.0
    %7033 = vmatpush1.msra.mxu0 %v6918
    %7034 = vmatprep.subr.mxu0 0.0
    %7035 = vmatpush1.msra.mxu0 %v6919
    %7036 = vmatprep.subr.mxu0 0.0
    %7037 = vmatpush1.msra.mxu0 %v6920
    %7038 = vmatprep.subr.mxu0 0.0
    %7039 = vmatpush1.msra.mxu0 %v6921
    %7040 = vmatprep.subr.mxu0 0.0
    %7041 = vmatpush1.msra.mxu0 %v6922
    %7042 = vmatprep.subr.mxu0 0.0
    %7043 = vmatpush1.msra.mxu0 0.0
    %7044 = vmatprep.subr.mxu0 0.0
    %7045 = vmatpush1.msra.mxu0 0.0
    %7046 = vmatprep.subr.mxu0 0.0
    %7047 = vmatpush1.msra.mxu0 0.0
    %7048 = vmatprep.subr.mxu0 0.0
    %7049 = vmatpush1.msra.mxu0 0.0
    %7050 = vmatprep.subr.mxu0 0.0
    %7051 = vmatpush1.msra.mxu0 0.0
    %7052 = vmatprep.subr.mxu0 0.0
    %7053 = vmatpush1.msra.mxu0 0.0
    %7054 = vmatprep.subr.mxu0 0.0
    %7055 = vmatpush1.msra.mxu0 0.0
    %7056 = vmatprep.subr.mxu0 0.0
    %7057 = vmatpush1.msra.mxu0 0.0
    %7058 = vmatprep.subr.mxu0 0.0
    %7059 = vmatpush1.msra.mxu0 0.0
    %7060 = vmatprep.subr.mxu0 0.0
    %7061 = vmatpush1.msra.mxu0 0.0
    %7062 = vmatprep.subr.mxu0 0.0
    %7063 = vmatpush1.msra.mxu0 0.0
    %7064 = vmatprep.subr.mxu0 0.0
    %7065 = vmatpush1.msra.mxu0 0.0
    %7066 = vmatprep.subr.mxu0 0.0
    %7067 = vmatpush1.msra.mxu0 0.0
    %7068 = vmatprep.subr.mxu0 0.0
    %7069 = vmatpush1.msra.mxu0 0.0
    %7070 = vmatprep.subr.mxu0 0.0
    %7071 = vmatpush1.msra.mxu0 0.0
    %7072 = vmatprep.subr.mxu0 0.0
    %7073 = vmatpush1.msra.mxu0 0.0
    %7074 = vmatprep.mubr.f32.mxu0 0.0
    %7075 = vmatmul.mubr.f32.gmra.mrb[0].mxu0 %v6906
    %v7076 = vpop.f32.mrb[0].mxu0
    %v7077 = vadd.f32 %v7007, %v7076
    %v7078 = vpop.f32.mrb[0].mxu0
    %7079 = vdwg.mxu0
    %v7080 = vld [vmem:[%s5900] sm:$0xff]
    %v7081 = vld [vmem:[%s6467] sm:$0xff]
    %v7082 = vld [vmem:[%s6467 + $0x8] sm:$0xff]
    %v7083 = vld [vmem:[%s6467 + $0x10] sm:$0xff]
    %v7084 = vld [vmem:[%s6467 + $0x18] sm:$0xff]
    %v7085 = vld [vmem:[%s6467 + $0x20] sm:$0xff]
    %v7086 = vld [vmem:[%s6467 + $0x28] sm:$0xff]
    %v7087 = vld [vmem:[%s6467 + $0x30] sm:$0xff]
    %v7088 = vld [vmem:[%s6467 + $0x38] sm:$0xff]
    %v7089 = vld [vmem:[%s6467 + $0x40] sm:$0xff]
    %v7090 = vld [vmem:[%s6467 + $0x48] sm:$0xff]
    %v7091 = vld [vmem:[%s6467 + $0x50] sm:$0xff]
    %v7092 = vld [vmem:[%s6467 + $0x58] sm:$0xff]
    %v7093 = vld [vmem:[%s6467 + $0x60] sm:$0xff]
    %v7094 = vld [vmem:[%s6467 + $0x68] sm:$0xff]
    %v7095 = vld [vmem:[%s6467 + $0x70] sm:$0xff]
    %v7096 = vld [vmem:[%s6467 + $0x78] sm:$0xff]
    %7097 = vmatprep.subr.mxu0 0.0
    %7098 = vmatpush1.msra.mxu0 %v7081
    %7099 = vmatprep.subr.mxu0 0.0
    %7100 = vmatpush1.msra.mxu0 %v7082
    %7101 = vmatprep.subr.mxu0 0.0
    %7102 = vmatpush1.msra.mxu0 %v7083
    %7103 = vmatprep.subr.mxu0 0.0
    %7104 = vmatpush1.msra.mxu0 %v7084
    %7105 = vmatprep.subr.mxu0 0.0
    %7106 = vmatpush1.msra.mxu0 %v7085
    %7107 = vmatprep.subr.mxu0 0.0
    %7108 = vmatpush1.msra.mxu0 %v7086
    %7109 = vmatprep.subr.mxu0 0.0
    %7110 = vmatpush1.msra.mxu0 %v7087
    %7111 = vmatprep.subr.mxu0 0.0
    %7112 = vmatpush1.msra.mxu0 %v7088
    %7113 = vmatprep.subr.mxu0 0.0
    %7114 = vmatpush1.msra.mxu0 %v7089
    %7115 = vmatprep.subr.mxu0 0.0
    %7116 = vmatpush1.msra.mxu0 %v7090
    %7117 = vmatprep.subr.mxu0 0.0
    %7118 = vmatpush1.msra.mxu0 %v7091
    %7119 = vmatprep.subr.mxu0 0.0
    %7120 = vmatpush1.msra.mxu0 %v7092
    %7121 = vmatprep.subr.mxu0 0.0
    %7122 = vmatpush1.msra.mxu0 %v7093
    %7123 = vmatprep.subr.mxu0 0.0
    %7124 = vmatpush1.msra.mxu0 %v7094
    %7125 = vmatprep.subr.mxu0 0.0
    %7126 = vmatpush1.msra.mxu0 %v7095
    %7127 = vmatprep.subr.mxu0 0.0
    %7128 = vmatpush1.msra.mxu0 %v7096
    %7129 = vmatprep.subr.mxu0 0.0
    %7130 = vmatpush1.msra.mxu0 0.0
    %7131 = vmatprep.subr.mxu0 0.0
    %7132 = vmatpush1.msra.mxu0 0.0
    %7133 = vmatprep.subr.mxu0 0.0
    %7134 = vmatpush1.msra.mxu0 0.0
    %7135 = vmatprep.subr.mxu0 0.0
    %7136 = vmatpush1.msra.mxu0 0.0
    %7137 = vmatprep.subr.mxu0 0.0
    %7138 = vmatpush1.msra.mxu0 0.0
    %7139 = vmatprep.subr.mxu0 0.0
    %7140 = vmatpush1.msra.mxu0 0.0
    %7141 = vmatprep.subr.mxu0 0.0
    %7142 = vmatpush1.msra.mxu0 0.0
    %7143 = vmatprep.subr.mxu0 0.0
    %7144 = vmatpush1.msra.mxu0 0.0
    %7145 = vmatprep.subr.mxu0 0.0
    %7146 = vmatpush1.msra.mxu0 0.0
    %7147 = vmatprep.subr.mxu0 0.0
    %7148 = vmatpush1.msra.mxu0 0.0
    %7149 = vmatprep.subr.mxu0 0.0
    %7150 = vmatpush1.msra.mxu0 0.0
    %7151 = vmatprep.subr.mxu0 0.0
    %7152 = vmatpush1.msra.mxu0 0.0
    %7153 = vmatprep.subr.mxu0 0.0
    %7154 = vmatpush1.msra.mxu0 0.0
    %7155 = vmatprep.subr.mxu0 0.0
    %7156 = vmatpush1.msra.mxu0 0.0
    %7157 = vmatprep.subr.mxu0 0.0
    %7158 = vmatpush1.msra.mxu0 0.0
    %7159 = vmatprep.subr.mxu0 0.0
    %7160 = vmatpush1.msra.mxu0 0.0
    %7161 = vmatprep.mubr.f32.mxu0 0.0
    %7162 = vmatmul.mubr.f32.gmra.mrb[0].mxu0 %v7080
    %v7163 = vpop.f32.mrb[0].mxu0
    %v7164 = vadd.f32 0.0, %v7163
    %v7165 = vpop.f32.mrb[0].mxu0
    %7166 = vdwg.mxu0
    %v7167 = vadd.f32 %v7077, %v7164
    %v7168 = vld [vmem:[%s6] sm:$0x1]
    %v7170 = vlaneseq
    %v7171 = vshrl.u32 %v7170, 7
    %v7172 = vsub.s32 0, %v7171
    %v7173 = vrot.slane %v7168, %v7172
    %v7175 = vadd.f32 %v7167, %v7173
    %v7176 = vmax.f32 %v7175, 0.0
    %7177 = vst [vmem:[%s813] sm:$0xff] %v7176
    %v7178 = vld [vmem:[%s5900] sm:$0xff]
    %v7179 = vld [vmem:[#allocation8] sm:$0xff]
    %v7180 = vld [vmem:[#allocation8 + $0x8] sm:$0xff]
    %v7181 = vld [vmem:[#allocation8 + $0x10] sm:$0xff]
    %v7182 = vld [vmem:[#allocation8 + $0x18] sm:$0xff]
    %v7183 = vld [vmem:[#allocation8 + $0x20] sm:$0xff]
    %v7184 = vld [vmem:[#allocation8 + $0x28] sm:$0xff]
    %v7185 = vld [vmem:[#allocation8 + $0x30] sm:$0xff]
    %v7186 = vld [vmem:[#allocation8 + $0x38] sm:$0xff]
    %v7187 = vld [vmem:[#allocation8 + $0x40] sm:$0xff]
    %v7188 = vld [vmem:[#allocation8 + $0x48] sm:$0xff]
    %v7189 = vld [vmem:[#allocation8 + $0x50] sm:$0xff]
    %v7190 = vld [vmem:[#allocation8 + $0x58] sm:$0xff]
    %v7191 = vld [vmem:[#allocation8 + $0x60] sm:$0xff]
    %v7192 = vld [vmem:[#allocation8 + $0x68] sm:$0xff]
    %v7193 = vld [vmem:[#allocation8 + $0x70] sm:$0xff]
    %v7194 = vld [vmem:[#allocation8 + $0x78] sm:$0xff]
    %v7195 = vld [vmem:[%s6173] sm:$0xff]
    %v7196 = vld [vmem:[%s6449] sm:$0xff]
    %v7197 = vld [vmem:[%s6449 + $0x8] sm:$0xff]
    %v7198 = vld [vmem:[%s6449 + $0x10] sm:$0xff]
    %v7199 = vld [vmem:[%s6449 + $0x18] sm:$0xff]
    %v7200 = vld [vmem:[%s6449 + $0x20] sm:$0xff]
    %v7201 = vld [vmem:[%s6449 + $0x28] sm:$0xff]
    %v7202 = vld [vmem:[%s6449 + $0x30] sm:$0xff]
    %v7203 = vld [vmem:[%s6449 + $0x38] sm:$0xff]
    %v7204 = vld [vmem:[%s6449 + $0x40] sm:$0xff]
    %v7205 = vld [vmem:[%s6449 + $0x48] sm:$0xff]
    %v7206 = vld [vmem:[%s6449 + $0x50] sm:$0xff]
    %v7207 = vld [vmem:[%s6449 + $0x58] sm:$0xff]
    %v7208 = vld [vmem:[%s6449 + $0x60] sm:$0xff]
    %v7209 = vld [vmem:[%s6449 + $0x68] sm:$0xff]
    %v7210 = vld [vmem:[%s6449 + $0x70] sm:$0xff]
    %v7211 = vld [vmem:[%s6449 + $0x78] sm:$0xff]
    %7212 = vmatprep.subr.mxu0 0.0
    %7213 = vmatpush1.msra.mxu0 %v7196
    %7214 = vmatprep.subr.mxu0 0.0
    %7215 = vmatpush1.msra.mxu0 %v7197
    %7216 = vmatprep.subr.mxu0 0.0
    %7217 = vmatpush1.msra.mxu0 %v7198
    %7218 = vmatprep.subr.mxu0 0.0
    %7219 = vmatpush1.msra.mxu0 %v7199
    %7220 = vmatprep.subr.mxu0 0.0
    %7221 = vmatpush1.msra.mxu0 %v7200
    %7222 = vmatprep.subr.mxu0 0.0
    %7223 = vmatpush1.msra.mxu0 %v7201
    %7224 = vmatprep.subr.mxu0 0.0
    %7225 = vmatpush1.msra.mxu0 %v7202
    %7226 = vmatprep.subr.mxu0 0.0
    %7227 = vmatpush1.msra.mxu0 %v7203
    %7228 = vmatprep.subr.mxu0 0.0
    %7229 = vmatpush1.msra.mxu0 %v7204
    %7230 = vmatprep.subr.mxu0 0.0
    %7231 = vmatpush1.msra.mxu0 %v7205
    %7232 = vmatprep.subr.mxu0 0.0
    %7233 = vmatpush1.msra.mxu0 %v7206
    %7234 = vmatprep.subr.mxu0 0.0
    %7235 = vmatpush1.msra.mxu0 %v7207
    %7236 = vmatprep.subr.mxu0 0.0
    %7237 = vmatpush1.msra.mxu0 %v7208
    %7238 = vmatprep.subr.mxu0 0.0
    %7239 = vmatpush1.msra.mxu0 %v7209
    %7240 = vmatprep.subr.mxu0 0.0
    %7241 = vmatpush1.msra.mxu0 %v7210
    %7242 = vmatprep.subr.mxu0 0.0
    %7243 = vmatpush1.msra.mxu0 %v7211
    %7244 = vmatprep.subr.mxu0 0.0
    %7245 = vmatpush1.msra.mxu0 0.0
    %7246 = vmatprep.subr.mxu0 0.0
    %7247 = vmatpush1.msra.mxu0 0.0
    %7248 = vmatprep.subr.mxu0 0.0
    %7249 = vmatpush1.msra.mxu0 0.0
    %7250 = vmatprep.subr.mxu0 0.0
    %7251 = vmatpush1.msra.mxu0 0.0
    %7252 = vmatprep.subr.mxu0 0.0
    %7253 = vmatpush1.msra.mxu0 0.0
    %7254 = vmatprep.subr.mxu0 0.0
    %7255 = vmatpush1.msra.mxu0 0.0
    %7256 = vmatprep.subr.mxu0 0.0
    %7257 = vmatpush1.msra.mxu0 0.0
    %7258 = vmatprep.subr.mxu0 0.0
    %7259 = vmatpush1.msra.mxu0 0.0
    %7260 = vmatprep.subr.mxu0 0.0
    %7261 = vmatpush1.msra.mxu0 0.0
    %7262 = vmatprep.subr.mxu0 0.0
    %7263 = vmatpush1.msra.mxu0 0.0
    %7264 = vmatprep.subr.mxu0 0.0
    %7265 = vmatpush1.msra.mxu0 0.0
    %7266 = vmatprep.subr.mxu0 0.0
    %7267 = vmatpush1.msra.mxu0 0.0
    %7268 = vmatprep.subr.mxu0 0.0
    %7269 = vmatpush1.msra.mxu0 0.0
    %7270 = vmatprep.subr.mxu0 0.0
    %7271 = vmatpush1.msra.mxu0 0.0
    %7272 = vmatprep.subr.mxu0 0.0
    %7273 = vmatpush1.msra.mxu0 0.0
    %7274 = vmatprep.subr.mxu0 0.0
    %7275 = vmatpush1.msra.mxu0 0.0
    %7276 = vmatprep.mubr.f32.mxu0 0.0
    %7277 = vmatmul.mubr.f32.gmra.mrb[0].mxu0 %v7195
    %v7278 = vpop.f32.mrb[0].mxu0
    %v7279 = vadd.f32 0.0, %v7278
    %v7280 = vpop.f32.mrb[0].mxu0
    %7281 = vdwg.mxu0
    %7282 = vmatprep.subr.mxu0 0.0
    %7283 = vmatpush1.msra.mxu0 %v7179
    %7284 = vmatprep.subr.mxu0 0.0
    %7285 = vmatpush1.msra.mxu0 %v7180
    %7286 = vmatprep.subr.mxu0 0.0
    %7287 = vmatpush1.msra.mxu0 %v7181
    %7288 = vmatprep.subr.mxu0 0.0
    %7289 = vmatpush1.msra.mxu0 %v7182
    %7290 = vmatprep.subr.mxu0 0.0
    %7291 = vmatpush1.msra.mxu0 %v7183
    %7292 = vmatprep.subr.mxu0 0.0
    %7293 = vmatpush1.msra.mxu0 %v7184
    %7294 = vmatprep.subr.mxu0 0.0
    %7295 = vmatpush1.msra.mxu0 %v7185
    %7296 = vmatprep.subr.mxu0 0.0
    %7297 = vmatpush1.msra.mxu0 %v7186
    %7298 = vmatprep.subr.mxu0 0.0
    %7299 = vmatpush1.msra.mxu0 %v7187
    %7300 = vmatprep.subr.mxu0 0.0
    %7301 = vmatpush1.msra.mxu0 %v7188
    %7302 = vmatprep.subr.mxu0 0.0
    %7303 = vmatpush1.msra.mxu0 %v7189
    %7304 = vmatprep.subr.mxu0 0.0
    %7305 = vmatpush1.msra.mxu0 %v7190
    %7306 = vmatprep.subr.mxu0 0.0
    %7307 = vmatpush1.msra.mxu0 %v7191
    %7308 = vmatprep.subr.mxu0 0.0
    %7309 = vmatpush1.msra.mxu0 %v7192
    %7310 = vmatprep.subr.mxu0 0.0
    %7311 = vmatpush1.msra.mxu0 %v7193
    %7312 = vmatprep.subr.mxu0 0.0
    %7313 = vmatpush1.msra.mxu0 %v7194
    %7314 = vmatprep.subr.mxu0 0.0
    %7315 = vmatpush1.msra.mxu0 0.0
    %7316 = vmatprep.subr.mxu0 0.0
    %7317 = vmatpush1.msra.mxu0 0.0
    %7318 = vmatprep.subr.mxu0 0.0
    %7319 = vmatpush1.msra.mxu0 0.0
    %7320 = vmatprep.subr.mxu0 0.0
    %7321 = vmatpush1.msra.mxu0 0.0
    %7322 = vmatprep.subr.mxu0 0.0
    %7323 = vmatpush1.msra.mxu0 0.0
    %7324 = vmatprep.subr.mxu0 0.0
    %7325 = vmatpush1.msra.mxu0 0.0
    %7326 = vmatprep.subr.mxu0 0.0
    %7327 = vmatpush1.msra.mxu0 0.0
    %7328 = vmatprep.subr.mxu0 0.0
    %7329 = vmatpush1.msra.mxu0 0.0
    %7330 = vmatprep.subr.mxu0 0.0
    %7331 = vmatpush1.msra.mxu0 0.0
    %7332 = vmatprep.subr.mxu0 0.0
    %7333 = vmatpush1.msra.mxu0 0.0
    %7334 = vmatprep.subr.mxu0 0.0
    %7335 = vmatpush1.msra.mxu0 0.0
    %7336 = vmatprep.subr.mxu0 0.0
    %7337 = vmatpush1.msra.mxu0 0.0
    %7338 = vmatprep.subr.mxu0 0.0
    %7339 = vmatpush1.msra.mxu0 0.0
    %7340 = vmatprep.subr.mxu0 0.0
    %7341 = vmatpush1.msra.mxu0 0.0
    %7342 = vmatprep.subr.mxu0 0.0
    %7343 = vmatpush1.msra.mxu0 0.0
    %7344 = vmatprep.subr.mxu0 0.0
    %7345 = vmatpush1.msra.mxu0 0.0
    %7346 = vmatprep.mubr.f32.mxu0 0.0
    %7347 = vmatmul.mubr.f32.gmra.mrb[0].mxu0 %v7178
    %v7348 = vpop.f32.mrb[0].mxu0
    %v7349 = vadd.f32 %v7279, %v7348
    %v7350 = vpop.f32.mrb[0].mxu0
    %7351 = vdwg.mxu0
    %v7352 = vld [vmem:[%s6446] sm:$0xff]
    %v7353 = vld [vmem:[%s6467] sm:$0xff]
    %v7354 = vld [vmem:[%s6467 + $0x8] sm:$0xff]
    %v7355 = vld [vmem:[%s6467 + $0x10] sm:$0xff]
    %v7356 = vld [vmem:[%s6467 + $0x18] sm:$0xff]
    %v7357 = vld [vmem:[%s6467 + $0x20] sm:$0xff]
    %v7358 = vld [vmem:[%s6467 + $0x28] sm:$0xff]
    %v7359 = vld [vmem:[%s6467 + $0x30] sm:$0xff]
    %v7360 = vld [vmem:[%s6467 + $0x38] sm:$0xff]
    %v7361 = vld [vmem:[%s6467 + $0x40] sm:$0xff]
    %v7362 = vld [vmem:[%s6467 + $0x48] sm:$0xff]
    %v7363 = vld [vmem:[%s6467 + $0x50] sm:$0xff]
    %v7364 = vld [vmem:[%s6467 + $0x58] sm:$0xff]
    %v7365 = vld [vmem:[%s6467 + $0x60] sm:$0xff]
    %v7366 = vld [vmem:[%s6467 + $0x68] sm:$0xff]
    %v7367 = vld [vmem:[%s6467 + $0x70] sm:$0xff]
    %v7368 = vld [vmem:[%s6467 + $0x78] sm:$0xff]
    %7369 = vmatprep.subr.mxu0 0.0
    %7370 = vmatpush1.msra.mxu0 %v7353
    %7371 = vmatprep.subr.mxu0 0.0
    %7372 = vmatpush1.msra.mxu0 %v7354
    %7373 = vmatprep.subr.mxu0 0.0
    %7374 = vmatpush1.msra.mxu0 %v7355
    %7375 = vmatprep.subr.mxu0 0.0
    %7376 = vmatpush1.msra.mxu0 %v7356
    %7377 = vmatprep.subr.mxu0 0.0
    %7378 = vmatpush1.msra.mxu0 %v7357
    %7379 = vmatprep.subr.mxu0 0.0
    %7380 = vmatpush1.msra.mxu0 %v7358
    %7381 = vmatprep.subr.mxu0 0.0
    %7382 = vmatpush1.msra.mxu0 %v7359
    %7383 = vmatprep.subr.mxu0 0.0
    %7384 = vmatpush1.msra.mxu0 %v7360
    %7385 = vmatprep.subr.mxu0 0.0
    %7386 = vmatpush1.msra.mxu0 %v7361
    %7387 = vmatprep.subr.mxu0 0.0
    %7388 = vmatpush1.msra.mxu0 %v7362
    %7389 = vmatprep.subr.mxu0 0.0
    %7390 = vmatpush1.msra.mxu0 %v7363
    %7391 = vmatprep.subr.mxu0 0.0
    %7392 = vmatpush1.msra.mxu0 %v7364
    %7393 = vmatprep.subr.mxu0 0.0
    %7394 = vmatpush1.msra.mxu0 %v7365
    %7395 = vmatprep.subr.mxu0 0.0
    %7396 = vmatpush1.msra.mxu0 %v7366
    %7397 = vmatprep.subr.mxu0 0.0
    %7398 = vmatpush1.msra.mxu0 %v7367
    %7399 = vmatprep.subr.mxu0 0.0
    %7400 = vmatpush1.msra.mxu0 %v7368
    %7401 = vmatprep.subr.mxu0 0.0
    %7402 = vmatpush1.msra.mxu0 0.0
    %7403 = vmatprep.subr.mxu0 0.0
    %7404 = vmatpush1.msra.mxu0 0.0
    %7405 = vmatprep.subr.mxu0 0.0
    %7406 = vmatpush1.msra.mxu0 0.0
    %7407 = vmatprep.subr.mxu0 0.0
    %7408 = vmatpush1.msra.mxu0 0.0
    %7409 = vmatprep.subr.mxu0 0.0
    %7410 = vmatpush1.msra.mxu0 0.0
    %7411 = vmatprep.subr.mxu0 0.0
    %7412 = vmatpush1.msra.mxu0 0.0
    %7413 = vmatprep.subr.mxu0 0.0
    %7414 = vmatpush1.msra.mxu0 0.0
    %7415 = vmatprep.subr.mxu0 0.0
    %7416 = vmatpush1.msra.mxu0 0.0
    %7417 = vmatprep.subr.mxu0 0.0
    %7418 = vmatpush1.msra.mxu0 0.0
    %7419 = vmatprep.subr.mxu0 0.0
    %7420 = vmatpush1.msra.mxu0 0.0
    %7421 = vmatprep.subr.mxu0 0.0
    %7422 = vmatpush1.msra.mxu0 0.0
    %7423 = vmatprep.subr.mxu0 0.0
    %7424 = vmatpush1.msra.mxu0 0.0
    %7425 = vmatprep.subr.mxu0 0.0
    %7426 = vmatpush1.msra.mxu0 0.0
    %7427 = vmatprep.subr.mxu0 0.0
    %7428 = vmatpush1.msra.mxu0 0.0
    %7429 = vmatprep.subr.mxu0 0.0
    %7430 = vmatpush1.msra.mxu0 0.0
    %7431 = vmatprep.subr.mxu0 0.0
    %7432 = vmatpush1.msra.mxu0 0.0
    %7433 = vmatprep.mubr.f32.mxu0 0.0
    %7434 = vmatmul.mubr.f32.gmra.mrb[0].mxu0 %v7352
    %v7435 = vpop.f32.mrb[0].mxu0
    %v7436 = vadd.f32 0.0, %v7435
    %v7437 = vpop.f32.mrb[0].mxu0
    %7438 = vdwg.mxu0
    %v7439 = vadd.f32 %v7349, %v7436
    %v7440 = vld [vmem:[%s6] sm:$0x1]
    %v7442 = vlaneseq
    %v7443 = vshrl.u32 %v7442, 7
    %v7444 = vsub.s32 0, %v7443
    %v7445 = vrot.slane %v7440, %v7444
    %v7447 = vadd.f32 %v7439, %v7445
    %v7448 = vmax.f32 %v7447, 0.0
    %7449 = vst [vmem:[%s1085] sm:$0xff] %v7448
    %v7450 = vld [vmem:[#allocation2] sm:$0xff]
    %s7451 = scalar_lea.vmem %s7, 128
    %v7452 = vld [vmem:[%s7451] sm:$0xff]
    %v7453 = vld [vmem:[%s7451 + $0x8] sm:$0xff]
    %v7454 = vld [vmem:[%s7451 + $0x10] sm:$0xff]
    %v7455 = vld [vmem:[%s7451 + $0x18] sm:$0xff]
    %v7456 = vld [vmem:[%s7451 + $0x20] sm:$0xff]
    %v7457 = vld [vmem:[%s7451 + $0x28] sm:$0xff]
    %v7458 = vld [vmem:[%s7451 + $0x30] sm:$0xff]
    %v7459 = vld [vmem:[%s7451 + $0x38] sm:$0xff]
    %v7460 = vld [vmem:[%s7451 + $0x40] sm:$0xff]
    %v7461 = vld [vmem:[%s7451 + $0x48] sm:$0xff]
    %v7462 = vld [vmem:[%s7451 + $0x50] sm:$0xff]
    %v7463 = vld [vmem:[%s7451 + $0x58] sm:$0xff]
    %v7464 = vld [vmem:[%s7451 + $0x60] sm:$0xff]
    %v7465 = vld [vmem:[%s7451 + $0x68] sm:$0xff]
    %v7466 = vld [vmem:[%s7451 + $0x70] sm:$0xff]
    %v7467 = vld [vmem:[%s7451 + $0x78] sm:$0xff]
    %v7468 = vld [vmem:[%s541] sm:$0xff]
    %s7469 = scalar_lea.vmem %s7, 256
    %v7470 = vld [vmem:[%s7469] sm:$0xff]
    %v7471 = vld [vmem:[%s7469 + $0x8] sm:$0xff]
    %v7472 = vld [vmem:[%s7469 + $0x10] sm:$0xff]
    %v7473 = vld [vmem:[%s7469 + $0x18] sm:$0xff]
    %v7474 = vld [vmem:[%s7469 + $0x20] sm:$0xff]
    %v7475 = vld [vmem:[%s7469 + $0x28] sm:$0xff]
    %v7476 = vld [vmem:[%s7469 + $0x30] sm:$0xff]
    %v7477 = vld [vmem:[%s7469 + $0x38] sm:$0xff]
    %v7478 = vld [vmem:[%s7469 + $0x40] sm:$0xff]
    %v7479 = vld [vmem:[%s7469 + $0x48] sm:$0xff]
    %v7480 = vld [vmem:[%s7469 + $0x50] sm:$0xff]
    %v7481 = vld [vmem:[%s7469 + $0x58] sm:$0xff]
    %v7482 = vld [vmem:[%s7469 + $0x60] sm:$0xff]
    %v7483 = vld [vmem:[%s7469 + $0x68] sm:$0xff]
    %v7484 = vld [vmem:[%s7469 + $0x70] sm:$0xff]
    %v7485 = vld [vmem:[%s7469 + $0x78] sm:$0xff]
    %7486 = vmatprep.subr.mxu0 0.0
    %7487 = vmatpush1.msra.mxu0 %v7470
    %7488 = vmatprep.subr.mxu0 0.0
    %7489 = vmatpush1.msra.mxu0 %v7471
    %7490 = vmatprep.subr.mxu0 0.0
    %7491 = vmatpush1.msra.mxu0 %v7472
    %7492 = vmatprep.subr.mxu0 0.0
    %7493 = vmatpush1.msra.mxu0 %v7473
    %7494 = vmatprep.subr.mxu0 0.0
    %7495 = vmatpush1.msra.mxu0 %v7474
    %7496 = vmatprep.subr.mxu0 0.0
    %7497 = vmatpush1.msra.mxu0 %v7475
    %7498 = vmatprep.subr.mxu0 0.0
    %7499 = vmatpush1.msra.mxu0 %v7476
    %7500 = vmatprep.subr.mxu0 0.0
    %7501 = vmatpush1.msra.mxu0 %v7477
    %7502 = vmatprep.subr.mxu0 0.0
    %7503 = vmatpush1.msra.mxu0 %v7478
    %7504 = vmatprep.subr.mxu0 0.0
    %7505 = vmatpush1.msra.mxu0 %v7479
    %7506 = vmatprep.subr.mxu0 0.0
    %7507 = vmatpush1.msra.mxu0 %v7480
    %7508 = vmatprep.subr.mxu0 0.0
    %7509 = vmatpush1.msra.mxu0 %v7481
    %7510 = vmatprep.subr.mxu0 0.0
    %7511 = vmatpush1.msra.mxu0 %v7482
    %7512 = vmatprep.subr.mxu0 0.0
    %7513 = vmatpush1.msra.mxu0 %v7483
    %7514 = vmatprep.subr.mxu0 0.0
    %7515 = vmatpush1.msra.mxu0 %v7484
    %7516 = vmatprep.subr.mxu0 0.0
    %7517 = vmatpush1.msra.mxu0 %v7485
    %7518 = vmatprep.subr.mxu0 0.0
    %7519 = vmatpush1.msra.mxu0 0.0
    %7520 = vmatprep.subr.mxu0 0.0
    %7521 = vmatpush1.msra.mxu0 0.0
    %7522 = vmatprep.subr.mxu0 0.0
    %7523 = vmatpush1.msra.mxu0 0.0
    %7524 = vmatprep.subr.mxu0 0.0
    %7525 = vmatpush1.msra.mxu0 0.0
    %7526 = vmatprep.subr.mxu0 0.0
    %7527 = vmatpush1.msra.mxu0 0.0
    %7528 = vmatprep.subr.mxu0 0.0
    %7529 = vmatpush1.msra.mxu0 0.0
    %7530 = vmatprep.subr.mxu0 0.0
    %7531 = vmatpush1.msra.mxu0 0.0
    %7532 = vmatprep.subr.mxu0 0.0
    %7533 = vmatpush1.msra.mxu0 0.0
    %7534 = vmatprep.subr.mxu0 0.0
    %7535 = vmatpush1.msra.mxu0 0.0
    %7536 = vmatprep.subr.mxu0 0.0
    %7537 = vmatpush1.msra.mxu0 0.0
    %7538 = vmatprep.subr.mxu0 0.0
    %7539 = vmatpush1.msra.mxu0 0.0
    %7540 = vmatprep.subr.mxu0 0.0
    %7541 = vmatpush1.msra.mxu0 0.0
    %7542 = vmatprep.subr.mxu0 0.0
    %7543 = vmatpush1.msra.mxu0 0.0
    %7544 = vmatprep.subr.mxu0 0.0
    %7545 = vmatpush1.msra.mxu0 0.0
    %7546 = vmatprep.subr.mxu0 0.0
    %7547 = vmatpush1.msra.mxu0 0.0
    %7548 = vmatprep.subr.mxu0 0.0
    %7549 = vmatpush1.msra.mxu0 0.0
    %7550 = vmatprep.mubr.f32.mxu0 0.0
    %7551 = vmatmul.mubr.f32.gmra.mrb[0].mxu0 %v7468
    %v7552 = vpop.f32.mrb[0].mxu0
    %v7553 = vadd.f32 0.0, %v7552
    %v7554 = vpop.f32.mrb[0].mxu0
    %7555 = vdwg.mxu0
    %7556 = vmatprep.subr.mxu0 0.0
    %7557 = vmatpush1.msra.mxu0 %v7452
    %7558 = vmatprep.subr.mxu0 0.0
    %7559 = vmatpush1.msra.mxu0 %v7453
    %7560 = vmatprep.subr.mxu0 0.0
    %7561 = vmatpush1.msra.mxu0 %v7454
    %7562 = vmatprep.subr.mxu0 0.0
    %7563 = vmatpush1.msra.mxu0 %v7455
    %7564 = vmatprep.subr.mxu0 0.0
    %7565 = vmatpush1.msra.mxu0 %v7456
    %7566 = vmatprep.subr.mxu0 0.0
    %7567 = vmatpush1.msra.mxu0 %v7457
    %7568 = vmatprep.subr.mxu0 0.0
    %7569 = vmatpush1.msra.mxu0 %v7458
    %7570 = vmatprep.subr.mxu0 0.0
    %7571 = vmatpush1.msra.mxu0 %v7459
    %7572 = vmatprep.subr.mxu0 0.0
    %7573 = vmatpush1.msra.mxu0 %v7460
    %7574 = vmatprep.subr.mxu0 0.0
    %7575 = vmatpush1.msra.mxu0 %v7461
    %7576 = vmatprep.subr.mxu0 0.0
    %7577 = vmatpush1.msra.mxu0 %v7462
    %7578 = vmatprep.subr.mxu0 0.0
    %7579 = vmatpush1.msra.mxu0 %v7463
    %7580 = vmatprep.subr.mxu0 0.0
    %7581 = vmatpush1.msra.mxu0 %v7464
    %7582 = vmatprep.subr.mxu0 0.0
    %7583 = vmatpush1.msra.mxu0 %v7465
    %7584 = vmatprep.subr.mxu0 0.0
    %7585 = vmatpush1.msra.mxu0 %v7466
    %7586 = vmatprep.subr.mxu0 0.0
    %7587 = vmatpush1.msra.mxu0 %v7467
    %7588 = vmatprep.subr.mxu0 0.0
    %7589 = vmatpush1.msra.mxu0 0.0
    %7590 = vmatprep.subr.mxu0 0.0
    %7591 = vmatpush1.msra.mxu0 0.0
    %7592 = vmatprep.subr.mxu0 0.0
    %7593 = vmatpush1.msra.mxu0 0.0
    %7594 = vmatprep.subr.mxu0 0.0
    %7595 = vmatpush1.msra.mxu0 0.0
    %7596 = vmatprep.subr.mxu0 0.0
    %7597 = vmatpush1.msra.mxu0 0.0
    %7598 = vmatprep.subr.mxu0 0.0
    %7599 = vmatpush1.msra.mxu0 0.0
    %7600 = vmatprep.subr.mxu0 0.0
    %7601 = vmatpush1.msra.mxu0 0.0
    %7602 = vmatprep.subr.mxu0 0.0
    %7603 = vmatpush1.msra.mxu0 0.0
    %7604 = vmatprep.subr.mxu0 0.0
    %7605 = vmatpush1.msra.mxu0 0.0
    %7606 = vmatprep.subr.mxu0 0.0
    %7607 = vmatpush1.msra.mxu0 0.0
    %7608 = vmatprep.subr.mxu0 0.0
    %7609 = vmatpush1.msra.mxu0 0.0
    %7610 = vmatprep.subr.mxu0 0.0
    %7611 = vmatpush1.msra.mxu0 0.0
    %7612 = vmatprep.subr.mxu0 0.0
    %7613 = vmatpush1.msra.mxu0 0.0
    %7614 = vmatprep.subr.mxu0 0.0
    %7615 = vmatpush1.msra.mxu0 0.0
    %7616 = vmatprep.subr.mxu0 0.0
    %7617 = vmatpush1.msra.mxu0 0.0
    %7618 = vmatprep.subr.mxu0 0.0
    %7619 = vmatpush1.msra.mxu0 0.0
    %7620 = vmatprep.mubr.f32.mxu0 0.0
    %7621 = vmatmul.mubr.f32.gmra.mrb[0].mxu0 %v7450
    %v7622 = vpop.f32.mrb[0].mxu0
    %v7623 = vadd.f32 %v7553, %v7622
    %v7624 = vpop.f32.mrb[0].mxu0
    %7625 = vdwg.mxu0
    %v7626 = vld [vmem:[%s8] sm:$0x1]
    %v7628 = vlaneseq
    %v7629 = vshrl.u32 %v7628, 7
    %v7630 = vsub.s32 0, %v7629
    %v7631 = vrot.slane %v7626, %v7630
    %v7633 = vadd.f32 %v7623, %v7631
    %v7634 = vmax.f32 %v7633, 0.0
    %7635 = vst [vmem:[#allocation3] sm:$0xff] %v7634
    %v7636 = vld [vmem:[%s541] sm:$0xff]
    %v7637 = vld [vmem:[%s7] sm:$0xff]
    %v7638 = vld [vmem:[%s7 + $0x8] sm:$0xff]
    %v7639 = vld [vmem:[%s7 + $0x10] sm:$0xff]
    %v7640 = vld [vmem:[%s7 + $0x18] sm:$0xff]
    %v7641 = vld [vmem:[%s7 + $0x20] sm:$0xff]
    %v7642 = vld [vmem:[%s7 + $0x28] sm:$0xff]
    %v7643 = vld [vmem:[%s7 + $0x30] sm:$0xff]
    %v7644 = vld [vmem:[%s7 + $0x38] sm:$0xff]
    %v7645 = vld [vmem:[%s7 + $0x40] sm:$0xff]
    %v7646 = vld [vmem:[%s7 + $0x48] sm:$0xff]
    %v7647 = vld [vmem:[%s7 + $0x50] sm:$0xff]
    %v7648 = vld [vmem:[%s7 + $0x58] sm:$0xff]
    %v7649 = vld [vmem:[%s7 + $0x60] sm:$0xff]
    %v7650 = vld [vmem:[%s7 + $0x68] sm:$0xff]
    %v7651 = vld [vmem:[%s7 + $0x70] sm:$0xff]
    %v7652 = vld [vmem:[%s7 + $0x78] sm:$0xff]
    %v7653 = vld [vmem:[%s813] sm:$0xff]
    %v7654 = vld [vmem:[%s7451] sm:$0xff]
    %v7655 = vld [vmem:[%s7451 + $0x8] sm:$0xff]
    %v7656 = vld [vmem:[%s7451 + $0x10] sm:$0xff]
    %v7657 = vld [vmem:[%s7451 + $0x18] sm:$0xff]
    %v7658 = vld [vmem:[%s7451 + $0x20] sm:$0xff]
    %v7659 = vld [vmem:[%s7451 + $0x28] sm:$0xff]
    %v7660 = vld [vmem:[%s7451 + $0x30] sm:$0xff]
    %v7661 = vld [vmem:[%s7451 + $0x38] sm:$0xff]
    %v7662 = vld [vmem:[%s7451 + $0x40] sm:$0xff]
    %v7663 = vld [vmem:[%s7451 + $0x48] sm:$0xff]
    %v7664 = vld [vmem:[%s7451 + $0x50] sm:$0xff]
    %v7665 = vld [vmem:[%s7451 + $0x58] sm:$0xff]
    %v7666 = vld [vmem:[%s7451 + $0x60] sm:$0xff]
    %v7667 = vld [vmem:[%s7451 + $0x68] sm:$0xff]
    %v7668 = vld [vmem:[%s7451 + $0x70] sm:$0xff]
    %v7669 = vld [vmem:[%s7451 + $0x78] sm:$0xff]
    %7670 = vmatprep.subr.mxu0 0.0
    %7671 = vmatpush1.msra.mxu0 %v7654
    %7672 = vmatprep.subr.mxu0 0.0
    %7673 = vmatpush1.msra.mxu0 %v7655
    %7674 = vmatprep.subr.mxu0 0.0
    %7675 = vmatpush1.msra.mxu0 %v7656
    %7676 = vmatprep.subr.mxu0 0.0
    %7677 = vmatpush1.msra.mxu0 %v7657
    %7678 = vmatprep.subr.mxu0 0.0
    %7679 = vmatpush1.msra.mxu0 %v7658
    %7680 = vmatprep.subr.mxu0 0.0
    %7681 = vmatpush1.msra.mxu0 %v7659
    %7682 = vmatprep.subr.mxu0 0.0
    %7683 = vmatpush1.msra.mxu0 %v7660
    %7684 = vmatprep.subr.mxu0 0.0
    %7685 = vmatpush1.msra.mxu0 %v7661
    %7686 = vmatprep.subr.mxu0 0.0
    %7687 = vmatpush1.msra.mxu0 %v7662
    %7688 = vmatprep.subr.mxu0 0.0
    %7689 = vmatpush1.msra.mxu0 %v7663
    %7690 = vmatprep.subr.mxu0 0.0
    %7691 = vmatpush1.msra.mxu0 %v7664
    %7692 = vmatprep.subr.mxu0 0.0
    %7693 = vmatpush1.msra.mxu0 %v7665
    %7694 = vmatprep.subr.mxu0 0.0
    %7695 = vmatpush1.msra.mxu0 %v7666
    %7696 = vmatprep.subr.mxu0 0.0
    %7697 = vmatpush1.msra.mxu0 %v7667
    %7698 = vmatprep.subr.mxu0 0.0
    %7699 = vmatpush1.msra.mxu0 %v7668
    %7700 = vmatprep.subr.mxu0 0.0
    %7701 = vmatpush1.msra.mxu0 %v7669
    %7702 = vmatprep.subr.mxu0 0.0
    %7703 = vmatpush1.msra.mxu0 0.0
    %7704 = vmatprep.subr.mxu0 0.0
    %7705 = vmatpush1.msra.mxu0 0.0
    %7706 = vmatprep.subr.mxu0 0.0
    %7707 = vmatpush1.msra.mxu0 0.0
    %7708 = vmatprep.subr.mxu0 0.0
    %7709 = vmatpush1.msra.mxu0 0.0
    %7710 = vmatprep.subr.mxu0 0.0
    %7711 = vmatpush1.msra.mxu0 0.0
    %7712 = vmatprep.subr.mxu0 0.0
    %7713 = vmatpush1.msra.mxu0 0.0
    %7714 = vmatprep.subr.mxu0 0.0
    %7715 = vmatpush1.msra.mxu0 0.0
    %7716 = vmatprep.subr.mxu0 0.0
    %7717 = vmatpush1.msra.mxu0 0.0
    %7718 = vmatprep.subr.mxu0 0.0
    %7719 = vmatpush1.msra.mxu0 0.0
    %7720 = vmatprep.subr.mxu0 0.0
    %7721 = vmatpush1.msra.mxu0 0.0
    %7722 = vmatprep.subr.mxu0 0.0
    %7723 = vmatpush1.msra.mxu0 0.0
    %7724 = vmatprep.subr.mxu0 0.0
    %7725 = vmatpush1.msra.mxu0 0.0
    %7726 = vmatprep.subr.mxu0 0.0
    %7727 = vmatpush1.msra.mxu0 0.0
    %7728 = vmatprep.subr.mxu0 0.0
    %7729 = vmatpush1.msra.mxu0 0.0
    %7730 = vmatprep.subr.mxu0 0.0
    %7731 = vmatpush1.msra.mxu0 0.0
    %7732 = vmatprep.subr.mxu0 0.0
    %7733 = vmatpush1.msra.mxu0 0.0
    %7734 = vmatprep.mubr.f32.mxu0 0.0
    %7735 = vmatmul.mubr.f32.gmra.mrb[0].mxu0 %v7653
    %v7736 = vpop.f32.mrb[0].mxu0
    %v7737 = vadd.f32 0.0, %v7736
    %v7738 = vpop.f32.mrb[0].mxu0
    %7739 = vdwg.mxu0
    %7740 = vmatprep.subr.mxu0 0.0
    %7741 = vmatpush1.msra.mxu0 %v7637
    %7742 = vmatprep.subr.mxu0 0.0
    %7743 = vmatpush1.msra.mxu0 %v7638
    %7744 = vmatprep.subr.mxu0 0.0
    %7745 = vmatpush1.msra.mxu0 %v7639
    %7746 = vmatprep.subr.mxu0 0.0
    %7747 = vmatpush1.msra.mxu0 %v7640
    %7748 = vmatprep.subr.mxu0 0.0
    %7749 = vmatpush1.msra.mxu0 %v7641
    %7750 = vmatprep.subr.mxu0 0.0
    %7751 = vmatpush1.msra.mxu0 %v7642
    %7752 = vmatprep.subr.mxu0 0.0
    %7753 = vmatpush1.msra.mxu0 %v7643
    %7754 = vmatprep.subr.mxu0 0.0
    %7755 = vmatpush1.msra.mxu0 %v7644
    %7756 = vmatprep.subr.mxu0 0.0
    %7757 = vmatpush1.msra.mxu0 %v7645
    %7758 = vmatprep.subr.mxu0 0.0
    %7759 = vmatpush1.msra.mxu0 %v7646
    %7760 = vmatprep.subr.mxu0 0.0
    %7761 = vmatpush1.msra.mxu0 %v7647
    %7762 = vmatprep.subr.mxu0 0.0
    %7763 = vmatpush1.msra.mxu0 %v7648
    %7764 = vmatprep.subr.mxu0 0.0
    %7765 = vmatpush1.msra.mxu0 %v7649
    %7766 = vmatprep.subr.mxu0 0.0
    %7767 = vmatpush1.msra.mxu0 %v7650
    %7768 = vmatprep.subr.mxu0 0.0
    %7769 = vmatpush1.msra.mxu0 %v7651
    %7770 = vmatprep.subr.mxu0 0.0
    %7771 = vmatpush1.msra.mxu0 %v7652
    %7772 = vmatprep.subr.mxu0 0.0
    %7773 = vmatpush1.msra.mxu0 0.0
    %7774 = vmatprep.subr.mxu0 0.0
    %7775 = vmatpush1.msra.mxu0 0.0
    %7776 = vmatprep.subr.mxu0 0.0
    %7777 = vmatpush1.msra.mxu0 0.0
    %7778 = vmatprep.subr.mxu0 0.0
    %7779 = vmatpush1.msra.mxu0 0.0
    %7780 = vmatprep.subr.mxu0 0.0
    %7781 = vmatpush1.msra.mxu0 0.0
    %7782 = vmatprep.subr.mxu0 0.0
    %7783 = vmatpush1.msra.mxu0 0.0
    %7784 = vmatprep.subr.mxu0 0.0
    %7785 = vmatpush1.msra.mxu0 0.0
    %7786 = vmatprep.subr.mxu0 0.0
    %7787 = vmatpush1.msra.mxu0 0.0
    %7788 = vmatprep.subr.mxu0 0.0
    %7789 = vmatpush1.msra.mxu0 0.0
    %7790 = vmatprep.subr.mxu0 0.0
    %7791 = vmatpush1.msra.mxu0 0.0
    %7792 = vmatprep.subr.mxu0 0.0
    %7793 = vmatpush1.msra.mxu0 0.0
    %7794 = vmatprep.subr.mxu0 0.0
    %7795 = vmatpush1.msra.mxu0 0.0
    %7796 = vmatprep.subr.mxu0 0.0
    %7797 = vmatpush1.msra.mxu0 0.0
    %7798 = vmatprep.subr.mxu0 0.0
    %7799 = vmatpush1.msra.mxu0 0.0
    %7800 = vmatprep.subr.mxu0 0.0
    %7801 = vmatpush1.msra.mxu0 0.0
    %7802 = vmatprep.subr.mxu0 0.0
    %7803 = vmatpush1.msra.mxu0 0.0
    %7804 = vmatprep.mubr.f32.mxu0 0.0
    %7805 = vmatmul.mubr.f32.gmra.mrb[0].mxu0 %v7636
    %v7806 = vpop.f32.mrb[0].mxu0
    %v7807 = vadd.f32 %v7737, %v7806
    %v7808 = vpop.f32.mrb[0].mxu0
    %7809 = vdwg.mxu0
    %v7810 = vld [vmem:[%s1085] sm:$0xff]
    %v7811 = vld [vmem:[%s7469] sm:$0xff]
    %v7812 = vld [vmem:[%s7469 + $0x8] sm:$0xff]
    %v7813 = vld [vmem:[%s7469 + $0x10] sm:$0xff]
    %v7814 = vld [vmem:[%s7469 + $0x18] sm:$0xff]
    %v7815 = vld [vmem:[%s7469 + $0x20] sm:$0xff]
    %v7816 = vld [vmem:[%s7469 + $0x28] sm:$0xff]
    %v7817 = vld [vmem:[%s7469 + $0x30] sm:$0xff]
    %v7818 = vld [vmem:[%s7469 + $0x38] sm:$0xff]
    %v7819 = vld [vmem:[%s7469 + $0x40] sm:$0xff]
    %v7820 = vld [vmem:[%s7469 + $0x48] sm:$0xff]
    %v7821 = vld [vmem:[%s7469 + $0x50] sm:$0xff]
    %v7822 = vld [vmem:[%s7469 + $0x58] sm:$0xff]
    %v7823 = vld [vmem:[%s7469 + $0x60] sm:$0xff]
    %v7824 = vld [vmem:[%s7469 + $0x68] sm:$0xff]
    %v7825 = vld [vmem:[%s7469 + $0x70] sm:$0xff]
    %v7826 = vld [vmem:[%s7469 + $0x78] sm:$0xff]
    %7827 = vmatprep.subr.mxu0 0.0
    %7828 = vmatpush1.msra.mxu0 %v7811
    %7829 = vmatprep.subr.mxu0 0.0
    %7830 = vmatpush1.msra.mxu0 %v7812
    %7831 = vmatprep.subr.mxu0 0.0
    %7832 = vmatpush1.msra.mxu0 %v7813
    %7833 = vmatprep.subr.mxu0 0.0
    %7834 = vmatpush1.msra.mxu0 %v7814
    %7835 = vmatprep.subr.mxu0 0.0
    %7836 = vmatpush1.msra.mxu0 %v7815
    %7837 = vmatprep.subr.mxu0 0.0
    %7838 = vmatpush1.msra.mxu0 %v7816
    %7839 = vmatprep.subr.mxu0 0.0
    %7840 = vmatpush1.msra.mxu0 %v7817
    %7841 = vmatprep.subr.mxu0 0.0
    %7842 = vmatpush1.msra.mxu0 %v7818
    %7843 = vmatprep.subr.mxu0 0.0
    %7844 = vmatpush1.msra.mxu0 %v7819
    %7845 = vmatprep.subr.mxu0 0.0
    %7846 = vmatpush1.msra.mxu0 %v7820
    %7847 = vmatprep.subr.mxu0 0.0
    %7848 = vmatpush1.msra.mxu0 %v7821
    %7849 = vmatprep.subr.mxu0 0.0
    %7850 = vmatpush1.msra.mxu0 %v7822
    %7851 = vmatprep.subr.mxu0 0.0
    %7852 = vmatpush1.msra.mxu0 %v7823
    %7853 = vmatprep.subr.mxu0 0.0
    %7854 = vmatpush1.msra.mxu0 %v7824
    %7855 = vmatprep.subr.mxu0 0.0
    %7856 = vmatpush1.msra.mxu0 %v7825
    %7857 = vmatprep.subr.mxu0 0.0
    %7858 = vmatpush1.msra.mxu0 %v7826
    %7859 = vmatprep.subr.mxu0 0.0
    %7860 = vmatpush1.msra.mxu0 0.0
    %7861 = vmatprep.subr.mxu0 0.0
    %7862 = vmatpush1.msra.mxu0 0.0
    %7863 = vmatprep.subr.mxu0 0.0
    %7864 = vmatpush1.msra.mxu0 0.0
    %7865 = vmatprep.subr.mxu0 0.0
    %7866 = vmatpush1.msra.mxu0 0.0
    %7867 = vmatprep.subr.mxu0 0.0
    %7868 = vmatpush1.msra.mxu0 0.0
    %7869 = vmatprep.subr.mxu0 0.0
    %7870 = vmatpush1.msra.mxu0 0.0
    %7871 = vmatprep.subr.mxu0 0.0
    %7872 = vmatpush1.msra.mxu0 0.0
    %7873 = vmatprep.subr.mxu0 0.0
    %7874 = vmatpush1.msra.mxu0 0.0
    %7875 = vmatprep.subr.mxu0 0.0
    %7876 = vmatpush1.msra.mxu0 0.0
    %7877 = vmatprep.subr.mxu0 0.0
    %7878 = vmatpush1.msra.mxu0 0.0
    %7879 = vmatprep.subr.mxu0 0.0
    %7880 = vmatpush1.msra.mxu0 0.0
    %7881 = vmatprep.subr.mxu0 0.0
    %7882 = vmatpush1.msra.mxu0 0.0
    %7883 = vmatprep.subr.mxu0 0.0
    %7884 = vmatpush1.msra.mxu0 0.0
    %7885 = vmatprep.subr.mxu0 0.0
    %7886 = vmatpush1.msra.mxu0 0.0
    %7887 = vmatprep.subr.mxu0 0.0
    %7888 = vmatpush1.msra.mxu0 0.0
    %7889 = vmatprep.subr.mxu0 0.0
    %7890 = vmatpush1.msra.mxu0 0.0
    %7891 = vmatprep.mubr.f32.mxu0 0.0
    %7892 = vmatmul.mubr.f32.gmra.mrb[0].mxu0 %v7810
    %v7893 = vpop.f32.mrb[0].mxu0
    %v7894 = vadd.f32 0.0, %v7893
    %v7895 = vpop.f32.mrb[0].mxu0
    %7896 = vdwg.mxu0
    %v7897 = vadd.f32 %v7807, %v7894
    %v7898 = vld [vmem:[%s8] sm:$0x1]
    %v7900 = vlaneseq
    %v7901 = vshrl.u32 %v7900, 7
    %v7902 = vsub.s32 0, %v7901
    %v7903 = vrot.slane %v7898, %v7902
    %v7905 = vadd.f32 %v7897, %v7903
    %v7906 = vmax.f32 %v7905, 0.0
    %7907 = vst [vmem:[%s4808] sm:$0xff] %v7906
    %v7908 = vld [vmem:[#allocation3] sm:$0xff]
    %s7909 = scalar_lea.vmem %s9, 128
    %v7910 = vld [vmem:[%s7909] sm:$0xff]
    %v7911 = vld [vmem:[%s7909 + $0x8] sm:$0xff]
    %v7912 = vld [vmem:[%s7909 + $0x10] sm:$0xff]
    %v7913 = vld [vmem:[%s7909 + $0x18] sm:$0xff]
    %v7914 = vld [vmem:[%s7909 + $0x20] sm:$0xff]
    %v7915 = vld [vmem:[%s7909 + $0x28] sm:$0xff]
    %v7916 = vld [vmem:[%s7909 + $0x30] sm:$0xff]
    %v7917 = vld [vmem:[%s7909 + $0x38] sm:$0xff]
    %v7918 = vld [vmem:[%s7909 + $0x40] sm:$0xff]
    %v7919 = vld [vmem:[%s7909 + $0x48] sm:$0xff]
    %v7920 = vld [vmem:[%s7909 + $0x50] sm:$0xff]
    %v7921 = vld [vmem:[%s7909 + $0x58] sm:$0xff]
    %v7922 = vld [vmem:[%s7909 + $0x60] sm:$0xff]
    %v7923 = vld [vmem:[%s7909 + $0x68] sm:$0xff]
    %v7924 = vld [vmem:[%s7909 + $0x70] sm:$0xff]
    %v7925 = vld [vmem:[%s7909 + $0x78] sm:$0xff]
    %v7926 = vld [vmem:[%s4808] sm:$0xff]
    %s7927 = scalar_lea.vmem %s9, 256
    %v7928 = vld [vmem:[%s7927] sm:$0xff]
    %v7929 = vld [vmem:[%s7927 + $0x8] sm:$0xff]
    %v7930 = vld [vmem:[%s7927 + $0x10] sm:$0xff]
    %v7931 = vld [vmem:[%s7927 + $0x18] sm:$0xff]
    %v7932 = vld [vmem:[%s7927 + $0x20] sm:$0xff]
    %v7933 = vld [vmem:[%s7927 + $0x28] sm:$0xff]
    %v7934 = vld [vmem:[%s7927 + $0x30] sm:$0xff]
    %v7935 = vld [vmem:[%s7927 + $0x38] sm:$0xff]
    %v7936 = vld [vmem:[%s7927 + $0x40] sm:$0xff]
    %v7937 = vld [vmem:[%s7927 + $0x48] sm:$0xff]
    %v7938 = vld [vmem:[%s7927 + $0x50] sm:$0xff]
    %v7939 = vld [vmem:[%s7927 + $0x58] sm:$0xff]
    %v7940 = vld [vmem:[%s7927 + $0x60] sm:$0xff]
    %v7941 = vld [vmem:[%s7927 + $0x68] sm:$0xff]
    %v7942 = vld [vmem:[%s7927 + $0x70] sm:$0xff]
    %v7943 = vld [vmem:[%s7927 + $0x78] sm:$0xff]
    %7944 = vmatprep.subr.mxu0 0.0
    %7945 = vmatpush1.msra.mxu0 %v7928
    %7946 = vmatprep.subr.mxu0 0.0
    %7947 = vmatpush1.msra.mxu0 %v7929
    %7948 = vmatprep.subr.mxu0 0.0
    %7949 = vmatpush1.msra.mxu0 %v7930
    %7950 = vmatprep.subr.mxu0 0.0
    %7951 = vmatpush1.msra.mxu0 %v7931
    %7952 = vmatprep.subr.mxu0 0.0
    %7953 = vmatpush1.msra.mxu0 %v7932
    %7954 = vmatprep.subr.mxu0 0.0
    %7955 = vmatpush1.msra.mxu0 %v7933
    %7956 = vmatprep.subr.mxu0 0.0
    %7957 = vmatpush1.msra.mxu0 %v7934
    %7958 = vmatprep.subr.mxu0 0.0
    %7959 = vmatpush1.msra.mxu0 %v7935
    %7960 = vmatprep.subr.mxu0 0.0
    %7961 = vmatpush1.msra.mxu0 %v7936
    %7962 = vmatprep.subr.mxu0 0.0
    %7963 = vmatpush1.msra.mxu0 %v7937
    %7964 = vmatprep.subr.mxu0 0.0
    %7965 = vmatpush1.msra.mxu0 %v7938
    %7966 = vmatprep.subr.mxu0 0.0
    %7967 = vmatpush1.msra.mxu0 %v7939
    %7968 = vmatprep.subr.mxu0 0.0
    %7969 = vmatpush1.msra.mxu0 %v7940
    %7970 = vmatprep.subr.mxu0 0.0
    %7971 = vmatpush1.msra.mxu0 %v7941
    %7972 = vmatprep.subr.mxu0 0.0
    %7973 = vmatpush1.msra.mxu0 %v7942
    %7974 = vmatprep.subr.mxu0 0.0
    %7975 = vmatpush1.msra.mxu0 %v7943
    %7976 = vmatprep.subr.mxu0 0.0
    %7977 = vmatpush1.msra.mxu0 0.0
    %7978 = vmatprep.subr.mxu0 0.0
    %7979 = vmatpush1.msra.mxu0 0.0
    %7980 = vmatprep.subr.mxu0 0.0
    %7981 = vmatpush1.msra.mxu0 0.0
    %7982 = vmatprep.subr.mxu0 0.0
    %7983 = vmatpush1.msra.mxu0 0.0
    %7984 = vmatprep.subr.mxu0 0.0
    %7985 = vmatpush1.msra.mxu0 0.0
    %7986 = vmatprep.subr.mxu0 0.0
    %7987 = vmatpush1.msra.mxu0 0.0
    %7988 = vmatprep.subr.mxu0 0.0
    %7989 = vmatpush1.msra.mxu0 0.0
    %7990 = vmatprep.subr.mxu0 0.0
    %7991 = vmatpush1.msra.mxu0 0.0
    %7992 = vmatprep.subr.mxu0 0.0
    %7993 = vmatpush1.msra.mxu0 0.0
    %7994 = vmatprep.subr.mxu0 0.0
    %7995 = vmatpush1.msra.mxu0 0.0
    %7996 = vmatprep.subr.mxu0 0.0
    %7997 = vmatpush1.msra.mxu0 0.0
    %7998 = vmatprep.subr.mxu0 0.0
    %7999 = vmatpush1.msra.mxu0 0.0
    %8000 = vmatprep.subr.mxu0 0.0
    %8001 = vmatpush1.msra.mxu0 0.0
    %8002 = vmatprep.subr.mxu0 0.0
    %8003 = vmatpush1.msra.mxu0 0.0
    %8004 = vmatprep.subr.mxu0 0.0
    %8005 = vmatpush1.msra.mxu0 0.0
    %8006 = vmatprep.subr.mxu0 0.0
    %8007 = vmatpush1.msra.mxu0 0.0
    %8008 = vmatprep.mubr.f32.mxu0 0.0
    %8009 = vmatmul.mubr.f32.gmra.mrb[0].mxu0 %v7926
    %v8010 = vpop.f32.mrb[0].mxu0
    %v8011 = vadd.f32 0.0, %v8010
    %v8012 = vpop.f32.mrb[0].mxu0
    %8013 = vdwg.mxu0
    %8014 = vmatprep.subr.mxu0 0.0
    %8015 = vmatpush1.msra.mxu0 %v7910
    %8016 = vmatprep.subr.mxu0 0.0
    %8017 = vmatpush1.msra.mxu0 %v7911
    %8018 = vmatprep.subr.mxu0 0.0
    %8019 = vmatpush1.msra.mxu0 %v7912
    %8020 = vmatprep.subr.mxu0 0.0
    %8021 = vmatpush1.msra.mxu0 %v7913
    %8022 = vmatprep.subr.mxu0 0.0
    %8023 = vmatpush1.msra.mxu0 %v7914
    %8024 = vmatprep.subr.mxu0 0.0
    %8025 = vmatpush1.msra.mxu0 %v7915
    %8026 = vmatprep.subr.mxu0 0.0
    %8027 = vmatpush1.msra.mxu0 %v7916
    %8028 = vmatprep.subr.mxu0 0.0
    %8029 = vmatpush1.msra.mxu0 %v7917
    %8030 = vmatprep.subr.mxu0 0.0
    %8031 = vmatpush1.msra.mxu0 %v7918
    %8032 = vmatprep.subr.mxu0 0.0
    %8033 = vmatpush1.msra.mxu0 %v7919
    %8034 = vmatprep.subr.mxu0 0.0
    %8035 = vmatpush1.msra.mxu0 %v7920
    %8036 = vmatprep.subr.mxu0 0.0
    %8037 = vmatpush1.msra.mxu0 %v7921
    %8038 = vmatprep.subr.mxu0 0.0
    %8039 = vmatpush1.msra.mxu0 %v7922
    %8040 = vmatprep.subr.mxu0 0.0
    %8041 = vmatpush1.msra.mxu0 %v7923
    %8042 = vmatprep.subr.mxu0 0.0
    %8043 = vmatpush1.msra.mxu0 %v7924
    %8044 = vmatprep.subr.mxu0 0.0
    %8045 = vmatpush1.msra.mxu0 %v7925
    %8046 = vmatprep.subr.mxu0 0.0
    %8047 = vmatpush1.msra.mxu0 0.0
    %8048 = vmatprep.subr.mxu0 0.0
    %8049 = vmatpush1.msra.mxu0 0.0
    %8050 = vmatprep.subr.mxu0 0.0
    %8051 = vmatpush1.msra.mxu0 0.0
    %8052 = vmatprep.subr.mxu0 0.0
    %8053 = vmatpush1.msra.mxu0 0.0
    %8054 = vmatprep.subr.mxu0 0.0
    %8055 = vmatpush1.msra.mxu0 0.0
    %8056 = vmatprep.subr.mxu0 0.0
    %8057 = vmatpush1.msra.mxu0 0.0
    %8058 = vmatprep.subr.mxu0 0.0
    %8059 = vmatpush1.msra.mxu0 0.0
    %8060 = vmatprep.subr.mxu0 0.0
    %8061 = vmatpush1.msra.mxu0 0.0
    %8062 = vmatprep.subr.mxu0 0.0
    %8063 = vmatpush1.msra.mxu0 0.0
    %8064 = vmatprep.subr.mxu0 0.0
    %8065 = vmatpush1.msra.mxu0 0.0
    %8066 = vmatprep.subr.mxu0 0.0
    %8067 = vmatpush1.msra.mxu0 0.0
    %8068 = vmatprep.subr.mxu0 0.0
    %8069 = vmatpush1.msra.mxu0 0.0
    %8070 = vmatprep.subr.mxu0 0.0
    %8071 = vmatpush1.msra.mxu0 0.0
    %8072 = vmatprep.subr.mxu0 0.0
    %8073 = vmatpush1.msra.mxu0 0.0
    %8074 = vmatprep.subr.mxu0 0.0
    %8075 = vmatpush1.msra.mxu0 0.0
    %8076 = vmatprep.subr.mxu0 0.0
    %8077 = vmatpush1.msra.mxu0 0.0
    %8078 = vmatprep.mubr.f32.mxu0 0.0
    %8079 = vmatmul.mubr.f32.gmra.mrb[0].mxu0 %v7908
    %v8080 = vpop.f32.mrb[0].mxu0
    %v8081 = vadd.f32 %v8011, %v8080
    %v8082 = vpop.f32.mrb[0].mxu0
    %8083 = vdwg.mxu0
    %v8084 = vld [vmem:[%s10] sm:$0x1]
    %v8086 = vlaneseq
    %v8087 = vshrl.u32 %v8086, 7
    %v8088 = vsub.s32 0, %v8087
    %v8089 = vrot.slane %v8084, %v8088
    %v8091 = vadd.f32 %v8081, %v8089
    %v8092 = vmax.f32 %v8091, 0.0
    %8093 = vst [vmem:[#allocation2] sm:$0xff] %v8092
    %v8094 = vld [vmem:[#allocation2] sm:$0xff]
    %v8095 = vld [vmem:[%s11] sm:$0xff]
    %v8096 = vld [vmem:[%s11 + $0x8] sm:$0xff]
    %v8097 = vld [vmem:[%s11 + $0x10] sm:$0xff]
    %v8098 = vld [vmem:[%s11 + $0x18] sm:$0xff]
    %v8099 = vld [vmem:[%s11 + $0x20] sm:$0xff]
    %v8100 = vld [vmem:[%s11 + $0x28] sm:$0xff]
    %v8101 = vld [vmem:[%s11 + $0x30] sm:$0xff]
    %v8102 = vld [vmem:[%s11 + $0x38] sm:$0xff]
    %v8103 = vld [vmem:[%s11 + $0x40] sm:$0xff]
    %v8104 = vld [vmem:[%s11 + $0x48] sm:$0xff]
    %v8105 = vld [vmem:[%s11 + $0x50] sm:$0xff]
    %v8106 = vld [vmem:[%s11 + $0x58] sm:$0xff]
    %v8107 = vld [vmem:[%s11 + $0x60] sm:$0xff]
    %v8108 = vld [vmem:[%s11 + $0x68] sm:$0xff]
    %v8109 = vld [vmem:[%s11 + $0x70] sm:$0xff]
    %v8110 = vld [vmem:[%s11 + $0x78] sm:$0xff]
    %v8111 = vld [vmem:[%s12] sm:$0x1]
    %v8113 = vlaneseq
    %v8114 = vshrl.u32 %v8113, 7
    %v8115 = vsub.s32 0, %v8114
    %v8116 = vrot.slane %v8111, %v8115
    %8118 = vmatprep.subr.mxu0 0.0
    %8119 = vmatpush1.msra.mxu0 %v8095
    %8120 = vmatprep.subr.mxu0 0.0
    %8121 = vmatpush1.msra.mxu0 %v8096
    %8122 = vmatprep.subr.mxu0 0.0
    %8123 = vmatpush1.msra.mxu0 %v8097
    %8124 = vmatprep.subr.mxu0 0.0
    %8125 = vmatpush1.msra.mxu0 %v8098
    %8126 = vmatprep.subr.mxu0 0.0
    %8127 = vmatpush1.msra.mxu0 %v8099
    %8128 = vmatprep.subr.mxu0 0.0
    %8129 = vmatpush1.msra.mxu0 %v8100
    %8130 = vmatprep.subr.mxu0 0.0
    %8131 = vmatpush1.msra.mxu0 %v8101
    %8132 = vmatprep.subr.mxu0 0.0
    %8133 = vmatpush1.msra.mxu0 %v8102
    %8134 = vmatprep.subr.mxu0 0.0
    %8135 = vmatpush1.msra.mxu0 %v8103
    %8136 = vmatprep.subr.mxu0 0.0
    %8137 = vmatpush1.msra.mxu0 %v8104
    %8138 = vmatprep.subr.mxu0 0.0
    %8139 = vmatpush1.msra.mxu0 %v8105
    %8140 = vmatprep.subr.mxu0 0.0
    %8141 = vmatpush1.msra.mxu0 %v8106
    %8142 = vmatprep.subr.mxu0 0.0
    %8143 = vmatpush1.msra.mxu0 %v8107
    %8144 = vmatprep.subr.mxu0 0.0
    %8145 = vmatpush1.msra.mxu0 %v8108
    %8146 = vmatprep.subr.mxu0 0.0
    %8147 = vmatpush1.msra.mxu0 %v8109
    %8148 = vmatprep.subr.mxu0 0.0
    %8149 = vmatpush1.msra.mxu0 %v8110
    %8150 = vmatprep.subr.mxu0 0.0
    %8151 = vmatpush1.msra.mxu0 0.0
    %8152 = vmatprep.subr.mxu0 0.0
    %8153 = vmatpush1.msra.mxu0 0.0
    %8154 = vmatprep.subr.mxu0 0.0
    %8155 = vmatpush1.msra.mxu0 0.0
    %8156 = vmatprep.subr.mxu0 0.0
    %8157 = vmatpush1.msra.mxu0 0.0
    %8158 = vmatprep.subr.mxu0 0.0
    %8159 = vmatpush1.msra.mxu0 0.0
    %8160 = vmatprep.subr.mxu0 0.0
    %8161 = vmatpush1.msra.mxu0 0.0
    %8162 = vmatprep.subr.mxu0 0.0
    %8163 = vmatpush1.msra.mxu0 0.0
    %8164 = vmatprep.subr.mxu0 0.0
    %8165 = vmatpush1.msra.mxu0 0.0
    %8166 = vmatprep.subr.mxu0 0.0
    %8167 = vmatpush1.msra.mxu0 0.0
    %8168 = vmatprep.subr.mxu0 0.0
    %8169 = vmatpush1.msra.mxu0 0.0
    %8170 = vmatprep.subr.mxu0 0.0
    %8171 = vmatpush1.msra.mxu0 0.0
    %8172 = vmatprep.subr.mxu0 0.0
    %8173 = vmatpush1.msra.mxu0 0.0
    %8174 = vmatprep.subr.mxu0 0.0
    %8175 = vmatpush1.msra.mxu0 0.0
    %8176 = vmatprep.subr.mxu0 0.0
    %8177 = vmatpush1.msra.mxu0 0.0
    %8178 = vmatprep.subr.mxu0 0.0
    %8179 = vmatpush1.msra.mxu0 0.0
    %8180 = vmatprep.subr.mxu0 0.0
    %8181 = vmatpush1.msra.mxu0 0.0
    %8182 = vmatprep.mubr.f32.mxu0 0.0
    %8183 = vmatmul.mubr.f32.gmra.mrb[0].mxu0 %v8094
    %v8184 = vpop.f32.mrb[0].mxu0
    %v8185 = vadd.f32 %v8116, %v8184
    %v8186 = vpop.f32.mrb[0].mxu0
    %8187 = vdwg.mxu0
    %v8188 = vmax.f32 %v8185, 0.0
    %8189 = vst [vmem:[%s13] sm:$0xff] %v8188
    // Predicated region
    $region66: #{_lambda_.1} parent=1 // pred_check
      _
    $region67: #{_lambda_.1} parent=1 // pred_check_branch
      %8191 = sbr.rel (0) target = $region69
    $region68: #{_lambda_.1} parent=1 // pred_region
      _
    $region69: #{_lambda_.1} parent=1 // pred_fallthru
      _
    // Predicated region
    $region70: #{_lambda_.1} parent=1 // pred_check
      _
    $region71: #{_lambda_.1} parent=1 // pred_check_branch
      %8193 = sbr.rel (0) target = $region73
    $region72: #{_lambda_.1} parent=1 // pred_region
      _
    $region73: #{_lambda_.1} parent=1 // pred_fallthru
      _
    %8194 = vsyncpa [#allocation5], 1
    %8195 = vsyncpa [#allocation7], 1

</llo_original>
